<compile_context>
chip_gen: v5e
topology: v5e:2x2
jax: 0.10.0
libtpu: 0.0.40
codegen_flags: <defaults>
</compile_context>

<pallas_src>
import functools

import numpy as np
import jax
import jax.numpy as jnp
from jax import lax
from jax.experimental import pallas as pl
from jax.experimental.pallas import tpu as pltpu

NEG_SLOPE = 0.01   # nn.LeakyReLU default
EPS = 1e-5         # nn.InstanceNorm2d default


def _round_up(x, m):
    return (x + m - 1) // m * m


# ----------------------------------------------------------------------------
# Fused kernel: 6x (conv + instance-norm + leaky-relu) + dense concats.
# One grid step processes `nb` images (nb = N on single-core chips, 1 on v7x).
# ----------------------------------------------------------------------------
def _feb_kernel(x_ref, masks_ref,
                w1a, w1b, w2a0, w2a1, w2b, w3a0, w3a1, w3a2, w3b,
                o_ref, *, H, W, K, pad, in_c_p, out_c_p):
    HW = H * W
    KK = K * K
    # Static tap -> flat-spatial shift table; tap order (ki, kj) matches the
    # packed weights' leading axis.
    shifts = [(ki - pad) * W + (kj - pad) for ki in range(K) for kj in range(K)]

    def taps_of(a, cg):
        """a: (cg, HW) -> list of K*K rolled + boundary-masked taps (cg, HW)."""
        taps = []
        for t, d in enumerate(shifts):
            if d == 0:
                taps.append(a)                       # center tap: always valid
            else:
                r = pltpu.roll(a, shift=(-d) % HW, axis=1)
                # Aligned (cg, HW) mask block (== conv zero-padding).
                taps.append(r * masks_ref[t, 0:cg, :])
        return taps

    def conv(groups, w_refs):
        """acc[co,p] = sum_g sum_t W_g[t] @ tap_g[t]  (accumulated on MXU/VPU)."""
        acc = None
        for taps, w_ref in zip(groups, w_refs):
            for t in range(KK):
                part = jnp.dot(w_ref[t], taps[t],
                               preferred_element_type=jnp.float32)
                acc = part if acc is None else acc + part
        return acc

    def in_lrelu(acc):
        # InstanceNorm2d (biased var, no affine) + LeakyReLU(0.01) on (C, HW).
        mean = jnp.mean(acc, axis=1, keepdims=True)
        d = acc - mean                               # reused for var and norm
        var = jnp.mean(d * d, axis=1, keepdims=True)
        yn = d * lax.rsqrt(var + EPS)
        return jnp.where(yn >= 0, yn, NEG_SLOPE * yn)

    nb = x_ref.shape[0]
    for b in range(nb):                              # static unroll over batch
        x = x_ref[b]                                 # (in_c_p, HW)
        o_ref[b, 0:in_c_p, :] = x.astype(o_ref.dtype)

        # conv1: x -> a1 -> c1
        x_taps = taps_of(x, in_c_p)                  # cached, reused 3x
        a1 = in_lrelu(conv([x_taps], [w1a]))
        c1 = in_lrelu(conv([taps_of(a1, out_c_p)], [w1b]))
        o_ref[b, in_c_p:in_c_p + out_c_p, :] = c1.astype(o_ref.dtype)

        # conv2: [x, c1] -> a2 -> c2
        c1_taps = taps_of(c1, out_c_p)               # cached, reused 2x
        a2 = in_lrelu(conv([x_taps, c1_taps], [w2a0, w2a1]))
        c2 = in_lrelu(conv([taps_of(a2, out_c_p)], [w2b]))
        o_ref[b, in_c_p + out_c_p:in_c_p + 2 * out_c_p, :] = \
            c2.astype(o_ref.dtype)

        # conv3: [x, c1, c2] -> a3 -> c3
        c2_taps = taps_of(c2, out_c_p)
        a3 = in_lrelu(conv([x_taps, c1_taps, c2_taps], [w3a0, w3a1, w3a2]))
        c3 = in_lrelu(conv([taps_of(a3, out_c_p)], [w3b]))
        o_ref[b, in_c_p + 2 * out_c_p:in_c_p + 3 * out_c_p, :] = \
            c3.astype(o_ref.dtype)


# ----------------------------------------------------------------------------
# Wrapper-side (one-time) plumbing: masks, per-group weight repack, launch.
# ----------------------------------------------------------------------------
def _boundary_masks(H, W, K, pad, c_bcast):
    """(K*K, c_bcast, H*W) f32 {0,1}: per-tap valid mask, pre-broadcast on
    sublanes so in-kernel mask multiplies are aligned (C, HW) vreg ops."""
    r = np.arange(H * W) // W
    c = np.arange(H * W) % W
    masks = np.zeros((K * K, H * W), np.float32)
    for ki in range(K):
        for kj in range(K):
            di, dj = ki - pad, kj - pad
            valid = (r + di >= 0) & (r + di < H) & (c + dj >= 0) & (c + dj < W)
            masks[ki * K + kj] = valid.astype(np.float32)
    masks = np.broadcast_to(masks[:, None, :], (K * K, c_bcast, H * W)).copy()
    return jnp.asarray(masks)


def _pack_weight_groups(w_hwio, groups):
    """HWIO (K, K, Cin, Cout) -> list of per-group (K*K, Cout_p, Cg_p) weights.

    Group = one dense-concat input segment; each group is zero-padded to a
    multiple of 8 so it lines up with the channel-padded activations."""
    K1, K2, Cin, Cout = w_hwio.shape
    assert sum(groups) == Cin
    Cout_p = _round_up(Cout, 8)
    packed, off = [], 0
    for g in groups:
        gp = _round_up(g, 8)
        part = w_hwio[:, :, off:off + g, :]
        part = jnp.pad(part, ((0, 0), (0, 0), (0, gp - g), (0, Cout_p - Cout)))
        # (K,K,gp,Cout_p) -> (K*K, gp, Cout_p) -> (K*K, Cout_p, gp)
        part = jnp.transpose(part.reshape(K1 * K2, gp, Cout_p), (0, 2, 1))
        packed.append(part)
        off += g
    return packed


def _default_batch_per_step(N):
    """v7x (2 TensorCores/chip): 1 image per grid step so the 'parallel' axis
    shards across cores. Single-core v5e/v6e: fold the whole batch into one
    step to avoid per-step overhead."""
    try:
        kind = jax.devices()[0].device_kind.lower()
    except Exception:
        return N
    return 1 if ("v7" in kind or "7x" in kind) else N


def feature_extraction_block(x, params, *, kernel=3, pad=1,
                             batch_per_step=None):
    """x: (N, C, H, W) f32 (NCHW, like PyTorch). Returns (N, C + 3*out_c, H, W)."""
    N, in_c, H, W = x.shape
    out_c = params["conv1"][0].shape[-1]
    assert 2 * pad == kernel - 1, "dense concat requires 'same' conv padding"
    HW = H * W
    in_c_p = _round_up(in_c, 8)
    out_c_p = _round_up(out_c, 8)
    c_total_p = in_c_p + 3 * out_c_p
    c_max_p = max(in_c_p, out_c_p)

    if batch_per_step is None:
        batch_per_step = _default_batch_per_step(N)
    batch_per_step = max(1, min(int(batch_per_step), N))
    while N % batch_per_step:
        batch_per_step -= 1
    n_steps = N // batch_per_step
    nb = batch_per_step

    # Per-group weight repack (free wrapper plumbing under jit).
    (w1a,) = _pack_weight_groups(params["conv1"][0], [in_c])
    (w1b,) = _pack_weight_groups(params["conv1"][1], [out_c])
    w2a0, w2a1 = _pack_weight_groups(params["conv2"][0], [in_c, out_c])
    (w2b,) = _pack_weight_groups(params["conv2"][1], [out_c])
    w3a0, w3a1, w3a2 = _pack_weight_groups(params["conv3"][0],
                                           [in_c, out_c, out_c])
    (w3b,) = _pack_weight_groups(params["conv3"][1], [out_c])

    masks = _boundary_masks(H, W, kernel, pad, c_max_p)

    # NCHW -> (N, C_p, H*W): channels on sublanes, flat spatial on lanes.
    x_flat = jnp.pad(x.reshape(N, in_c, HW),
                     ((0, 0), (0, in_c_p - in_c), (0, 0)))

    kern = functools.partial(_feb_kernel, H=H, W=W, K=kernel, pad=pad,
                             in_c_p=in_c_p, out_c_p=out_c_p)
    # Whole-array VMEM residents: masks + 9 per-group weights (no re-DMA).
    resident = pl.BlockSpec(memory_space=pltpu.MemorySpace.VMEM)

    y = pl.pallas_call(
        kern,
        out_shape=jax.ShapeDtypeStruct((N, c_total_p, HW), jnp.float32),
        grid=(n_steps,),
        in_specs=[pl.BlockSpec((nb, in_c_p, HW), lambda n: (n, 0, 0))]
                 + [resident] * 10,
        out_specs=pl.BlockSpec((nb, c_total_p, HW), lambda n: (n, 0, 0)),
        compiler_params=pltpu.CompilerParams(
            dimension_semantics=("parallel",)),
    )(x_flat, masks, w1a, w1b, w2a0, w2a1, w2b, w3a0, w3a1, w3a2, w3b)

    if (in_c % 8 == 0) and (out_c % 8 == 0):
        out = y                      # no channel padding: use result directly
    else:
        offs = [0, in_c_p, in_c_p + out_c_p, in_c_p + 2 * out_c_p]
        sizes = [in_c, out_c, out_c, out_c]
        out = jnp.concatenate([y[:, o:o + s] for o, s in zip(offs, sizes)],
                              axis=1)
    return out.reshape(N, in_c + 3 * out_c, H, W)


def init_params(key, in_c, out_c, kernel):
    """Deterministic synthetic weights, HWIO layout (K, K, Cin, Cout)."""
    keys = jax.random.split(key, 6)

    def w(k, cin, cout):
        return (jax.random.normal(k, (kernel, kernel, cin, cout), jnp.float32)
                * 0.1)

    return {
        "conv1": (w(keys[0], in_c, out_c),             w(keys[1], out_c, out_c)),
        "conv2": (w(keys[2], in_c + out_c, out_c),     w(keys[3], out_c, out_c)),
        "conv3": (w(keys[4], in_c + 2 * out_c, out_c), w(keys[5], out_c, out_c)),
    }


if __name__ == "__main__":
    N, in_c, out_c, H, W = 2, 4, 8, 16, 16
    kernel, pad = 3, 1

    root = jax.random.PRNGKey(0)
    k_x, k_p = jax.random.split(root)

    x = jax.random.normal(k_x, (N, in_c, H, W), jnp.float32)
    params = init_params(k_p, in_c, out_c, kernel)

    fwd = jax.jit(functools.partial(feature_extraction_block,
                                    kernel=kernel, pad=pad))
    out = fwd(x, params)
    jax.block_until_ready(out)

    assert out.shape == (N, in_c + 3 * out_c, H, W), out.shape
    assert out.dtype == jnp.float32

    print("KERNEL_OK")
</pallas_src>

<mosaic_0001>
module attributes {stable_mosaic.version = 11 : i64} {
  func.func @_feb_kernel(%arg0: i32, %arg1: memref<2x8x256xf32, #tpu.memory_space<vmem>>, %arg2: memref<9x8x256xf32, #tpu.memory_space<vmem>>, %arg3: memref<9x8x8xf32, #tpu.memory_space<vmem>>, %arg4: memref<9x8x8xf32, #tpu.memory_space<vmem>>, %arg5: memref<9x8x8xf32, #tpu.memory_space<vmem>>, %arg6: memref<9x8x8xf32, #tpu.memory_space<vmem>>, %arg7: memref<9x8x8xf32, #tpu.memory_space<vmem>>, %arg8: memref<9x8x8xf32, #tpu.memory_space<vmem>>, %arg9: memref<9x8x8xf32, #tpu.memory_space<vmem>>, %arg10: memref<9x8x8xf32, #tpu.memory_space<vmem>>, %arg11: memref<9x8x8xf32, #tpu.memory_space<vmem>>, %arg12: memref<2x32x256xf32, #tpu.memory_space<vmem>>) attributes {dimension_semantics = [#tpu.dimension_semantics<parallel>], iteration_bounds = array<i64: 1>, scalar_prefetch = 0 : i64, scratch_operands = 0 : i64, tpu.core_type = #tpu.core_type<tc>, window_params = [{transform_indices = @transform_0, window_bounds = array<i64: 2, 8, 256>}, {pipeline_mode = #tpu.pipeline_mode<synchronous>, transform_indices = @transform_1, window_bounds = array<i64: 9, 8, 256>}, {pipeline_mode = #tpu.pipeline_mode<synchronous>, transform_indices = @transform_2, window_bounds = array<i64: 9, 8, 8>}, {pipeline_mode = #tpu.pipeline_mode<synchronous>, transform_indices = @transform_3, window_bounds = array<i64: 9, 8, 8>}, {pipeline_mode = #tpu.pipeline_mode<synchronous>, transform_indices = @transform_4, window_bounds = array<i64: 9, 8, 8>}, {pipeline_mode = #tpu.pipeline_mode<synchronous>, transform_indices = @transform_5, window_bounds = array<i64: 9, 8, 8>}, {pipeline_mode = #tpu.pipeline_mode<synchronous>, transform_indices = @transform_6, window_bounds = array<i64: 9, 8, 8>}, {pipeline_mode = #tpu.pipeline_mode<synchronous>, transform_indices = @transform_7, window_bounds = array<i64: 9, 8, 8>}, {pipeline_mode = #tpu.pipeline_mode<synchronous>, transform_indices = @transform_8, window_bounds = array<i64: 9, 8, 8>}, {pipeline_mode = #tpu.pipeline_mode<synchronous>, transform_indices = @transform_9, window_bounds = array<i64: 9, 8, 8>}, {pipeline_mode = #tpu.pipeline_mode<synchronous>, transform_indices = @transform_10, window_bounds = array<i64: 9, 8, 8>}, {transform_indices = @transform_11, window_bounds = array<i64: 2, 32, 256>}]} {
    %c0 = arith.constant 0 : index
    %c0_0 = arith.constant 0 : index
    %c0_1 = arith.constant 0 : index
    %0 = vector.load %arg1[%c0, %c0_0, %c0_1] : memref<2x8x256xf32, #tpu.memory_space<vmem>>, vector<1x8x256xf32>
    %1 = vector.shape_cast %0 : vector<1x8x256xf32> to vector<8x256xf32>
    %c0_2 = arith.constant 0 : index
    %c0_3 = arith.constant 0 : index
    %c0_4 = arith.constant 0 : index
    %2 = vector.load %arg12[%c0_2, %c0_3, %c0_4] : memref<2x32x256xf32, #tpu.memory_space<vmem>>, vector<1x8x256xf32>
    %3 = vector.shape_cast %2 : vector<1x8x256xf32> to vector<8x256xf32>
    %4 = vector.shape_cast %1 : vector<8x256xf32> to vector<1x8x256xf32>
    tpu.vector_store %arg12[%c0_2, %c0_3, %c0_4], %4 {strides = array<i32>} : memref<2x32x256xf32, #tpu.memory_space<vmem>>, vector<1x8x256xf32>,
    %c17_i32 = arith.constant 17 : i32
    %5 = tpu.dynamic_rotate %1 by %c17_i32 dim 1 : vector<8x256xf32>, i32 -> vector<8x256xf32>
    %c0_5 = arith.constant 0 : index
    %c0_6 = arith.constant 0 : index
    %c0_7 = arith.constant 0 : index
    %6 = vector.load %arg2[%c0_5, %c0_6, %c0_7] : memref<9x8x256xf32, #tpu.memory_space<vmem>>, vector<1x8x256xf32>
    %7 = vector.shape_cast %6 : vector<1x8x256xf32> to vector<8x256xf32>
    %8 = arith.mulf %5, %7 : vector<8x256xf32>
    %c16_i32 = arith.constant 16 : i32
    %9 = tpu.dynamic_rotate %1 by %c16_i32 dim 1 : vector<8x256xf32>, i32 -> vector<8x256xf32>
    %c1 = arith.constant 1 : index
    %c0_8 = arith.constant 0 : index
    %c0_9 = arith.constant 0 : index
    %10 = vector.load %arg2[%c1, %c0_8, %c0_9] : memref<9x8x256xf32, #tpu.memory_space<vmem>>, vector<1x8x256xf32>
    %11 = vector.shape_cast %10 : vector<1x8x256xf32> to vector<8x256xf32>
    %12 = arith.mulf %9, %11 : vector<8x256xf32>
    %c15_i32 = arith.constant 15 : i32
    %13 = tpu.dynamic_rotate %1 by %c15_i32 dim 1 : vector<8x256xf32>, i32 -> vector<8x256xf32>
    %c2 = arith.constant 2 : index
    %c0_10 = arith.constant 0 : index
    %c0_11 = arith.constant 0 : index
    %14 = vector.load %arg2[%c2, %c0_10, %c0_11] : memref<9x8x256xf32, #tpu.memory_space<vmem>>, vector<1x8x256xf32>
    %15 = vector.shape_cast %14 : vector<1x8x256xf32> to vector<8x256xf32>
    %16 = arith.mulf %13, %15 : vector<8x256xf32>
    %c1_i32 = arith.constant 1 : i32
    %17 = tpu.dynamic_rotate %1 by %c1_i32 dim 1 : vector<8x256xf32>, i32 -> vector<8x256xf32>
    %c3 = arith.constant 3 : index
    %c0_12 = arith.constant 0 : index
    %c0_13 = arith.constant 0 : index
    %18 = vector.load %arg2[%c3, %c0_12, %c0_13] : memref<9x8x256xf32, #tpu.memory_space<vmem>>, vector<1x8x256xf32>
    %19 = vector.shape_cast %18 : vector<1x8x256xf32> to vector<8x256xf32>
    %20 = arith.mulf %17, %19 : vector<8x256xf32>
    %c255_i32 = arith.constant 255 : i32
    %21 = tpu.dynamic_rotate %1 by %c255_i32 dim 1 : vector<8x256xf32>, i32 -> vector<8x256xf32>
    %c5 = arith.constant 5 : index
    %c0_14 = arith.constant 0 : index
    %c0_15 = arith.constant 0 : index
    %22 = vector.load %arg2[%c5, %c0_14, %c0_15] : memref<9x8x256xf32, #tpu.memory_space<vmem>>, vector<1x8x256xf32>
    %23 = vector.shape_cast %22 : vector<1x8x256xf32> to vector<8x256xf32>
    %24 = arith.mulf %21, %23 : vector<8x256xf32>
    %c241_i32 = arith.constant 241 : i32
    %25 = tpu.dynamic_rotate %1 by %c241_i32 dim 1 : vector<8x256xf32>, i32 -> vector<8x256xf32>
    %c6 = arith.constant 6 : index
    %c0_16 = arith.constant 0 : index
    %c0_17 = arith.constant 0 : index
    %26 = vector.load %arg2[%c6, %c0_16, %c0_17] : memref<9x8x256xf32, #tpu.memory_space<vmem>>, vector<1x8x256xf32>
    %27 = vector.shape_cast %26 : vector<1x8x256xf32> to vector<8x256xf32>
    %28 = arith.mulf %25, %27 : vector<8x256xf32>
    %c240_i32 = arith.constant 240 : i32
    %29 = tpu.dynamic_rotate %1 by %c240_i32 dim 1 : vector<8x256xf32>, i32 -> vector<8x256xf32>
    %c7 = arith.constant 7 : index
    %c0_18 = arith.constant 0 : index
    %c0_19 = arith.constant 0 : index
    %30 = vector.load %arg2[%c7, %c0_18, %c0_19] : memref<9x8x256xf32, #tpu.memory_space<vmem>>, vector<1x8x256xf32>
    %31 = vector.shape_cast %30 : vector<1x8x256xf32> to vector<8x256xf32>
    %32 = arith.mulf %29, %31 : vector<8x256xf32>
    %c239_i32 = arith.constant 239 : i32
    %33 = tpu.dynamic_rotate %1 by %c239_i32 dim 1 : vector<8x256xf32>, i32 -> vector<8x256xf32>
    %c8 = arith.constant 8 : index
    %c0_20 = arith.constant 0 : index
    %c0_21 = arith.constant 0 : index
    %34 = vector.load %arg2[%c8, %c0_20, %c0_21] : memref<9x8x256xf32, #tpu.memory_space<vmem>>, vector<1x8x256xf32>
    %35 = vector.shape_cast %34 : vector<1x8x256xf32> to vector<8x256xf32>
    %36 = arith.mulf %33, %35 : vector<8x256xf32>
    %c0_22 = arith.constant 0 : index
    %c0_23 = arith.constant 0 : index
    %c0_24 = arith.constant 0 : index
    %37 = vector.load %arg3[%c0_22, %c0_23, %c0_24] : memref<9x8x8xf32, #tpu.memory_space<vmem>>, vector<1x8x8xf32>
    %38 = vector.shape_cast %37 : vector<1x8x8xf32> to vector<8x8xf32>
    %cst = arith.constant dense<0.000000e+00> : vector<8x256xf32>
    %39 = tpu.matmul %38, %8, %cst {dimension_numbers = #tpu.dot_dimension_numbers<[1], [0], [0], [1], [0, 0, 1, 1], [], []>} : vector<8x8xf32>, vector<8x256xf32>, vector<8x256xf32> -> vector<8x256xf32>
    %c1_25 = arith.constant 1 : index
    %c0_26 = arith.constant 0 : index
    %c0_27 = arith.constant 0 : index
    %40 = vector.load %arg3[%c1_25, %c0_26, %c0_27] : memref<9x8x8xf32, #tpu.memory_space<vmem>>, vector<1x8x8xf32>
    %41 = vector.shape_cast %40 : vector<1x8x8xf32> to vector<8x8xf32>
    %cst_28 = arith.constant dense<0.000000e+00> : vector<8x256xf32>
    %42 = tpu.matmul %41, %12, %cst_28 {dimension_numbers = #tpu.dot_dimension_numbers<[1], [0], [0], [1], [0, 0, 1, 1], [], []>} : vector<8x8xf32>, vector<8x256xf32>, vector<8x256xf32> -> vector<8x256xf32>
    %43 = arith.addf %39, %42 : vector<8x256xf32>
    %c2_29 = arith.constant 2 : index
    %c0_30 = arith.constant 0 : index
    %c0_31 = arith.constant 0 : index
    %44 = vector.load %arg3[%c2_29, %c0_30, %c0_31] : memref<9x8x8xf32, #tpu.memory_space<vmem>>, vector<1x8x8xf32>
    %45 = vector.shape_cast %44 : vector<1x8x8xf32> to vector<8x8xf32>
    %cst_32 = arith.constant dense<0.000000e+00> : vector<8x256xf32>
    %46 = tpu.matmul %45, %16, %cst_32 {dimension_numbers = #tpu.dot_dimension_numbers<[1], [0], [0], [1], [0, 0, 1, 1], [], []>} : vector<8x8xf32>, vector<8x256xf32>, vector<8x256xf32> -> vector<8x256xf32>
    %47 = arith.addf %43, %46 : vector<8x256xf32>
    %c3_33 = arith.constant 3 : index
    %c0_34 = arith.constant 0 : index
    %c0_35 = arith.constant 0 : index
    %48 = vector.load %arg3[%c3_33, %c0_34, %c0_35] : memref<9x8x8xf32, #tpu.memory_space<vmem>>, vector<1x8x8xf32>
    %49 = vector.shape_cast %48 : vector<1x8x8xf32> to vector<8x8xf32>
    %cst_36 = arith.constant dense<0.000000e+00> : vector<8x256xf32>
    %50 = tpu.matmul %49, %20, %cst_36 {dimension_numbers = #tpu.dot_dimension_numbers<[1], [0], [0], [1], [0, 0, 1, 1], [], []>} : vector<8x8xf32>, vector<8x256xf32>, vector<8x256xf32> -> vector<8x256xf32>
    %51 = arith.addf %47, %50 : vector<8x256xf32>
    %c4 = arith.constant 4 : index
    %c0_37 = arith.constant 0 : index
    %c0_38 = arith.constant 0 : index
    %52 = vector.load %arg3[%c4, %c0_37, %c0_38] : memref<9x8x8xf32, #tpu.memory_space<vmem>>, vector<1x8x8xf32>
    %53 = vector.shape_cast %52 : vector<1x8x8xf32> to vector<8x8xf32>
    %cst_39 = arith.constant dense<0.000000e+00> : vector<8x256xf32>
    %54 = tpu.matmul %53, %1, %cst_39 {dimension_numbers = #tpu.dot_dimension_numbers<[1], [0], [0], [1], [0, 0, 1, 1], [], []>} : vector<8x8xf32>, vector<8x256xf32>, vector<8x256xf32> -> vector<8x256xf32>
    %55 = arith.addf %51, %54 : vector<8x256xf32>
    %c5_40 = arith.constant 5 : index
    %c0_41 = arith.constant 0 : index
    %c0_42 = arith.constant 0 : index
    %56 = vector.load %arg3[%c5_40, %c0_41, %c0_42] : memref<9x8x8xf32, #tpu.memory_space<vmem>>, vector<1x8x8xf32>
    %57 = vector.shape_cast %56 : vector<1x8x8xf32> to vector<8x8xf32>
    %cst_43 = arith.constant dense<0.000000e+00> : vector<8x256xf32>
    %58 = tpu.matmul %57, %24, %cst_43 {dimension_numbers = #tpu.dot_dimension_numbers<[1], [0], [0], [1], [0, 0, 1, 1], [], []>} : vector<8x8xf32>, vector<8x256xf32>, vector<8x256xf32> -> vector<8x256xf32>
    %59 = arith.addf %55, %58 : vector<8x256xf32>
    %c6_44 = arith.constant 6 : index
    %c0_45 = arith.constant 0 : index
    %c0_46 = arith.constant 0 : index
    %60 = vector.load %arg3[%c6_44, %c0_45, %c0_46] : memref<9x8x8xf32, #tpu.memory_space<vmem>>, vector<1x8x8xf32>
    %61 = vector.shape_cast %60 : vector<1x8x8xf32> to vector<8x8xf32>
    %cst_47 = arith.constant dense<0.000000e+00> : vector<8x256xf32>
    %62 = tpu.matmul %61, %28, %cst_47 {dimension_numbers = #tpu.dot_dimension_numbers<[1], [0], [0], [1], [0, 0, 1, 1], [], []>} : vector<8x8xf32>, vector<8x256xf32>, vector<8x256xf32> -> vector<8x256xf32>
    %63 = arith.addf %59, %62 : vector<8x256xf32>
    %c7_48 = arith.constant 7 : index
    %c0_49 = arith.constant 0 : index
    %c0_50 = arith.constant 0 : index
    %64 = vector.load %arg3[%c7_48, %c0_49, %c0_50] : memref<9x8x8xf32, #tpu.memory_space<vmem>>, vector<1x8x8xf32>
    %65 = vector.shape_cast %64 : vector<1x8x8xf32> to vector<8x8xf32>
    %cst_51 = arith.constant dense<0.000000e+00> : vector<8x256xf32>
    %66 = tpu.matmul %65, %32, %cst_51 {dimension_numbers = #tpu.dot_dimension_numbers<[1], [0], [0], [1], [0, 0, 1, 1], [], []>} : vector<8x8xf32>, vector<8x256xf32>, vector<8x256xf32> -> vector<8x256xf32>
    %67 = arith.addf %63, %66 : vector<8x256xf32>
    %c8_52 = arith.constant 8 : index
    %c0_53 = arith.constant 0 : index
    %c0_54 = arith.constant 0 : index
    %68 = vector.load %arg3[%c8_52, %c0_53, %c0_54] : memref<9x8x8xf32, #tpu.memory_space<vmem>>, vector<1x8x8xf32>
    %69 = vector.shape_cast %68 : vector<1x8x8xf32> to vector<8x8xf32>
    %cst_55 = arith.constant dense<0.000000e+00> : vector<8x256xf32>
    %70 = tpu.matmul %69, %36, %cst_55 {dimension_numbers = #tpu.dot_dimension_numbers<[1], [0], [0], [1], [0, 0, 1, 1], [], []>} : vector<8x8xf32>, vector<8x256xf32>, vector<8x256xf32> -> vector<8x256xf32>
    %71 = arith.addf %67, %70 : vector<8x256xf32>
    %cst_56 = arith.constant dense<0.000000e+00> : vector<8xf32>
    %72 = vector.multi_reduction <add>, %71, %cst_56 [1] : vector<8x256xf32> to vector<8xf32>
    %73 = vector.shape_cast %72 : vector<8xf32> to vector<8x1xf32>
    %cst_57 = arith.constant 2.560000e+02 : f32
    %74 = vector.broadcast %cst_57 : f32 to vector<8x1xf32>
    %75 = arith.divf %73, %74 : vector<8x1xf32>
    %76 = vector.broadcast %75 : vector<8x1xf32> to vector<8x256xf32>
    %77 = arith.subf %71, %76 : vector<8x256xf32>
    %78 = arith.mulf %77, %77 : vector<8x256xf32>
    %cst_58 = arith.constant dense<0.000000e+00> : vector<8xf32>
    %79 = vector.multi_reduction <add>, %78, %cst_58 [1] : vector<8x256xf32> to vector<8xf32>
    %80 = vector.shape_cast %79 : vector<8xf32> to vector<8x1xf32>
    %cst_59 = arith.constant 2.560000e+02 : f32
    %81 = vector.broadcast %cst_59 : f32 to vector<8x1xf32>
    %82 = arith.divf %80, %81 : vector<8x1xf32>
    %cst_60 = arith.constant 9.99999974E-6 : f32
    %83 = vector.broadcast %cst_60 : f32 to vector<8x1xf32>
    %84 = arith.addf %82, %83 : vector<8x1xf32>
    %85 = math.rsqrt %84 : vector<8x1xf32>
    %86 = vector.broadcast %85 : vector<8x1xf32> to vector<8x256xf32>
    %87 = arith.mulf %77, %86 : vector<8x256xf32>
    %cst_61 = arith.constant 0.000000e+00 : f32
    %88 = vector.broadcast %cst_61 : f32 to vector<8x256xf32>
    %89 = arith.cmpf oge, %87, %88 : vector<8x256xf32>
    %cst_62 = arith.constant 0.00999999977 : f32
    %90 = vector.broadcast %cst_62 : f32 to vector<8x256xf32>
    %91 = arith.mulf %90, %87 : vector<8x256xf32>
    %92 = arith.select %89, %87, %91 : vector<8x256xi1>, vector<8x256xf32>
    %c17_i32_63 = arith.constant 17 : i32
    %93 = tpu.dynamic_rotate %92 by %c17_i32_63 dim 1 : vector<8x256xf32>, i32 -> vector<8x256xf32>
    %c0_64 = arith.constant 0 : index
    %c0_65 = arith.constant 0 : index
    %c0_66 = arith.constant 0 : index
    %94 = vector.load %arg2[%c0_64, %c0_65, %c0_66] : memref<9x8x256xf32, #tpu.memory_space<vmem>>, vector<1x8x256xf32>
    %95 = vector.shape_cast %94 : vector<1x8x256xf32> to vector<8x256xf32>
    %96 = arith.mulf %93, %95 : vector<8x256xf32>
    %c16_i32_67 = arith.constant 16 : i32
    %97 = tpu.dynamic_rotate %92 by %c16_i32_67 dim 1 : vector<8x256xf32>, i32 -> vector<8x256xf32>
    %c1_68 = arith.constant 1 : index
    %c0_69 = arith.constant 0 : index
    %c0_70 = arith.constant 0 : index
    %98 = vector.load %arg2[%c1_68, %c0_69, %c0_70] : memref<9x8x256xf32, #tpu.memory_space<vmem>>, vector<1x8x256xf32>
    %99 = vector.shape_cast %98 : vector<1x8x256xf32> to vector<8x256xf32>
    %100 = arith.mulf %97, %99 : vector<8x256xf32>
    %c15_i32_71 = arith.constant 15 : i32
    %101 = tpu.dynamic_rotate %92 by %c15_i32_71 dim 1 : vector<8x256xf32>, i32 -> vector<8x256xf32>
    %c2_72 = arith.constant 2 : index
    %c0_73 = arith.constant 0 : index
    %c0_74 = arith.constant 0 : index
    %102 = vector.load %arg2[%c2_72, %c0_73, %c0_74] : memref<9x8x256xf32, #tpu.memory_space<vmem>>, vector<1x8x256xf32>
    %103 = vector.shape_cast %102 : vector<1x8x256xf32> to vector<8x256xf32>
    %104 = arith.mulf %101, %103 : vector<8x256xf32>
    %c1_i32_75 = arith.constant 1 : i32
    %105 = tpu.dynamic_rotate %92 by %c1_i32_75 dim 1 : vector<8x256xf32>, i32 -> vector<8x256xf32>
    %c3_76 = arith.constant 3 : index
    %c0_77 = arith.constant 0 : index
    %c0_78 = arith.constant 0 : index
    %106 = vector.load %arg2[%c3_76, %c0_77, %c0_78] : memref<9x8x256xf32, #tpu.memory_space<vmem>>, vector<1x8x256xf32>
    %107 = vector.shape_cast %106 : vector<1x8x256xf32> to vector<8x256xf32>
    %108 = arith.mulf %105, %107 : vector<8x256xf32>
    %c255_i32_79 = arith.constant 255 : i32
    %109 = tpu.dynamic_rotate %92 by %c255_i32_79 dim 1 : vector<8x256xf32>, i32 -> vector<8x256xf32>
    %c5_80 = arith.constant 5 : index
    %c0_81 = arith.constant 0 : index
    %c0_82 = arith.constant 0 : index
    %110 = vector.load %arg2[%c5_80, %c0_81, %c0_82] : memref<9x8x256xf32, #tpu.memory_space<vmem>>, vector<1x8x256xf32>
    %111 = vector.shape_cast %110 : vector<1x8x256xf32> to vector<8x256xf32>
    %112 = arith.mulf %109, %111 : vector<8x256xf32>
    %c241_i32_83 = arith.constant 241 : i32
    %113 = tpu.dynamic_rotate %92 by %c241_i32_83 dim 1 : vector<8x256xf32>, i32 -> vector<8x256xf32>
    %c6_84 = arith.constant 6 : index
    %c0_85 = arith.constant 0 : index
    %c0_86 = arith.constant 0 : index
    %114 = vector.load %arg2[%c6_84, %c0_85, %c0_86] : memref<9x8x256xf32, #tpu.memory_space<vmem>>, vector<1x8x256xf32>
    %115 = vector.shape_cast %114 : vector<1x8x256xf32> to vector<8x256xf32>
    %116 = arith.mulf %113, %115 : vector<8x256xf32>
    %c240_i32_87 = arith.constant 240 : i32
    %117 = tpu.dynamic_rotate %92 by %c240_i32_87 dim 1 : vector<8x256xf32>, i32 -> vector<8x256xf32>
    %c7_88 = arith.constant 7 : index
    %c0_89 = arith.constant 0 : index
    %c0_90 = arith.constant 0 : index
    %118 = vector.load %arg2[%c7_88, %c0_89, %c0_90] : memref<9x8x256xf32, #tpu.memory_space<vmem>>, vector<1x8x256xf32>
    %119 = vector.shape_cast %118 : vector<1x8x256xf32> to vector<8x256xf32>
    %120 = arith.mulf %117, %119 : vector<8x256xf32>
    %c239_i32_91 = arith.constant 239 : i32
    %121 = tpu.dynamic_rotate %92 by %c239_i32_91 dim 1 : vector<8x256xf32>, i32 -> vector<8x256xf32>
    %c8_92 = arith.constant 8 : index
    %c0_93 = arith.constant 0 : index
    %c0_94 = arith.constant 0 : index
    %122 = vector.load %arg2[%c8_92, %c0_93, %c0_94] : memref<9x8x256xf32, #tpu.memory_space<vmem>>, vector<1x8x256xf32>
    %123 = vector.shape_cast %122 : vector<1x8x256xf32> to vector<8x256xf32>
    %124 = arith.mulf %121, %123 : vector<8x256xf32>
    %c0_95 = arith.constant 0 : index
    %c0_96 = arith.constant 0 : index
    %c0_97 = arith.constant 0 : index
    %125 = vector.load %arg4[%c0_95, %c0_96, %c0_97] : memref<9x8x8xf32, #tpu.memory_space<vmem>>, vector<1x8x8xf32>
    %126 = vector.shape_cast %125 : vector<1x8x8xf32> to vector<8x8xf32>
    %cst_98 = arith.constant dense<0.000000e+00> : vector<8x256xf32>
    %127 = tpu.matmul %126, %96, %cst_98 {dimension_numbers = #tpu.dot_dimension_numbers<[1], [0], [0], [1], [0, 0, 1, 1], [], []>} : vector<8x8xf32>, vector<8x256xf32>, vector<8x256xf32> -> vector<8x256xf32>
    %c1_99 = arith.constant 1 : index
    %c0_100 = arith.constant 0 : index
    %c0_101 = arith.constant 0 : index
    %128 = vector.load %arg4[%c1_99, %c0_100, %c0_101] : memref<9x8x8xf32, #tpu.memory_space<vmem>>, vector<1x8x8xf32>
    %129 = vector.shape_cast %128 : vector<1x8x8xf32> to vector<8x8xf32>
    %cst_102 = arith.constant dense<0.000000e+00> : vector<8x256xf32>
    %130 = tpu.matmul %129, %100, %cst_102 {dimension_numbers = #tpu.dot_dimension_numbers<[1], [0], [0], [1], [0, 0, 1, 1], [], []>} : vector<8x8xf32>, vector<8x256xf32>, vector<8x256xf32> -> vector<8x256xf32>
    %131 = arith.addf %127, %130 : vector<8x256xf32>
    %c2_103 = arith.constant 2 : index
    %c0_104 = arith.constant 0 : index
    %c0_105 = arith.constant 0 : index
    %132 = vector.load %arg4[%c2_103, %c0_104, %c0_105] : memref<9x8x8xf32, #tpu.memory_space<vmem>>, vector<1x8x8xf32>
    %133 = vector.shape_cast %132 : vector<1x8x8xf32> to vector<8x8xf32>
    %cst_106 = arith.constant dense<0.000000e+00> : vector<8x256xf32>
    %134 = tpu.matmul %133, %104, %cst_106 {dimension_numbers = #tpu.dot_dimension_numbers<[1], [0], [0], [1], [0, 0, 1, 1], [], []>} : vector<8x8xf32>, vector<8x256xf32>, vector<8x256xf32> -> vector<8x256xf32>
    %135 = arith.addf %131, %134 : vector<8x256xf32>
    %c3_107 = arith.constant 3 : index
    %c0_108 = arith.constant 0 : index
    %c0_109 = arith.constant 0 : index
    %136 = vector.load %arg4[%c3_107, %c0_108, %c0_109] : memref<9x8x8xf32, #tpu.memory_space<vmem>>, vector<1x8x8xf32>
    %137 = vector.shape_cast %136 : vector<1x8x8xf32> to vector<8x8xf32>
    %cst_110 = arith.constant dense<0.000000e+00> : vector<8x256xf32>
    %138 = tpu.matmul %137, %108, %cst_110 {dimension_numbers = #tpu.dot_dimension_numbers<[1], [0], [0], [1], [0, 0, 1, 1], [], []>} : vector<8x8xf32>, vector<8x256xf32>, vector<8x256xf32> -> vector<8x256xf32>
    %139 = arith.addf %135, %138 : vector<8x256xf32>
    %c4_111 = arith.constant 4 : index
    %c0_112 = arith.constant 0 : index
    %c0_113 = arith.constant 0 : index
    %140 = vector.load %arg4[%c4_111, %c0_112, %c0_113] : memref<9x8x8xf32, #tpu.memory_space<vmem>>, vector<1x8x8xf32>
    %141 = vector.shape_cast %140 : vector<1x8x8xf32> to vector<8x8xf32>
    %cst_114 = arith.constant dense<0.000000e+00> : vector<8x256xf32>
    %142 = tpu.matmul %141, %92, %cst_114 {dimension_numbers = #tpu.dot_dimension_numbers<[1], [0], [0], [1], [0, 0, 1, 1], [], []>} : vector<8x8xf32>, vector<8x256xf32>, vector<8x256xf32> -> vector<8x256xf32>
    %143 = arith.addf %139, %142 : vector<8x256xf32>
    %c5_115 = arith.constant 5 : index
    %c0_116 = arith.constant 0 : index
    %c0_117 = arith.constant 0 : index
    %144 = vector.load %arg4[%c5_115, %c0_116, %c0_117] : memref<9x8x8xf32, #tpu.memory_space<vmem>>, vector<1x8x8xf32>
    %145 = vector.shape_cast %144 : vector<1x8x8xf32> to vector<8x8xf32>
    %cst_118 = arith.constant dense<0.000000e+00> : vector<8x256xf32>
    %146 = tpu.matmul %145, %112, %cst_118 {dimension_numbers = #tpu.dot_dimension_numbers<[1], [0], [0], [1], [0, 0, 1, 1], [], []>} : vector<8x8xf32>, vector<8x256xf32>, vector<8x256xf32> -> vector<8x256xf32>
    %147 = arith.addf %143, %146 : vector<8x256xf32>
    %c6_119 = arith.constant 6 : index
    %c0_120 = arith.constant 0 : index
    %c0_121 = arith.constant 0 : index
    %148 = vector.load %arg4[%c6_119, %c0_120, %c0_121] : memref<9x8x8xf32, #tpu.memory_space<vmem>>, vector<1x8x8xf32>
    %149 = vector.shape_cast %148 : vector<1x8x8xf32> to vector<8x8xf32>
    %cst_122 = arith.constant dense<0.000000e+00> : vector<8x256xf32>
    %150 = tpu.matmul %149, %116, %cst_122 {dimension_numbers = #tpu.dot_dimension_numbers<[1], [0], [0], [1], [0, 0, 1, 1], [], []>} : vector<8x8xf32>, vector<8x256xf32>, vector<8x256xf32> -> vector<8x256xf32>
    %151 = arith.addf %147, %150 : vector<8x256xf32>
    %c7_123 = arith.constant 7 : index
    %c0_124 = arith.constant 0 : index
    %c0_125 = arith.constant 0 : index
    %152 = vector.load %arg4[%c7_123, %c0_124, %c0_125] : memref<9x8x8xf32, #tpu.memory_space<vmem>>, vector<1x8x8xf32>
    %153 = vector.shape_cast %152 : vector<1x8x8xf32> to vector<8x8xf32>
    %cst_126 = arith.constant dense<0.000000e+00> : vector<8x256xf32>
    %154 = tpu.matmul %153, %120, %cst_126 {dimension_numbers = #tpu.dot_dimension_numbers<[1], [0], [0], [1], [0, 0, 1, 1], [], []>} : vector<8x8xf32>, vector<8x256xf32>, vector<8x256xf32> -> vector<8x256xf32>
    %155 = arith.addf %151, %154 : vector<8x256xf32>
    %c8_127 = arith.constant 8 : index
    %c0_128 = arith.constant 0 : index
    %c0_129 = arith.constant 0 : index
    %156 = vector.load %arg4[%c8_127, %c0_128, %c0_129] : memref<9x8x8xf32, #tpu.memory_space<vmem>>, vector<1x8x8xf32>
    %157 = vector.shape_cast %156 : vector<1x8x8xf32> to vector<8x8xf32>
    %cst_130 = arith.constant dense<0.000000e+00> : vector<8x256xf32>
    %158 = tpu.matmul %157, %124, %cst_130 {dimension_numbers = #tpu.dot_dimension_numbers<[1], [0], [0], [1], [0, 0, 1, 1], [], []>} : vector<8x8xf32>, vector<8x256xf32>, vector<8x256xf32> -> vector<8x256xf32>
    %159 = arith.addf %155, %158 : vector<8x256xf32>
    %cst_131 = arith.constant dense<0.000000e+00> : vector<8xf32>
    %160 = vector.multi_reduction <add>, %159, %cst_131 [1] : vector<8x256xf32> to vector<8xf32>
    %161 = vector.shape_cast %160 : vector<8xf32> to vector<8x1xf32>
    %cst_132 = arith.constant 2.560000e+02 : f32
    %162 = vector.broadcast %cst_132 : f32 to vector<8x1xf32>
    %163 = arith.divf %161, %162 : vector<8x1xf32>
    %164 = vector.broadcast %163 : vector<8x1xf32> to vector<8x256xf32>
    %165 = arith.subf %159, %164 : vector<8x256xf32>
    %166 = arith.mulf %165, %165 : vector<8x256xf32>
    %cst_133 = arith.constant dense<0.000000e+00> : vector<8xf32>
    %167 = vector.multi_reduction <add>, %166, %cst_133 [1] : vector<8x256xf32> to vector<8xf32>
    %168 = vector.shape_cast %167 : vector<8xf32> to vector<8x1xf32>
    %cst_134 = arith.constant 2.560000e+02 : f32
    %169 = vector.broadcast %cst_134 : f32 to vector<8x1xf32>
    %170 = arith.divf %168, %169 : vector<8x1xf32>
    %cst_135 = arith.constant 9.99999974E-6 : f32
    %171 = vector.broadcast %cst_135 : f32 to vector<8x1xf32>
    %172 = arith.addf %170, %171 : vector<8x1xf32>
    %173 = math.rsqrt %172 : vector<8x1xf32>
    %174 = vector.broadcast %173 : vector<8x1xf32> to vector<8x256xf32>
    %175 = arith.mulf %165, %174 : vector<8x256xf32>
    %cst_136 = arith.constant 0.000000e+00 : f32
    %176 = vector.broadcast %cst_136 : f32 to vector<8x256xf32>
    %177 = arith.cmpf oge, %175, %176 : vector<8x256xf32>
    %cst_137 = arith.constant 0.00999999977 : f32
    %178 = vector.broadcast %cst_137 : f32 to vector<8x256xf32>
    %179 = arith.mulf %178, %175 : vector<8x256xf32>
    %180 = arith.select %177, %175, %179 : vector<8x256xi1>, vector<8x256xf32>
    %c0_138 = arith.constant 0 : index
    %c8_139 = arith.constant 8 : index
    %c0_140 = arith.constant 0 : index
    %181 = vector.load %arg12[%c0_138, %c8_139, %c0_140] : memref<2x32x256xf32, #tpu.memory_space<vmem>>, vector<1x8x256xf32>
    %182 = vector.shape_cast %181 : vector<1x8x256xf32> to vector<8x256xf32>
    %183 = vector.shape_cast %180 : vector<8x256xf32> to vector<1x8x256xf32>
    tpu.vector_store %arg12[%c0_138, %c8_139, %c0_140], %183 {strides = array<i32>} : memref<2x32x256xf32, #tpu.memory_space<vmem>>, vector<1x8x256xf32>,
    %c17_i32_141 = arith.constant 17 : i32
    %184 = tpu.dynamic_rotate %180 by %c17_i32_141 dim 1 : vector<8x256xf32>, i32 -> vector<8x256xf32>
    %c0_142 = arith.constant 0 : index
    %c0_143 = arith.constant 0 : index
    %c0_144 = arith.constant 0 : index
    %185 = vector.load %arg2[%c0_142, %c0_143, %c0_144] : memref<9x8x256xf32, #tpu.memory_space<vmem>>, vector<1x8x256xf32>
    %186 = vector.shape_cast %185 : vector<1x8x256xf32> to vector<8x256xf32>
    %187 = arith.mulf %184, %186 : vector<8x256xf32>
    %c16_i32_145 = arith.constant 16 : i32
    %188 = tpu.dynamic_rotate %180 by %c16_i32_145 dim 1 : vector<8x256xf32>, i32 -> vector<8x256xf32>
    %c1_146 = arith.constant 1 : index
    %c0_147 = arith.constant 0 : index
    %c0_148 = arith.constant 0 : index
    %189 = vector.load %arg2[%c1_146, %c0_147, %c0_148] : memref<9x8x256xf32, #tpu.memory_space<vmem>>, vector<1x8x256xf32>
    %190 = vector.shape_cast %189 : vector<1x8x256xf32> to vector<8x256xf32>
    %191 = arith.mulf %188, %190 : vector<8x256xf32>
    %c15_i32_149 = arith.constant 15 : i32
    %192 = tpu.dynamic_rotate %180 by %c15_i32_149 dim 1 : vector<8x256xf32>, i32 -> vector<8x256xf32>
    %c2_150 = arith.constant 2 : index
    %c0_151 = arith.constant 0 : index
    %c0_152 = arith.constant 0 : index
    %193 = vector.load %arg2[%c2_150, %c0_151, %c0_152] : memref<9x8x256xf32, #tpu.memory_space<vmem>>, vector<1x8x256xf32>
    %194 = vector.shape_cast %193 : vector<1x8x256xf32> to vector<8x256xf32>
    %195 = arith.mulf %192, %194 : vector<8x256xf32>
    %c1_i32_153 = arith.constant 1 : i32
    %196 = tpu.dynamic_rotate %180 by %c1_i32_153 dim 1 : vector<8x256xf32>, i32 -> vector<8x256xf32>
    %c3_154 = arith.constant 3 : index
    %c0_155 = arith.constant 0 : index
    %c0_156 = arith.constant 0 : index
    %197 = vector.load %arg2[%c3_154, %c0_155, %c0_156] : memref<9x8x256xf32, #tpu.memory_space<vmem>>, vector<1x8x256xf32>
    %198 = vector.shape_cast %197 : vector<1x8x256xf32> to vector<8x256xf32>
    %199 = arith.mulf %196, %198 : vector<8x256xf32>
    %c255_i32_157 = arith.constant 255 : i32
    %200 = tpu.dynamic_rotate %180 by %c255_i32_157 dim 1 : vector<8x256xf32>, i32 -> vector<8x256xf32>
    %c5_158 = arith.constant 5 : index
    %c0_159 = arith.constant 0 : index
    %c0_160 = arith.constant 0 : index
    %201 = vector.load %arg2[%c5_158, %c0_159, %c0_160] : memref<9x8x256xf32, #tpu.memory_space<vmem>>, vector<1x8x256xf32>
    %202 = vector.shape_cast %201 : vector<1x8x256xf32> to vector<8x256xf32>
    %203 = arith.mulf %200, %202 : vector<8x256xf32>
    %c241_i32_161 = arith.constant 241 : i32
    %204 = tpu.dynamic_rotate %180 by %c241_i32_161 dim 1 : vector<8x256xf32>, i32 -> vector<8x256xf32>
    %c6_162 = arith.constant 6 : index
    %c0_163 = arith.constant 0 : index
    %c0_164 = arith.constant 0 : index
    %205 = vector.load %arg2[%c6_162, %c0_163, %c0_164] : memref<9x8x256xf32, #tpu.memory_space<vmem>>, vector<1x8x256xf32>
    %206 = vector.shape_cast %205 : vector<1x8x256xf32> to vector<8x256xf32>
    %207 = arith.mulf %204, %206 : vector<8x256xf32>
    %c240_i32_165 = arith.constant 240 : i32
    %208 = tpu.dynamic_rotate %180 by %c240_i32_165 dim 1 : vector<8x256xf32>, i32 -> vector<8x256xf32>
    %c7_166 = arith.constant 7 : index
    %c0_167 = arith.constant 0 : index
    %c0_168 = arith.constant 0 : index
    %209 = vector.load %arg2[%c7_166, %c0_167, %c0_168] : memref<9x8x256xf32, #tpu.memory_space<vmem>>, vector<1x8x256xf32>
    %210 = vector.shape_cast %209 : vector<1x8x256xf32> to vector<8x256xf32>
    %211 = arith.mulf %208, %210 : vector<8x256xf32>
    %c239_i32_169 = arith.constant 239 : i32
    %212 = tpu.dynamic_rotate %180 by %c239_i32_169 dim 1 : vector<8x256xf32>, i32 -> vector<8x256xf32>
    %c8_170 = arith.constant 8 : index
    %c0_171 = arith.constant 0 : index
    %c0_172 = arith.constant 0 : index
    %213 = vector.load %arg2[%c8_170, %c0_171, %c0_172] : memref<9x8x256xf32, #tpu.memory_space<vmem>>, vector<1x8x256xf32>
    %214 = vector.shape_cast %213 : vector<1x8x256xf32> to vector<8x256xf32>
    %215 = arith.mulf %212, %214 : vector<8x256xf32>
    %c0_173 = arith.constant 0 : index
    %c0_174 = arith.constant 0 : index
    %c0_175 = arith.constant 0 : index
    %216 = vector.load %arg5[%c0_173, %c0_174, %c0_175] : memref<9x8x8xf32, #tpu.memory_space<vmem>>, vector<1x8x8xf32>
    %217 = vector.shape_cast %216 : vector<1x8x8xf32> to vector<8x8xf32>
    %cst_176 = arith.constant dense<0.000000e+00> : vector<8x256xf32>
    %218 = tpu.matmul %217, %8, %cst_176 {dimension_numbers = #tpu.dot_dimension_numbers<[1], [0], [0], [1], [0, 0, 1, 1], [], []>} : vector<8x8xf32>, vector<8x256xf32>, vector<8x256xf32> -> vector<8x256xf32>
    %c1_177 = arith.constant 1 : index
    %c0_178 = arith.constant 0 : index
    %c0_179 = arith.constant 0 : index
    %219 = vector.load %arg5[%c1_177, %c0_178, %c0_179] : memref<9x8x8xf32, #tpu.memory_space<vmem>>, vector<1x8x8xf32>
    %220 = vector.shape_cast %219 : vector<1x8x8xf32> to vector<8x8xf32>
    %cst_180 = arith.constant dense<0.000000e+00> : vector<8x256xf32>
    %221 = tpu.matmul %220, %12, %cst_180 {dimension_numbers = #tpu.dot_dimension_numbers<[1], [0], [0], [1], [0, 0, 1, 1], [], []>} : vector<8x8xf32>, vector<8x256xf32>, vector<8x256xf32> -> vector<8x256xf32>
    %222 = arith.addf %218, %221 : vector<8x256xf32>
    %c2_181 = arith.constant 2 : index
    %c0_182 = arith.constant 0 : index
    %c0_183 = arith.constant 0 : index
    %223 = vector.load %arg5[%c2_181, %c0_182, %c0_183] : memref<9x8x8xf32, #tpu.memory_space<vmem>>, vector<1x8x8xf32>
    %224 = vector.shape_cast %223 : vector<1x8x8xf32> to vector<8x8xf32>
    %cst_184 = arith.constant dense<0.000000e+00> : vector<8x256xf32>
    %225 = tpu.matmul %224, %16, %cst_184 {dimension_numbers = #tpu.dot_dimension_numbers<[1], [0], [0], [1], [0, 0, 1, 1], [], []>} : vector<8x8xf32>, vector<8x256xf32>, vector<8x256xf32> -> vector<8x256xf32>
    %226 = arith.addf %222, %225 : vector<8x256xf32>
    %c3_185 = arith.constant 3 : index
    %c0_186 = arith.constant 0 : index
    %c0_187 = arith.constant 0 : index
    %227 = vector.load %arg5[%c3_185, %c0_186, %c0_187] : memref<9x8x8xf32, #tpu.memory_space<vmem>>, vector<1x8x8xf32>
    %228 = vector.shape_cast %227 : vector<1x8x8xf32> to vector<8x8xf32>
    %cst_188 = arith.constant dense<0.000000e+00> : vector<8x256xf32>
    %229 = tpu.matmul %228, %20, %cst_188 {dimension_numbers = #tpu.dot_dimension_numbers<[1], [0], [0], [1], [0, 0, 1, 1], [], []>} : vector<8x8xf32>, vector<8x256xf32>, vector<8x256xf32> -> vector<8x256xf32>
    %230 = arith.addf %226, %229 : vector<8x256xf32>
    %c4_189 = arith.constant 4 : index
    %c0_190 = arith.constant 0 : index
    %c0_191 = arith.constant 0 : index
    %231 = vector.load %arg5[%c4_189, %c0_190, %c0_191] : memref<9x8x8xf32, #tpu.memory_space<vmem>>, vector<1x8x8xf32>
    %232 = vector.shape_cast %231 : vector<1x8x8xf32> to vector<8x8xf32>
    %cst_192 = arith.constant dense<0.000000e+00> : vector<8x256xf32>
    %233 = tpu.matmul %232, %1, %cst_192 {dimension_numbers = #tpu.dot_dimension_numbers<[1], [0], [0], [1], [0, 0, 1, 1], [], []>} : vector<8x8xf32>, vector<8x256xf32>, vector<8x256xf32> -> vector<8x256xf32>
    %234 = arith.addf %230, %233 : vector<8x256xf32>
    %c5_193 = arith.constant 5 : index
    %c0_194 = arith.constant 0 : index
    %c0_195 = arith.constant 0 : index
    %235 = vector.load %arg5[%c5_193, %c0_194, %c0_195] : memref<9x8x8xf32, #tpu.memory_space<vmem>>, vector<1x8x8xf32>
    %236 = vector.shape_cast %235 : vector<1x8x8xf32> to vector<8x8xf32>
    %cst_196 = arith.constant dense<0.000000e+00> : vector<8x256xf32>
    %237 = tpu.matmul %236, %24, %cst_196 {dimension_numbers = #tpu.dot_dimension_numbers<[1], [0], [0], [1], [0, 0, 1, 1], [], []>} : vector<8x8xf32>, vector<8x256xf32>, vector<8x256xf32> -> vector<8x256xf32>
    %238 = arith.addf %234, %237 : vector<8x256xf32>
    %c6_197 = arith.constant 6 : index
    %c0_198 = arith.constant 0 : index
    %c0_199 = arith.constant 0 : index
    %239 = vector.load %arg5[%c6_197, %c0_198, %c0_199] : memref<9x8x8xf32, #tpu.memory_space<vmem>>, vector<1x8x8xf32>
    %240 = vector.shape_cast %239 : vector<1x8x8xf32> to vector<8x8xf32>
    %cst_200 = arith.constant dense<0.000000e+00> : vector<8x256xf32>
    %241 = tpu.matmul %240, %28, %cst_200 {dimension_numbers = #tpu.dot_dimension_numbers<[1], [0], [0], [1], [0, 0, 1, 1], [], []>} : vector<8x8xf32>, vector<8x256xf32>, vector<8x256xf32> -> vector<8x256xf32>
    %242 = arith.addf %238, %241 : vector<8x256xf32>
    %c7_201 = arith.constant 7 : index
    %c0_202 = arith.constant 0 : index
    %c0_203 = arith.constant 0 : index
    %243 = vector.load %arg5[%c7_201, %c0_202, %c0_203] : memref<9x8x8xf32, #tpu.memory_space<vmem>>, vector<1x8x8xf32>
    %244 = vector.shape_cast %243 : vector<1x8x8xf32> to vector<8x8xf32>
    %cst_204 = arith.constant dense<0.000000e+00> : vector<8x256xf32>
    %245 = tpu.matmul %244, %32, %cst_204 {dimension_numbers = #tpu.dot_dimension_numbers<[1], [0], [0], [1], [0, 0, 1, 1], [], []>} : vector<8x8xf32>, vector<8x256xf32>, vector<8x256xf32> -> vector<8x256xf32>
    %246 = arith.addf %242, %245 : vector<8x256xf32>
    %c8_205 = arith.constant 8 : index
    %c0_206 = arith.constant 0 : index
    %c0_207 = arith.constant 0 : index
    %247 = vector.load %arg5[%c8_205, %c0_206, %c0_207] : memref<9x8x8xf32, #tpu.memory_space<vmem>>, vector<1x8x8xf32>
    %248 = vector.shape_cast %247 : vector<1x8x8xf32> to vector<8x8xf32>
    %cst_208 = arith.constant dense<0.000000e+00> : vector<8x256xf32>
    %249 = tpu.matmul %248, %36, %cst_208 {dimension_numbers = #tpu.dot_dimension_numbers<[1], [0], [0], [1], [0, 0, 1, 1], [], []>} : vector<8x8xf32>, vector<8x256xf32>, vector<8x256xf32> -> vector<8x256xf32>
    %250 = arith.addf %246, %249 : vector<8x256xf32>
    %c0_209 = arith.constant 0 : index
    %c0_210 = arith.constant 0 : index
    %c0_211 = arith.constant 0 : index
    %251 = vector.load %arg6[%c0_209, %c0_210, %c0_211] : memref<9x8x8xf32, #tpu.memory_space<vmem>>, vector<1x8x8xf32>
    %252 = vector.shape_cast %251 : vector<1x8x8xf32> to vector<8x8xf32>
    %cst_212 = arith.constant dense<0.000000e+00> : vector<8x256xf32>
    %253 = tpu.matmul %252, %187, %cst_212 {dimension_numbers = #tpu.dot_dimension_numbers<[1], [0], [0], [1], [0, 0, 1, 1], [], []>} : vector<8x8xf32>, vector<8x256xf32>, vector<8x256xf32> -> vector<8x256xf32>
    %254 = arith.addf %250, %253 : vector<8x256xf32>
    %c1_213 = arith.constant 1 : index
    %c0_214 = arith.constant 0 : index
    %c0_215 = arith.constant 0 : index
    %255 = vector.load %arg6[%c1_213, %c0_214, %c0_215] : memref<9x8x8xf32, #tpu.memory_space<vmem>>, vector<1x8x8xf32>
    %256 = vector.shape_cast %255 : vector<1x8x8xf32> to vector<8x8xf32>
    %cst_216 = arith.constant dense<0.000000e+00> : vector<8x256xf32>
    %257 = tpu.matmul %256, %191, %cst_216 {dimension_numbers = #tpu.dot_dimension_numbers<[1], [0], [0], [1], [0, 0, 1, 1], [], []>} : vector<8x8xf32>, vector<8x256xf32>, vector<8x256xf32> -> vector<8x256xf32>
    %258 = arith.addf %254, %257 : vector<8x256xf32>
    %c2_217 = arith.constant 2 : index
    %c0_218 = arith.constant 0 : index
    %c0_219 = arith.constant 0 : index
    %259 = vector.load %arg6[%c2_217, %c0_218, %c0_219] : memref<9x8x8xf32, #tpu.memory_space<vmem>>, vector<1x8x8xf32>
    %260 = vector.shape_cast %259 : vector<1x8x8xf32> to vector<8x8xf32>
    %cst_220 = arith.constant dense<0.000000e+00> : vector<8x256xf32>
    %261 = tpu.matmul %260, %195, %cst_220 {dimension_numbers = #tpu.dot_dimension_numbers<[1], [0], [0], [1], [0, 0, 1, 1], [], []>} : vector<8x8xf32>, vector<8x256xf32>, vector<8x256xf32> -> vector<8x256xf32>
    %262 = arith.addf %258, %261 : vector<8x256xf32>
    %c3_221 = arith.constant 3 : index
    %c0_222 = arith.constant 0 : index
    %c0_223 = arith.constant 0 : index
    %263 = vector.load %arg6[%c3_221, %c0_222, %c0_223] : memref<9x8x8xf32, #tpu.memory_space<vmem>>, vector<1x8x8xf32>
    %264 = vector.shape_cast %263 : vector<1x8x8xf32> to vector<8x8xf32>
    %cst_224 = arith.constant dense<0.000000e+00> : vector<8x256xf32>
    %265 = tpu.matmul %264, %199, %cst_224 {dimension_numbers = #tpu.dot_dimension_numbers<[1], [0], [0], [1], [0, 0, 1, 1], [], []>} : vector<8x8xf32>, vector<8x256xf32>, vector<8x256xf32> -> vector<8x256xf32>
    %266 = arith.addf %262, %265 : vector<8x256xf32>
    %c4_225 = arith.constant 4 : index
    %c0_226 = arith.constant 0 : index
    %c0_227 = arith.constant 0 : index
    %267 = vector.load %arg6[%c4_225, %c0_226, %c0_227] : memref<9x8x8xf32, #tpu.memory_space<vmem>>, vector<1x8x8xf32>
    %268 = vector.shape_cast %267 : vector<1x8x8xf32> to vector<8x8xf32>
    %cst_228 = arith.constant dense<0.000000e+00> : vector<8x256xf32>
    %269 = tpu.matmul %268, %180, %cst_228 {dimension_numbers = #tpu.dot_dimension_numbers<[1], [0], [0], [1], [0, 0, 1, 1], [], []>} : vector<8x8xf32>, vector<8x256xf32>, vector<8x256xf32> -> vector<8x256xf32>
    %270 = arith.addf %266, %269 : vector<8x256xf32>
    %c5_229 = arith.constant 5 : index
    %c0_230 = arith.constant 0 : index
    %c0_231 = arith.constant 0 : index
    %271 = vector.load %arg6[%c5_229, %c0_230, %c0_231] : memref<9x8x8xf32, #tpu.memory_space<vmem>>, vector<1x8x8xf32>
    %272 = vector.shape_cast %271 : vector<1x8x8xf32> to vector<8x8xf32>
    %cst_232 = arith.constant dense<0.000000e+00> : vector<8x256xf32>
    %273 = tpu.matmul %272, %203, %cst_232 {dimension_numbers = #tpu.dot_dimension_numbers<[1], [0], [0], [1], [0, 0, 1, 1], [], []>} : vector<8x8xf32>, vector<8x256xf32>, vector<8x256xf32> -> vector<8x256xf32>
    %274 = arith.addf %270, %273 : vector<8x256xf32>
    %c6_233 = arith.constant 6 : index
    %c0_234 = arith.constant 0 : index
    %c0_235 = arith.constant 0 : index
    %275 = vector.load %arg6[%c6_233, %c0_234, %c0_235] : memref<9x8x8xf32, #tpu.memory_space<vmem>>, vector<1x8x8xf32>
    %276 = vector.shape_cast %275 : vector<1x8x8xf32> to vector<8x8xf32>
    %cst_236 = arith.constant dense<0.000000e+00> : vector<8x256xf32>
    %277 = tpu.matmul %276, %207, %cst_236 {dimension_numbers = #tpu.dot_dimension_numbers<[1], [0], [0], [1], [0, 0, 1, 1], [], []>} : vector<8x8xf32>, vector<8x256xf32>, vector<8x256xf32> -> vector<8x256xf32>
    %278 = arith.addf %274, %277 : vector<8x256xf32>
    %c7_237 = arith.constant 7 : index
    %c0_238 = arith.constant 0 : index
    %c0_239 = arith.constant 0 : index
    %279 = vector.load %arg6[%c7_237, %c0_238, %c0_239] : memref<9x8x8xf32, #tpu.memory_space<vmem>>, vector<1x8x8xf32>
    %280 = vector.shape_cast %279 : vector<1x8x8xf32> to vector<8x8xf32>
    %cst_240 = arith.constant dense<0.000000e+00> : vector<8x256xf32>
    %281 = tpu.matmul %280, %211, %cst_240 {dimension_numbers = #tpu.dot_dimension_numbers<[1], [0], [0], [1], [0, 0, 1, 1], [], []>} : vector<8x8xf32>, vector<8x256xf32>, vector<8x256xf32> -> vector<8x256xf32>
    %282 = arith.addf %278, %281 : vector<8x256xf32>
    %c8_241 = arith.constant 8 : index
    %c0_242 = arith.constant 0 : index
    %c0_243 = arith.constant 0 : index
    %283 = vector.load %arg6[%c8_241, %c0_242, %c0_243] : memref<9x8x8xf32, #tpu.memory_space<vmem>>, vector<1x8x8xf32>
    %284 = vector.shape_cast %283 : vector<1x8x8xf32> to vector<8x8xf32>
    %cst_244 = arith.constant dense<0.000000e+00> : vector<8x256xf32>
    %285 = tpu.matmul %284, %215, %cst_244 {dimension_numbers = #tpu.dot_dimension_numbers<[1], [0], [0], [1], [0, 0, 1, 1], [], []>} : vector<8x8xf32>, vector<8x256xf32>, vector<8x256xf32> -> vector<8x256xf32>
    %286 = arith.addf %282, %285 : vector<8x256xf32>
    %cst_245 = arith.constant dense<0.000000e+00> : vector<8xf32>
    %287 = vector.multi_reduction <add>, %286, %cst_245 [1] : vector<8x256xf32> to vector<8xf32>
    %288 = vector.shape_cast %287 : vector<8xf32> to vector<8x1xf32>
    %cst_246 = arith.constant 2.560000e+02 : f32
    %289 = vector.broadcast %cst_246 : f32 to vector<8x1xf32>
    %290 = arith.divf %288, %289 : vector<8x1xf32>
    %291 = vector.broadcast %290 : vector<8x1xf32> to vector<8x256xf32>
    %292 = arith.subf %286, %291 : vector<8x256xf32>
    %293 = arith.mulf %292, %292 : vector<8x256xf32>
    %cst_247 = arith.constant dense<0.000000e+00> : vector<8xf32>
    %294 = vector.multi_reduction <add>, %293, %cst_247 [1] : vector<8x256xf32> to vector<8xf32>
    %295 = vector.shape_cast %294 : vector<8xf32> to vector<8x1xf32>
    %cst_248 = arith.constant 2.560000e+02 : f32
    %296 = vector.broadcast %cst_248 : f32 to vector<8x1xf32>
    %297 = arith.divf %295, %296 : vector<8x1xf32>
    %cst_249 = arith.constant 9.99999974E-6 : f32
    %298 = vector.broadcast %cst_249 : f32 to vector<8x1xf32>
    %299 = arith.addf %297, %298 : vector<8x1xf32>
    %300 = math.rsqrt %299 : vector<8x1xf32>
    %301 = vector.broadcast %300 : vector<8x1xf32> to vector<8x256xf32>
    %302 = arith.mulf %292, %301 : vector<8x256xf32>
    %cst_250 = arith.constant 0.000000e+00 : f32
    %303 = vector.broadcast %cst_250 : f32 to vector<8x256xf32>
    %304 = arith.cmpf oge, %302, %303 : vector<8x256xf32>
    %cst_251 = arith.constant 0.00999999977 : f32
    %305 = vector.broadcast %cst_251 : f32 to vector<8x256xf32>
    %306 = arith.mulf %305, %302 : vector<8x256xf32>
    %307 = arith.select %304, %302, %306 : vector<8x256xi1>, vector<8x256xf32>
    %c17_i32_252 = arith.constant 17 : i32
    %308 = tpu.dynamic_rotate %307 by %c17_i32_252 dim 1 : vector<8x256xf32>, i32 -> vector<8x256xf32>
    %c0_253 = arith.constant 0 : index
    %c0_254 = arith.constant 0 : index
    %c0_255 = arith.constant 0 : index
    %309 = vector.load %arg2[%c0_253, %c0_254, %c0_255] : memref<9x8x256xf32, #tpu.memory_space<vmem>>, vector<1x8x256xf32>
    %310 = vector.shape_cast %309 : vector<1x8x256xf32> to vector<8x256xf32>
    %311 = arith.mulf %308, %310 : vector<8x256xf32>
    %c16_i32_256 = arith.constant 16 : i32
    %312 = tpu.dynamic_rotate %307 by %c16_i32_256 dim 1 : vector<8x256xf32>, i32 -> vector<8x256xf32>
    %c1_257 = arith.constant 1 : index
    %c0_258 = arith.constant 0 : index
    %c0_259 = arith.constant 0 : index
    %313 = vector.load %arg2[%c1_257, %c0_258, %c0_259] : memref<9x8x256xf32, #tpu.memory_space<vmem>>, vector<1x8x256xf32>
    %314 = vector.shape_cast %313 : vector<1x8x256xf32> to vector<8x256xf32>
    %315 = arith.mulf %312, %314 : vector<8x256xf32>
    %c15_i32_260 = arith.constant 15 : i32
    %316 = tpu.dynamic_rotate %307 by %c15_i32_260 dim 1 : vector<8x256xf32>, i32 -> vector<8x256xf32>
    %c2_261 = arith.constant 2 : index
    %c0_262 = arith.constant 0 : index
    %c0_263 = arith.constant 0 : index
    %317 = vector.load %arg2[%c2_261, %c0_262, %c0_263] : memref<9x8x256xf32, #tpu.memory_space<vmem>>, vector<1x8x256xf32>
    %318 = vector.shape_cast %317 : vector<1x8x256xf32> to vector<8x256xf32>
    %319 = arith.mulf %316, %318 : vector<8x256xf32>
    %c1_i32_264 = arith.constant 1 : i32
    %320 = tpu.dynamic_rotate %307 by %c1_i32_264 dim 1 : vector<8x256xf32>, i32 -> vector<8x256xf32>
    %c3_265 = arith.constant 3 : index
    %c0_266 = arith.constant 0 : index
    %c0_267 = arith.constant 0 : index
    %321 = vector.load %arg2[%c3_265, %c0_266, %c0_267] : memref<9x8x256xf32, #tpu.memory_space<vmem>>, vector<1x8x256xf32>
    %322 = vector.shape_cast %321 : vector<1x8x256xf32> to vector<8x256xf32>
    %323 = arith.mulf %320, %322 : vector<8x256xf32>
    %c255_i32_268 = arith.constant 255 : i32
    %324 = tpu.dynamic_rotate %307 by %c255_i32_268 dim 1 : vector<8x256xf32>, i32 -> vector<8x256xf32>
    %c5_269 = arith.constant 5 : index
    %c0_270 = arith.constant 0 : index
    %c0_271 = arith.constant 0 : index
    %325 = vector.load %arg2[%c5_269, %c0_270, %c0_271] : memref<9x8x256xf32, #tpu.memory_space<vmem>>, vector<1x8x256xf32>
    %326 = vector.shape_cast %325 : vector<1x8x256xf32> to vector<8x256xf32>
    %327 = arith.mulf %324, %326 : vector<8x256xf32>
    %c241_i32_272 = arith.constant 241 : i32
    %328 = tpu.dynamic_rotate %307 by %c241_i32_272 dim 1 : vector<8x256xf32>, i32 -> vector<8x256xf32>
    %c6_273 = arith.constant 6 : index
    %c0_274 = arith.constant 0 : index
    %c0_275 = arith.constant 0 : index
    %329 = vector.load %arg2[%c6_273, %c0_274, %c0_275] : memref<9x8x256xf32, #tpu.memory_space<vmem>>, vector<1x8x256xf32>
    %330 = vector.shape_cast %329 : vector<1x8x256xf32> to vector<8x256xf32>
    %331 = arith.mulf %328, %330 : vector<8x256xf32>
    %c240_i32_276 = arith.constant 240 : i32
    %332 = tpu.dynamic_rotate %307 by %c240_i32_276 dim 1 : vector<8x256xf32>, i32 -> vector<8x256xf32>
    %c7_277 = arith.constant 7 : index
    %c0_278 = arith.constant 0 : index
    %c0_279 = arith.constant 0 : index
    %333 = vector.load %arg2[%c7_277, %c0_278, %c0_279] : memref<9x8x256xf32, #tpu.memory_space<vmem>>, vector<1x8x256xf32>
    %334 = vector.shape_cast %333 : vector<1x8x256xf32> to vector<8x256xf32>
    %335 = arith.mulf %332, %334 : vector<8x256xf32>
    %c239_i32_280 = arith.constant 239 : i32
    %336 = tpu.dynamic_rotate %307 by %c239_i32_280 dim 1 : vector<8x256xf32>, i32 -> vector<8x256xf32>
    %c8_281 = arith.constant 8 : index
    %c0_282 = arith.constant 0 : index
    %c0_283 = arith.constant 0 : index
    %337 = vector.load %arg2[%c8_281, %c0_282, %c0_283] : memref<9x8x256xf32, #tpu.memory_space<vmem>>, vector<1x8x256xf32>
    %338 = vector.shape_cast %337 : vector<1x8x256xf32> to vector<8x256xf32>
    %339 = arith.mulf %336, %338 : vector<8x256xf32>
    %c0_284 = arith.constant 0 : index
    %c0_285 = arith.constant 0 : index
    %c0_286 = arith.constant 0 : index
    %340 = vector.load %arg7[%c0_284, %c0_285, %c0_286] : memref<9x8x8xf32, #tpu.memory_space<vmem>>, vector<1x8x8xf32>
    %341 = vector.shape_cast %340 : vector<1x8x8xf32> to vector<8x8xf32>
    %cst_287 = arith.constant dense<0.000000e+00> : vector<8x256xf32>
    %342 = tpu.matmul %341, %311, %cst_287 {dimension_numbers = #tpu.dot_dimension_numbers<[1], [0], [0], [1], [0, 0, 1, 1], [], []>} : vector<8x8xf32>, vector<8x256xf32>, vector<8x256xf32> -> vector<8x256xf32>
    %c1_288 = arith.constant 1 : index
    %c0_289 = arith.constant 0 : index
    %c0_290 = arith.constant 0 : index
    %343 = vector.load %arg7[%c1_288, %c0_289, %c0_290] : memref<9x8x8xf32, #tpu.memory_space<vmem>>, vector<1x8x8xf32>
    %344 = vector.shape_cast %343 : vector<1x8x8xf32> to vector<8x8xf32>
    %cst_291 = arith.constant dense<0.000000e+00> : vector<8x256xf32>
    %345 = tpu.matmul %344, %315, %cst_291 {dimension_numbers = #tpu.dot_dimension_numbers<[1], [0], [0], [1], [0, 0, 1, 1], [], []>} : vector<8x8xf32>, vector<8x256xf32>, vector<8x256xf32> -> vector<8x256xf32>
    %346 = arith.addf %342, %345 : vector<8x256xf32>
    %c2_292 = arith.constant 2 : index
    %c0_293 = arith.constant 0 : index
    %c0_294 = arith.constant 0 : index
    %347 = vector.load %arg7[%c2_292, %c0_293, %c0_294] : memref<9x8x8xf32, #tpu.memory_space<vmem>>, vector<1x8x8xf32>
    %348 = vector.shape_cast %347 : vector<1x8x8xf32> to vector<8x8xf32>
    %cst_295 = arith.constant dense<0.000000e+00> : vector<8x256xf32>
    %349 = tpu.matmul %348, %319, %cst_295 {dimension_numbers = #tpu.dot_dimension_numbers<[1], [0], [0], [1], [0, 0, 1, 1], [], []>} : vector<8x8xf32>, vector<8x256xf32>, vector<8x256xf32> -> vector<8x256xf32>
    %350 = arith.addf %346, %349 : vector<8x256xf32>
    %c3_296 = arith.constant 3 : index
    %c0_297 = arith.constant 0 : index
    %c0_298 = arith.constant 0 : index
    %351 = vector.load %arg7[%c3_296, %c0_297, %c0_298] : memref<9x8x8xf32, #tpu.memory_space<vmem>>, vector<1x8x8xf32>
    %352 = vector.shape_cast %351 : vector<1x8x8xf32> to vector<8x8xf32>
    %cst_299 = arith.constant dense<0.000000e+00> : vector<8x256xf32>
    %353 = tpu.matmul %352, %323, %cst_299 {dimension_numbers = #tpu.dot_dimension_numbers<[1], [0], [0], [1], [0, 0, 1, 1], [], []>} : vector<8x8xf32>, vector<8x256xf32>, vector<8x256xf32> -> vector<8x256xf32>
    %354 = arith.addf %350, %353 : vector<8x256xf32>
    %c4_300 = arith.constant 4 : index
    %c0_301 = arith.constant 0 : index
    %c0_302 = arith.constant 0 : index
    %355 = vector.load %arg7[%c4_300, %c0_301, %c0_302] : memref<9x8x8xf32, #tpu.memory_space<vmem>>, vector<1x8x8xf32>
    %356 = vector.shape_cast %355 : vector<1x8x8xf32> to vector<8x8xf32>
    %cst_303 = arith.constant dense<0.000000e+00> : vector<8x256xf32>
    %357 = tpu.matmul %356, %307, %cst_303 {dimension_numbers = #tpu.dot_dimension_numbers<[1], [0], [0], [1], [0, 0, 1, 1], [], []>} : vector<8x8xf32>, vector<8x256xf32>, vector<8x256xf32> -> vector<8x256xf32>
    %358 = arith.addf %354, %357 : vector<8x256xf32>
    %c5_304 = arith.constant 5 : index
    %c0_305 = arith.constant 0 : index
    %c0_306 = arith.constant 0 : index
    %359 = vector.load %arg7[%c5_304, %c0_305, %c0_306] : memref<9x8x8xf32, #tpu.memory_space<vmem>>, vector<1x8x8xf32>
    %360 = vector.shape_cast %359 : vector<1x8x8xf32> to vector<8x8xf32>
    %cst_307 = arith.constant dense<0.000000e+00> : vector<8x256xf32>
    %361 = tpu.matmul %360, %327, %cst_307 {dimension_numbers = #tpu.dot_dimension_numbers<[1], [0], [0], [1], [0, 0, 1, 1], [], []>} : vector<8x8xf32>, vector<8x256xf32>, vector<8x256xf32> -> vector<8x256xf32>
    %362 = arith.addf %358, %361 : vector<8x256xf32>
    %c6_308 = arith.constant 6 : index
    %c0_309 = arith.constant 0 : index
    %c0_310 = arith.constant 0 : index
    %363 = vector.load %arg7[%c6_308, %c0_309, %c0_310] : memref<9x8x8xf32, #tpu.memory_space<vmem>>, vector<1x8x8xf32>
    %364 = vector.shape_cast %363 : vector<1x8x8xf32> to vector<8x8xf32>
    %cst_311 = arith.constant dense<0.000000e+00> : vector<8x256xf32>
    %365 = tpu.matmul %364, %331, %cst_311 {dimension_numbers = #tpu.dot_dimension_numbers<[1], [0], [0], [1], [0, 0, 1, 1], [], []>} : vector<8x8xf32>, vector<8x256xf32>, vector<8x256xf32> -> vector<8x256xf32>
    %366 = arith.addf %362, %365 : vector<8x256xf32>
    %c7_312 = arith.constant 7 : index
    %c0_313 = arith.constant 0 : index
    %c0_314 = arith.constant 0 : index
    %367 = vector.load %arg7[%c7_312, %c0_313, %c0_314] : memref<9x8x8xf32, #tpu.memory_space<vmem>>, vector<1x8x8xf32>
    %368 = vector.shape_cast %367 : vector<1x8x8xf32> to vector<8x8xf32>
    %cst_315 = arith.constant dense<0.000000e+00> : vector<8x256xf32>
    %369 = tpu.matmul %368, %335, %cst_315 {dimension_numbers = #tpu.dot_dimension_numbers<[1], [0], [0], [1], [0, 0, 1, 1], [], []>} : vector<8x8xf32>, vector<8x256xf32>, vector<8x256xf32> -> vector<8x256xf32>
    %370 = arith.addf %366, %369 : vector<8x256xf32>
    %c8_316 = arith.constant 8 : index
    %c0_317 = arith.constant 0 : index
    %c0_318 = arith.constant 0 : index
    %371 = vector.load %arg7[%c8_316, %c0_317, %c0_318] : memref<9x8x8xf32, #tpu.memory_space<vmem>>, vector<1x8x8xf32>
    %372 = vector.shape_cast %371 : vector<1x8x8xf32> to vector<8x8xf32>
    %cst_319 = arith.constant dense<0.000000e+00> : vector<8x256xf32>
    %373 = tpu.matmul %372, %339, %cst_319 {dimension_numbers = #tpu.dot_dimension_numbers<[1], [0], [0], [1], [0, 0, 1, 1], [], []>} : vector<8x8xf32>, vector<8x256xf32>, vector<8x256xf32> -> vector<8x256xf32>
    %374 = arith.addf %370, %373 : vector<8x256xf32>
    %cst_320 = arith.constant dense<0.000000e+00> : vector<8xf32>
    %375 = vector.multi_reduction <add>, %374, %cst_320 [1] : vector<8x256xf32> to vector<8xf32>
    %376 = vector.shape_cast %375 : vector<8xf32> to vector<8x1xf32>
    %cst_321 = arith.constant 2.560000e+02 : f32
    %377 = vector.broadcast %cst_321 : f32 to vector<8x1xf32>
    %378 = arith.divf %376, %377 : vector<8x1xf32>
    %379 = vector.broadcast %378 : vector<8x1xf32> to vector<8x256xf32>
    %380 = arith.subf %374, %379 : vector<8x256xf32>
    %381 = arith.mulf %380, %380 : vector<8x256xf32>
    %cst_322 = arith.constant dense<0.000000e+00> : vector<8xf32>
    %382 = vector.multi_reduction <add>, %381, %cst_322 [1] : vector<8x256xf32> to vector<8xf32>
    %383 = vector.shape_cast %382 : vector<8xf32> to vector<8x1xf32>
    %cst_323 = arith.constant 2.560000e+02 : f32
    %384 = vector.broadcast %cst_323 : f32 to vector<8x1xf32>
    %385 = arith.divf %383, %384 : vector<8x1xf32>
    %cst_324 = arith.constant 9.99999974E-6 : f32
    %386 = vector.broadcast %cst_324 : f32 to vector<8x1xf32>
    %387 = arith.addf %385, %386 : vector<8x1xf32>
    %388 = math.rsqrt %387 : vector<8x1xf32>
    %389 = vector.broadcast %388 : vector<8x1xf32> to vector<8x256xf32>
    %390 = arith.mulf %380, %389 : vector<8x256xf32>
    %cst_325 = arith.constant 0.000000e+00 : f32
    %391 = vector.broadcast %cst_325 : f32 to vector<8x256xf32>
    %392 = arith.cmpf oge, %390, %391 : vector<8x256xf32>
    %cst_326 = arith.constant 0.00999999977 : f32
    %393 = vector.broadcast %cst_326 : f32 to vector<8x256xf32>
    %394 = arith.mulf %393, %390 : vector<8x256xf32>
    %395 = arith.select %392, %390, %394 : vector<8x256xi1>, vector<8x256xf32>
    %c0_327 = arith.constant 0 : index
    %c16 = arith.constant 16 : index
    %c0_328 = arith.constant 0 : index
    %396 = vector.load %arg12[%c0_327, %c16, %c0_328] : memref<2x32x256xf32, #tpu.memory_space<vmem>>, vector<1x8x256xf32>
    %397 = vector.shape_cast %396 : vector<1x8x256xf32> to vector<8x256xf32>
    %398 = vector.shape_cast %395 : vector<8x256xf32> to vector<1x8x256xf32>
    tpu.vector_store %arg12[%c0_327, %c16, %c0_328], %398 {strides = array<i32>} : memref<2x32x256xf32, #tpu.memory_space<vmem>>, vector<1x8x256xf32>,
    %c17_i32_329 = arith.constant 17 : i32
    %399 = tpu.dynamic_rotate %395 by %c17_i32_329 dim 1 : vector<8x256xf32>, i32 -> vector<8x256xf32>
    %c0_330 = arith.constant 0 : index
    %c0_331 = arith.constant 0 : index
    %c0_332 = arith.constant 0 : index
    %400 = vector.load %arg2[%c0_330, %c0_331, %c0_332] : memref<9x8x256xf32, #tpu.memory_space<vmem>>, vector<1x8x256xf32>
    %401 = vector.shape_cast %400 : vector<1x8x256xf32> to vector<8x256xf32>
    %402 = arith.mulf %399, %401 : vector<8x256xf32>
    %c16_i32_333 = arith.constant 16 : i32
    %403 = tpu.dynamic_rotate %395 by %c16_i32_333 dim 1 : vector<8x256xf32>, i32 -> vector<8x256xf32>
    %c1_334 = arith.constant 1 : index
    %c0_335 = arith.constant 0 : index
    %c0_336 = arith.constant 0 : index
    %404 = vector.load %arg2[%c1_334, %c0_335, %c0_336] : memref<9x8x256xf32, #tpu.memory_space<vmem>>, vector<1x8x256xf32>
    %405 = vector.shape_cast %404 : vector<1x8x256xf32> to vector<8x256xf32>
    %406 = arith.mulf %403, %405 : vector<8x256xf32>
    %c15_i32_337 = arith.constant 15 : i32
    %407 = tpu.dynamic_rotate %395 by %c15_i32_337 dim 1 : vector<8x256xf32>, i32 -> vector<8x256xf32>
    %c2_338 = arith.constant 2 : index
    %c0_339 = arith.constant 0 : index
    %c0_340 = arith.constant 0 : index
    %408 = vector.load %arg2[%c2_338, %c0_339, %c0_340] : memref<9x8x256xf32, #tpu.memory_space<vmem>>, vector<1x8x256xf32>
    %409 = vector.shape_cast %408 : vector<1x8x256xf32> to vector<8x256xf32>
    %410 = arith.mulf %407, %409 : vector<8x256xf32>
    %c1_i32_341 = arith.constant 1 : i32
    %411 = tpu.dynamic_rotate %395 by %c1_i32_341 dim 1 : vector<8x256xf32>, i32 -> vector<8x256xf32>
    %c3_342 = arith.constant 3 : index
    %c0_343 = arith.constant 0 : index
    %c0_344 = arith.constant 0 : index
    %412 = vector.load %arg2[%c3_342, %c0_343, %c0_344] : memref<9x8x256xf32, #tpu.memory_space<vmem>>, vector<1x8x256xf32>
    %413 = vector.shape_cast %412 : vector<1x8x256xf32> to vector<8x256xf32>
    %414 = arith.mulf %411, %413 : vector<8x256xf32>
    %c255_i32_345 = arith.constant 255 : i32
    %415 = tpu.dynamic_rotate %395 by %c255_i32_345 dim 1 : vector<8x256xf32>, i32 -> vector<8x256xf32>
    %c5_346 = arith.constant 5 : index
    %c0_347 = arith.constant 0 : index
    %c0_348 = arith.constant 0 : index
    %416 = vector.load %arg2[%c5_346, %c0_347, %c0_348] : memref<9x8x256xf32, #tpu.memory_space<vmem>>, vector<1x8x256xf32>
    %417 = vector.shape_cast %416 : vector<1x8x256xf32> to vector<8x256xf32>
    %418 = arith.mulf %415, %417 : vector<8x256xf32>
    %c241_i32_349 = arith.constant 241 : i32
    %419 = tpu.dynamic_rotate %395 by %c241_i32_349 dim 1 : vector<8x256xf32>, i32 -> vector<8x256xf32>
    %c6_350 = arith.constant 6 : index
    %c0_351 = arith.constant 0 : index
    %c0_352 = arith.constant 0 : index
    %420 = vector.load %arg2[%c6_350, %c0_351, %c0_352] : memref<9x8x256xf32, #tpu.memory_space<vmem>>, vector<1x8x256xf32>
    %421 = vector.shape_cast %420 : vector<1x8x256xf32> to vector<8x256xf32>
    %422 = arith.mulf %419, %421 : vector<8x256xf32>
    %c240_i32_353 = arith.constant 240 : i32
    %423 = tpu.dynamic_rotate %395 by %c240_i32_353 dim 1 : vector<8x256xf32>, i32 -> vector<8x256xf32>
    %c7_354 = arith.constant 7 : index
    %c0_355 = arith.constant 0 : index
    %c0_356 = arith.constant 0 : index
    %424 = vector.load %arg2[%c7_354, %c0_355, %c0_356] : memref<9x8x256xf32, #tpu.memory_space<vmem>>, vector<1x8x256xf32>
    %425 = vector.shape_cast %424 : vector<1x8x256xf32> to vector<8x256xf32>
    %426 = arith.mulf %423, %425 : vector<8x256xf32>
    %c239_i32_357 = arith.constant 239 : i32
    %427 = tpu.dynamic_rotate %395 by %c239_i32_357 dim 1 : vector<8x256xf32>, i32 -> vector<8x256xf32>
    %c8_358 = arith.constant 8 : index
    %c0_359 = arith.constant 0 : index
    %c0_360 = arith.constant 0 : index
    %428 = vector.load %arg2[%c8_358, %c0_359, %c0_360] : memref<9x8x256xf32, #tpu.memory_space<vmem>>, vector<1x8x256xf32>
    %429 = vector.shape_cast %428 : vector<1x8x256xf32> to vector<8x256xf32>
    %430 = arith.mulf %427, %429 : vector<8x256xf32>
    %c0_361 = arith.constant 0 : index
    %c0_362 = arith.constant 0 : index
    %c0_363 = arith.constant 0 : index
    %431 = vector.load %arg8[%c0_361, %c0_362, %c0_363] : memref<9x8x8xf32, #tpu.memory_space<vmem>>, vector<1x8x8xf32>
    %432 = vector.shape_cast %431 : vector<1x8x8xf32> to vector<8x8xf32>
    %cst_364 = arith.constant dense<0.000000e+00> : vector<8x256xf32>
    %433 = tpu.matmul %432, %8, %cst_364 {dimension_numbers = #tpu.dot_dimension_numbers<[1], [0], [0], [1], [0, 0, 1, 1], [], []>} : vector<8x8xf32>, vector<8x256xf32>, vector<8x256xf32> -> vector<8x256xf32>
    %c1_365 = arith.constant 1 : index
    %c0_366 = arith.constant 0 : index
    %c0_367 = arith.constant 0 : index
    %434 = vector.load %arg8[%c1_365, %c0_366, %c0_367] : memref<9x8x8xf32, #tpu.memory_space<vmem>>, vector<1x8x8xf32>
    %435 = vector.shape_cast %434 : vector<1x8x8xf32> to vector<8x8xf32>
    %cst_368 = arith.constant dense<0.000000e+00> : vector<8x256xf32>
    %436 = tpu.matmul %435, %12, %cst_368 {dimension_numbers = #tpu.dot_dimension_numbers<[1], [0], [0], [1], [0, 0, 1, 1], [], []>} : vector<8x8xf32>, vector<8x256xf32>, vector<8x256xf32> -> vector<8x256xf32>
    %437 = arith.addf %433, %436 : vector<8x256xf32>
    %c2_369 = arith.constant 2 : index
    %c0_370 = arith.constant 0 : index
    %c0_371 = arith.constant 0 : index
    %438 = vector.load %arg8[%c2_369, %c0_370, %c0_371] : memref<9x8x8xf32, #tpu.memory_space<vmem>>, vector<1x8x8xf32>
    %439 = vector.shape_cast %438 : vector<1x8x8xf32> to vector<8x8xf32>
    %cst_372 = arith.constant dense<0.000000e+00> : vector<8x256xf32>
    %440 = tpu.matmul %439, %16, %cst_372 {dimension_numbers = #tpu.dot_dimension_numbers<[1], [0], [0], [1], [0, 0, 1, 1], [], []>} : vector<8x8xf32>, vector<8x256xf32>, vector<8x256xf32> -> vector<8x256xf32>
    %441 = arith.addf %437, %440 : vector<8x256xf32>
    %c3_373 = arith.constant 3 : index
    %c0_374 = arith.constant 0 : index
    %c0_375 = arith.constant 0 : index
    %442 = vector.load %arg8[%c3_373, %c0_374, %c0_375] : memref<9x8x8xf32, #tpu.memory_space<vmem>>, vector<1x8x8xf32>
    %443 = vector.shape_cast %442 : vector<1x8x8xf32> to vector<8x8xf32>
    %cst_376 = arith.constant dense<0.000000e+00> : vector<8x256xf32>
    %444 = tpu.matmul %443, %20, %cst_376 {dimension_numbers = #tpu.dot_dimension_numbers<[1], [0], [0], [1], [0, 0, 1, 1], [], []>} : vector<8x8xf32>, vector<8x256xf32>, vector<8x256xf32> -> vector<8x256xf32>
    %445 = arith.addf %441, %444 : vector<8x256xf32>
    %c4_377 = arith.constant 4 : index
    %c0_378 = arith.constant 0 : index
    %c0_379 = arith.constant 0 : index
    %446 = vector.load %arg8[%c4_377, %c0_378, %c0_379] : memref<9x8x8xf32, #tpu.memory_space<vmem>>, vector<1x8x8xf32>
    %447 = vector.shape_cast %446 : vector<1x8x8xf32> to vector<8x8xf32>
    %cst_380 = arith.constant dense<0.000000e+00> : vector<8x256xf32>
    %448 = tpu.matmul %447, %1, %cst_380 {dimension_numbers = #tpu.dot_dimension_numbers<[1], [0], [0], [1], [0, 0, 1, 1], [], []>} : vector<8x8xf32>, vector<8x256xf32>, vector<8x256xf32> -> vector<8x256xf32>
    %449 = arith.addf %445, %448 : vector<8x256xf32>
    %c5_381 = arith.constant 5 : index
    %c0_382 = arith.constant 0 : index
    %c0_383 = arith.constant 0 : index
    %450 = vector.load %arg8[%c5_381, %c0_382, %c0_383] : memref<9x8x8xf32, #tpu.memory_space<vmem>>, vector<1x8x8xf32>
    %451 = vector.shape_cast %450 : vector<1x8x8xf32> to vector<8x8xf32>
    %cst_384 = arith.constant dense<0.000000e+00> : vector<8x256xf32>
    %452 = tpu.matmul %451, %24, %cst_384 {dimension_numbers = #tpu.dot_dimension_numbers<[1], [0], [0], [1], [0, 0, 1, 1], [], []>} : vector<8x8xf32>, vector<8x256xf32>, vector<8x256xf32> -> vector<8x256xf32>
    %453 = arith.addf %449, %452 : vector<8x256xf32>
    %c6_385 = arith.constant 6 : index
    %c0_386 = arith.constant 0 : index
    %c0_387 = arith.constant 0 : index
    %454 = vector.load %arg8[%c6_385, %c0_386, %c0_387] : memref<9x8x8xf32, #tpu.memory_space<vmem>>, vector<1x8x8xf32>
    %455 = vector.shape_cast %454 : vector<1x8x8xf32> to vector<8x8xf32>
    %cst_388 = arith.constant dense<0.000000e+00> : vector<8x256xf32>
    %456 = tpu.matmul %455, %28, %cst_388 {dimension_numbers = #tpu.dot_dimension_numbers<[1], [0], [0], [1], [0, 0, 1, 1], [], []>} : vector<8x8xf32>, vector<8x256xf32>, vector<8x256xf32> -> vector<8x256xf32>
    %457 = arith.addf %453, %456 : vector<8x256xf32>
    %c7_389 = arith.constant 7 : index
    %c0_390 = arith.constant 0 : index
    %c0_391 = arith.constant 0 : index
    %458 = vector.load %arg8[%c7_389, %c0_390, %c0_391] : memref<9x8x8xf32, #tpu.memory_space<vmem>>, vector<1x8x8xf32>
    %459 = vector.shape_cast %458 : vector<1x8x8xf32> to vector<8x8xf32>
    %cst_392 = arith.constant dense<0.000000e+00> : vector<8x256xf32>
    %460 = tpu.matmul %459, %32, %cst_392 {dimension_numbers = #tpu.dot_dimension_numbers<[1], [0], [0], [1], [0, 0, 1, 1], [], []>} : vector<8x8xf32>, vector<8x256xf32>, vector<8x256xf32> -> vector<8x256xf32>
    %461 = arith.addf %457, %460 : vector<8x256xf32>
    %c8_393 = arith.constant 8 : index
    %c0_394 = arith.constant 0 : index
    %c0_395 = arith.constant 0 : index
    %462 = vector.load %arg8[%c8_393, %c0_394, %c0_395] : memref<9x8x8xf32, #tpu.memory_space<vmem>>, vector<1x8x8xf32>
    %463 = vector.shape_cast %462 : vector<1x8x8xf32> to vector<8x8xf32>
    %cst_396 = arith.constant dense<0.000000e+00> : vector<8x256xf32>
    %464 = tpu.matmul %463, %36, %cst_396 {dimension_numbers = #tpu.dot_dimension_numbers<[1], [0], [0], [1], [0, 0, 1, 1], [], []>} : vector<8x8xf32>, vector<8x256xf32>, vector<8x256xf32> -> vector<8x256xf32>
    %465 = arith.addf %461, %464 : vector<8x256xf32>
    %c0_397 = arith.constant 0 : index
    %c0_398 = arith.constant 0 : index
    %c0_399 = arith.constant 0 : index
    %466 = vector.load %arg9[%c0_397, %c0_398, %c0_399] : memref<9x8x8xf32, #tpu.memory_space<vmem>>, vector<1x8x8xf32>
    %467 = vector.shape_cast %466 : vector<1x8x8xf32> to vector<8x8xf32>
    %cst_400 = arith.constant dense<0.000000e+00> : vector<8x256xf32>
    %468 = tpu.matmul %467, %187, %cst_400 {dimension_numbers = #tpu.dot_dimension_numbers<[1], [0], [0], [1], [0, 0, 1, 1], [], []>} : vector<8x8xf32>, vector<8x256xf32>, vector<8x256xf32> -> vector<8x256xf32>
    %469 = arith.addf %465, %468 : vector<8x256xf32>
    %c1_401 = arith.constant 1 : index
    %c0_402 = arith.constant 0 : index
    %c0_403 = arith.constant 0 : index
    %470 = vector.load %arg9[%c1_401, %c0_402, %c0_403] : memref<9x8x8xf32, #tpu.memory_space<vmem>>, vector<1x8x8xf32>
    %471 = vector.shape_cast %470 : vector<1x8x8xf32> to vector<8x8xf32>
    %cst_404 = arith.constant dense<0.000000e+00> : vector<8x256xf32>
    %472 = tpu.matmul %471, %191, %cst_404 {dimension_numbers = #tpu.dot_dimension_numbers<[1], [0], [0], [1], [0, 0, 1, 1], [], []>} : vector<8x8xf32>, vector<8x256xf32>, vector<8x256xf32> -> vector<8x256xf32>
    %473 = arith.addf %469, %472 : vector<8x256xf32>
    %c2_405 = arith.constant 2 : index
    %c0_406 = arith.constant 0 : index
    %c0_407 = arith.constant 0 : index
    %474 = vector.load %arg9[%c2_405, %c0_406, %c0_407] : memref<9x8x8xf32, #tpu.memory_space<vmem>>, vector<1x8x8xf32>
    %475 = vector.shape_cast %474 : vector<1x8x8xf32> to vector<8x8xf32>
    %cst_408 = arith.constant dense<0.000000e+00> : vector<8x256xf32>
    %476 = tpu.matmul %475, %195, %cst_408 {dimension_numbers = #tpu.dot_dimension_numbers<[1], [0], [0], [1], [0, 0, 1, 1], [], []>} : vector<8x8xf32>, vector<8x256xf32>, vector<8x256xf32> -> vector<8x256xf32>
    %477 = arith.addf %473, %476 : vector<8x256xf32>
    %c3_409 = arith.constant 3 : index
    %c0_410 = arith.constant 0 : index
    %c0_411 = arith.constant 0 : index
    %478 = vector.load %arg9[%c3_409, %c0_410, %c0_411] : memref<9x8x8xf32, #tpu.memory_space<vmem>>, vector<1x8x8xf32>
    %479 = vector.shape_cast %478 : vector<1x8x8xf32> to vector<8x8xf32>
    %cst_412 = arith.constant dense<0.000000e+00> : vector<8x256xf32>
    %480 = tpu.matmul %479, %199, %cst_412 {dimension_numbers = #tpu.dot_dimension_numbers<[1], [0], [0], [1], [0, 0, 1, 1], [], []>} : vector<8x8xf32>, vector<8x256xf32>, vector<8x256xf32> -> vector<8x256xf32>
    %481 = arith.addf %477, %480 : vector<8x256xf32>
    %c4_413 = arith.constant 4 : index
    %c0_414 = arith.constant 0 : index
    %c0_415 = arith.constant 0 : index
    %482 = vector.load %arg9[%c4_413, %c0_414, %c0_415] : memref<9x8x8xf32, #tpu.memory_space<vmem>>, vector<1x8x8xf32>
    %483 = vector.shape_cast %482 : vector<1x8x8xf32> to vector<8x8xf32>
    %cst_416 = arith.constant dense<0.000000e+00> : vector<8x256xf32>
    %484 = tpu.matmul %483, %180, %cst_416 {dimension_numbers = #tpu.dot_dimension_numbers<[1], [0], [0], [1], [0, 0, 1, 1], [], []>} : vector<8x8xf32>, vector<8x256xf32>, vector<8x256xf32> -> vector<8x256xf32>
    %485 = arith.addf %481, %484 : vector<8x256xf32>
    %c5_417 = arith.constant 5 : index
    %c0_418 = arith.constant 0 : index
    %c0_419 = arith.constant 0 : index
    %486 = vector.load %arg9[%c5_417, %c0_418, %c0_419] : memref<9x8x8xf32, #tpu.memory_space<vmem>>, vector<1x8x8xf32>
    %487 = vector.shape_cast %486 : vector<1x8x8xf32> to vector<8x8xf32>
    %cst_420 = arith.constant dense<0.000000e+00> : vector<8x256xf32>
    %488 = tpu.matmul %487, %203, %cst_420 {dimension_numbers = #tpu.dot_dimension_numbers<[1], [0], [0], [1], [0, 0, 1, 1], [], []>} : vector<8x8xf32>, vector<8x256xf32>, vector<8x256xf32> -> vector<8x256xf32>
    %489 = arith.addf %485, %488 : vector<8x256xf32>
    %c6_421 = arith.constant 6 : index
    %c0_422 = arith.constant 0 : index
    %c0_423 = arith.constant 0 : index
    %490 = vector.load %arg9[%c6_421, %c0_422, %c0_423] : memref<9x8x8xf32, #tpu.memory_space<vmem>>, vector<1x8x8xf32>
    %491 = vector.shape_cast %490 : vector<1x8x8xf32> to vector<8x8xf32>
    %cst_424 = arith.constant dense<0.000000e+00> : vector<8x256xf32>
    %492 = tpu.matmul %491, %207, %cst_424 {dimension_numbers = #tpu.dot_dimension_numbers<[1], [0], [0], [1], [0, 0, 1, 1], [], []>} : vector<8x8xf32>, vector<8x256xf32>, vector<8x256xf32> -> vector<8x256xf32>
    %493 = arith.addf %489, %492 : vector<8x256xf32>
    %c7_425 = arith.constant 7 : index
    %c0_426 = arith.constant 0 : index
    %c0_427 = arith.constant 0 : index
    %494 = vector.load %arg9[%c7_425, %c0_426, %c0_427] : memref<9x8x8xf32, #tpu.memory_space<vmem>>, vector<1x8x8xf32>
    %495 = vector.shape_cast %494 : vector<1x8x8xf32> to vector<8x8xf32>
    %cst_428 = arith.constant dense<0.000000e+00> : vector<8x256xf32>
    %496 = tpu.matmul %495, %211, %cst_428 {dimension_numbers = #tpu.dot_dimension_numbers<[1], [0], [0], [1], [0, 0, 1, 1], [], []>} : vector<8x8xf32>, vector<8x256xf32>, vector<8x256xf32> -> vector<8x256xf32>
    %497 = arith.addf %493, %496 : vector<8x256xf32>
    %c8_429 = arith.constant 8 : index
    %c0_430 = arith.constant 0 : index
    %c0_431 = arith.constant 0 : index
    %498 = vector.load %arg9[%c8_429, %c0_430, %c0_431] : memref<9x8x8xf32, #tpu.memory_space<vmem>>, vector<1x8x8xf32>
    %499 = vector.shape_cast %498 : vector<1x8x8xf32> to vector<8x8xf32>
    %cst_432 = arith.constant dense<0.000000e+00> : vector<8x256xf32>
    %500 = tpu.matmul %499, %215, %cst_432 {dimension_numbers = #tpu.dot_dimension_numbers<[1], [0], [0], [1], [0, 0, 1, 1], [], []>} : vector<8x8xf32>, vector<8x256xf32>, vector<8x256xf32> -> vector<8x256xf32>
    %501 = arith.addf %497, %500 : vector<8x256xf32>
    %c0_433 = arith.constant 0 : index
    %c0_434 = arith.constant 0 : index
    %c0_435 = arith.constant 0 : index
    %502 = vector.load %arg10[%c0_433, %c0_434, %c0_435] : memref<9x8x8xf32, #tpu.memory_space<vmem>>, vector<1x8x8xf32>
    %503 = vector.shape_cast %502 : vector<1x8x8xf32> to vector<8x8xf32>
    %cst_436 = arith.constant dense<0.000000e+00> : vector<8x256xf32>
    %504 = tpu.matmul %503, %402, %cst_436 {dimension_numbers = #tpu.dot_dimension_numbers<[1], [0], [0], [1], [0, 0, 1, 1], [], []>} : vector<8x8xf32>, vector<8x256xf32>, vector<8x256xf32> -> vector<8x256xf32>
    %505 = arith.addf %501, %504 : vector<8x256xf32>
    %c1_437 = arith.constant 1 : index
    %c0_438 = arith.constant 0 : index
    %c0_439 = arith.constant 0 : index
    %506 = vector.load %arg10[%c1_437, %c0_438, %c0_439] : memref<9x8x8xf32, #tpu.memory_space<vmem>>, vector<1x8x8xf32>
    %507 = vector.shape_cast %506 : vector<1x8x8xf32> to vector<8x8xf32>
    %cst_440 = arith.constant dense<0.000000e+00> : vector<8x256xf32>
    %508 = tpu.matmul %507, %406, %cst_440 {dimension_numbers = #tpu.dot_dimension_numbers<[1], [0], [0], [1], [0, 0, 1, 1], [], []>} : vector<8x8xf32>, vector<8x256xf32>, vector<8x256xf32> -> vector<8x256xf32>
    %509 = arith.addf %505, %508 : vector<8x256xf32>
    %c2_441 = arith.constant 2 : index
    %c0_442 = arith.constant 0 : index
    %c0_443 = arith.constant 0 : index
    %510 = vector.load %arg10[%c2_441, %c0_442, %c0_443] : memref<9x8x8xf32, #tpu.memory_space<vmem>>, vector<1x8x8xf32>
    %511 = vector.shape_cast %510 : vector<1x8x8xf32> to vector<8x8xf32>
    %cst_444 = arith.constant dense<0.000000e+00> : vector<8x256xf32>
    %512 = tpu.matmul %511, %410, %cst_444 {dimension_numbers = #tpu.dot_dimension_numbers<[1], [0], [0], [1], [0, 0, 1, 1], [], []>} : vector<8x8xf32>, vector<8x256xf32>, vector<8x256xf32> -> vector<8x256xf32>
    %513 = arith.addf %509, %512 : vector<8x256xf32>
    %c3_445 = arith.constant 3 : index
    %c0_446 = arith.constant 0 : index
    %c0_447 = arith.constant 0 : index
    %514 = vector.load %arg10[%c3_445, %c0_446, %c0_447] : memref<9x8x8xf32, #tpu.memory_space<vmem>>, vector<1x8x8xf32>
    %515 = vector.shape_cast %514 : vector<1x8x8xf32> to vector<8x8xf32>
    %cst_448 = arith.constant dense<0.000000e+00> : vector<8x256xf32>
    %516 = tpu.matmul %515, %414, %cst_448 {dimension_numbers = #tpu.dot_dimension_numbers<[1], [0], [0], [1], [0, 0, 1, 1], [], []>} : vector<8x8xf32>, vector<8x256xf32>, vector<8x256xf32> -> vector<8x256xf32>
    %517 = arith.addf %513, %516 : vector<8x256xf32>
    %c4_449 = arith.constant 4 : index
    %c0_450 = arith.constant 0 : index
    %c0_451 = arith.constant 0 : index
    %518 = vector.load %arg10[%c4_449, %c0_450, %c0_451] : memref<9x8x8xf32, #tpu.memory_space<vmem>>, vector<1x8x8xf32>
    %519 = vector.shape_cast %518 : vector<1x8x8xf32> to vector<8x8xf32>
    %cst_452 = arith.constant dense<0.000000e+00> : vector<8x256xf32>
    %520 = tpu.matmul %519, %395, %cst_452 {dimension_numbers = #tpu.dot_dimension_numbers<[1], [0], [0], [1], [0, 0, 1, 1], [], []>} : vector<8x8xf32>, vector<8x256xf32>, vector<8x256xf32> -> vector<8x256xf32>
    %521 = arith.addf %517, %520 : vector<8x256xf32>
    %c5_453 = arith.constant 5 : index
    %c0_454 = arith.constant 0 : index
    %c0_455 = arith.constant 0 : index
    %522 = vector.load %arg10[%c5_453, %c0_454, %c0_455] : memref<9x8x8xf32, #tpu.memory_space<vmem>>, vector<1x8x8xf32>
    %523 = vector.shape_cast %522 : vector<1x8x8xf32> to vector<8x8xf32>
    %cst_456 = arith.constant dense<0.000000e+00> : vector<8x256xf32>
    %524 = tpu.matmul %523, %418, %cst_456 {dimension_numbers = #tpu.dot_dimension_numbers<[1], [0], [0], [1], [0, 0, 1, 1], [], []>} : vector<8x8xf32>, vector<8x256xf32>, vector<8x256xf32> -> vector<8x256xf32>
    %525 = arith.addf %521, %524 : vector<8x256xf32>
    %c6_457 = arith.constant 6 : index
    %c0_458 = arith.constant 0 : index
    %c0_459 = arith.constant 0 : index
    %526 = vector.load %arg10[%c6_457, %c0_458, %c0_459] : memref<9x8x8xf32, #tpu.memory_space<vmem>>, vector<1x8x8xf32>
    %527 = vector.shape_cast %526 : vector<1x8x8xf32> to vector<8x8xf32>
    %cst_460 = arith.constant dense<0.000000e+00> : vector<8x256xf32>
    %528 = tpu.matmul %527, %422, %cst_460 {dimension_numbers = #tpu.dot_dimension_numbers<[1], [0], [0], [1], [0, 0, 1, 1], [], []>} : vector<8x8xf32>, vector<8x256xf32>, vector<8x256xf32> -> vector<8x256xf32>
    %529 = arith.addf %525, %528 : vector<8x256xf32>
    %c7_461 = arith.constant 7 : index
    %c0_462 = arith.constant 0 : index
    %c0_463 = arith.constant 0 : index
    %530 = vector.load %arg10[%c7_461, %c0_462, %c0_463] : memref<9x8x8xf32, #tpu.memory_space<vmem>>, vector<1x8x8xf32>
    %531 = vector.shape_cast %530 : vector<1x8x8xf32> to vector<8x8xf32>
    %cst_464 = arith.constant dense<0.000000e+00> : vector<8x256xf32>
    %532 = tpu.matmul %531, %426, %cst_464 {dimension_numbers = #tpu.dot_dimension_numbers<[1], [0], [0], [1], [0, 0, 1, 1], [], []>} : vector<8x8xf32>, vector<8x256xf32>, vector<8x256xf32> -> vector<8x256xf32>
    %533 = arith.addf %529, %532 : vector<8x256xf32>
    %c8_465 = arith.constant 8 : index
    %c0_466 = arith.constant 0 : index
    %c0_467 = arith.constant 0 : index
    %534 = vector.load %arg10[%c8_465, %c0_466, %c0_467] : memref<9x8x8xf32, #tpu.memory_space<vmem>>, vector<1x8x8xf32>
    %535 = vector.shape_cast %534 : vector<1x8x8xf32> to vector<8x8xf32>
    %cst_468 = arith.constant dense<0.000000e+00> : vector<8x256xf32>
    %536 = tpu.matmul %535, %430, %cst_468 {dimension_numbers = #tpu.dot_dimension_numbers<[1], [0], [0], [1], [0, 0, 1, 1], [], []>} : vector<8x8xf32>, vector<8x256xf32>, vector<8x256xf32> -> vector<8x256xf32>
    %537 = arith.addf %533, %536 : vector<8x256xf32>
    %cst_469 = arith.constant dense<0.000000e+00> : vector<8xf32>
    %538 = vector.multi_reduction <add>, %537, %cst_469 [1] : vector<8x256xf32> to vector<8xf32>
    %539 = vector.shape_cast %538 : vector<8xf32> to vector<8x1xf32>
    %cst_470 = arith.constant 2.560000e+02 : f32
    %540 = vector.broadcast %cst_470 : f32 to vector<8x1xf32>
    %541 = arith.divf %539, %540 : vector<8x1xf32>
    %542 = vector.broadcast %541 : vector<8x1xf32> to vector<8x256xf32>
    %543 = arith.subf %537, %542 : vector<8x256xf32>
    %544 = arith.mulf %543, %543 : vector<8x256xf32>
    %cst_471 = arith.constant dense<0.000000e+00> : vector<8xf32>
    %545 = vector.multi_reduction <add>, %544, %cst_471 [1] : vector<8x256xf32> to vector<8xf32>
    %546 = vector.shape_cast %545 : vector<8xf32> to vector<8x1xf32>
    %cst_472 = arith.constant 2.560000e+02 : f32
    %547 = vector.broadcast %cst_472 : f32 to vector<8x1xf32>
    %548 = arith.divf %546, %547 : vector<8x1xf32>
    %cst_473 = arith.constant 9.99999974E-6 : f32
    %549 = vector.broadcast %cst_473 : f32 to vector<8x1xf32>
    %550 = arith.addf %548, %549 : vector<8x1xf32>
    %551 = math.rsqrt %550 : vector<8x1xf32>
    %552 = vector.broadcast %551 : vector<8x1xf32> to vector<8x256xf32>
    %553 = arith.mulf %543, %552 : vector<8x256xf32>
    %cst_474 = arith.constant 0.000000e+00 : f32
    %554 = vector.broadcast %cst_474 : f32 to vector<8x256xf32>
    %555 = arith.cmpf oge, %553, %554 : vector<8x256xf32>
    %cst_475 = arith.constant 0.00999999977 : f32
    %556 = vector.broadcast %cst_475 : f32 to vector<8x256xf32>
    %557 = arith.mulf %556, %553 : vector<8x256xf32>
    %558 = arith.select %555, %553, %557 : vector<8x256xi1>, vector<8x256xf32>
    %c17_i32_476 = arith.constant 17 : i32
    %559 = tpu.dynamic_rotate %558 by %c17_i32_476 dim 1 : vector<8x256xf32>, i32 -> vector<8x256xf32>
    %c0_477 = arith.constant 0 : index
    %c0_478 = arith.constant 0 : index
    %c0_479 = arith.constant 0 : index
    %560 = vector.load %arg2[%c0_477, %c0_478, %c0_479] : memref<9x8x256xf32, #tpu.memory_space<vmem>>, vector<1x8x256xf32>
    %561 = vector.shape_cast %560 : vector<1x8x256xf32> to vector<8x256xf32>
    %562 = arith.mulf %559, %561 : vector<8x256xf32>
    %c16_i32_480 = arith.constant 16 : i32
    %563 = tpu.dynamic_rotate %558 by %c16_i32_480 dim 1 : vector<8x256xf32>, i32 -> vector<8x256xf32>
    %c1_481 = arith.constant 1 : index
    %c0_482 = arith.constant 0 : index
    %c0_483 = arith.constant 0 : index
    %564 = vector.load %arg2[%c1_481, %c0_482, %c0_483] : memref<9x8x256xf32, #tpu.memory_space<vmem>>, vector<1x8x256xf32>
    %565 = vector.shape_cast %564 : vector<1x8x256xf32> to vector<8x256xf32>
    %566 = arith.mulf %563, %565 : vector<8x256xf32>
    %c15_i32_484 = arith.constant 15 : i32
    %567 = tpu.dynamic_rotate %558 by %c15_i32_484 dim 1 : vector<8x256xf32>, i32 -> vector<8x256xf32>
    %c2_485 = arith.constant 2 : index
    %c0_486 = arith.constant 0 : index
    %c0_487 = arith.constant 0 : index
    %568 = vector.load %arg2[%c2_485, %c0_486, %c0_487] : memref<9x8x256xf32, #tpu.memory_space<vmem>>, vector<1x8x256xf32>
    %569 = vector.shape_cast %568 : vector<1x8x256xf32> to vector<8x256xf32>
    %570 = arith.mulf %567, %569 : vector<8x256xf32>
    %c1_i32_488 = arith.constant 1 : i32
    %571 = tpu.dynamic_rotate %558 by %c1_i32_488 dim 1 : vector<8x256xf32>, i32 -> vector<8x256xf32>
    %c3_489 = arith.constant 3 : index
    %c0_490 = arith.constant 0 : index
    %c0_491 = arith.constant 0 : index
    %572 = vector.load %arg2[%c3_489, %c0_490, %c0_491] : memref<9x8x256xf32, #tpu.memory_space<vmem>>, vector<1x8x256xf32>
    %573 = vector.shape_cast %572 : vector<1x8x256xf32> to vector<8x256xf32>
    %574 = arith.mulf %571, %573 : vector<8x256xf32>
    %c255_i32_492 = arith.constant 255 : i32
    %575 = tpu.dynamic_rotate %558 by %c255_i32_492 dim 1 : vector<8x256xf32>, i32 -> vector<8x256xf32>
    %c5_493 = arith.constant 5 : index
    %c0_494 = arith.constant 0 : index
    %c0_495 = arith.constant 0 : index
    %576 = vector.load %arg2[%c5_493, %c0_494, %c0_495] : memref<9x8x256xf32, #tpu.memory_space<vmem>>, vector<1x8x256xf32>
    %577 = vector.shape_cast %576 : vector<1x8x256xf32> to vector<8x256xf32>
    %578 = arith.mulf %575, %577 : vector<8x256xf32>
    %c241_i32_496 = arith.constant 241 : i32
    %579 = tpu.dynamic_rotate %558 by %c241_i32_496 dim 1 : vector<8x256xf32>, i32 -> vector<8x256xf32>
    %c6_497 = arith.constant 6 : index
    %c0_498 = arith.constant 0 : index
    %c0_499 = arith.constant 0 : index
    %580 = vector.load %arg2[%c6_497, %c0_498, %c0_499] : memref<9x8x256xf32, #tpu.memory_space<vmem>>, vector<1x8x256xf32>
    %581 = vector.shape_cast %580 : vector<1x8x256xf32> to vector<8x256xf32>
    %582 = arith.mulf %579, %581 : vector<8x256xf32>
    %c240_i32_500 = arith.constant 240 : i32
    %583 = tpu.dynamic_rotate %558 by %c240_i32_500 dim 1 : vector<8x256xf32>, i32 -> vector<8x256xf32>
    %c7_501 = arith.constant 7 : index
    %c0_502 = arith.constant 0 : index
    %c0_503 = arith.constant 0 : index
    %584 = vector.load %arg2[%c7_501, %c0_502, %c0_503] : memref<9x8x256xf32, #tpu.memory_space<vmem>>, vector<1x8x256xf32>
    %585 = vector.shape_cast %584 : vector<1x8x256xf32> to vector<8x256xf32>
    %586 = arith.mulf %583, %585 : vector<8x256xf32>
    %c239_i32_504 = arith.constant 239 : i32
    %587 = tpu.dynamic_rotate %558 by %c239_i32_504 dim 1 : vector<8x256xf32>, i32 -> vector<8x256xf32>
    %c8_505 = arith.constant 8 : index
    %c0_506 = arith.constant 0 : index
    %c0_507 = arith.constant 0 : index
    %588 = vector.load %arg2[%c8_505, %c0_506, %c0_507] : memref<9x8x256xf32, #tpu.memory_space<vmem>>, vector<1x8x256xf32>
    %589 = vector.shape_cast %588 : vector<1x8x256xf32> to vector<8x256xf32>
    %590 = arith.mulf %587, %589 : vector<8x256xf32>
    %c0_508 = arith.constant 0 : index
    %c0_509 = arith.constant 0 : index
    %c0_510 = arith.constant 0 : index
    %591 = vector.load %arg11[%c0_508, %c0_509, %c0_510] : memref<9x8x8xf32, #tpu.memory_space<vmem>>, vector<1x8x8xf32>
    %592 = vector.shape_cast %591 : vector<1x8x8xf32> to vector<8x8xf32>
    %cst_511 = arith.constant dense<0.000000e+00> : vector<8x256xf32>
    %593 = tpu.matmul %592, %562, %cst_511 {dimension_numbers = #tpu.dot_dimension_numbers<[1], [0], [0], [1], [0, 0, 1, 1], [], []>} : vector<8x8xf32>, vector<8x256xf32>, vector<8x256xf32> -> vector<8x256xf32>
    %c1_512 = arith.constant 1 : index
    %c0_513 = arith.constant 0 : index
    %c0_514 = arith.constant 0 : index
    %594 = vector.load %arg11[%c1_512, %c0_513, %c0_514] : memref<9x8x8xf32, #tpu.memory_space<vmem>>, vector<1x8x8xf32>
    %595 = vector.shape_cast %594 : vector<1x8x8xf32> to vector<8x8xf32>
    %cst_515 = arith.constant dense<0.000000e+00> : vector<8x256xf32>
    %596 = tpu.matmul %595, %566, %cst_515 {dimension_numbers = #tpu.dot_dimension_numbers<[1], [0], [0], [1], [0, 0, 1, 1], [], []>} : vector<8x8xf32>, vector<8x256xf32>, vector<8x256xf32> -> vector<8x256xf32>
    %597 = arith.addf %593, %596 : vector<8x256xf32>
    %c2_516 = arith.constant 2 : index
    %c0_517 = arith.constant 0 : index
    %c0_518 = arith.constant 0 : index
    %598 = vector.load %arg11[%c2_516, %c0_517, %c0_518] : memref<9x8x8xf32, #tpu.memory_space<vmem>>, vector<1x8x8xf32>
    %599 = vector.shape_cast %598 : vector<1x8x8xf32> to vector<8x8xf32>
    %cst_519 = arith.constant dense<0.000000e+00> : vector<8x256xf32>
    %600 = tpu.matmul %599, %570, %cst_519 {dimension_numbers = #tpu.dot_dimension_numbers<[1], [0], [0], [1], [0, 0, 1, 1], [], []>} : vector<8x8xf32>, vector<8x256xf32>, vector<8x256xf32> -> vector<8x256xf32>
    %601 = arith.addf %597, %600 : vector<8x256xf32>
    %c3_520 = arith.constant 3 : index
    %c0_521 = arith.constant 0 : index
    %c0_522 = arith.constant 0 : index
    %602 = vector.load %arg11[%c3_520, %c0_521, %c0_522] : memref<9x8x8xf32, #tpu.memory_space<vmem>>, vector<1x8x8xf32>
    %603 = vector.shape_cast %602 : vector<1x8x8xf32> to vector<8x8xf32>
    %cst_523 = arith.constant dense<0.000000e+00> : vector<8x256xf32>
    %604 = tpu.matmul %603, %574, %cst_523 {dimension_numbers = #tpu.dot_dimension_numbers<[1], [0], [0], [1], [0, 0, 1, 1], [], []>} : vector<8x8xf32>, vector<8x256xf32>, vector<8x256xf32> -> vector<8x256xf32>
    %605 = arith.addf %601, %604 : vector<8x256xf32>
    %c4_524 = arith.constant 4 : index
    %c0_525 = arith.constant 0 : index
    %c0_526 = arith.constant 0 : index
    %606 = vector.load %arg11[%c4_524, %c0_525, %c0_526] : memref<9x8x8xf32, #tpu.memory_space<vmem>>, vector<1x8x8xf32>
    %607 = vector.shape_cast %606 : vector<1x8x8xf32> to vector<8x8xf32>
    %cst_527 = arith.constant dense<0.000000e+00> : vector<8x256xf32>
    %608 = tpu.matmul %607, %558, %cst_527 {dimension_numbers = #tpu.dot_dimension_numbers<[1], [0], [0], [1], [0, 0, 1, 1], [], []>} : vector<8x8xf32>, vector<8x256xf32>, vector<8x256xf32> -> vector<8x256xf32>
    %609 = arith.addf %605, %608 : vector<8x256xf32>
    %c5_528 = arith.constant 5 : index
    %c0_529 = arith.constant 0 : index
    %c0_530 = arith.constant 0 : index
    %610 = vector.load %arg11[%c5_528, %c0_529, %c0_530] : memref<9x8x8xf32, #tpu.memory_space<vmem>>, vector<1x8x8xf32>
    %611 = vector.shape_cast %610 : vector<1x8x8xf32> to vector<8x8xf32>
    %cst_531 = arith.constant dense<0.000000e+00> : vector<8x256xf32>
    %612 = tpu.matmul %611, %578, %cst_531 {dimension_numbers = #tpu.dot_dimension_numbers<[1], [0], [0], [1], [0, 0, 1, 1], [], []>} : vector<8x8xf32>, vector<8x256xf32>, vector<8x256xf32> -> vector<8x256xf32>
    %613 = arith.addf %609, %612 : vector<8x256xf32>
    %c6_532 = arith.constant 6 : index
    %c0_533 = arith.constant 0 : index
    %c0_534 = arith.constant 0 : index
    %614 = vector.load %arg11[%c6_532, %c0_533, %c0_534] : memref<9x8x8xf32, #tpu.memory_space<vmem>>, vector<1x8x8xf32>
    %615 = vector.shape_cast %614 : vector<1x8x8xf32> to vector<8x8xf32>
    %cst_535 = arith.constant dense<0.000000e+00> : vector<8x256xf32>
    %616 = tpu.matmul %615, %582, %cst_535 {dimension_numbers = #tpu.dot_dimension_numbers<[1], [0], [0], [1], [0, 0, 1, 1], [], []>} : vector<8x8xf32>, vector<8x256xf32>, vector<8x256xf32> -> vector<8x256xf32>
    %617 = arith.addf %613, %616 : vector<8x256xf32>
    %c7_536 = arith.constant 7 : index
    %c0_537 = arith.constant 0 : index
    %c0_538 = arith.constant 0 : index
    %618 = vector.load %arg11[%c7_536, %c0_537, %c0_538] : memref<9x8x8xf32, #tpu.memory_space<vmem>>, vector<1x8x8xf32>
    %619 = vector.shape_cast %618 : vector<1x8x8xf32> to vector<8x8xf32>
    %cst_539 = arith.constant dense<0.000000e+00> : vector<8x256xf32>
    %620 = tpu.matmul %619, %586, %cst_539 {dimension_numbers = #tpu.dot_dimension_numbers<[1], [0], [0], [1], [0, 0, 1, 1], [], []>} : vector<8x8xf32>, vector<8x256xf32>, vector<8x256xf32> -> vector<8x256xf32>
    %621 = arith.addf %617, %620 : vector<8x256xf32>
    %c8_540 = arith.constant 8 : index
    %c0_541 = arith.constant 0 : index
    %c0_542 = arith.constant 0 : index
    %622 = vector.load %arg11[%c8_540, %c0_541, %c0_542] : memref<9x8x8xf32, #tpu.memory_space<vmem>>, vector<1x8x8xf32>
    %623 = vector.shape_cast %622 : vector<1x8x8xf32> to vector<8x8xf32>
    %cst_543 = arith.constant dense<0.000000e+00> : vector<8x256xf32>
    %624 = tpu.matmul %623, %590, %cst_543 {dimension_numbers = #tpu.dot_dimension_numbers<[1], [0], [0], [1], [0, 0, 1, 1], [], []>} : vector<8x8xf32>, vector<8x256xf32>, vector<8x256xf32> -> vector<8x256xf32>
    %625 = arith.addf %621, %624 : vector<8x256xf32>
    %cst_544 = arith.constant dense<0.000000e+00> : vector<8xf32>
    %626 = vector.multi_reduction <add>, %625, %cst_544 [1] : vector<8x256xf32> to vector<8xf32>
    %627 = vector.shape_cast %626 : vector<8xf32> to vector<8x1xf32>
    %cst_545 = arith.constant 2.560000e+02 : f32
    %628 = vector.broadcast %cst_545 : f32 to vector<8x1xf32>
    %629 = arith.divf %627, %628 : vector<8x1xf32>
    %630 = vector.broadcast %629 : vector<8x1xf32> to vector<8x256xf32>
    %631 = arith.subf %625, %630 : vector<8x256xf32>
    %632 = arith.mulf %631, %631 : vector<8x256xf32>
    %cst_546 = arith.constant dense<0.000000e+00> : vector<8xf32>
    %633 = vector.multi_reduction <add>, %632, %cst_546 [1] : vector<8x256xf32> to vector<8xf32>
    %634 = vector.shape_cast %633 : vector<8xf32> to vector<8x1xf32>
    %cst_547 = arith.constant 2.560000e+02 : f32
    %635 = vector.broadcast %cst_547 : f32 to vector<8x1xf32>
    %636 = arith.divf %634, %635 : vector<8x1xf32>
    %cst_548 = arith.constant 9.99999974E-6 : f32
    %637 = vector.broadcast %cst_548 : f32 to vector<8x1xf32>
    %638 = arith.addf %636, %637 : vector<8x1xf32>
    %639 = math.rsqrt %638 : vector<8x1xf32>
    %640 = vector.broadcast %639 : vector<8x1xf32> to vector<8x256xf32>
    %641 = arith.mulf %631, %640 : vector<8x256xf32>
    %cst_549 = arith.constant 0.000000e+00 : f32
    %642 = vector.broadcast %cst_549 : f32 to vector<8x256xf32>
    %643 = arith.cmpf oge, %641, %642 : vector<8x256xf32>
    %cst_550 = arith.constant 0.00999999977 : f32
    %644 = vector.broadcast %cst_550 : f32 to vector<8x256xf32>
    %645 = arith.mulf %644, %641 : vector<8x256xf32>
    %646 = arith.select %643, %641, %645 : vector<8x256xi1>, vector<8x256xf32>
    %c0_551 = arith.constant 0 : index
    %c24 = arith.constant 24 : index
    %c0_552 = arith.constant 0 : index
    %647 = vector.load %arg12[%c0_551, %c24, %c0_552] : memref<2x32x256xf32, #tpu.memory_space<vmem>>, vector<1x8x256xf32>
    %648 = vector.shape_cast %647 : vector<1x8x256xf32> to vector<8x256xf32>
    %649 = vector.shape_cast %646 : vector<8x256xf32> to vector<1x8x256xf32>
    tpu.vector_store %arg12[%c0_551, %c24, %c0_552], %649 {strides = array<i32>} : memref<2x32x256xf32, #tpu.memory_space<vmem>>, vector<1x8x256xf32>,
    %c1_553 = arith.constant 1 : index
    %c0_554 = arith.constant 0 : index
    %c0_555 = arith.constant 0 : index
    %650 = vector.load %arg1[%c1_553, %c0_554, %c0_555] : memref<2x8x256xf32, #tpu.memory_space<vmem>>, vector<1x8x256xf32>
    %651 = vector.shape_cast %650 : vector<1x8x256xf32> to vector<8x256xf32>
    %c1_556 = arith.constant 1 : index
    %c0_557 = arith.constant 0 : index
    %c0_558 = arith.constant 0 : index
    %652 = vector.load %arg12[%c1_556, %c0_557, %c0_558] : memref<2x32x256xf32, #tpu.memory_space<vmem>>, vector<1x8x256xf32>
    %653 = vector.shape_cast %652 : vector<1x8x256xf32> to vector<8x256xf32>
    %654 = vector.shape_cast %651 : vector<8x256xf32> to vector<1x8x256xf32>
    tpu.vector_store %arg12[%c1_556, %c0_557, %c0_558], %654 {strides = array<i32>} : memref<2x32x256xf32, #tpu.memory_space<vmem>>, vector<1x8x256xf32>,
    %c17_i32_559 = arith.constant 17 : i32
    %655 = tpu.dynamic_rotate %651 by %c17_i32_559 dim 1 : vector<8x256xf32>, i32 -> vector<8x256xf32>
    %c0_560 = arith.constant 0 : index
    %c0_561 = arith.constant 0 : index
    %c0_562 = arith.constant 0 : index
    %656 = vector.load %arg2[%c0_560, %c0_561, %c0_562] : memref<9x8x256xf32, #tpu.memory_space<vmem>>, vector<1x8x256xf32>
    %657 = vector.shape_cast %656 : vector<1x8x256xf32> to vector<8x256xf32>
    %658 = arith.mulf %655, %657 : vector<8x256xf32>
    %c16_i32_563 = arith.constant 16 : i32
    %659 = tpu.dynamic_rotate %651 by %c16_i32_563 dim 1 : vector<8x256xf32>, i32 -> vector<8x256xf32>
    %c1_564 = arith.constant 1 : index
    %c0_565 = arith.constant 0 : index
    %c0_566 = arith.constant 0 : index
    %660 = vector.load %arg2[%c1_564, %c0_565, %c0_566] : memref<9x8x256xf32, #tpu.memory_space<vmem>>, vector<1x8x256xf32>
    %661 = vector.shape_cast %660 : vector<1x8x256xf32> to vector<8x256xf32>
    %662 = arith.mulf %659, %661 : vector<8x256xf32>
    %c15_i32_567 = arith.constant 15 : i32
    %663 = tpu.dynamic_rotate %651 by %c15_i32_567 dim 1 : vector<8x256xf32>, i32 -> vector<8x256xf32>
    %c2_568 = arith.constant 2 : index
    %c0_569 = arith.constant 0 : index
    %c0_570 = arith.constant 0 : index
    %664 = vector.load %arg2[%c2_568, %c0_569, %c0_570] : memref<9x8x256xf32, #tpu.memory_space<vmem>>, vector<1x8x256xf32>
    %665 = vector.shape_cast %664 : vector<1x8x256xf32> to vector<8x256xf32>
    %666 = arith.mulf %663, %665 : vector<8x256xf32>
    %c1_i32_571 = arith.constant 1 : i32
    %667 = tpu.dynamic_rotate %651 by %c1_i32_571 dim 1 : vector<8x256xf32>, i32 -> vector<8x256xf32>
    %c3_572 = arith.constant 3 : index
    %c0_573 = arith.constant 0 : index
    %c0_574 = arith.constant 0 : index
    %668 = vector.load %arg2[%c3_572, %c0_573, %c0_574] : memref<9x8x256xf32, #tpu.memory_space<vmem>>, vector<1x8x256xf32>
    %669 = vector.shape_cast %668 : vector<1x8x256xf32> to vector<8x256xf32>
    %670 = arith.mulf %667, %669 : vector<8x256xf32>
    %c255_i32_575 = arith.constant 255 : i32
    %671 = tpu.dynamic_rotate %651 by %c255_i32_575 dim 1 : vector<8x256xf32>, i32 -> vector<8x256xf32>
    %c5_576 = arith.constant 5 : index
    %c0_577 = arith.constant 0 : index
    %c0_578 = arith.constant 0 : index
    %672 = vector.load %arg2[%c5_576, %c0_577, %c0_578] : memref<9x8x256xf32, #tpu.memory_space<vmem>>, vector<1x8x256xf32>
    %673 = vector.shape_cast %672 : vector<1x8x256xf32> to vector<8x256xf32>
    %674 = arith.mulf %671, %673 : vector<8x256xf32>
    %c241_i32_579 = arith.constant 241 : i32
    %675 = tpu.dynamic_rotate %651 by %c241_i32_579 dim 1 : vector<8x256xf32>, i32 -> vector<8x256xf32>
    %c6_580 = arith.constant 6 : index
    %c0_581 = arith.constant 0 : index
    %c0_582 = arith.constant 0 : index
    %676 = vector.load %arg2[%c6_580, %c0_581, %c0_582] : memref<9x8x256xf32, #tpu.memory_space<vmem>>, vector<1x8x256xf32>
    %677 = vector.shape_cast %676 : vector<1x8x256xf32> to vector<8x256xf32>
    %678 = arith.mulf %675, %677 : vector<8x256xf32>
    %c240_i32_583 = arith.constant 240 : i32
    %679 = tpu.dynamic_rotate %651 by %c240_i32_583 dim 1 : vector<8x256xf32>, i32 -> vector<8x256xf32>
    %c7_584 = arith.constant 7 : index
    %c0_585 = arith.constant 0 : index
    %c0_586 = arith.constant 0 : index
    %680 = vector.load %arg2[%c7_584, %c0_585, %c0_586] : memref<9x8x256xf32, #tpu.memory_space<vmem>>, vector<1x8x256xf32>
    %681 = vector.shape_cast %680 : vector<1x8x256xf32> to vector<8x256xf32>
    %682 = arith.mulf %679, %681 : vector<8x256xf32>
    %c239_i32_587 = arith.constant 239 : i32
    %683 = tpu.dynamic_rotate %651 by %c239_i32_587 dim 1 : vector<8x256xf32>, i32 -> vector<8x256xf32>
    %c8_588 = arith.constant 8 : index
    %c0_589 = arith.constant 0 : index
    %c0_590 = arith.constant 0 : index
    %684 = vector.load %arg2[%c8_588, %c0_589, %c0_590] : memref<9x8x256xf32, #tpu.memory_space<vmem>>, vector<1x8x256xf32>
    %685 = vector.shape_cast %684 : vector<1x8x256xf32> to vector<8x256xf32>
    %686 = arith.mulf %683, %685 : vector<8x256xf32>
    %c0_591 = arith.constant 0 : index
    %c0_592 = arith.constant 0 : index
    %c0_593 = arith.constant 0 : index
    %687 = vector.load %arg3[%c0_591, %c0_592, %c0_593] : memref<9x8x8xf32, #tpu.memory_space<vmem>>, vector<1x8x8xf32>
    %688 = vector.shape_cast %687 : vector<1x8x8xf32> to vector<8x8xf32>
    %cst_594 = arith.constant dense<0.000000e+00> : vector<8x256xf32>
    %689 = tpu.matmul %688, %658, %cst_594 {dimension_numbers = #tpu.dot_dimension_numbers<[1], [0], [0], [1], [0, 0, 1, 1], [], []>} : vector<8x8xf32>, vector<8x256xf32>, vector<8x256xf32> -> vector<8x256xf32>
    %c1_595 = arith.constant 1 : index
    %c0_596 = arith.constant 0 : index
    %c0_597 = arith.constant 0 : index
    %690 = vector.load %arg3[%c1_595, %c0_596, %c0_597] : memref<9x8x8xf32, #tpu.memory_space<vmem>>, vector<1x8x8xf32>
    %691 = vector.shape_cast %690 : vector<1x8x8xf32> to vector<8x8xf32>
    %cst_598 = arith.constant dense<0.000000e+00> : vector<8x256xf32>
    %692 = tpu.matmul %691, %662, %cst_598 {dimension_numbers = #tpu.dot_dimension_numbers<[1], [0], [0], [1], [0, 0, 1, 1], [], []>} : vector<8x8xf32>, vector<8x256xf32>, vector<8x256xf32> -> vector<8x256xf32>
    %693 = arith.addf %689, %692 : vector<8x256xf32>
    %c2_599 = arith.constant 2 : index
    %c0_600 = arith.constant 0 : index
    %c0_601 = arith.constant 0 : index
    %694 = vector.load %arg3[%c2_599, %c0_600, %c0_601] : memref<9x8x8xf32, #tpu.memory_space<vmem>>, vector<1x8x8xf32>
    %695 = vector.shape_cast %694 : vector<1x8x8xf32> to vector<8x8xf32>
    %cst_602 = arith.constant dense<0.000000e+00> : vector<8x256xf32>
    %696 = tpu.matmul %695, %666, %cst_602 {dimension_numbers = #tpu.dot_dimension_numbers<[1], [0], [0], [1], [0, 0, 1, 1], [], []>} : vector<8x8xf32>, vector<8x256xf32>, vector<8x256xf32> -> vector<8x256xf32>
    %697 = arith.addf %693, %696 : vector<8x256xf32>
    %c3_603 = arith.constant 3 : index
    %c0_604 = arith.constant 0 : index
    %c0_605 = arith.constant 0 : index
    %698 = vector.load %arg3[%c3_603, %c0_604, %c0_605] : memref<9x8x8xf32, #tpu.memory_space<vmem>>, vector<1x8x8xf32>
    %699 = vector.shape_cast %698 : vector<1x8x8xf32> to vector<8x8xf32>
    %cst_606 = arith.constant dense<0.000000e+00> : vector<8x256xf32>
    %700 = tpu.matmul %699, %670, %cst_606 {dimension_numbers = #tpu.dot_dimension_numbers<[1], [0], [0], [1], [0, 0, 1, 1], [], []>} : vector<8x8xf32>, vector<8x256xf32>, vector<8x256xf32> -> vector<8x256xf32>
    %701 = arith.addf %697, %700 : vector<8x256xf32>
    %c4_607 = arith.constant 4 : index
    %c0_608 = arith.constant 0 : index
    %c0_609 = arith.constant 0 : index
    %702 = vector.load %arg3[%c4_607, %c0_608, %c0_609] : memref<9x8x8xf32, #tpu.memory_space<vmem>>, vector<1x8x8xf32>
    %703 = vector.shape_cast %702 : vector<1x8x8xf32> to vector<8x8xf32>
    %cst_610 = arith.constant dense<0.000000e+00> : vector<8x256xf32>
    %704 = tpu.matmul %703, %651, %cst_610 {dimension_numbers = #tpu.dot_dimension_numbers<[1], [0], [0], [1], [0, 0, 1, 1], [], []>} : vector<8x8xf32>, vector<8x256xf32>, vector<8x256xf32> -> vector<8x256xf32>
    %705 = arith.addf %701, %704 : vector<8x256xf32>
    %c5_611 = arith.constant 5 : index
    %c0_612 = arith.constant 0 : index
    %c0_613 = arith.constant 0 : index
    %706 = vector.load %arg3[%c5_611, %c0_612, %c0_613] : memref<9x8x8xf32, #tpu.memory_space<vmem>>, vector<1x8x8xf32>
    %707 = vector.shape_cast %706 : vector<1x8x8xf32> to vector<8x8xf32>
    %cst_614 = arith.constant dense<0.000000e+00> : vector<8x256xf32>
    %708 = tpu.matmul %707, %674, %cst_614 {dimension_numbers = #tpu.dot_dimension_numbers<[1], [0], [0], [1], [0, 0, 1, 1], [], []>} : vector<8x8xf32>, vector<8x256xf32>, vector<8x256xf32> -> vector<8x256xf32>
    %709 = arith.addf %705, %708 : vector<8x256xf32>
    %c6_615 = arith.constant 6 : index
    %c0_616 = arith.constant 0 : index
    %c0_617 = arith.constant 0 : index
    %710 = vector.load %arg3[%c6_615, %c0_616, %c0_617] : memref<9x8x8xf32, #tpu.memory_space<vmem>>, vector<1x8x8xf32>
    %711 = vector.shape_cast %710 : vector<1x8x8xf32> to vector<8x8xf32>
    %cst_618 = arith.constant dense<0.000000e+00> : vector<8x256xf32>
    %712 = tpu.matmul %711, %678, %cst_618 {dimension_numbers = #tpu.dot_dimension_numbers<[1], [0], [0], [1], [0, 0, 1, 1], [], []>} : vector<8x8xf32>, vector<8x256xf32>, vector<8x256xf32> -> vector<8x256xf32>
    %713 = arith.addf %709, %712 : vector<8x256xf32>
    %c7_619 = arith.constant 7 : index
    %c0_620 = arith.constant 0 : index
    %c0_621 = arith.constant 0 : index
    %714 = vector.load %arg3[%c7_619, %c0_620, %c0_621] : memref<9x8x8xf32, #tpu.memory_space<vmem>>, vector<1x8x8xf32>
    %715 = vector.shape_cast %714 : vector<1x8x8xf32> to vector<8x8xf32>
    %cst_622 = arith.constant dense<0.000000e+00> : vector<8x256xf32>
    %716 = tpu.matmul %715, %682, %cst_622 {dimension_numbers = #tpu.dot_dimension_numbers<[1], [0], [0], [1], [0, 0, 1, 1], [], []>} : vector<8x8xf32>, vector<8x256xf32>, vector<8x256xf32> -> vector<8x256xf32>
    %717 = arith.addf %713, %716 : vector<8x256xf32>
    %c8_623 = arith.constant 8 : index
    %c0_624 = arith.constant 0 : index
    %c0_625 = arith.constant 0 : index
    %718 = vector.load %arg3[%c8_623, %c0_624, %c0_625] : memref<9x8x8xf32, #tpu.memory_space<vmem>>, vector<1x8x8xf32>
    %719 = vector.shape_cast %718 : vector<1x8x8xf32> to vector<8x8xf32>
    %cst_626 = arith.constant dense<0.000000e+00> : vector<8x256xf32>
    %720 = tpu.matmul %719, %686, %cst_626 {dimension_numbers = #tpu.dot_dimension_numbers<[1], [0], [0], [1], [0, 0, 1, 1], [], []>} : vector<8x8xf32>, vector<8x256xf32>, vector<8x256xf32> -> vector<8x256xf32>
    %721 = arith.addf %717, %720 : vector<8x256xf32>
    %cst_627 = arith.constant dense<0.000000e+00> : vector<8xf32>
    %722 = vector.multi_reduction <add>, %721, %cst_627 [1] : vector<8x256xf32> to vector<8xf32>
    %723 = vector.shape_cast %722 : vector<8xf32> to vector<8x1xf32>
    %cst_628 = arith.constant 2.560000e+02 : f32
    %724 = vector.broadcast %cst_628 : f32 to vector<8x1xf32>
    %725 = arith.divf %723, %724 : vector<8x1xf32>
    %726 = vector.broadcast %725 : vector<8x1xf32> to vector<8x256xf32>
    %727 = arith.subf %721, %726 : vector<8x256xf32>
    %728 = arith.mulf %727, %727 : vector<8x256xf32>
    %cst_629 = arith.constant dense<0.000000e+00> : vector<8xf32>
    %729 = vector.multi_reduction <add>, %728, %cst_629 [1] : vector<8x256xf32> to vector<8xf32>
    %730 = vector.shape_cast %729 : vector<8xf32> to vector<8x1xf32>
    %cst_630 = arith.constant 2.560000e+02 : f32
    %731 = vector.broadcast %cst_630 : f32 to vector<8x1xf32>
    %732 = arith.divf %730, %731 : vector<8x1xf32>
    %cst_631 = arith.constant 9.99999974E-6 : f32
    %733 = vector.broadcast %cst_631 : f32 to vector<8x1xf32>
    %734 = arith.addf %732, %733 : vector<8x1xf32>
    %735 = math.rsqrt %734 : vector<8x1xf32>
    %736 = vector.broadcast %735 : vector<8x1xf32> to vector<8x256xf32>
    %737 = arith.mulf %727, %736 : vector<8x256xf32>
    %cst_632 = arith.constant 0.000000e+00 : f32
    %738 = vector.broadcast %cst_632 : f32 to vector<8x256xf32>
    %739 = arith.cmpf oge, %737, %738 : vector<8x256xf32>
    %cst_633 = arith.constant 0.00999999977 : f32
    %740 = vector.broadcast %cst_633 : f32 to vector<8x256xf32>
    %741 = arith.mulf %740, %737 : vector<8x256xf32>
    %742 = arith.select %739, %737, %741 : vector<8x256xi1>, vector<8x256xf32>
    %c17_i32_634 = arith.constant 17 : i32
    %743 = tpu.dynamic_rotate %742 by %c17_i32_634 dim 1 : vector<8x256xf32>, i32 -> vector<8x256xf32>
    %c0_635 = arith.constant 0 : index
    %c0_636 = arith.constant 0 : index
    %c0_637 = arith.constant 0 : index
    %744 = vector.load %arg2[%c0_635, %c0_636, %c0_637] : memref<9x8x256xf32, #tpu.memory_space<vmem>>, vector<1x8x256xf32>
    %745 = vector.shape_cast %744 : vector<1x8x256xf32> to vector<8x256xf32>
    %746 = arith.mulf %743, %745 : vector<8x256xf32>
    %c16_i32_638 = arith.constant 16 : i32
    %747 = tpu.dynamic_rotate %742 by %c16_i32_638 dim 1 : vector<8x256xf32>, i32 -> vector<8x256xf32>
    %c1_639 = arith.constant 1 : index
    %c0_640 = arith.constant 0 : index
    %c0_641 = arith.constant 0 : index
    %748 = vector.load %arg2[%c1_639, %c0_640, %c0_641] : memref<9x8x256xf32, #tpu.memory_space<vmem>>, vector<1x8x256xf32>
    %749 = vector.shape_cast %748 : vector<1x8x256xf32> to vector<8x256xf32>
    %750 = arith.mulf %747, %749 : vector<8x256xf32>
    %c15_i32_642 = arith.constant 15 : i32
    %751 = tpu.dynamic_rotate %742 by %c15_i32_642 dim 1 : vector<8x256xf32>, i32 -> vector<8x256xf32>
    %c2_643 = arith.constant 2 : index
    %c0_644 = arith.constant 0 : index
    %c0_645 = arith.constant 0 : index
    %752 = vector.load %arg2[%c2_643, %c0_644, %c0_645] : memref<9x8x256xf32, #tpu.memory_space<vmem>>, vector<1x8x256xf32>
    %753 = vector.shape_cast %752 : vector<1x8x256xf32> to vector<8x256xf32>
    %754 = arith.mulf %751, %753 : vector<8x256xf32>
    %c1_i32_646 = arith.constant 1 : i32
    %755 = tpu.dynamic_rotate %742 by %c1_i32_646 dim 1 : vector<8x256xf32>, i32 -> vector<8x256xf32>
    %c3_647 = arith.constant 3 : index
    %c0_648 = arith.constant 0 : index
    %c0_649 = arith.constant 0 : index
    %756 = vector.load %arg2[%c3_647, %c0_648, %c0_649] : memref<9x8x256xf32, #tpu.memory_space<vmem>>, vector<1x8x256xf32>
    %757 = vector.shape_cast %756 : vector<1x8x256xf32> to vector<8x256xf32>
    %758 = arith.mulf %755, %757 : vector<8x256xf32>
    %c255_i32_650 = arith.constant 255 : i32
    %759 = tpu.dynamic_rotate %742 by %c255_i32_650 dim 1 : vector<8x256xf32>, i32 -> vector<8x256xf32>
    %c5_651 = arith.constant 5 : index
    %c0_652 = arith.constant 0 : index
    %c0_653 = arith.constant 0 : index
    %760 = vector.load %arg2[%c5_651, %c0_652, %c0_653] : memref<9x8x256xf32, #tpu.memory_space<vmem>>, vector<1x8x256xf32>
    %761 = vector.shape_cast %760 : vector<1x8x256xf32> to vector<8x256xf32>
    %762 = arith.mulf %759, %761 : vector<8x256xf32>
    %c241_i32_654 = arith.constant 241 : i32
    %763 = tpu.dynamic_rotate %742 by %c241_i32_654 dim 1 : vector<8x256xf32>, i32 -> vector<8x256xf32>
    %c6_655 = arith.constant 6 : index
    %c0_656 = arith.constant 0 : index
    %c0_657 = arith.constant 0 : index
    %764 = vector.load %arg2[%c6_655, %c0_656, %c0_657] : memref<9x8x256xf32, #tpu.memory_space<vmem>>, vector<1x8x256xf32>
    %765 = vector.shape_cast %764 : vector<1x8x256xf32> to vector<8x256xf32>
    %766 = arith.mulf %763, %765 : vector<8x256xf32>
    %c240_i32_658 = arith.constant 240 : i32
    %767 = tpu.dynamic_rotate %742 by %c240_i32_658 dim 1 : vector<8x256xf32>, i32 -> vector<8x256xf32>
    %c7_659 = arith.constant 7 : index
    %c0_660 = arith.constant 0 : index
    %c0_661 = arith.constant 0 : index
    %768 = vector.load %arg2[%c7_659, %c0_660, %c0_661] : memref<9x8x256xf32, #tpu.memory_space<vmem>>, vector<1x8x256xf32>
    %769 = vector.shape_cast %768 : vector<1x8x256xf32> to vector<8x256xf32>
    %770 = arith.mulf %767, %769 : vector<8x256xf32>
    %c239_i32_662 = arith.constant 239 : i32
    %771 = tpu.dynamic_rotate %742 by %c239_i32_662 dim 1 : vector<8x256xf32>, i32 -> vector<8x256xf32>
    %c8_663 = arith.constant 8 : index
    %c0_664 = arith.constant 0 : index
    %c0_665 = arith.constant 0 : index
    %772 = vector.load %arg2[%c8_663, %c0_664, %c0_665] : memref<9x8x256xf32, #tpu.memory_space<vmem>>, vector<1x8x256xf32>
    %773 = vector.shape_cast %772 : vector<1x8x256xf32> to vector<8x256xf32>
    %774 = arith.mulf %771, %773 : vector<8x256xf32>
    %c0_666 = arith.constant 0 : index
    %c0_667 = arith.constant 0 : index
    %c0_668 = arith.constant 0 : index
    %775 = vector.load %arg4[%c0_666, %c0_667, %c0_668] : memref<9x8x8xf32, #tpu.memory_space<vmem>>, vector<1x8x8xf32>
    %776 = vector.shape_cast %775 : vector<1x8x8xf32> to vector<8x8xf32>
    %cst_669 = arith.constant dense<0.000000e+00> : vector<8x256xf32>
    %777 = tpu.matmul %776, %746, %cst_669 {dimension_numbers = #tpu.dot_dimension_numbers<[1], [0], [0], [1], [0, 0, 1, 1], [], []>} : vector<8x8xf32>, vector<8x256xf32>, vector<8x256xf32> -> vector<8x256xf32>
    %c1_670 = arith.constant 1 : index
    %c0_671 = arith.constant 0 : index
    %c0_672 = arith.constant 0 : index
    %778 = vector.load %arg4[%c1_670, %c0_671, %c0_672] : memref<9x8x8xf32, #tpu.memory_space<vmem>>, vector<1x8x8xf32>
    %779 = vector.shape_cast %778 : vector<1x8x8xf32> to vector<8x8xf32>
    %cst_673 = arith.constant dense<0.000000e+00> : vector<8x256xf32>
    %780 = tpu.matmul %779, %750, %cst_673 {dimension_numbers = #tpu.dot_dimension_numbers<[1], [0], [0], [1], [0, 0, 1, 1], [], []>} : vector<8x8xf32>, vector<8x256xf32>, vector<8x256xf32> -> vector<8x256xf32>
    %781 = arith.addf %777, %780 : vector<8x256xf32>
    %c2_674 = arith.constant 2 : index
    %c0_675 = arith.constant 0 : index
    %c0_676 = arith.constant 0 : index
    %782 = vector.load %arg4[%c2_674, %c0_675, %c0_676] : memref<9x8x8xf32, #tpu.memory_space<vmem>>, vector<1x8x8xf32>
    %783 = vector.shape_cast %782 : vector<1x8x8xf32> to vector<8x8xf32>
    %cst_677 = arith.constant dense<0.000000e+00> : vector<8x256xf32>
    %784 = tpu.matmul %783, %754, %cst_677 {dimension_numbers = #tpu.dot_dimension_numbers<[1], [0], [0], [1], [0, 0, 1, 1], [], []>} : vector<8x8xf32>, vector<8x256xf32>, vector<8x256xf32> -> vector<8x256xf32>
    %785 = arith.addf %781, %784 : vector<8x256xf32>
    %c3_678 = arith.constant 3 : index
    %c0_679 = arith.constant 0 : index
    %c0_680 = arith.constant 0 : index
    %786 = vector.load %arg4[%c3_678, %c0_679, %c0_680] : memref<9x8x8xf32, #tpu.memory_space<vmem>>, vector<1x8x8xf32>
    %787 = vector.shape_cast %786 : vector<1x8x8xf32> to vector<8x8xf32>
    %cst_681 = arith.constant dense<0.000000e+00> : vector<8x256xf32>
    %788 = tpu.matmul %787, %758, %cst_681 {dimension_numbers = #tpu.dot_dimension_numbers<[1], [0], [0], [1], [0, 0, 1, 1], [], []>} : vector<8x8xf32>, vector<8x256xf32>, vector<8x256xf32> -> vector<8x256xf32>
    %789 = arith.addf %785, %788 : vector<8x256xf32>
    %c4_682 = arith.constant 4 : index
    %c0_683 = arith.constant 0 : index
    %c0_684 = arith.constant 0 : index
    %790 = vector.load %arg4[%c4_682, %c0_683, %c0_684] : memref<9x8x8xf32, #tpu.memory_space<vmem>>, vector<1x8x8xf32>
    %791 = vector.shape_cast %790 : vector<1x8x8xf32> to vector<8x8xf32>
    %cst_685 = arith.constant dense<0.000000e+00> : vector<8x256xf32>
    %792 = tpu.matmul %791, %742, %cst_685 {dimension_numbers = #tpu.dot_dimension_numbers<[1], [0], [0], [1], [0, 0, 1, 1], [], []>} : vector<8x8xf32>, vector<8x256xf32>, vector<8x256xf32> -> vector<8x256xf32>
    %793 = arith.addf %789, %792 : vector<8x256xf32>
    %c5_686 = arith.constant 5 : index
    %c0_687 = arith.constant 0 : index
    %c0_688 = arith.constant 0 : index
    %794 = vector.load %arg4[%c5_686, %c0_687, %c0_688] : memref<9x8x8xf32, #tpu.memory_space<vmem>>, vector<1x8x8xf32>
    %795 = vector.shape_cast %794 : vector<1x8x8xf32> to vector<8x8xf32>
    %cst_689 = arith.constant dense<0.000000e+00> : vector<8x256xf32>
    %796 = tpu.matmul %795, %762, %cst_689 {dimension_numbers = #tpu.dot_dimension_numbers<[1], [0], [0], [1], [0, 0, 1, 1], [], []>} : vector<8x8xf32>, vector<8x256xf32>, vector<8x256xf32> -> vector<8x256xf32>
    %797 = arith.addf %793, %796 : vector<8x256xf32>
    %c6_690 = arith.constant 6 : index
    %c0_691 = arith.constant 0 : index
    %c0_692 = arith.constant 0 : index
    %798 = vector.load %arg4[%c6_690, %c0_691, %c0_692] : memref<9x8x8xf32, #tpu.memory_space<vmem>>, vector<1x8x8xf32>
    %799 = vector.shape_cast %798 : vector<1x8x8xf32> to vector<8x8xf32>
    %cst_693 = arith.constant dense<0.000000e+00> : vector<8x256xf32>
    %800 = tpu.matmul %799, %766, %cst_693 {dimension_numbers = #tpu.dot_dimension_numbers<[1], [0], [0], [1], [0, 0, 1, 1], [], []>} : vector<8x8xf32>, vector<8x256xf32>, vector<8x256xf32> -> vector<8x256xf32>
    %801 = arith.addf %797, %800 : vector<8x256xf32>
    %c7_694 = arith.constant 7 : index
    %c0_695 = arith.constant 0 : index
    %c0_696 = arith.constant 0 : index
    %802 = vector.load %arg4[%c7_694, %c0_695, %c0_696] : memref<9x8x8xf32, #tpu.memory_space<vmem>>, vector<1x8x8xf32>
    %803 = vector.shape_cast %802 : vector<1x8x8xf32> to vector<8x8xf32>
    %cst_697 = arith.constant dense<0.000000e+00> : vector<8x256xf32>
    %804 = tpu.matmul %803, %770, %cst_697 {dimension_numbers = #tpu.dot_dimension_numbers<[1], [0], [0], [1], [0, 0, 1, 1], [], []>} : vector<8x8xf32>, vector<8x256xf32>, vector<8x256xf32> -> vector<8x256xf32>
    %805 = arith.addf %801, %804 : vector<8x256xf32>
    %c8_698 = arith.constant 8 : index
    %c0_699 = arith.constant 0 : index
    %c0_700 = arith.constant 0 : index
    %806 = vector.load %arg4[%c8_698, %c0_699, %c0_700] : memref<9x8x8xf32, #tpu.memory_space<vmem>>, vector<1x8x8xf32>
    %807 = vector.shape_cast %806 : vector<1x8x8xf32> to vector<8x8xf32>
    %cst_701 = arith.constant dense<0.000000e+00> : vector<8x256xf32>
    %808 = tpu.matmul %807, %774, %cst_701 {dimension_numbers = #tpu.dot_dimension_numbers<[1], [0], [0], [1], [0, 0, 1, 1], [], []>} : vector<8x8xf32>, vector<8x256xf32>, vector<8x256xf32> -> vector<8x256xf32>
    %809 = arith.addf %805, %808 : vector<8x256xf32>
    %cst_702 = arith.constant dense<0.000000e+00> : vector<8xf32>
    %810 = vector.multi_reduction <add>, %809, %cst_702 [1] : vector<8x256xf32> to vector<8xf32>
    %811 = vector.shape_cast %810 : vector<8xf32> to vector<8x1xf32>
    %cst_703 = arith.constant 2.560000e+02 : f32
    %812 = vector.broadcast %cst_703 : f32 to vector<8x1xf32>
    %813 = arith.divf %811, %812 : vector<8x1xf32>
    %814 = vector.broadcast %813 : vector<8x1xf32> to vector<8x256xf32>
    %815 = arith.subf %809, %814 : vector<8x256xf32>
    %816 = arith.mulf %815, %815 : vector<8x256xf32>
    %cst_704 = arith.constant dense<0.000000e+00> : vector<8xf32>
    %817 = vector.multi_reduction <add>, %816, %cst_704 [1] : vector<8x256xf32> to vector<8xf32>
    %818 = vector.shape_cast %817 : vector<8xf32> to vector<8x1xf32>
    %cst_705 = arith.constant 2.560000e+02 : f32
    %819 = vector.broadcast %cst_705 : f32 to vector<8x1xf32>
    %820 = arith.divf %818, %819 : vector<8x1xf32>
    %cst_706 = arith.constant 9.99999974E-6 : f32
    %821 = vector.broadcast %cst_706 : f32 to vector<8x1xf32>
    %822 = arith.addf %820, %821 : vector<8x1xf32>
    %823 = math.rsqrt %822 : vector<8x1xf32>
    %824 = vector.broadcast %823 : vector<8x1xf32> to vector<8x256xf32>
    %825 = arith.mulf %815, %824 : vector<8x256xf32>
    %cst_707 = arith.constant 0.000000e+00 : f32
    %826 = vector.broadcast %cst_707 : f32 to vector<8x256xf32>
    %827 = arith.cmpf oge, %825, %826 : vector<8x256xf32>
    %cst_708 = arith.constant 0.00999999977 : f32
    %828 = vector.broadcast %cst_708 : f32 to vector<8x256xf32>
    %829 = arith.mulf %828, %825 : vector<8x256xf32>
    %830 = arith.select %827, %825, %829 : vector<8x256xi1>, vector<8x256xf32>
    %c1_709 = arith.constant 1 : index
    %c8_710 = arith.constant 8 : index
    %c0_711 = arith.constant 0 : index
    %831 = vector.load %arg12[%c1_709, %c8_710, %c0_711] : memref<2x32x256xf32, #tpu.memory_space<vmem>>, vector<1x8x256xf32>
    %832 = vector.shape_cast %831 : vector<1x8x256xf32> to vector<8x256xf32>
    %833 = vector.shape_cast %830 : vector<8x256xf32> to vector<1x8x256xf32>
    tpu.vector_store %arg12[%c1_709, %c8_710, %c0_711], %833 {strides = array<i32>} : memref<2x32x256xf32, #tpu.memory_space<vmem>>, vector<1x8x256xf32>,
    %c17_i32_712 = arith.constant 17 : i32
    %834 = tpu.dynamic_rotate %830 by %c17_i32_712 dim 1 : vector<8x256xf32>, i32 -> vector<8x256xf32>
    %c0_713 = arith.constant 0 : index
    %c0_714 = arith.constant 0 : index
    %c0_715 = arith.constant 0 : index
    %835 = vector.load %arg2[%c0_713, %c0_714, %c0_715] : memref<9x8x256xf32, #tpu.memory_space<vmem>>, vector<1x8x256xf32>
    %836 = vector.shape_cast %835 : vector<1x8x256xf32> to vector<8x256xf32>
    %837 = arith.mulf %834, %836 : vector<8x256xf32>
    %c16_i32_716 = arith.constant 16 : i32
    %838 = tpu.dynamic_rotate %830 by %c16_i32_716 dim 1 : vector<8x256xf32>, i32 -> vector<8x256xf32>
    %c1_717 = arith.constant 1 : index
    %c0_718 = arith.constant 0 : index
    %c0_719 = arith.constant 0 : index
    %839 = vector.load %arg2[%c1_717, %c0_718, %c0_719] : memref<9x8x256xf32, #tpu.memory_space<vmem>>, vector<1x8x256xf32>
    %840 = vector.shape_cast %839 : vector<1x8x256xf32> to vector<8x256xf32>
    %841 = arith.mulf %838, %840 : vector<8x256xf32>
    %c15_i32_720 = arith.constant 15 : i32
    %842 = tpu.dynamic_rotate %830 by %c15_i32_720 dim 1 : vector<8x256xf32>, i32 -> vector<8x256xf32>
    %c2_721 = arith.constant 2 : index
    %c0_722 = arith.constant 0 : index
    %c0_723 = arith.constant 0 : index
    %843 = vector.load %arg2[%c2_721, %c0_722, %c0_723] : memref<9x8x256xf32, #tpu.memory_space<vmem>>, vector<1x8x256xf32>
    %844 = vector.shape_cast %843 : vector<1x8x256xf32> to vector<8x256xf32>
    %845 = arith.mulf %842, %844 : vector<8x256xf32>
    %c1_i32_724 = arith.constant 1 : i32
    %846 = tpu.dynamic_rotate %830 by %c1_i32_724 dim 1 : vector<8x256xf32>, i32 -> vector<8x256xf32>
    %c3_725 = arith.constant 3 : index
    %c0_726 = arith.constant 0 : index
    %c0_727 = arith.constant 0 : index
    %847 = vector.load %arg2[%c3_725, %c0_726, %c0_727] : memref<9x8x256xf32, #tpu.memory_space<vmem>>, vector<1x8x256xf32>
    %848 = vector.shape_cast %847 : vector<1x8x256xf32> to vector<8x256xf32>
    %849 = arith.mulf %846, %848 : vector<8x256xf32>
    %c255_i32_728 = arith.constant 255 : i32
    %850 = tpu.dynamic_rotate %830 by %c255_i32_728 dim 1 : vector<8x256xf32>, i32 -> vector<8x256xf32>
    %c5_729 = arith.constant 5 : index
    %c0_730 = arith.constant 0 : index
    %c0_731 = arith.constant 0 : index
    %851 = vector.load %arg2[%c5_729, %c0_730, %c0_731] : memref<9x8x256xf32, #tpu.memory_space<vmem>>, vector<1x8x256xf32>
    %852 = vector.shape_cast %851 : vector<1x8x256xf32> to vector<8x256xf32>
    %853 = arith.mulf %850, %852 : vector<8x256xf32>
    %c241_i32_732 = arith.constant 241 : i32
    %854 = tpu.dynamic_rotate %830 by %c241_i32_732 dim 1 : vector<8x256xf32>, i32 -> vector<8x256xf32>
    %c6_733 = arith.constant 6 : index
    %c0_734 = arith.constant 0 : index
    %c0_735 = arith.constant 0 : index
    %855 = vector.load %arg2[%c6_733, %c0_734, %c0_735] : memref<9x8x256xf32, #tpu.memory_space<vmem>>, vector<1x8x256xf32>
    %856 = vector.shape_cast %855 : vector<1x8x256xf32> to vector<8x256xf32>
    %857 = arith.mulf %854, %856 : vector<8x256xf32>
    %c240_i32_736 = arith.constant 240 : i32
    %858 = tpu.dynamic_rotate %830 by %c240_i32_736 dim 1 : vector<8x256xf32>, i32 -> vector<8x256xf32>
    %c7_737 = arith.constant 7 : index
    %c0_738 = arith.constant 0 : index
    %c0_739 = arith.constant 0 : index
    %859 = vector.load %arg2[%c7_737, %c0_738, %c0_739] : memref<9x8x256xf32, #tpu.memory_space<vmem>>, vector<1x8x256xf32>
    %860 = vector.shape_cast %859 : vector<1x8x256xf32> to vector<8x256xf32>
    %861 = arith.mulf %858, %860 : vector<8x256xf32>
    %c239_i32_740 = arith.constant 239 : i32
    %862 = tpu.dynamic_rotate %830 by %c239_i32_740 dim 1 : vector<8x256xf32>, i32 -> vector<8x256xf32>
    %c8_741 = arith.constant 8 : index
    %c0_742 = arith.constant 0 : index
    %c0_743 = arith.constant 0 : index
    %863 = vector.load %arg2[%c8_741, %c0_742, %c0_743] : memref<9x8x256xf32, #tpu.memory_space<vmem>>, vector<1x8x256xf32>
    %864 = vector.shape_cast %863 : vector<1x8x256xf32> to vector<8x256xf32>
    %865 = arith.mulf %862, %864 : vector<8x256xf32>
    %c0_744 = arith.constant 0 : index
    %c0_745 = arith.constant 0 : index
    %c0_746 = arith.constant 0 : index
    %866 = vector.load %arg5[%c0_744, %c0_745, %c0_746] : memref<9x8x8xf32, #tpu.memory_space<vmem>>, vector<1x8x8xf32>
    %867 = vector.shape_cast %866 : vector<1x8x8xf32> to vector<8x8xf32>
    %cst_747 = arith.constant dense<0.000000e+00> : vector<8x256xf32>
    %868 = tpu.matmul %867, %658, %cst_747 {dimension_numbers = #tpu.dot_dimension_numbers<[1], [0], [0], [1], [0, 0, 1, 1], [], []>} : vector<8x8xf32>, vector<8x256xf32>, vector<8x256xf32> -> vector<8x256xf32>
    %c1_748 = arith.constant 1 : index
    %c0_749 = arith.constant 0 : index
    %c0_750 = arith.constant 0 : index
    %869 = vector.load %arg5[%c1_748, %c0_749, %c0_750] : memref<9x8x8xf32, #tpu.memory_space<vmem>>, vector<1x8x8xf32>
    %870 = vector.shape_cast %869 : vector<1x8x8xf32> to vector<8x8xf32>
    %cst_751 = arith.constant dense<0.000000e+00> : vector<8x256xf32>
    %871 = tpu.matmul %870, %662, %cst_751 {dimension_numbers = #tpu.dot_dimension_numbers<[1], [0], [0], [1], [0, 0, 1, 1], [], []>} : vector<8x8xf32>, vector<8x256xf32>, vector<8x256xf32> -> vector<8x256xf32>
    %872 = arith.addf %868, %871 : vector<8x256xf32>
    %c2_752 = arith.constant 2 : index
    %c0_753 = arith.constant 0 : index
    %c0_754 = arith.constant 0 : index
    %873 = vector.load %arg5[%c2_752, %c0_753, %c0_754] : memref<9x8x8xf32, #tpu.memory_space<vmem>>, vector<1x8x8xf32>
    %874 = vector.shape_cast %873 : vector<1x8x8xf32> to vector<8x8xf32>
    %cst_755 = arith.constant dense<0.000000e+00> : vector<8x256xf32>
    %875 = tpu.matmul %874, %666, %cst_755 {dimension_numbers = #tpu.dot_dimension_numbers<[1], [0], [0], [1], [0, 0, 1, 1], [], []>} : vector<8x8xf32>, vector<8x256xf32>, vector<8x256xf32> -> vector<8x256xf32>
    %876 = arith.addf %872, %875 : vector<8x256xf32>
    %c3_756 = arith.constant 3 : index
    %c0_757 = arith.constant 0 : index
    %c0_758 = arith.constant 0 : index
    %877 = vector.load %arg5[%c3_756, %c0_757, %c0_758] : memref<9x8x8xf32, #tpu.memory_space<vmem>>, vector<1x8x8xf32>
    %878 = vector.shape_cast %877 : vector<1x8x8xf32> to vector<8x8xf32>
    %cst_759 = arith.constant dense<0.000000e+00> : vector<8x256xf32>
    %879 = tpu.matmul %878, %670, %cst_759 {dimension_numbers = #tpu.dot_dimension_numbers<[1], [0], [0], [1], [0, 0, 1, 1], [], []>} : vector<8x8xf32>, vector<8x256xf32>, vector<8x256xf32> -> vector<8x256xf32>
    %880 = arith.addf %876, %879 : vector<8x256xf32>
    %c4_760 = arith.constant 4 : index
    %c0_761 = arith.constant 0 : index
    %c0_762 = arith.constant 0 : index
    %881 = vector.load %arg5[%c4_760, %c0_761, %c0_762] : memref<9x8x8xf32, #tpu.memory_space<vmem>>, vector<1x8x8xf32>
    %882 = vector.shape_cast %881 : vector<1x8x8xf32> to vector<8x8xf32>
    %cst_763 = arith.constant dense<0.000000e+00> : vector<8x256xf32>
    %883 = tpu.matmul %882, %651, %cst_763 {dimension_numbers = #tpu.dot_dimension_numbers<[1], [0], [0], [1], [0, 0, 1, 1], [], []>} : vector<8x8xf32>, vector<8x256xf32>, vector<8x256xf32> -> vector<8x256xf32>
    %884 = arith.addf %880, %883 : vector<8x256xf32>
    %c5_764 = arith.constant 5 : index
    %c0_765 = arith.constant 0 : index
    %c0_766 = arith.constant 0 : index
    %885 = vector.load %arg5[%c5_764, %c0_765, %c0_766] : memref<9x8x8xf32, #tpu.memory_space<vmem>>, vector<1x8x8xf32>
    %886 = vector.shape_cast %885 : vector<1x8x8xf32> to vector<8x8xf32>
    %cst_767 = arith.constant dense<0.000000e+00> : vector<8x256xf32>
    %887 = tpu.matmul %886, %674, %cst_767 {dimension_numbers = #tpu.dot_dimension_numbers<[1], [0], [0], [1], [0, 0, 1, 1], [], []>} : vector<8x8xf32>, vector<8x256xf32>, vector<8x256xf32> -> vector<8x256xf32>
    %888 = arith.addf %884, %887 : vector<8x256xf32>
    %c6_768 = arith.constant 6 : index
    %c0_769 = arith.constant 0 : index
    %c0_770 = arith.constant 0 : index
    %889 = vector.load %arg5[%c6_768, %c0_769, %c0_770] : memref<9x8x8xf32, #tpu.memory_space<vmem>>, vector<1x8x8xf32>
    %890 = vector.shape_cast %889 : vector<1x8x8xf32> to vector<8x8xf32>
    %cst_771 = arith.constant dense<0.000000e+00> : vector<8x256xf32>
    %891 = tpu.matmul %890, %678, %cst_771 {dimension_numbers = #tpu.dot_dimension_numbers<[1], [0], [0], [1], [0, 0, 1, 1], [], []>} : vector<8x8xf32>, vector<8x256xf32>, vector<8x256xf32> -> vector<8x256xf32>
    %892 = arith.addf %888, %891 : vector<8x256xf32>
    %c7_772 = arith.constant 7 : index
    %c0_773 = arith.constant 0 : index
    %c0_774 = arith.constant 0 : index
    %893 = vector.load %arg5[%c7_772, %c0_773, %c0_774] : memref<9x8x8xf32, #tpu.memory_space<vmem>>, vector<1x8x8xf32>
    %894 = vector.shape_cast %893 : vector<1x8x8xf32> to vector<8x8xf32>
    %cst_775 = arith.constant dense<0.000000e+00> : vector<8x256xf32>
    %895 = tpu.matmul %894, %682, %cst_775 {dimension_numbers = #tpu.dot_dimension_numbers<[1], [0], [0], [1], [0, 0, 1, 1], [], []>} : vector<8x8xf32>, vector<8x256xf32>, vector<8x256xf32> -> vector<8x256xf32>
    %896 = arith.addf %892, %895 : vector<8x256xf32>
    %c8_776 = arith.constant 8 : index
    %c0_777 = arith.constant 0 : index
    %c0_778 = arith.constant 0 : index
    %897 = vector.load %arg5[%c8_776, %c0_777, %c0_778] : memref<9x8x8xf32, #tpu.memory_space<vmem>>, vector<1x8x8xf32>
    %898 = vector.shape_cast %897 : vector<1x8x8xf32> to vector<8x8xf32>
    %cst_779 = arith.constant dense<0.000000e+00> : vector<8x256xf32>
    %899 = tpu.matmul %898, %686, %cst_779 {dimension_numbers = #tpu.dot_dimension_numbers<[1], [0], [0], [1], [0, 0, 1, 1], [], []>} : vector<8x8xf32>, vector<8x256xf32>, vector<8x256xf32> -> vector<8x256xf32>
    %900 = arith.addf %896, %899 : vector<8x256xf32>
    %c0_780 = arith.constant 0 : index
    %c0_781 = arith.constant 0 : index
    %c0_782 = arith.constant 0 : index
    %901 = vector.load %arg6[%c0_780, %c0_781, %c0_782] : memref<9x8x8xf32, #tpu.memory_space<vmem>>, vector<1x8x8xf32>
    %902 = vector.shape_cast %901 : vector<1x8x8xf32> to vector<8x8xf32>
    %cst_783 = arith.constant dense<0.000000e+00> : vector<8x256xf32>
    %903 = tpu.matmul %902, %837, %cst_783 {dimension_numbers = #tpu.dot_dimension_numbers<[1], [0], [0], [1], [0, 0, 1, 1], [], []>} : vector<8x8xf32>, vector<8x256xf32>, vector<8x256xf32> -> vector<8x256xf32>
    %904 = arith.addf %900, %903 : vector<8x256xf32>
    %c1_784 = arith.constant 1 : index
    %c0_785 = arith.constant 0 : index
    %c0_786 = arith.constant 0 : index
    %905 = vector.load %arg6[%c1_784, %c0_785, %c0_786] : memref<9x8x8xf32, #tpu.memory_space<vmem>>, vector<1x8x8xf32>
    %906 = vector.shape_cast %905 : vector<1x8x8xf32> to vector<8x8xf32>
    %cst_787 = arith.constant dense<0.000000e+00> : vector<8x256xf32>
    %907 = tpu.matmul %906, %841, %cst_787 {dimension_numbers = #tpu.dot_dimension_numbers<[1], [0], [0], [1], [0, 0, 1, 1], [], []>} : vector<8x8xf32>, vector<8x256xf32>, vector<8x256xf32> -> vector<8x256xf32>
    %908 = arith.addf %904, %907 : vector<8x256xf32>
    %c2_788 = arith.constant 2 : index
    %c0_789 = arith.constant 0 : index
    %c0_790 = arith.constant 0 : index
    %909 = vector.load %arg6[%c2_788, %c0_789, %c0_790] : memref<9x8x8xf32, #tpu.memory_space<vmem>>, vector<1x8x8xf32>
    %910 = vector.shape_cast %909 : vector<1x8x8xf32> to vector<8x8xf32>
    %cst_791 = arith.constant dense<0.000000e+00> : vector<8x256xf32>
    %911 = tpu.matmul %910, %845, %cst_791 {dimension_numbers = #tpu.dot_dimension_numbers<[1], [0], [0], [1], [0, 0, 1, 1], [], []>} : vector<8x8xf32>, vector<8x256xf32>, vector<8x256xf32> -> vector<8x256xf32>
    %912 = arith.addf %908, %911 : vector<8x256xf32>
    %c3_792 = arith.constant 3 : index
    %c0_793 = arith.constant 0 : index
    %c0_794 = arith.constant 0 : index
    %913 = vector.load %arg6[%c3_792, %c0_793, %c0_794] : memref<9x8x8xf32, #tpu.memory_space<vmem>>, vector<1x8x8xf32>
    %914 = vector.shape_cast %913 : vector<1x8x8xf32> to vector<8x8xf32>
    %cst_795 = arith.constant dense<0.000000e+00> : vector<8x256xf32>
    %915 = tpu.matmul %914, %849, %cst_795 {dimension_numbers = #tpu.dot_dimension_numbers<[1], [0], [0], [1], [0, 0, 1, 1], [], []>} : vector<8x8xf32>, vector<8x256xf32>, vector<8x256xf32> -> vector<8x256xf32>
    %916 = arith.addf %912, %915 : vector<8x256xf32>
    %c4_796 = arith.constant 4 : index
    %c0_797 = arith.constant 0 : index
    %c0_798 = arith.constant 0 : index
    %917 = vector.load %arg6[%c4_796, %c0_797, %c0_798] : memref<9x8x8xf32, #tpu.memory_space<vmem>>, vector<1x8x8xf32>
    %918 = vector.shape_cast %917 : vector<1x8x8xf32> to vector<8x8xf32>
    %cst_799 = arith.constant dense<0.000000e+00> : vector<8x256xf32>
    %919 = tpu.matmul %918, %830, %cst_799 {dimension_numbers = #tpu.dot_dimension_numbers<[1], [0], [0], [1], [0, 0, 1, 1], [], []>} : vector<8x8xf32>, vector<8x256xf32>, vector<8x256xf32> -> vector<8x256xf32>
    %920 = arith.addf %916, %919 : vector<8x256xf32>
    %c5_800 = arith.constant 5 : index
    %c0_801 = arith.constant 0 : index
    %c0_802 = arith.constant 0 : index
    %921 = vector.load %arg6[%c5_800, %c0_801, %c0_802] : memref<9x8x8xf32, #tpu.memory_space<vmem>>, vector<1x8x8xf32>
    %922 = vector.shape_cast %921 : vector<1x8x8xf32> to vector<8x8xf32>
    %cst_803 = arith.constant dense<0.000000e+00> : vector<8x256xf32>
    %923 = tpu.matmul %922, %853, %cst_803 {dimension_numbers = #tpu.dot_dimension_numbers<[1], [0], [0], [1], [0, 0, 1, 1], [], []>} : vector<8x8xf32>, vector<8x256xf32>, vector<8x256xf32> -> vector<8x256xf32>
    %924 = arith.addf %920, %923 : vector<8x256xf32>
    %c6_804 = arith.constant 6 : index
    %c0_805 = arith.constant 0 : index
    %c0_806 = arith.constant 0 : index
    %925 = vector.load %arg6[%c6_804, %c0_805, %c0_806] : memref<9x8x8xf32, #tpu.memory_space<vmem>>, vector<1x8x8xf32>
    %926 = vector.shape_cast %925 : vector<1x8x8xf32> to vector<8x8xf32>
    %cst_807 = arith.constant dense<0.000000e+00> : vector<8x256xf32>
    %927 = tpu.matmul %926, %857, %cst_807 {dimension_numbers = #tpu.dot_dimension_numbers<[1], [0], [0], [1], [0, 0, 1, 1], [], []>} : vector<8x8xf32>, vector<8x256xf32>, vector<8x256xf32> -> vector<8x256xf32>
    %928 = arith.addf %924, %927 : vector<8x256xf32>
    %c7_808 = arith.constant 7 : index
    %c0_809 = arith.constant 0 : index
    %c0_810 = arith.constant 0 : index
    %929 = vector.load %arg6[%c7_808, %c0_809, %c0_810] : memref<9x8x8xf32, #tpu.memory_space<vmem>>, vector<1x8x8xf32>
    %930 = vector.shape_cast %929 : vector<1x8x8xf32> to vector<8x8xf32>
    %cst_811 = arith.constant dense<0.000000e+00> : vector<8x256xf32>
    %931 = tpu.matmul %930, %861, %cst_811 {dimension_numbers = #tpu.dot_dimension_numbers<[1], [0], [0], [1], [0, 0, 1, 1], [], []>} : vector<8x8xf32>, vector<8x256xf32>, vector<8x256xf32> -> vector<8x256xf32>
    %932 = arith.addf %928, %931 : vector<8x256xf32>
    %c8_812 = arith.constant 8 : index
    %c0_813 = arith.constant 0 : index
    %c0_814 = arith.constant 0 : index
    %933 = vector.load %arg6[%c8_812, %c0_813, %c0_814] : memref<9x8x8xf32, #tpu.memory_space<vmem>>, vector<1x8x8xf32>
    %934 = vector.shape_cast %933 : vector<1x8x8xf32> to vector<8x8xf32>
    %cst_815 = arith.constant dense<0.000000e+00> : vector<8x256xf32>
    %935 = tpu.matmul %934, %865, %cst_815 {dimension_numbers = #tpu.dot_dimension_numbers<[1], [0], [0], [1], [0, 0, 1, 1], [], []>} : vector<8x8xf32>, vector<8x256xf32>, vector<8x256xf32> -> vector<8x256xf32>
    %936 = arith.addf %932, %935 : vector<8x256xf32>
    %cst_816 = arith.constant dense<0.000000e+00> : vector<8xf32>
    %937 = vector.multi_reduction <add>, %936, %cst_816 [1] : vector<8x256xf32> to vector<8xf32>
    %938 = vector.shape_cast %937 : vector<8xf32> to vector<8x1xf32>
    %cst_817 = arith.constant 2.560000e+02 : f32
    %939 = vector.broadcast %cst_817 : f32 to vector<8x1xf32>
    %940 = arith.divf %938, %939 : vector<8x1xf32>
    %941 = vector.broadcast %940 : vector<8x1xf32> to vector<8x256xf32>
    %942 = arith.subf %936, %941 : vector<8x256xf32>
    %943 = arith.mulf %942, %942 : vector<8x256xf32>
    %cst_818 = arith.constant dense<0.000000e+00> : vector<8xf32>
    %944 = vector.multi_reduction <add>, %943, %cst_818 [1] : vector<8x256xf32> to vector<8xf32>
    %945 = vector.shape_cast %944 : vector<8xf32> to vector<8x1xf32>
    %cst_819 = arith.constant 2.560000e+02 : f32
    %946 = vector.broadcast %cst_819 : f32 to vector<8x1xf32>
    %947 = arith.divf %945, %946 : vector<8x1xf32>
    %cst_820 = arith.constant 9.99999974E-6 : f32
    %948 = vector.broadcast %cst_820 : f32 to vector<8x1xf32>
    %949 = arith.addf %947, %948 : vector<8x1xf32>
    %950 = math.rsqrt %949 : vector<8x1xf32>
    %951 = vector.broadcast %950 : vector<8x1xf32> to vector<8x256xf32>
    %952 = arith.mulf %942, %951 : vector<8x256xf32>
    %cst_821 = arith.constant 0.000000e+00 : f32
    %953 = vector.broadcast %cst_821 : f32 to vector<8x256xf32>
    %954 = arith.cmpf oge, %952, %953 : vector<8x256xf32>
    %cst_822 = arith.constant 0.00999999977 : f32
    %955 = vector.broadcast %cst_822 : f32 to vector<8x256xf32>
    %956 = arith.mulf %955, %952 : vector<8x256xf32>
    %957 = arith.select %954, %952, %956 : vector<8x256xi1>, vector<8x256xf32>
    %c17_i32_823 = arith.constant 17 : i32
    %958 = tpu.dynamic_rotate %957 by %c17_i32_823 dim 1 : vector<8x256xf32>, i32 -> vector<8x256xf32>
    %c0_824 = arith.constant 0 : index
    %c0_825 = arith.constant 0 : index
    %c0_826 = arith.constant 0 : index
    %959 = vector.load %arg2[%c0_824, %c0_825, %c0_826] : memref<9x8x256xf32, #tpu.memory_space<vmem>>, vector<1x8x256xf32>
    %960 = vector.shape_cast %959 : vector<1x8x256xf32> to vector<8x256xf32>
    %961 = arith.mulf %958, %960 : vector<8x256xf32>
    %c16_i32_827 = arith.constant 16 : i32
    %962 = tpu.dynamic_rotate %957 by %c16_i32_827 dim 1 : vector<8x256xf32>, i32 -> vector<8x256xf32>
    %c1_828 = arith.constant 1 : index
    %c0_829 = arith.constant 0 : index
    %c0_830 = arith.constant 0 : index
    %963 = vector.load %arg2[%c1_828, %c0_829, %c0_830] : memref<9x8x256xf32, #tpu.memory_space<vmem>>, vector<1x8x256xf32>
    %964 = vector.shape_cast %963 : vector<1x8x256xf32> to vector<8x256xf32>
    %965 = arith.mulf %962, %964 : vector<8x256xf32>
    %c15_i32_831 = arith.constant 15 : i32
    %966 = tpu.dynamic_rotate %957 by %c15_i32_831 dim 1 : vector<8x256xf32>, i32 -> vector<8x256xf32>
    %c2_832 = arith.constant 2 : index
    %c0_833 = arith.constant 0 : index
    %c0_834 = arith.constant 0 : index
    %967 = vector.load %arg2[%c2_832, %c0_833, %c0_834] : memref<9x8x256xf32, #tpu.memory_space<vmem>>, vector<1x8x256xf32>
    %968 = vector.shape_cast %967 : vector<1x8x256xf32> to vector<8x256xf32>
    %969 = arith.mulf %966, %968 : vector<8x256xf32>
    %c1_i32_835 = arith.constant 1 : i32
    %970 = tpu.dynamic_rotate %957 by %c1_i32_835 dim 1 : vector<8x256xf32>, i32 -> vector<8x256xf32>
    %c3_836 = arith.constant 3 : index
    %c0_837 = arith.constant 0 : index
    %c0_838 = arith.constant 0 : index
    %971 = vector.load %arg2[%c3_836, %c0_837, %c0_838] : memref<9x8x256xf32, #tpu.memory_space<vmem>>, vector<1x8x256xf32>
    %972 = vector.shape_cast %971 : vector<1x8x256xf32> to vector<8x256xf32>
    %973 = arith.mulf %970, %972 : vector<8x256xf32>
    %c255_i32_839 = arith.constant 255 : i32
    %974 = tpu.dynamic_rotate %957 by %c255_i32_839 dim 1 : vector<8x256xf32>, i32 -> vector<8x256xf32>
    %c5_840 = arith.constant 5 : index
    %c0_841 = arith.constant 0 : index
    %c0_842 = arith.constant 0 : index
    %975 = vector.load %arg2[%c5_840, %c0_841, %c0_842] : memref<9x8x256xf32, #tpu.memory_space<vmem>>, vector<1x8x256xf32>
    %976 = vector.shape_cast %975 : vector<1x8x256xf32> to vector<8x256xf32>
    %977 = arith.mulf %974, %976 : vector<8x256xf32>
    %c241_i32_843 = arith.constant 241 : i32
    %978 = tpu.dynamic_rotate %957 by %c241_i32_843 dim 1 : vector<8x256xf32>, i32 -> vector<8x256xf32>
    %c6_844 = arith.constant 6 : index
    %c0_845 = arith.constant 0 : index
    %c0_846 = arith.constant 0 : index
    %979 = vector.load %arg2[%c6_844, %c0_845, %c0_846] : memref<9x8x256xf32, #tpu.memory_space<vmem>>, vector<1x8x256xf32>
    %980 = vector.shape_cast %979 : vector<1x8x256xf32> to vector<8x256xf32>
    %981 = arith.mulf %978, %980 : vector<8x256xf32>
    %c240_i32_847 = arith.constant 240 : i32
    %982 = tpu.dynamic_rotate %957 by %c240_i32_847 dim 1 : vector<8x256xf32>, i32 -> vector<8x256xf32>
    %c7_848 = arith.constant 7 : index
    %c0_849 = arith.constant 0 : index
    %c0_850 = arith.constant 0 : index
    %983 = vector.load %arg2[%c7_848, %c0_849, %c0_850] : memref<9x8x256xf32, #tpu.memory_space<vmem>>, vector<1x8x256xf32>
    %984 = vector.shape_cast %983 : vector<1x8x256xf32> to vector<8x256xf32>
    %985 = arith.mulf %982, %984 : vector<8x256xf32>
    %c239_i32_851 = arith.constant 239 : i32
    %986 = tpu.dynamic_rotate %957 by %c239_i32_851 dim 1 : vector<8x256xf32>, i32 -> vector<8x256xf32>
    %c8_852 = arith.constant 8 : index
    %c0_853 = arith.constant 0 : index
    %c0_854 = arith.constant 0 : index
    %987 = vector.load %arg2[%c8_852, %c0_853, %c0_854] : memref<9x8x256xf32, #tpu.memory_space<vmem>>, vector<1x8x256xf32>
    %988 = vector.shape_cast %987 : vector<1x8x256xf32> to vector<8x256xf32>
    %989 = arith.mulf %986, %988 : vector<8x256xf32>
    %c0_855 = arith.constant 0 : index
    %c0_856 = arith.constant 0 : index
    %c0_857 = arith.constant 0 : index
    %990 = vector.load %arg7[%c0_855, %c0_856, %c0_857] : memref<9x8x8xf32, #tpu.memory_space<vmem>>, vector<1x8x8xf32>
    %991 = vector.shape_cast %990 : vector<1x8x8xf32> to vector<8x8xf32>
    %cst_858 = arith.constant dense<0.000000e+00> : vector<8x256xf32>
    %992 = tpu.matmul %991, %961, %cst_858 {dimension_numbers = #tpu.dot_dimension_numbers<[1], [0], [0], [1], [0, 0, 1, 1], [], []>} : vector<8x8xf32>, vector<8x256xf32>, vector<8x256xf32> -> vector<8x256xf32>
    %c1_859 = arith.constant 1 : index
    %c0_860 = arith.constant 0 : index
    %c0_861 = arith.constant 0 : index
    %993 = vector.load %arg7[%c1_859, %c0_860, %c0_861] : memref<9x8x8xf32, #tpu.memory_space<vmem>>, vector<1x8x8xf32>
    %994 = vector.shape_cast %993 : vector<1x8x8xf32> to vector<8x8xf32>
    %cst_862 = arith.constant dense<0.000000e+00> : vector<8x256xf32>
    %995 = tpu.matmul %994, %965, %cst_862 {dimension_numbers = #tpu.dot_dimension_numbers<[1], [0], [0], [1], [0, 0, 1, 1], [], []>} : vector<8x8xf32>, vector<8x256xf32>, vector<8x256xf32> -> vector<8x256xf32>
    %996 = arith.addf %992, %995 : vector<8x256xf32>
    %c2_863 = arith.constant 2 : index
    %c0_864 = arith.constant 0 : index
    %c0_865 = arith.constant 0 : index
    %997 = vector.load %arg7[%c2_863, %c0_864, %c0_865] : memref<9x8x8xf32, #tpu.memory_space<vmem>>, vector<1x8x8xf32>
    %998 = vector.shape_cast %997 : vector<1x8x8xf32> to vector<8x8xf32>
    %cst_866 = arith.constant dense<0.000000e+00> : vector<8x256xf32>
    %999 = tpu.matmul %998, %969, %cst_866 {dimension_numbers = #tpu.dot_dimension_numbers<[1], [0], [0], [1], [0, 0, 1, 1], [], []>} : vector<8x8xf32>, vector<8x256xf32>, vector<8x256xf32> -> vector<8x256xf32>
    %1000 = arith.addf %996, %999 : vector<8x256xf32>
    %c3_867 = arith.constant 3 : index
    %c0_868 = arith.constant 0 : index
    %c0_869 = arith.constant 0 : index
    %1001 = vector.load %arg7[%c3_867, %c0_868, %c0_869] : memref<9x8x8xf32, #tpu.memory_space<vmem>>, vector<1x8x8xf32>
    %1002 = vector.shape_cast %1001 : vector<1x8x8xf32> to vector<8x8xf32>
    %cst_870 = arith.constant dense<0.000000e+00> : vector<8x256xf32>
    %1003 = tpu.matmul %1002, %973, %cst_870 {dimension_numbers = #tpu.dot_dimension_numbers<[1], [0], [0], [1], [0, 0, 1, 1], [], []>} : vector<8x8xf32>, vector<8x256xf32>, vector<8x256xf32> -> vector<8x256xf32>
    %1004 = arith.addf %1000, %1003 : vector<8x256xf32>
    %c4_871 = arith.constant 4 : index
    %c0_872 = arith.constant 0 : index
    %c0_873 = arith.constant 0 : index
    %1005 = vector.load %arg7[%c4_871, %c0_872, %c0_873] : memref<9x8x8xf32, #tpu.memory_space<vmem>>, vector<1x8x8xf32>
    %1006 = vector.shape_cast %1005 : vector<1x8x8xf32> to vector<8x8xf32>
    %cst_874 = arith.constant dense<0.000000e+00> : vector<8x256xf32>
    %1007 = tpu.matmul %1006, %957, %cst_874 {dimension_numbers = #tpu.dot_dimension_numbers<[1], [0], [0], [1], [0, 0, 1, 1], [], []>} : vector<8x8xf32>, vector<8x256xf32>, vector<8x256xf32> -> vector<8x256xf32>
    %1008 = arith.addf %1004, %1007 : vector<8x256xf32>
    %c5_875 = arith.constant 5 : index
    %c0_876 = arith.constant 0 : index
    %c0_877 = arith.constant 0 : index
    %1009 = vector.load %arg7[%c5_875, %c0_876, %c0_877] : memref<9x8x8xf32, #tpu.memory_space<vmem>>, vector<1x8x8xf32>
    %1010 = vector.shape_cast %1009 : vector<1x8x8xf32> to vector<8x8xf32>
    %cst_878 = arith.constant dense<0.000000e+00> : vector<8x256xf32>
    %1011 = tpu.matmul %1010, %977, %cst_878 {dimension_numbers = #tpu.dot_dimension_numbers<[1], [0], [0], [1], [0, 0, 1, 1], [], []>} : vector<8x8xf32>, vector<8x256xf32>, vector<8x256xf32> -> vector<8x256xf32>
    %1012 = arith.addf %1008, %1011 : vector<8x256xf32>
    %c6_879 = arith.constant 6 : index
    %c0_880 = arith.constant 0 : index
    %c0_881 = arith.constant 0 : index
    %1013 = vector.load %arg7[%c6_879, %c0_880, %c0_881] : memref<9x8x8xf32, #tpu.memory_space<vmem>>, vector<1x8x8xf32>
    %1014 = vector.shape_cast %1013 : vector<1x8x8xf32> to vector<8x8xf32>
    %cst_882 = arith.constant dense<0.000000e+00> : vector<8x256xf32>
    %1015 = tpu.matmul %1014, %981, %cst_882 {dimension_numbers = #tpu.dot_dimension_numbers<[1], [0], [0], [1], [0, 0, 1, 1], [], []>} : vector<8x8xf32>, vector<8x256xf32>, vector<8x256xf32> -> vector<8x256xf32>
    %1016 = arith.addf %1012, %1015 : vector<8x256xf32>
    %c7_883 = arith.constant 7 : index
    %c0_884 = arith.constant 0 : index
    %c0_885 = arith.constant 0 : index
    %1017 = vector.load %arg7[%c7_883, %c0_884, %c0_885] : memref<9x8x8xf32, #tpu.memory_space<vmem>>, vector<1x8x8xf32>
    %1018 = vector.shape_cast %1017 : vector<1x8x8xf32> to vector<8x8xf32>
    %cst_886 = arith.constant dense<0.000000e+00> : vector<8x256xf32>
    %1019 = tpu.matmul %1018, %985, %cst_886 {dimension_numbers = #tpu.dot_dimension_numbers<[1], [0], [0], [1], [0, 0, 1, 1], [], []>} : vector<8x8xf32>, vector<8x256xf32>, vector<8x256xf32> -> vector<8x256xf32>
    %1020 = arith.addf %1016, %1019 : vector<8x256xf32>
    %c8_887 = arith.constant 8 : index
    %c0_888 = arith.constant 0 : index
    %c0_889 = arith.constant 0 : index
    %1021 = vector.load %arg7[%c8_887, %c0_888, %c0_889] : memref<9x8x8xf32, #tpu.memory_space<vmem>>, vector<1x8x8xf32>
    %1022 = vector.shape_cast %1021 : vector<1x8x8xf32> to vector<8x8xf32>
    %cst_890 = arith.constant dense<0.000000e+00> : vector<8x256xf32>
    %1023 = tpu.matmul %1022, %989, %cst_890 {dimension_numbers = #tpu.dot_dimension_numbers<[1], [0], [0], [1], [0, 0, 1, 1], [], []>} : vector<8x8xf32>, vector<8x256xf32>, vector<8x256xf32> -> vector<8x256xf32>
    %1024 = arith.addf %1020, %1023 : vector<8x256xf32>
    %cst_891 = arith.constant dense<0.000000e+00> : vector<8xf32>
    %1025 = vector.multi_reduction <add>, %1024, %cst_891 [1] : vector<8x256xf32> to vector<8xf32>
    %1026 = vector.shape_cast %1025 : vector<8xf32> to vector<8x1xf32>
    %cst_892 = arith.constant 2.560000e+02 : f32
    %1027 = vector.broadcast %cst_892 : f32 to vector<8x1xf32>
    %1028 = arith.divf %1026, %1027 : vector<8x1xf32>
    %1029 = vector.broadcast %1028 : vector<8x1xf32> to vector<8x256xf32>
    %1030 = arith.subf %1024, %1029 : vector<8x256xf32>
    %1031 = arith.mulf %1030, %1030 : vector<8x256xf32>
    %cst_893 = arith.constant dense<0.000000e+00> : vector<8xf32>
    %1032 = vector.multi_reduction <add>, %1031, %cst_893 [1] : vector<8x256xf32> to vector<8xf32>
    %1033 = vector.shape_cast %1032 : vector<8xf32> to vector<8x1xf32>
    %cst_894 = arith.constant 2.560000e+02 : f32
    %1034 = vector.broadcast %cst_894 : f32 to vector<8x1xf32>
    %1035 = arith.divf %1033, %1034 : vector<8x1xf32>
    %cst_895 = arith.constant 9.99999974E-6 : f32
    %1036 = vector.broadcast %cst_895 : f32 to vector<8x1xf32>
    %1037 = arith.addf %1035, %1036 : vector<8x1xf32>
    %1038 = math.rsqrt %1037 : vector<8x1xf32>
    %1039 = vector.broadcast %1038 : vector<8x1xf32> to vector<8x256xf32>
    %1040 = arith.mulf %1030, %1039 : vector<8x256xf32>
    %cst_896 = arith.constant 0.000000e+00 : f32
    %1041 = vector.broadcast %cst_896 : f32 to vector<8x256xf32>
    %1042 = arith.cmpf oge, %1040, %1041 : vector<8x256xf32>
    %cst_897 = arith.constant 0.00999999977 : f32
    %1043 = vector.broadcast %cst_897 : f32 to vector<8x256xf32>
    %1044 = arith.mulf %1043, %1040 : vector<8x256xf32>
    %1045 = arith.select %1042, %1040, %1044 : vector<8x256xi1>, vector<8x256xf32>
    %c1_898 = arith.constant 1 : index
    %c16_899 = arith.constant 16 : index
    %c0_900 = arith.constant 0 : index
    %1046 = vector.load %arg12[%c1_898, %c16_899, %c0_900] : memref<2x32x256xf32, #tpu.memory_space<vmem>>, vector<1x8x256xf32>
    %1047 = vector.shape_cast %1046 : vector<1x8x256xf32> to vector<8x256xf32>
    %1048 = vector.shape_cast %1045 : vector<8x256xf32> to vector<1x8x256xf32>
    tpu.vector_store %arg12[%c1_898, %c16_899, %c0_900], %1048 {strides = array<i32>} : memref<2x32x256xf32, #tpu.memory_space<vmem>>, vector<1x8x256xf32>,
    %c17_i32_901 = arith.constant 17 : i32
    %1049 = tpu.dynamic_rotate %1045 by %c17_i32_901 dim 1 : vector<8x256xf32>, i32 -> vector<8x256xf32>
    %c0_902 = arith.constant 0 : index
    %c0_903 = arith.constant 0 : index
    %c0_904 = arith.constant 0 : index
    %1050 = vector.load %arg2[%c0_902, %c0_903, %c0_904] : memref<9x8x256xf32, #tpu.memory_space<vmem>>, vector<1x8x256xf32>
    %1051 = vector.shape_cast %1050 : vector<1x8x256xf32> to vector<8x256xf32>
    %1052 = arith.mulf %1049, %1051 : vector<8x256xf32>
    %c16_i32_905 = arith.constant 16 : i32
    %1053 = tpu.dynamic_rotate %1045 by %c16_i32_905 dim 1 : vector<8x256xf32>, i32 -> vector<8x256xf32>
    %c1_906 = arith.constant 1 : index
    %c0_907 = arith.constant 0 : index
    %c0_908 = arith.constant 0 : index
    %1054 = vector.load %arg2[%c1_906, %c0_907, %c0_908] : memref<9x8x256xf32, #tpu.memory_space<vmem>>, vector<1x8x256xf32>
    %1055 = vector.shape_cast %1054 : vector<1x8x256xf32> to vector<8x256xf32>
    %1056 = arith.mulf %1053, %1055 : vector<8x256xf32>
    %c15_i32_909 = arith.constant 15 : i32
    %1057 = tpu.dynamic_rotate %1045 by %c15_i32_909 dim 1 : vector<8x256xf32>, i32 -> vector<8x256xf32>
    %c2_910 = arith.constant 2 : index
    %c0_911 = arith.constant 0 : index
    %c0_912 = arith.constant 0 : index
    %1058 = vector.load %arg2[%c2_910, %c0_911, %c0_912] : memref<9x8x256xf32, #tpu.memory_space<vmem>>, vector<1x8x256xf32>
    %1059 = vector.shape_cast %1058 : vector<1x8x256xf32> to vector<8x256xf32>
    %1060 = arith.mulf %1057, %1059 : vector<8x256xf32>
    %c1_i32_913 = arith.constant 1 : i32
    %1061 = tpu.dynamic_rotate %1045 by %c1_i32_913 dim 1 : vector<8x256xf32>, i32 -> vector<8x256xf32>
    %c3_914 = arith.constant 3 : index
    %c0_915 = arith.constant 0 : index
    %c0_916 = arith.constant 0 : index
    %1062 = vector.load %arg2[%c3_914, %c0_915, %c0_916] : memref<9x8x256xf32, #tpu.memory_space<vmem>>, vector<1x8x256xf32>
    %1063 = vector.shape_cast %1062 : vector<1x8x256xf32> to vector<8x256xf32>
    %1064 = arith.mulf %1061, %1063 : vector<8x256xf32>
    %c255_i32_917 = arith.constant 255 : i32
    %1065 = tpu.dynamic_rotate %1045 by %c255_i32_917 dim 1 : vector<8x256xf32>, i32 -> vector<8x256xf32>
    %c5_918 = arith.constant 5 : index
    %c0_919 = arith.constant 0 : index
    %c0_920 = arith.constant 0 : index
    %1066 = vector.load %arg2[%c5_918, %c0_919, %c0_920] : memref<9x8x256xf32, #tpu.memory_space<vmem>>, vector<1x8x256xf32>
    %1067 = vector.shape_cast %1066 : vector<1x8x256xf32> to vector<8x256xf32>
    %1068 = arith.mulf %1065, %1067 : vector<8x256xf32>
    %c241_i32_921 = arith.constant 241 : i32
    %1069 = tpu.dynamic_rotate %1045 by %c241_i32_921 dim 1 : vector<8x256xf32>, i32 -> vector<8x256xf32>
    %c6_922 = arith.constant 6 : index
    %c0_923 = arith.constant 0 : index
    %c0_924 = arith.constant 0 : index
    %1070 = vector.load %arg2[%c6_922, %c0_923, %c0_924] : memref<9x8x256xf32, #tpu.memory_space<vmem>>, vector<1x8x256xf32>
    %1071 = vector.shape_cast %1070 : vector<1x8x256xf32> to vector<8x256xf32>
    %1072 = arith.mulf %1069, %1071 : vector<8x256xf32>
    %c240_i32_925 = arith.constant 240 : i32
    %1073 = tpu.dynamic_rotate %1045 by %c240_i32_925 dim 1 : vector<8x256xf32>, i32 -> vector<8x256xf32>
    %c7_926 = arith.constant 7 : index
    %c0_927 = arith.constant 0 : index
    %c0_928 = arith.constant 0 : index
    %1074 = vector.load %arg2[%c7_926, %c0_927, %c0_928] : memref<9x8x256xf32, #tpu.memory_space<vmem>>, vector<1x8x256xf32>
    %1075 = vector.shape_cast %1074 : vector<1x8x256xf32> to vector<8x256xf32>
    %1076 = arith.mulf %1073, %1075 : vector<8x256xf32>
    %c239_i32_929 = arith.constant 239 : i32
    %1077 = tpu.dynamic_rotate %1045 by %c239_i32_929 dim 1 : vector<8x256xf32>, i32 -> vector<8x256xf32>
    %c8_930 = arith.constant 8 : index
    %c0_931 = arith.constant 0 : index
    %c0_932 = arith.constant 0 : index
    %1078 = vector.load %arg2[%c8_930, %c0_931, %c0_932] : memref<9x8x256xf32, #tpu.memory_space<vmem>>, vector<1x8x256xf32>
    %1079 = vector.shape_cast %1078 : vector<1x8x256xf32> to vector<8x256xf32>
    %1080 = arith.mulf %1077, %1079 : vector<8x256xf32>
    %c0_933 = arith.constant 0 : index
    %c0_934 = arith.constant 0 : index
    %c0_935 = arith.constant 0 : index
    %1081 = vector.load %arg8[%c0_933, %c0_934, %c0_935] : memref<9x8x8xf32, #tpu.memory_space<vmem>>, vector<1x8x8xf32>
    %1082 = vector.shape_cast %1081 : vector<1x8x8xf32> to vector<8x8xf32>
    %cst_936 = arith.constant dense<0.000000e+00> : vector<8x256xf32>
    %1083 = tpu.matmul %1082, %658, %cst_936 {dimension_numbers = #tpu.dot_dimension_numbers<[1], [0], [0], [1], [0, 0, 1, 1], [], []>} : vector<8x8xf32>, vector<8x256xf32>, vector<8x256xf32> -> vector<8x256xf32>
    %c1_937 = arith.constant 1 : index
    %c0_938 = arith.constant 0 : index
    %c0_939 = arith.constant 0 : index
    %1084 = vector.load %arg8[%c1_937, %c0_938, %c0_939] : memref<9x8x8xf32, #tpu.memory_space<vmem>>, vector<1x8x8xf32>
    %1085 = vector.shape_cast %1084 : vector<1x8x8xf32> to vector<8x8xf32>
    %cst_940 = arith.constant dense<0.000000e+00> : vector<8x256xf32>
    %1086 = tpu.matmul %1085, %662, %cst_940 {dimension_numbers = #tpu.dot_dimension_numbers<[1], [0], [0], [1], [0, 0, 1, 1], [], []>} : vector<8x8xf32>, vector<8x256xf32>, vector<8x256xf32> -> vector<8x256xf32>
    %1087 = arith.addf %1083, %1086 : vector<8x256xf32>
    %c2_941 = arith.constant 2 : index
    %c0_942 = arith.constant 0 : index
    %c0_943 = arith.constant 0 : index
    %1088 = vector.load %arg8[%c2_941, %c0_942, %c0_943] : memref<9x8x8xf32, #tpu.memory_space<vmem>>, vector<1x8x8xf32>
    %1089 = vector.shape_cast %1088 : vector<1x8x8xf32> to vector<8x8xf32>
    %cst_944 = arith.constant dense<0.000000e+00> : vector<8x256xf32>
    %1090 = tpu.matmul %1089, %666, %cst_944 {dimension_numbers = #tpu.dot_dimension_numbers<[1], [0], [0], [1], [0, 0, 1, 1], [], []>} : vector<8x8xf32>, vector<8x256xf32>, vector<8x256xf32> -> vector<8x256xf32>
    %1091 = arith.addf %1087, %1090 : vector<8x256xf32>
    %c3_945 = arith.constant 3 : index
    %c0_946 = arith.constant 0 : index
    %c0_947 = arith.constant 0 : index
    %1092 = vector.load %arg8[%c3_945, %c0_946, %c0_947] : memref<9x8x8xf32, #tpu.memory_space<vmem>>, vector<1x8x8xf32>
    %1093 = vector.shape_cast %1092 : vector<1x8x8xf32> to vector<8x8xf32>
    %cst_948 = arith.constant dense<0.000000e+00> : vector<8x256xf32>
    %1094 = tpu.matmul %1093, %670, %cst_948 {dimension_numbers = #tpu.dot_dimension_numbers<[1], [0], [0], [1], [0, 0, 1, 1], [], []>} : vector<8x8xf32>, vector<8x256xf32>, vector<8x256xf32> -> vector<8x256xf32>
    %1095 = arith.addf %1091, %1094 : vector<8x256xf32>
    %c4_949 = arith.constant 4 : index
    %c0_950 = arith.constant 0 : index
    %c0_951 = arith.constant 0 : index
    %1096 = vector.load %arg8[%c4_949, %c0_950, %c0_951] : memref<9x8x8xf32, #tpu.memory_space<vmem>>, vector<1x8x8xf32>
    %1097 = vector.shape_cast %1096 : vector<1x8x8xf32> to vector<8x8xf32>
    %cst_952 = arith.constant dense<0.000000e+00> : vector<8x256xf32>
    %1098 = tpu.matmul %1097, %651, %cst_952 {dimension_numbers = #tpu.dot_dimension_numbers<[1], [0], [0], [1], [0, 0, 1, 1], [], []>} : vector<8x8xf32>, vector<8x256xf32>, vector<8x256xf32> -> vector<8x256xf32>
    %1099 = arith.addf %1095, %1098 : vector<8x256xf32>
    %c5_953 = arith.constant 5 : index
    %c0_954 = arith.constant 0 : index
    %c0_955 = arith.constant 0 : index
    %1100 = vector.load %arg8[%c5_953, %c0_954, %c0_955] : memref<9x8x8xf32, #tpu.memory_space<vmem>>, vector<1x8x8xf32>
    %1101 = vector.shape_cast %1100 : vector<1x8x8xf32> to vector<8x8xf32>
    %cst_956 = arith.constant dense<0.000000e+00> : vector<8x256xf32>
    %1102 = tpu.matmul %1101, %674, %cst_956 {dimension_numbers = #tpu.dot_dimension_numbers<[1], [0], [0], [1], [0, 0, 1, 1], [], []>} : vector<8x8xf32>, vector<8x256xf32>, vector<8x256xf32> -> vector<8x256xf32>
    %1103 = arith.addf %1099, %1102 : vector<8x256xf32>
    %c6_957 = arith.constant 6 : index
    %c0_958 = arith.constant 0 : index
    %c0_959 = arith.constant 0 : index
    %1104 = vector.load %arg8[%c6_957, %c0_958, %c0_959] : memref<9x8x8xf32, #tpu.memory_space<vmem>>, vector<1x8x8xf32>
    %1105 = vector.shape_cast %1104 : vector<1x8x8xf32> to vector<8x8xf32>
    %cst_960 = arith.constant dense<0.000000e+00> : vector<8x256xf32>
    %1106 = tpu.matmul %1105, %678, %cst_960 {dimension_numbers = #tpu.dot_dimension_numbers<[1], [0], [0], [1], [0, 0, 1, 1], [], []>} : vector<8x8xf32>, vector<8x256xf32>, vector<8x256xf32> -> vector<8x256xf32>
    %1107 = arith.addf %1103, %1106 : vector<8x256xf32>
    %c7_961 = arith.constant 7 : index
    %c0_962 = arith.constant 0 : index
    %c0_963 = arith.constant 0 : index
    %1108 = vector.load %arg8[%c7_961, %c0_962, %c0_963] : memref<9x8x8xf32, #tpu.memory_space<vmem>>, vector<1x8x8xf32>
    %1109 = vector.shape_cast %1108 : vector<1x8x8xf32> to vector<8x8xf32>
    %cst_964 = arith.constant dense<0.000000e+00> : vector<8x256xf32>
    %1110 = tpu.matmul %1109, %682, %cst_964 {dimension_numbers = #tpu.dot_dimension_numbers<[1], [0], [0], [1], [0, 0, 1, 1], [], []>} : vector<8x8xf32>, vector<8x256xf32>, vector<8x256xf32> -> vector<8x256xf32>
    %1111 = arith.addf %1107, %1110 : vector<8x256xf32>
    %c8_965 = arith.constant 8 : index
    %c0_966 = arith.constant 0 : index
    %c0_967 = arith.constant 0 : index
    %1112 = vector.load %arg8[%c8_965, %c0_966, %c0_967] : memref<9x8x8xf32, #tpu.memory_space<vmem>>, vector<1x8x8xf32>
    %1113 = vector.shape_cast %1112 : vector<1x8x8xf32> to vector<8x8xf32>
    %cst_968 = arith.constant dense<0.000000e+00> : vector<8x256xf32>
    %1114 = tpu.matmul %1113, %686, %cst_968 {dimension_numbers = #tpu.dot_dimension_numbers<[1], [0], [0], [1], [0, 0, 1, 1], [], []>} : vector<8x8xf32>, vector<8x256xf32>, vector<8x256xf32> -> vector<8x256xf32>
    %1115 = arith.addf %1111, %1114 : vector<8x256xf32>
    %c0_969 = arith.constant 0 : index
    %c0_970 = arith.constant 0 : index
    %c0_971 = arith.constant 0 : index
    %1116 = vector.load %arg9[%c0_969, %c0_970, %c0_971] : memref<9x8x8xf32, #tpu.memory_space<vmem>>, vector<1x8x8xf32>
    %1117 = vector.shape_cast %1116 : vector<1x8x8xf32> to vector<8x8xf32>
    %cst_972 = arith.constant dense<0.000000e+00> : vector<8x256xf32>
    %1118 = tpu.matmul %1117, %837, %cst_972 {dimension_numbers = #tpu.dot_dimension_numbers<[1], [0], [0], [1], [0, 0, 1, 1], [], []>} : vector<8x8xf32>, vector<8x256xf32>, vector<8x256xf32> -> vector<8x256xf32>
    %1119 = arith.addf %1115, %1118 : vector<8x256xf32>
    %c1_973 = arith.constant 1 : index
    %c0_974 = arith.constant 0 : index
    %c0_975 = arith.constant 0 : index
    %1120 = vector.load %arg9[%c1_973, %c0_974, %c0_975] : memref<9x8x8xf32, #tpu.memory_space<vmem>>, vector<1x8x8xf32>
    %1121 = vector.shape_cast %1120 : vector<1x8x8xf32> to vector<8x8xf32>
    %cst_976 = arith.constant dense<0.000000e+00> : vector<8x256xf32>
    %1122 = tpu.matmul %1121, %841, %cst_976 {dimension_numbers = #tpu.dot_dimension_numbers<[1], [0], [0], [1], [0, 0, 1, 1], [], []>} : vector<8x8xf32>, vector<8x256xf32>, vector<8x256xf32> -> vector<8x256xf32>
    %1123 = arith.addf %1119, %1122 : vector<8x256xf32>
    %c2_977 = arith.constant 2 : index
    %c0_978 = arith.constant 0 : index
    %c0_979 = arith.constant 0 : index
    %1124 = vector.load %arg9[%c2_977, %c0_978, %c0_979] : memref<9x8x8xf32, #tpu.memory_space<vmem>>, vector<1x8x8xf32>
    %1125 = vector.shape_cast %1124 : vector<1x8x8xf32> to vector<8x8xf32>
    %cst_980 = arith.constant dense<0.000000e+00> : vector<8x256xf32>
    %1126 = tpu.matmul %1125, %845, %cst_980 {dimension_numbers = #tpu.dot_dimension_numbers<[1], [0], [0], [1], [0, 0, 1, 1], [], []>} : vector<8x8xf32>, vector<8x256xf32>, vector<8x256xf32> -> vector<8x256xf32>
    %1127 = arith.addf %1123, %1126 : vector<8x256xf32>
    %c3_981 = arith.constant 3 : index
    %c0_982 = arith.constant 0 : index
    %c0_983 = arith.constant 0 : index
    %1128 = vector.load %arg9[%c3_981, %c0_982, %c0_983] : memref<9x8x8xf32, #tpu.memory_space<vmem>>, vector<1x8x8xf32>
    %1129 = vector.shape_cast %1128 : vector<1x8x8xf32> to vector<8x8xf32>
    %cst_984 = arith.constant dense<0.000000e+00> : vector<8x256xf32>
    %1130 = tpu.matmul %1129, %849, %cst_984 {dimension_numbers = #tpu.dot_dimension_numbers<[1], [0], [0], [1], [0, 0, 1, 1], [], []>} : vector<8x8xf32>, vector<8x256xf32>, vector<8x256xf32> -> vector<8x256xf32>
    %1131 = arith.addf %1127, %1130 : vector<8x256xf32>
    %c4_985 = arith.constant 4 : index
    %c0_986 = arith.constant 0 : index
    %c0_987 = arith.constant 0 : index
    %1132 = vector.load %arg9[%c4_985, %c0_986, %c0_987] : memref<9x8x8xf32, #tpu.memory_space<vmem>>, vector<1x8x8xf32>
    %1133 = vector.shape_cast %1132 : vector<1x8x8xf32> to vector<8x8xf32>
    %cst_988 = arith.constant dense<0.000000e+00> : vector<8x256xf32>
    %1134 = tpu.matmul %1133, %830, %cst_988 {dimension_numbers = #tpu.dot_dimension_numbers<[1], [0], [0], [1], [0, 0, 1, 1], [], []>} : vector<8x8xf32>, vector<8x256xf32>, vector<8x256xf32> -> vector<8x256xf32>
    %1135 = arith.addf %1131, %1134 : vector<8x256xf32>
    %c5_989 = arith.constant 5 : index
    %c0_990 = arith.constant 0 : index
    %c0_991 = arith.constant 0 : index
    %1136 = vector.load %arg9[%c5_989, %c0_990, %c0_991] : memref<9x8x8xf32, #tpu.memory_space<vmem>>, vector<1x8x8xf32>
    %1137 = vector.shape_cast %1136 : vector<1x8x8xf32> to vector<8x8xf32>
    %cst_992 = arith.constant dense<0.000000e+00> : vector<8x256xf32>
    %1138 = tpu.matmul %1137, %853, %cst_992 {dimension_numbers = #tpu.dot_dimension_numbers<[1], [0], [0], [1], [0, 0, 1, 1], [], []>} : vector<8x8xf32>, vector<8x256xf32>, vector<8x256xf32> -> vector<8x256xf32>
    %1139 = arith.addf %1135, %1138 : vector<8x256xf32>
    %c6_993 = arith.constant 6 : index
    %c0_994 = arith.constant 0 : index
    %c0_995 = arith.constant 0 : index
    %1140 = vector.load %arg9[%c6_993, %c0_994, %c0_995] : memref<9x8x8xf32, #tpu.memory_space<vmem>>, vector<1x8x8xf32>
    %1141 = vector.shape_cast %1140 : vector<1x8x8xf32> to vector<8x8xf32>
    %cst_996 = arith.constant dense<0.000000e+00> : vector<8x256xf32>
    %1142 = tpu.matmul %1141, %857, %cst_996 {dimension_numbers = #tpu.dot_dimension_numbers<[1], [0], [0], [1], [0, 0, 1, 1], [], []>} : vector<8x8xf32>, vector<8x256xf32>, vector<8x256xf32> -> vector<8x256xf32>
    %1143 = arith.addf %1139, %1142 : vector<8x256xf32>
    %c7_997 = arith.constant 7 : index
    %c0_998 = arith.constant 0 : index
    %c0_999 = arith.constant 0 : index
    %1144 = vector.load %arg9[%c7_997, %c0_998, %c0_999] : memref<9x8x8xf32, #tpu.memory_space<vmem>>, vector<1x8x8xf32>
    %1145 = vector.shape_cast %1144 : vector<1x8x8xf32> to vector<8x8xf32>
    %cst_1000 = arith.constant dense<0.000000e+00> : vector<8x256xf32>
    %1146 = tpu.matmul %1145, %861, %cst_1000 {dimension_numbers = #tpu.dot_dimension_numbers<[1], [0], [0], [1], [0, 0, 1, 1], [], []>} : vector<8x8xf32>, vector<8x256xf32>, vector<8x256xf32> -> vector<8x256xf32>
    %1147 = arith.addf %1143, %1146 : vector<8x256xf32>
    %c8_1001 = arith.constant 8 : index
    %c0_1002 = arith.constant 0 : index
    %c0_1003 = arith.constant 0 : index
    %1148 = vector.load %arg9[%c8_1001, %c0_1002, %c0_1003] : memref<9x8x8xf32, #tpu.memory_space<vmem>>, vector<1x8x8xf32>
    %1149 = vector.shape_cast %1148 : vector<1x8x8xf32> to vector<8x8xf32>
    %cst_1004 = arith.constant dense<0.000000e+00> : vector<8x256xf32>
    %1150 = tpu.matmul %1149, %865, %cst_1004 {dimension_numbers = #tpu.dot_dimension_numbers<[1], [0], [0], [1], [0, 0, 1, 1], [], []>} : vector<8x8xf32>, vector<8x256xf32>, vector<8x256xf32> -> vector<8x256xf32>
    %1151 = arith.addf %1147, %1150 : vector<8x256xf32>
    %c0_1005 = arith.constant 0 : index
    %c0_1006 = arith.constant 0 : index
    %c0_1007 = arith.constant 0 : index
    %1152 = vector.load %arg10[%c0_1005, %c0_1006, %c0_1007] : memref<9x8x8xf32, #tpu.memory_space<vmem>>, vector<1x8x8xf32>
    %1153 = vector.shape_cast %1152 : vector<1x8x8xf32> to vector<8x8xf32>
    %cst_1008 = arith.constant dense<0.000000e+00> : vector<8x256xf32>
    %1154 = tpu.matmul %1153, %1052, %cst_1008 {dimension_numbers = #tpu.dot_dimension_numbers<[1], [0], [0], [1], [0, 0, 1, 1], [], []>} : vector<8x8xf32>, vector<8x256xf32>, vector<8x256xf32> -> vector<8x256xf32>
    %1155 = arith.addf %1151, %1154 : vector<8x256xf32>
    %c1_1009 = arith.constant 1 : index
    %c0_1010 = arith.constant 0 : index
    %c0_1011 = arith.constant 0 : index
    %1156 = vector.load %arg10[%c1_1009, %c0_1010, %c0_1011] : memref<9x8x8xf32, #tpu.memory_space<vmem>>, vector<1x8x8xf32>
    %1157 = vector.shape_cast %1156 : vector<1x8x8xf32> to vector<8x8xf32>
    %cst_1012 = arith.constant dense<0.000000e+00> : vector<8x256xf32>
    %1158 = tpu.matmul %1157, %1056, %cst_1012 {dimension_numbers = #tpu.dot_dimension_numbers<[1], [0], [0], [1], [0, 0, 1, 1], [], []>} : vector<8x8xf32>, vector<8x256xf32>, vector<8x256xf32> -> vector<8x256xf32>
    %1159 = arith.addf %1155, %1158 : vector<8x256xf32>
    %c2_1013 = arith.constant 2 : index
    %c0_1014 = arith.constant 0 : index
    %c0_1015 = arith.constant 0 : index
    %1160 = vector.load %arg10[%c2_1013, %c0_1014, %c0_1015] : memref<9x8x8xf32, #tpu.memory_space<vmem>>, vector<1x8x8xf32>
    %1161 = vector.shape_cast %1160 : vector<1x8x8xf32> to vector<8x8xf32>
    %cst_1016 = arith.constant dense<0.000000e+00> : vector<8x256xf32>
    %1162 = tpu.matmul %1161, %1060, %cst_1016 {dimension_numbers = #tpu.dot_dimension_numbers<[1], [0], [0], [1], [0, 0, 1, 1], [], []>} : vector<8x8xf32>, vector<8x256xf32>, vector<8x256xf32> -> vector<8x256xf32>
    %1163 = arith.addf %1159, %1162 : vector<8x256xf32>
    %c3_1017 = arith.constant 3 : index
    %c0_1018 = arith.constant 0 : index
    %c0_1019 = arith.constant 0 : index
    %1164 = vector.load %arg10[%c3_1017, %c0_1018, %c0_1019] : memref<9x8x8xf32, #tpu.memory_space<vmem>>, vector<1x8x8xf32>
    %1165 = vector.shape_cast %1164 : vector<1x8x8xf32> to vector<8x8xf32>
    %cst_1020 = arith.constant dense<0.000000e+00> : vector<8x256xf32>
    %1166 = tpu.matmul %1165, %1064, %cst_1020 {dimension_numbers = #tpu.dot_dimension_numbers<[1], [0], [0], [1], [0, 0, 1, 1], [], []>} : vector<8x8xf32>, vector<8x256xf32>, vector<8x256xf32> -> vector<8x256xf32>
    %1167 = arith.addf %1163, %1166 : vector<8x256xf32>
    %c4_1021 = arith.constant 4 : index
    %c0_1022 = arith.constant 0 : index
    %c0_1023 = arith.constant 0 : index
    %1168 = vector.load %arg10[%c4_1021, %c0_1022, %c0_1023] : memref<9x8x8xf32, #tpu.memory_space<vmem>>, vector<1x8x8xf32>
    %1169 = vector.shape_cast %1168 : vector<1x8x8xf32> to vector<8x8xf32>
    %cst_1024 = arith.constant dense<0.000000e+00> : vector<8x256xf32>
    %1170 = tpu.matmul %1169, %1045, %cst_1024 {dimension_numbers = #tpu.dot_dimension_numbers<[1], [0], [0], [1], [0, 0, 1, 1], [], []>} : vector<8x8xf32>, vector<8x256xf32>, vector<8x256xf32> -> vector<8x256xf32>
    %1171 = arith.addf %1167, %1170 : vector<8x256xf32>
    %c5_1025 = arith.constant 5 : index
    %c0_1026 = arith.constant 0 : index
    %c0_1027 = arith.constant 0 : index
    %1172 = vector.load %arg10[%c5_1025, %c0_1026, %c0_1027] : memref<9x8x8xf32, #tpu.memory_space<vmem>>, vector<1x8x8xf32>
    %1173 = vector.shape_cast %1172 : vector<1x8x8xf32> to vector<8x8xf32>
    %cst_1028 = arith.constant dense<0.000000e+00> : vector<8x256xf32>
    %1174 = tpu.matmul %1173, %1068, %cst_1028 {dimension_numbers = #tpu.dot_dimension_numbers<[1], [0], [0], [1], [0, 0, 1, 1], [], []>} : vector<8x8xf32>, vector<8x256xf32>, vector<8x256xf32> -> vector<8x256xf32>
    %1175 = arith.addf %1171, %1174 : vector<8x256xf32>
    %c6_1029 = arith.constant 6 : index
    %c0_1030 = arith.constant 0 : index
    %c0_1031 = arith.constant 0 : index
    %1176 = vector.load %arg10[%c6_1029, %c0_1030, %c0_1031] : memref<9x8x8xf32, #tpu.memory_space<vmem>>, vector<1x8x8xf32>
    %1177 = vector.shape_cast %1176 : vector<1x8x8xf32> to vector<8x8xf32>
    %cst_1032 = arith.constant dense<0.000000e+00> : vector<8x256xf32>
    %1178 = tpu.matmul %1177, %1072, %cst_1032 {dimension_numbers = #tpu.dot_dimension_numbers<[1], [0], [0], [1], [0, 0, 1, 1], [], []>} : vector<8x8xf32>, vector<8x256xf32>, vector<8x256xf32> -> vector<8x256xf32>
    %1179 = arith.addf %1175, %1178 : vector<8x256xf32>
    %c7_1033 = arith.constant 7 : index
    %c0_1034 = arith.constant 0 : index
    %c0_1035 = arith.constant 0 : index
    %1180 = vector.load %arg10[%c7_1033, %c0_1034, %c0_1035] : memref<9x8x8xf32, #tpu.memory_space<vmem>>, vector<1x8x8xf32>
    %1181 = vector.shape_cast %1180 : vector<1x8x8xf32> to vector<8x8xf32>
    %cst_1036 = arith.constant dense<0.000000e+00> : vector<8x256xf32>
    %1182 = tpu.matmul %1181, %1076, %cst_1036 {dimension_numbers = #tpu.dot_dimension_numbers<[1], [0], [0], [1], [0, 0, 1, 1], [], []>} : vector<8x8xf32>, vector<8x256xf32>, vector<8x256xf32> -> vector<8x256xf32>
    %1183 = arith.addf %1179, %1182 : vector<8x256xf32>
    %c8_1037 = arith.constant 8 : index
    %c0_1038 = arith.constant 0 : index
    %c0_1039 = arith.constant 0 : index
    %1184 = vector.load %arg10[%c8_1037, %c0_1038, %c0_1039] : memref<9x8x8xf32, #tpu.memory_space<vmem>>, vector<1x8x8xf32>
    %1185 = vector.shape_cast %1184 : vector<1x8x8xf32> to vector<8x8xf32>
    %cst_1040 = arith.constant dense<0.000000e+00> : vector<8x256xf32>
    %1186 = tpu.matmul %1185, %1080, %cst_1040 {dimension_numbers = #tpu.dot_dimension_numbers<[1], [0], [0], [1], [0, 0, 1, 1], [], []>} : vector<8x8xf32>, vector<8x256xf32>, vector<8x256xf32> -> vector<8x256xf32>
    %1187 = arith.addf %1183, %1186 : vector<8x256xf32>
    %cst_1041 = arith.constant dense<0.000000e+00> : vector<8xf32>
    %1188 = vector.multi_reduction <add>, %1187, %cst_1041 [1] : vector<8x256xf32> to vector<8xf32>
    %1189 = vector.shape_cast %1188 : vector<8xf32> to vector<8x1xf32>
    %cst_1042 = arith.constant 2.560000e+02 : f32
    %1190 = vector.broadcast %cst_1042 : f32 to vector<8x1xf32>
    %1191 = arith.divf %1189, %1190 : vector<8x1xf32>
    %1192 = vector.broadcast %1191 : vector<8x1xf32> to vector<8x256xf32>
    %1193 = arith.subf %1187, %1192 : vector<8x256xf32>
    %1194 = arith.mulf %1193, %1193 : vector<8x256xf32>
    %cst_1043 = arith.constant dense<0.000000e+00> : vector<8xf32>
    %1195 = vector.multi_reduction <add>, %1194, %cst_1043 [1] : vector<8x256xf32> to vector<8xf32>
    %1196 = vector.shape_cast %1195 : vector<8xf32> to vector<8x1xf32>
    %cst_1044 = arith.constant 2.560000e+02 : f32
    %1197 = vector.broadcast %cst_1044 : f32 to vector<8x1xf32>
    %1198 = arith.divf %1196, %1197 : vector<8x1xf32>
    %cst_1045 = arith.constant 9.99999974E-6 : f32
    %1199 = vector.broadcast %cst_1045 : f32 to vector<8x1xf32>
    %1200 = arith.addf %1198, %1199 : vector<8x1xf32>
    %1201 = math.rsqrt %1200 : vector<8x1xf32>
    %1202 = vector.broadcast %1201 : vector<8x1xf32> to vector<8x256xf32>
    %1203 = arith.mulf %1193, %1202 : vector<8x256xf32>
    %cst_1046 = arith.constant 0.000000e+00 : f32
    %1204 = vector.broadcast %cst_1046 : f32 to vector<8x256xf32>
    %1205 = arith.cmpf oge, %1203, %1204 : vector<8x256xf32>
    %cst_1047 = arith.constant 0.00999999977 : f32
    %1206 = vector.broadcast %cst_1047 : f32 to vector<8x256xf32>
    %1207 = arith.mulf %1206, %1203 : vector<8x256xf32>
    %1208 = arith.select %1205, %1203, %1207 : vector<8x256xi1>, vector<8x256xf32>
    %c17_i32_1048 = arith.constant 17 : i32
    %1209 = tpu.dynamic_rotate %1208 by %c17_i32_1048 dim 1 : vector<8x256xf32>, i32 -> vector<8x256xf32>
    %c0_1049 = arith.constant 0 : index
    %c0_1050 = arith.constant 0 : index
    %c0_1051 = arith.constant 0 : index
    %1210 = vector.load %arg2[%c0_1049, %c0_1050, %c0_1051] : memref<9x8x256xf32, #tpu.memory_space<vmem>>, vector<1x8x256xf32>
    %1211 = vector.shape_cast %1210 : vector<1x8x256xf32> to vector<8x256xf32>
    %1212 = arith.mulf %1209, %1211 : vector<8x256xf32>
    %c16_i32_1052 = arith.constant 16 : i32
    %1213 = tpu.dynamic_rotate %1208 by %c16_i32_1052 dim 1 : vector<8x256xf32>, i32 -> vector<8x256xf32>
    %c1_1053 = arith.constant 1 : index
    %c0_1054 = arith.constant 0 : index
    %c0_1055 = arith.constant 0 : index
    %1214 = vector.load %arg2[%c1_1053, %c0_1054, %c0_1055] : memref<9x8x256xf32, #tpu.memory_space<vmem>>, vector<1x8x256xf32>
    %1215 = vector.shape_cast %1214 : vector<1x8x256xf32> to vector<8x256xf32>
    %1216 = arith.mulf %1213, %1215 : vector<8x256xf32>
    %c15_i32_1056 = arith.constant 15 : i32
    %1217 = tpu.dynamic_rotate %1208 by %c15_i32_1056 dim 1 : vector<8x256xf32>, i32 -> vector<8x256xf32>
    %c2_1057 = arith.constant 2 : index
    %c0_1058 = arith.constant 0 : index
    %c0_1059 = arith.constant 0 : index
    %1218 = vector.load %arg2[%c2_1057, %c0_1058, %c0_1059] : memref<9x8x256xf32, #tpu.memory_space<vmem>>, vector<1x8x256xf32>
    %1219 = vector.shape_cast %1218 : vector<1x8x256xf32> to vector<8x256xf32>
    %1220 = arith.mulf %1217, %1219 : vector<8x256xf32>
    %c1_i32_1060 = arith.constant 1 : i32
    %1221 = tpu.dynamic_rotate %1208 by %c1_i32_1060 dim 1 : vector<8x256xf32>, i32 -> vector<8x256xf32>
    %c3_1061 = arith.constant 3 : index
    %c0_1062 = arith.constant 0 : index
    %c0_1063 = arith.constant 0 : index
    %1222 = vector.load %arg2[%c3_1061, %c0_1062, %c0_1063] : memref<9x8x256xf32, #tpu.memory_space<vmem>>, vector<1x8x256xf32>
    %1223 = vector.shape_cast %1222 : vector<1x8x256xf32> to vector<8x256xf32>
    %1224 = arith.mulf %1221, %1223 : vector<8x256xf32>
    %c255_i32_1064 = arith.constant 255 : i32
    %1225 = tpu.dynamic_rotate %1208 by %c255_i32_1064 dim 1 : vector<8x256xf32>, i32 -> vector<8x256xf32>
    %c5_1065 = arith.constant 5 : index
    %c0_1066 = arith.constant 0 : index
    %c0_1067 = arith.constant 0 : index
    %1226 = vector.load %arg2[%c5_1065, %c0_1066, %c0_1067] : memref<9x8x256xf32, #tpu.memory_space<vmem>>, vector<1x8x256xf32>
    %1227 = vector.shape_cast %1226 : vector<1x8x256xf32> to vector<8x256xf32>
    %1228 = arith.mulf %1225, %1227 : vector<8x256xf32>
    %c241_i32_1068 = arith.constant 241 : i32
    %1229 = tpu.dynamic_rotate %1208 by %c241_i32_1068 dim 1 : vector<8x256xf32>, i32 -> vector<8x256xf32>
    %c6_1069 = arith.constant 6 : index
    %c0_1070 = arith.constant 0 : index
    %c0_1071 = arith.constant 0 : index
    %1230 = vector.load %arg2[%c6_1069, %c0_1070, %c0_1071] : memref<9x8x256xf32, #tpu.memory_space<vmem>>, vector<1x8x256xf32>
    %1231 = vector.shape_cast %1230 : vector<1x8x256xf32> to vector<8x256xf32>
    %1232 = arith.mulf %1229, %1231 : vector<8x256xf32>
    %c240_i32_1072 = arith.constant 240 : i32
    %1233 = tpu.dynamic_rotate %1208 by %c240_i32_1072 dim 1 : vector<8x256xf32>, i32 -> vector<8x256xf32>
    %c7_1073 = arith.constant 7 : index
    %c0_1074 = arith.constant 0 : index
    %c0_1075 = arith.constant 0 : index
    %1234 = vector.load %arg2[%c7_1073, %c0_1074, %c0_1075] : memref<9x8x256xf32, #tpu.memory_space<vmem>>, vector<1x8x256xf32>
    %1235 = vector.shape_cast %1234 : vector<1x8x256xf32> to vector<8x256xf32>
    %1236 = arith.mulf %1233, %1235 : vector<8x256xf32>
    %c239_i32_1076 = arith.constant 239 : i32
    %1237 = tpu.dynamic_rotate %1208 by %c239_i32_1076 dim 1 : vector<8x256xf32>, i32 -> vector<8x256xf32>
    %c8_1077 = arith.constant 8 : index
    %c0_1078 = arith.constant 0 : index
    %c0_1079 = arith.constant 0 : index
    %1238 = vector.load %arg2[%c8_1077, %c0_1078, %c0_1079] : memref<9x8x256xf32, #tpu.memory_space<vmem>>, vector<1x8x256xf32>
    %1239 = vector.shape_cast %1238 : vector<1x8x256xf32> to vector<8x256xf32>
    %1240 = arith.mulf %1237, %1239 : vector<8x256xf32>
    %c0_1080 = arith.constant 0 : index
    %c0_1081 = arith.constant 0 : index
    %c0_1082 = arith.constant 0 : index
    %1241 = vector.load %arg11[%c0_1080, %c0_1081, %c0_1082] : memref<9x8x8xf32, #tpu.memory_space<vmem>>, vector<1x8x8xf32>
    %1242 = vector.shape_cast %1241 : vector<1x8x8xf32> to vector<8x8xf32>
    %cst_1083 = arith.constant dense<0.000000e+00> : vector<8x256xf32>
    %1243 = tpu.matmul %1242, %1212, %cst_1083 {dimension_numbers = #tpu.dot_dimension_numbers<[1], [0], [0], [1], [0, 0, 1, 1], [], []>} : vector<8x8xf32>, vector<8x256xf32>, vector<8x256xf32> -> vector<8x256xf32>
    %c1_1084 = arith.constant 1 : index
    %c0_1085 = arith.constant 0 : index
    %c0_1086 = arith.constant 0 : index
    %1244 = vector.load %arg11[%c1_1084, %c0_1085, %c0_1086] : memref<9x8x8xf32, #tpu.memory_space<vmem>>, vector<1x8x8xf32>
    %1245 = vector.shape_cast %1244 : vector<1x8x8xf32> to vector<8x8xf32>
    %cst_1087 = arith.constant dense<0.000000e+00> : vector<8x256xf32>
    %1246 = tpu.matmul %1245, %1216, %cst_1087 {dimension_numbers = #tpu.dot_dimension_numbers<[1], [0], [0], [1], [0, 0, 1, 1], [], []>} : vector<8x8xf32>, vector<8x256xf32>, vector<8x256xf32> -> vector<8x256xf32>
    %1247 = arith.addf %1243, %1246 : vector<8x256xf32>
    %c2_1088 = arith.constant 2 : index
    %c0_1089 = arith.constant 0 : index
    %c0_1090 = arith.constant 0 : index
    %1248 = vector.load %arg11[%c2_1088, %c0_1089, %c0_1090] : memref<9x8x8xf32, #tpu.memory_space<vmem>>, vector<1x8x8xf32>
    %1249 = vector.shape_cast %1248 : vector<1x8x8xf32> to vector<8x8xf32>
    %cst_1091 = arith.constant dense<0.000000e+00> : vector<8x256xf32>
    %1250 = tpu.matmul %1249, %1220, %cst_1091 {dimension_numbers = #tpu.dot_dimension_numbers<[1], [0], [0], [1], [0, 0, 1, 1], [], []>} : vector<8x8xf32>, vector<8x256xf32>, vector<8x256xf32> -> vector<8x256xf32>
    %1251 = arith.addf %1247, %1250 : vector<8x256xf32>
    %c3_1092 = arith.constant 3 : index
    %c0_1093 = arith.constant 0 : index
    %c0_1094 = arith.constant 0 : index
    %1252 = vector.load %arg11[%c3_1092, %c0_1093, %c0_1094] : memref<9x8x8xf32, #tpu.memory_space<vmem>>, vector<1x8x8xf32>
    %1253 = vector.shape_cast %1252 : vector<1x8x8xf32> to vector<8x8xf32>
    %cst_1095 = arith.constant dense<0.000000e+00> : vector<8x256xf32>
    %1254 = tpu.matmul %1253, %1224, %cst_1095 {dimension_numbers = #tpu.dot_dimension_numbers<[1], [0], [0], [1], [0, 0, 1, 1], [], []>} : vector<8x8xf32>, vector<8x256xf32>, vector<8x256xf32> -> vector<8x256xf32>
    %1255 = arith.addf %1251, %1254 : vector<8x256xf32>
    %c4_1096 = arith.constant 4 : index
    %c0_1097 = arith.constant 0 : index
    %c0_1098 = arith.constant 0 : index
    %1256 = vector.load %arg11[%c4_1096, %c0_1097, %c0_1098] : memref<9x8x8xf32, #tpu.memory_space<vmem>>, vector<1x8x8xf32>
    %1257 = vector.shape_cast %1256 : vector<1x8x8xf32> to vector<8x8xf32>
    %cst_1099 = arith.constant dense<0.000000e+00> : vector<8x256xf32>
    %1258 = tpu.matmul %1257, %1208, %cst_1099 {dimension_numbers = #tpu.dot_dimension_numbers<[1], [0], [0], [1], [0, 0, 1, 1], [], []>} : vector<8x8xf32>, vector<8x256xf32>, vector<8x256xf32> -> vector<8x256xf32>
    %1259 = arith.addf %1255, %1258 : vector<8x256xf32>
    %c5_1100 = arith.constant 5 : index
    %c0_1101 = arith.constant 0 : index
    %c0_1102 = arith.constant 0 : index
    %1260 = vector.load %arg11[%c5_1100, %c0_1101, %c0_1102] : memref<9x8x8xf32, #tpu.memory_space<vmem>>, vector<1x8x8xf32>
    %1261 = vector.shape_cast %1260 : vector<1x8x8xf32> to vector<8x8xf32>
    %cst_1103 = arith.constant dense<0.000000e+00> : vector<8x256xf32>
    %1262 = tpu.matmul %1261, %1228, %cst_1103 {dimension_numbers = #tpu.dot_dimension_numbers<[1], [0], [0], [1], [0, 0, 1, 1], [], []>} : vector<8x8xf32>, vector<8x256xf32>, vector<8x256xf32> -> vector<8x256xf32>
    %1263 = arith.addf %1259, %1262 : vector<8x256xf32>
    %c6_1104 = arith.constant 6 : index
    %c0_1105 = arith.constant 0 : index
    %c0_1106 = arith.constant 0 : index
    %1264 = vector.load %arg11[%c6_1104, %c0_1105, %c0_1106] : memref<9x8x8xf32, #tpu.memory_space<vmem>>, vector<1x8x8xf32>
    %1265 = vector.shape_cast %1264 : vector<1x8x8xf32> to vector<8x8xf32>
    %cst_1107 = arith.constant dense<0.000000e+00> : vector<8x256xf32>
    %1266 = tpu.matmul %1265, %1232, %cst_1107 {dimension_numbers = #tpu.dot_dimension_numbers<[1], [0], [0], [1], [0, 0, 1, 1], [], []>} : vector<8x8xf32>, vector<8x256xf32>, vector<8x256xf32> -> vector<8x256xf32>
    %1267 = arith.addf %1263, %1266 : vector<8x256xf32>
    %c7_1108 = arith.constant 7 : index
    %c0_1109 = arith.constant 0 : index
    %c0_1110 = arith.constant 0 : index
    %1268 = vector.load %arg11[%c7_1108, %c0_1109, %c0_1110] : memref<9x8x8xf32, #tpu.memory_space<vmem>>, vector<1x8x8xf32>
    %1269 = vector.shape_cast %1268 : vector<1x8x8xf32> to vector<8x8xf32>
    %cst_1111 = arith.constant dense<0.000000e+00> : vector<8x256xf32>
    %1270 = tpu.matmul %1269, %1236, %cst_1111 {dimension_numbers = #tpu.dot_dimension_numbers<[1], [0], [0], [1], [0, 0, 1, 1], [], []>} : vector<8x8xf32>, vector<8x256xf32>, vector<8x256xf32> -> vector<8x256xf32>
    %1271 = arith.addf %1267, %1270 : vector<8x256xf32>
    %c8_1112 = arith.constant 8 : index
    %c0_1113 = arith.constant 0 : index
    %c0_1114 = arith.constant 0 : index
    %1272 = vector.load %arg11[%c8_1112, %c0_1113, %c0_1114] : memref<9x8x8xf32, #tpu.memory_space<vmem>>, vector<1x8x8xf32>
    %1273 = vector.shape_cast %1272 : vector<1x8x8xf32> to vector<8x8xf32>
    %cst_1115 = arith.constant dense<0.000000e+00> : vector<8x256xf32>
    %1274 = tpu.matmul %1273, %1240, %cst_1115 {dimension_numbers = #tpu.dot_dimension_numbers<[1], [0], [0], [1], [0, 0, 1, 1], [], []>} : vector<8x8xf32>, vector<8x256xf32>, vector<8x256xf32> -> vector<8x256xf32>
    %1275 = arith.addf %1271, %1274 : vector<8x256xf32>
    %cst_1116 = arith.constant dense<0.000000e+00> : vector<8xf32>
    %1276 = vector.multi_reduction <add>, %1275, %cst_1116 [1] : vector<8x256xf32> to vector<8xf32>
    %1277 = vector.shape_cast %1276 : vector<8xf32> to vector<8x1xf32>
    %cst_1117 = arith.constant 2.560000e+02 : f32
    %1278 = vector.broadcast %cst_1117 : f32 to vector<8x1xf32>
    %1279 = arith.divf %1277, %1278 : vector<8x1xf32>
    %1280 = vector.broadcast %1279 : vector<8x1xf32> to vector<8x256xf32>
    %1281 = arith.subf %1275, %1280 : vector<8x256xf32>
    %1282 = arith.mulf %1281, %1281 : vector<8x256xf32>
    %cst_1118 = arith.constant dense<0.000000e+00> : vector<8xf32>
    %1283 = vector.multi_reduction <add>, %1282, %cst_1118 [1] : vector<8x256xf32> to vector<8xf32>
    %1284 = vector.shape_cast %1283 : vector<8xf32> to vector<8x1xf32>
    %cst_1119 = arith.constant 2.560000e+02 : f32
    %1285 = vector.broadcast %cst_1119 : f32 to vector<8x1xf32>
    %1286 = arith.divf %1284, %1285 : vector<8x1xf32>
    %cst_1120 = arith.constant 9.99999974E-6 : f32
    %1287 = vector.broadcast %cst_1120 : f32 to vector<8x1xf32>
    %1288 = arith.addf %1286, %1287 : vector<8x1xf32>
    %1289 = math.rsqrt %1288 : vector<8x1xf32>
    %1290 = vector.broadcast %1289 : vector<8x1xf32> to vector<8x256xf32>
    %1291 = arith.mulf %1281, %1290 : vector<8x256xf32>
    %cst_1121 = arith.constant 0.000000e+00 : f32
    %1292 = vector.broadcast %cst_1121 : f32 to vector<8x256xf32>
    %1293 = arith.cmpf oge, %1291, %1292 : vector<8x256xf32>
    %cst_1122 = arith.constant 0.00999999977 : f32
    %1294 = vector.broadcast %cst_1122 : f32 to vector<8x256xf32>
    %1295 = arith.mulf %1294, %1291 : vector<8x256xf32>
    %1296 = arith.select %1293, %1291, %1295 : vector<8x256xi1>, vector<8x256xf32>
    %c1_1123 = arith.constant 1 : index
    %c24_1124 = arith.constant 24 : index
    %c0_1125 = arith.constant 0 : index
    %1297 = vector.load %arg12[%c1_1123, %c24_1124, %c0_1125] : memref<2x32x256xf32, #tpu.memory_space<vmem>>, vector<1x8x256xf32>
    %1298 = vector.shape_cast %1297 : vector<1x8x256xf32> to vector<8x256xf32>
    %1299 = vector.shape_cast %1296 : vector<8x256xf32> to vector<1x8x256xf32>
    tpu.vector_store %arg12[%c1_1123, %c24_1124, %c0_1125], %1299 {strides = array<i32>} : memref<2x32x256xf32, #tpu.memory_space<vmem>>, vector<1x8x256xf32>,
    return
  }
  func.func @transform_0(%arg0: i32) -> (i32, i32, i32) {
    %c0_i32 = arith.constant 0 : i32
    %c0_i32_0 = arith.constant 0 : i32
    %c0_i32_1 = arith.constant 0 : i32
    return %arg0, %c0_i32, %c0_i32_0 : i32, i32, i32
  }
  func.func @transform_1(%arg0: i32) -> (i32, i32, i32) {
    %c0_i32 = arith.constant 0 : i32
    %c0_i32_0 = arith.constant 0 : i32
    %c0_i32_1 = arith.constant 0 : i32
    %c0_i32_2 = arith.constant 0 : i32
    return %c0_i32, %c0_i32_0, %c0_i32_1 : i32, i32, i32
  }
  func.func @transform_2(%arg0: i32) -> (i32, i32, i32) {
    %c0_i32 = arith.constant 0 : i32
    %c0_i32_0 = arith.constant 0 : i32
    %c0_i32_1 = arith.constant 0 : i32
    %c0_i32_2 = arith.constant 0 : i32
    return %c0_i32, %c0_i32_0, %c0_i32_1 : i32, i32, i32
  }
  func.func @transform_3(%arg0: i32) -> (i32, i32, i32) {
    %c0_i32 = arith.constant 0 : i32
    %c0_i32_0 = arith.constant 0 : i32
    %c0_i32_1 = arith.constant 0 : i32
    %c0_i32_2 = arith.constant 0 : i32
    return %c0_i32, %c0_i32_0, %c0_i32_1 : i32, i32, i32
  }
  func.func @transform_4(%arg0: i32) -> (i32, i32, i32) {
    %c0_i32 = arith.constant 0 : i32
    %c0_i32_0 = arith.constant 0 : i32
    %c0_i32_1 = arith.constant 0 : i32
    %c0_i32_2 = arith.constant 0 : i32
    return %c0_i32, %c0_i32_0, %c0_i32_1 : i32, i32, i32
  }
  func.func @transform_5(%arg0: i32) -> (i32, i32, i32) {
    %c0_i32 = arith.constant 0 : i32
    %c0_i32_0 = arith.constant 0 : i32
    %c0_i32_1 = arith.constant 0 : i32
    %c0_i32_2 = arith.constant 0 : i32
    return %c0_i32, %c0_i32_0, %c0_i32_1 : i32, i32, i32
  }
  func.func @transform_6(%arg0: i32) -> (i32, i32, i32) {
    %c0_i32 = arith.constant 0 : i32
    %c0_i32_0 = arith.constant 0 : i32
    %c0_i32_1 = arith.constant 0 : i32
    %c0_i32_2 = arith.constant 0 : i32
    return %c0_i32, %c0_i32_0, %c0_i32_1 : i32, i32, i32
  }
  func.func @transform_7(%arg0: i32) -> (i32, i32, i32) {
    %c0_i32 = arith.constant 0 : i32
    %c0_i32_0 = arith.constant 0 : i32
    %c0_i32_1 = arith.constant 0 : i32
    %c0_i32_2 = arith.constant 0 : i32
    return %c0_i32, %c0_i32_0, %c0_i32_1 : i32, i32, i32
  }
  func.func @transform_8(%arg0: i32) -> (i32, i32, i32) {
    %c0_i32 = arith.constant 0 : i32
    %c0_i32_0 = arith.constant 0 : i32
    %c0_i32_1 = arith.constant 0 : i32
    %c0_i32_2 = arith.constant 0 : i32
    return %c0_i32, %c0_i32_0, %c0_i32_1 : i32, i32, i32
  }
  func.func @transform_9(%arg0: i32) -> (i32, i32, i32) {
    %c0_i32 = arith.constant 0 : i32
    %c0_i32_0 = arith.constant 0 : i32
    %c0_i32_1 = arith.constant 0 : i32
    %c0_i32_2 = arith.constant 0 : i32
    return %c0_i32, %c0_i32_0, %c0_i32_1 : i32, i32, i32
  }
  func.func @transform_10(%arg0: i32) -> (i32, i32, i32) {
    %c0_i32 = arith.constant 0 : i32
    %c0_i32_0 = arith.constant 0 : i32
    %c0_i32_1 = arith.constant 0 : i32
    %c0_i32_2 = arith.constant 0 : i32
    return %c0_i32, %c0_i32_0, %c0_i32_1 : i32, i32, i32
  }
  func.func @transform_11(%arg0: i32) -> (i32, i32, i32) {
    %c0_i32 = arith.constant 0 : i32
    %c0_i32_0 = arith.constant 0 : i32
    %c0_i32_1 = arith.constant 0 : i32
    return %arg0, %c0_i32, %c0_i32_0 : i32, i32, i32
  }
}

</mosaic_0001>

<llo_original>
// kernel: feature_extraction_block.1
$region0: #{feature_extraction_block.1}
  #allocation0 [shape = 'u32[]', space=smem, size = 0x4, offset = 0x4, fixed_abs, tag = 'smem constant byte address 0x4 - core index']
  #allocation1 [shape = 'u32[72,128]{1,0:T(1,128)}', space=vmem, size = 0x9000, scoped, tag = 'internal scratch']
  %s0 = inlined_call_operand.vmem [shape: f32[2,8,256], index: 0, kind: input, shape index: {}]
  %s1 = inlined_call_operand.vmem [shape: f32[9,8,256], index: 1, kind: input, shape index: {}]
  %s2 = inlined_call_operand.vmem [shape: f32[9,8,8], index: 2, kind: input, shape index: {}]
  %s3 = inlined_call_operand.vmem [shape: f32[9,8,8], index: 3, kind: input, shape index: {}]
  %s4 = inlined_call_operand.vmem [shape: f32[9,8,8], index: 4, kind: input, shape index: {}]
  %s5 = inlined_call_operand.vmem [shape: f32[9,8,8], index: 5, kind: input, shape index: {}]
  %s6 = inlined_call_operand.vmem [shape: f32[9,8,8], index: 6, kind: input, shape index: {}]
  %s7 = inlined_call_operand.vmem [shape: f32[9,8,8], index: 7, kind: input, shape index: {}]
  %s8 = inlined_call_operand.vmem [shape: f32[9,8,8], index: 8, kind: input, shape index: {}]
  %s9 = inlined_call_operand.vmem [shape: f32[9,8,8], index: 9, kind: input, shape index: {}]
  %s10 = inlined_call_operand.vmem [shape: f32[9,8,8], index: 10, kind: input, shape index: {}]
  %s11 = inlined_call_operand.vmem [shape: f32[2,32,256], index: 11, kind: output, shape index: {}]
  %s12 = sld [smem:[#allocation0]]
  $region54: #{feature_extraction_block.1} parent=0
    _
  %s14 = ssub.s32 1, %s12
  %s15 = scalar_select 0, %s14, %s12
  // Predicated region
  $region2: #{feature_extraction_block.1} parent=0 // pred_check
    _
  $region3: #{feature_extraction_block.1} parent=0 // pred_check_branch
    %17 = sbr.rel (0) target = $region5
  $region4: #{feature_extraction_block.1} parent=0 // pred_region
    _
  $region5: #{feature_extraction_block.1} parent=0 // pred_fallthru
    _
  // Predicated region
  $region6: #{feature_extraction_block.1} parent=0 // pred_check
    _
  $region7: #{feature_extraction_block.1} parent=0 // pred_check_branch
    %19 = sbr.rel (0) target = $region9
  $region8: #{feature_extraction_block.1} parent=0 // pred_region
    _
  $region9: #{feature_extraction_block.1} parent=0 // pred_fallthru
    _
  // Predicated region
  $region10: #{feature_extraction_block.1} parent=0 // pred_check
    _
  $region11: #{feature_extraction_block.1} parent=0 // pred_check_branch
    %21 = sbr.rel (0) target = $region13
  $region12: #{feature_extraction_block.1} parent=0 // pred_region
    _
  $region13: #{feature_extraction_block.1} parent=0 // pred_fallthru
    _
  // Predicated region
  $region14: #{feature_extraction_block.1} parent=0 // pred_check
    _
  $region15: #{feature_extraction_block.1} parent=0 // pred_check_branch
    %23 = sbr.rel (0) target = $region17
  $region16: #{feature_extraction_block.1} parent=0 // pred_region
    _
  $region17: #{feature_extraction_block.1} parent=0 // pred_fallthru
    _
  // Predicated region
  $region18: #{feature_extraction_block.1} parent=0 // pred_check
    _
  $region19: #{feature_extraction_block.1} parent=0 // pred_check_branch
    %25 = sbr.rel (0) target = $region21
  $region20: #{feature_extraction_block.1} parent=0 // pred_region
    _
  $region21: #{feature_extraction_block.1} parent=0 // pred_fallthru
    _
  // Predicated region
  $region22: #{feature_extraction_block.1} parent=0 // pred_check
    _
  $region23: #{feature_extraction_block.1} parent=0 // pred_check_branch
    %27 = sbr.rel (0) target = $region25
  $region24: #{feature_extraction_block.1} parent=0 // pred_region
    _
  $region25: #{feature_extraction_block.1} parent=0 // pred_fallthru
    _
  // Predicated region
  $region26: #{feature_extraction_block.1} parent=0 // pred_check
    _
  $region27: #{feature_extraction_block.1} parent=0 // pred_check_branch
    %29 = sbr.rel (0) target = $region29
  $region28: #{feature_extraction_block.1} parent=0 // pred_region
    _
  $region29: #{feature_extraction_block.1} parent=0 // pred_fallthru
    _
  // Predicated region
  $region30: #{feature_extraction_block.1} parent=0 // pred_check
    _
  $region31: #{feature_extraction_block.1} parent=0 // pred_check_branch
    %31 = sbr.rel (0) target = $region33
  $region32: #{feature_extraction_block.1} parent=0 // pred_region
    _
  $region33: #{feature_extraction_block.1} parent=0 // pred_fallthru
    _
  // Predicated region
  $region34: #{feature_extraction_block.1} parent=0 // pred_check
    _
  $region35: #{feature_extraction_block.1} parent=0 // pred_check_branch
    %33 = sbr.rel (0) target = $region37
  $region36: #{feature_extraction_block.1} parent=0 // pred_region
    _
  $region37: #{feature_extraction_block.1} parent=0 // pred_fallthru
    _
  // Predicated region
  $region38: #{feature_extraction_block.1} parent=0 // pred_check
    _
  $region39: #{feature_extraction_block.1} parent=0 // pred_check_branch
    %35 = sbr.rel (0) target = $region41
  $region40: #{feature_extraction_block.1} parent=0 // pred_region
    _
  $region41: #{feature_extraction_block.1} parent=0 // pred_fallthru
    _
  // Predicated region
  $region42: #{feature_extraction_block.1} parent=0 // pred_check
    _
  $region43: #{feature_extraction_block.1} parent=0 // pred_check_branch
    %37 = sbr.rel (0) target = $region45
  $region44: #{feature_extraction_block.1} parent=0 // pred_region
    _
  $region45: #{feature_extraction_block.1} parent=0 // pred_fallthru
    _
  %v38 = vld [vmem:[%s0] sm:$0xff]
  %v39 = vld [vmem:[%s0 + $0x8] sm:$0xff]
  %40 = vst [vmem:[%s11] sm:$0xff] %v38
  %41 = vst [vmem:[%s11 + $0x8] sm:$0xff] %v39
  %42 = vrot.lane.b32.xlu0 %v38, 17
  %v43 = vpop.permute.xlu0 %42
  %44 = vrot.lane.b32.xlu0 %v39, 17
  %v45 = vpop.permute.xlu0 %44
  %v46 = vlaneseq
  %v47 = vand.u32 %v46, 127
  %vm48 = vcmp.lt.s32.totalorder %v47, 17
  %v49 = vsel %vm48, %v43, %v45
  %v50 = vsel %vm48, %v45, %v43
  %v51 = vld [vmem:[%s1] sm:$0xff]
  %v52 = vld [vmem:[%s1 + $0x8] sm:$0xff]
  %v53 = vmul.f32 %v50, %v51
  %v54 = vmul.f32 %v49, %v52
  %55 = vrot.lane.b32.xlu0 %v38, 16
  %v56 = vpop.permute.xlu0 %55
  %57 = vrot.lane.b32.xlu0 %v39, 16
  %v58 = vpop.permute.xlu0 %57
  %vm59 = vcmp.lt.s32.totalorder %v47, 16
  %v60 = vsel %vm59, %v56, %v58
  %v61 = vsel %vm59, %v58, %v56
  %s62 = scalar_lea.vmem %s1, 16
  %v63 = vld [vmem:[%s62] sm:$0xff]
  %v64 = vld [vmem:[%s62 + $0x8] sm:$0xff]
  %v65 = vmul.f32 %v61, %v63
  %v66 = vmul.f32 %v60, %v64
  %67 = vrot.lane.b32.xlu0 %v38, 15
  %v68 = vpop.permute.xlu0 %67
  %69 = vrot.lane.b32.xlu0 %v39, 15
  %v70 = vpop.permute.xlu0 %69
  %vm71 = vcmp.lt.s32.totalorder %v47, 15
  %v72 = vsel %vm71, %v68, %v70
  %v73 = vsel %vm71, %v70, %v68
  %s74 = scalar_lea.vmem %s1, 32
  %v75 = vld [vmem:[%s74] sm:$0xff]
  %v76 = vld [vmem:[%s74 + $0x8] sm:$0xff]
  %v77 = vmul.f32 %v73, %v75
  %v78 = vmul.f32 %v72, %v76
  %79 = vrot.lane.b32.xlu0 %v38, 1
  %v80 = vpop.permute.xlu0 %79
  %81 = vrot.lane.b32.xlu0 %v39, 1
  %v82 = vpop.permute.xlu0 %81
  %vm83 = vcmp.lt.s32.totalorder %v47, 1
  %v84 = vsel %vm83, %v80, %v82
  %v85 = vsel %vm83, %v82, %v80
  %s86 = scalar_lea.vmem %s1, 48
  %v87 = vld [vmem:[%s86] sm:$0xff]
  %v88 = vld [vmem:[%s86 + $0x8] sm:$0xff]
  %v89 = vmul.f32 %v85, %v87
  %v90 = vmul.f32 %v84, %v88
  %91 = vrot.lane.b32.xlu0 %v38, 127
  %v92 = vpop.permute.xlu0 %91
  %93 = vrot.lane.b32.xlu0 %v39, 127
  %v94 = vpop.permute.xlu0 %93
  %vm95 = vcmp.lt.s32.totalorder %v47, 127
  %v96 = vsel %vm95, %v92, %v94
  %v97 = vsel %vm95, %v94, %v92
  %s98 = scalar_lea.vmem %s1, 80
  %v99 = vld [vmem:[%s98] sm:$0xff]
  %v100 = vld [vmem:[%s98 + $0x8] sm:$0xff]
  %v101 = vmul.f32 %v96, %v99
  %v102 = vmul.f32 %v97, %v100
  %103 = vrot.lane.b32.xlu0 %v38, 113
  %v104 = vpop.permute.xlu0 %103
  %105 = vrot.lane.b32.xlu0 %v39, 113
  %v106 = vpop.permute.xlu0 %105
  %vm107 = vcmp.lt.s32.totalorder %v47, 113
  %v108 = vsel %vm107, %v104, %v106
  %v109 = vsel %vm107, %v106, %v104
  %s110 = scalar_lea.vmem %s1, 96
  %v111 = vld [vmem:[%s110] sm:$0xff]
  %v112 = vld [vmem:[%s110 + $0x8] sm:$0xff]
  %v113 = vmul.f32 %v108, %v111
  %v114 = vmul.f32 %v109, %v112
  %115 = vrot.lane.b32.xlu0 %v38, 112
  %v116 = vpop.permute.xlu0 %115
  %117 = vrot.lane.b32.xlu0 %v39, 112
  %v118 = vpop.permute.xlu0 %117
  %vm119 = vcmp.lt.s32.totalorder %v47, 112
  %v120 = vsel %vm119, %v116, %v118
  %v121 = vsel %vm119, %v118, %v116
  %s122 = scalar_lea.vmem %s1, 112
  %v123 = vld [vmem:[%s122] sm:$0xff]
  %v124 = vld [vmem:[%s122 + $0x8] sm:$0xff]
  %v125 = vmul.f32 %v120, %v123
  %v126 = vmul.f32 %v121, %v124
  %127 = vrot.lane.b32.xlu0 %v38, 111
  %v128 = vpop.permute.xlu0 %127
  %129 = vrot.lane.b32.xlu0 %v39, 111
  %v130 = vpop.permute.xlu0 %129
  %vm131 = vcmp.lt.s32.totalorder %v47, 111
  %v132 = vsel %vm131, %v128, %v130
  %v133 = vsel %vm131, %v130, %v128
  %s134 = scalar_lea.vmem %s1, 128
  %v135 = vld [vmem:[%s134] sm:$0xff]
  %v136 = vld [vmem:[%s134 + $0x8] sm:$0xff]
  %v137 = vmul.f32 %v132, %v135
  %v138 = vmul.f32 %v133, %v136
  %v139 = vld [vmem:[%s2] sm:$0xff]
  %s140 = scalar_lea.vmem %s2, 8
  %v141 = vld [vmem:[%s140] sm:$0xff]
  %vm142 = vcmask 64512
  %v144 = vsel %vm142, %v141, 0
  %146 = vmatpush.msra.mxu0 0.0
  %147 = vmatpush.msra.mxu0 0.0
  %148 = vmatpush.msra.mxu0 0.0
  %149 = vmatpush.msra.mxu0 0.0
  %150 = vmatpush.msra.mxu0 0.0
  %151 = vmatpush.msra.mxu0 0.0
  %152 = vmatpush.msra.mxu0 0.0
  %153 = vmatpush.msra.mxu0 0.0
  %154 = vmatpush.msra.mxu0 0.0
  %155 = vmatpush.msra.mxu0 0.0
  %156 = vmatpush.msra.mxu0 0.0
  %157 = vmatpush.msra.mxu0 0.0
  %158 = vmatpush.msra.mxu0 0.0
  %159 = vmatpush.msra.mxu0 0.0
  %160 = vmatpush.msra.mxu0 0.0
  %161 = vmatpush.msra.mxu0 %v65
  %162 = vmatmul.f32.gmra.mxu0 %v144
  %v163 = vpop.f32.mrf.mxu0
  %v164 = vadd.f32 0.0, %v163
  %165 = vdwg.mxu0
  %166 = vmatpush.msra.mxu0 0.0
  %167 = vmatpush.msra.mxu0 0.0
  %168 = vmatpush.msra.mxu0 0.0
  %169 = vmatpush.msra.mxu0 0.0
  %170 = vmatpush.msra.mxu0 0.0
  %171 = vmatpush.msra.mxu0 0.0
  %172 = vmatpush.msra.mxu0 0.0
  %173 = vmatpush.msra.mxu0 0.0
  %174 = vmatpush.msra.mxu0 0.0
  %175 = vmatpush.msra.mxu0 0.0
  %176 = vmatpush.msra.mxu0 0.0
  %177 = vmatpush.msra.mxu0 0.0
  %178 = vmatpush.msra.mxu0 0.0
  %179 = vmatpush.msra.mxu0 0.0
  %180 = vmatpush.msra.mxu0 0.0
  %181 = vmatpush.msra.mxu0 %v66
  %182 = vmatmul.f32.gmra.mxu0 %v144
  %v183 = vpop.f32.mrf.mxu0
  %v184 = vadd.f32 0.0, %v183
  %185 = vdwg.mxu0
  %v187 = vsel %vm142, %v139, 0
  %189 = vmatpush.msra.mxu0 0.0
  %190 = vmatpush.msra.mxu0 0.0
  %191 = vmatpush.msra.mxu0 0.0
  %192 = vmatpush.msra.mxu0 0.0
  %193 = vmatpush.msra.mxu0 0.0
  %194 = vmatpush.msra.mxu0 0.0
  %195 = vmatpush.msra.mxu0 0.0
  %196 = vmatpush.msra.mxu0 0.0
  %197 = vmatpush.msra.mxu0 0.0
  %198 = vmatpush.msra.mxu0 0.0
  %199 = vmatpush.msra.mxu0 0.0
  %200 = vmatpush.msra.mxu0 0.0
  %201 = vmatpush.msra.mxu0 0.0
  %202 = vmatpush.msra.mxu0 0.0
  %203 = vmatpush.msra.mxu0 0.0
  %204 = vmatpush.msra.mxu0 %v53
  %205 = vmatmul.f32.gmra.mxu0 %v187
  %v206 = vpop.f32.mrf.mxu0
  %v207 = vadd.f32 %v164, %v206
  %208 = vdwg.mxu0
  %209 = vmatpush.msra.mxu0 0.0
  %210 = vmatpush.msra.mxu0 0.0
  %211 = vmatpush.msra.mxu0 0.0
  %212 = vmatpush.msra.mxu0 0.0
  %213 = vmatpush.msra.mxu0 0.0
  %214 = vmatpush.msra.mxu0 0.0
  %215 = vmatpush.msra.mxu0 0.0
  %216 = vmatpush.msra.mxu0 0.0
  %217 = vmatpush.msra.mxu0 0.0
  %218 = vmatpush.msra.mxu0 0.0
  %219 = vmatpush.msra.mxu0 0.0
  %220 = vmatpush.msra.mxu0 0.0
  %221 = vmatpush.msra.mxu0 0.0
  %222 = vmatpush.msra.mxu0 0.0
  %223 = vmatpush.msra.mxu0 0.0
  %224 = vmatpush.msra.mxu0 %v54
  %225 = vmatmul.f32.gmra.mxu0 %v187
  %v226 = vpop.f32.mrf.mxu0
  %v227 = vadd.f32 %v184, %v226
  %228 = vdwg.mxu0
  %s229 = scalar_lea.vmem %s2, 16
  %v230 = vld [vmem:[%s229] sm:$0xff]
  %v232 = vsel %vm142, %v230, 0
  %234 = vmatpush.msra.mxu0 0.0
  %235 = vmatpush.msra.mxu0 0.0
  %236 = vmatpush.msra.mxu0 0.0
  %237 = vmatpush.msra.mxu0 0.0
  %238 = vmatpush.msra.mxu0 0.0
  %239 = vmatpush.msra.mxu0 0.0
  %240 = vmatpush.msra.mxu0 0.0
  %241 = vmatpush.msra.mxu0 0.0
  %242 = vmatpush.msra.mxu0 0.0
  %243 = vmatpush.msra.mxu0 0.0
  %244 = vmatpush.msra.mxu0 0.0
  %245 = vmatpush.msra.mxu0 0.0
  %246 = vmatpush.msra.mxu0 0.0
  %247 = vmatpush.msra.mxu0 0.0
  %248 = vmatpush.msra.mxu0 0.0
  %249 = vmatpush.msra.mxu0 %v77
  %250 = vmatmul.f32.gmra.mxu0 %v232
  %v251 = vpop.f32.mrf.mxu0
  %v252 = vadd.f32 0.0, %v251
  %253 = vdwg.mxu0
  %254 = vmatpush.msra.mxu0 0.0
  %255 = vmatpush.msra.mxu0 0.0
  %256 = vmatpush.msra.mxu0 0.0
  %257 = vmatpush.msra.mxu0 0.0
  %258 = vmatpush.msra.mxu0 0.0
  %259 = vmatpush.msra.mxu0 0.0
  %260 = vmatpush.msra.mxu0 0.0
  %261 = vmatpush.msra.mxu0 0.0
  %262 = vmatpush.msra.mxu0 0.0
  %263 = vmatpush.msra.mxu0 0.0
  %264 = vmatpush.msra.mxu0 0.0
  %265 = vmatpush.msra.mxu0 0.0
  %266 = vmatpush.msra.mxu0 0.0
  %267 = vmatpush.msra.mxu0 0.0
  %268 = vmatpush.msra.mxu0 0.0
  %269 = vmatpush.msra.mxu0 %v78
  %270 = vmatmul.f32.gmra.mxu0 %v232
  %v271 = vpop.f32.mrf.mxu0
  %v272 = vadd.f32 0.0, %v271
  %273 = vdwg.mxu0
  %v274 = vadd.f32 %v207, %v252
  %v275 = vadd.f32 %v227, %v272
  %s276 = scalar_lea.vmem %s2, 24
  %v277 = vld [vmem:[%s276] sm:$0xff]
  %v279 = vsel %vm142, %v277, 0
  %281 = vmatpush.msra.mxu0 0.0
  %282 = vmatpush.msra.mxu0 0.0
  %283 = vmatpush.msra.mxu0 0.0
  %284 = vmatpush.msra.mxu0 0.0
  %285 = vmatpush.msra.mxu0 0.0
  %286 = vmatpush.msra.mxu0 0.0
  %287 = vmatpush.msra.mxu0 0.0
  %288 = vmatpush.msra.mxu0 0.0
  %289 = vmatpush.msra.mxu0 0.0
  %290 = vmatpush.msra.mxu0 0.0
  %291 = vmatpush.msra.mxu0 0.0
  %292 = vmatpush.msra.mxu0 0.0
  %293 = vmatpush.msra.mxu0 0.0
  %294 = vmatpush.msra.mxu0 0.0
  %295 = vmatpush.msra.mxu0 0.0
  %296 = vmatpush.msra.mxu0 %v89
  %297 = vmatmul.f32.gmra.mxu0 %v279
  %v298 = vpop.f32.mrf.mxu0
  %v299 = vadd.f32 0.0, %v298
  %300 = vdwg.mxu0
  %301 = vmatpush.msra.mxu0 0.0
  %302 = vmatpush.msra.mxu0 0.0
  %303 = vmatpush.msra.mxu0 0.0
  %304 = vmatpush.msra.mxu0 0.0
  %305 = vmatpush.msra.mxu0 0.0
  %306 = vmatpush.msra.mxu0 0.0
  %307 = vmatpush.msra.mxu0 0.0
  %308 = vmatpush.msra.mxu0 0.0
  %309 = vmatpush.msra.mxu0 0.0
  %310 = vmatpush.msra.mxu0 0.0
  %311 = vmatpush.msra.mxu0 0.0
  %312 = vmatpush.msra.mxu0 0.0
  %313 = vmatpush.msra.mxu0 0.0
  %314 = vmatpush.msra.mxu0 0.0
  %315 = vmatpush.msra.mxu0 0.0
  %316 = vmatpush.msra.mxu0 %v90
  %317 = vmatmul.f32.gmra.mxu0 %v279
  %v318 = vpop.f32.mrf.mxu0
  %v319 = vadd.f32 0.0, %v318
  %320 = vdwg.mxu0
  %v321 = vadd.f32 %v274, %v299
  %v322 = vadd.f32 %v275, %v319
  %s323 = scalar_lea.vmem %s2, 32
  %v324 = vld [vmem:[%s323] sm:$0xff]
  %v326 = vsel %vm142, %v324, 0
  %328 = vmatpush.msra.mxu0 0.0
  %329 = vmatpush.msra.mxu0 0.0
  %330 = vmatpush.msra.mxu0 0.0
  %331 = vmatpush.msra.mxu0 0.0
  %332 = vmatpush.msra.mxu0 0.0
  %333 = vmatpush.msra.mxu0 0.0
  %334 = vmatpush.msra.mxu0 0.0
  %335 = vmatpush.msra.mxu0 0.0
  %336 = vmatpush.msra.mxu0 0.0
  %337 = vmatpush.msra.mxu0 0.0
  %338 = vmatpush.msra.mxu0 0.0
  %339 = vmatpush.msra.mxu0 0.0
  %340 = vmatpush.msra.mxu0 0.0
  %341 = vmatpush.msra.mxu0 0.0
  %342 = vmatpush.msra.mxu0 0.0
  %343 = vmatpush.msra.mxu0 %v38
  %344 = vmatmul.f32.gmra.mxu0 %v326
  %v345 = vpop.f32.mrf.mxu0
  %v346 = vadd.f32 0.0, %v345
  %347 = vdwg.mxu0
  %348 = vmatpush.msra.mxu0 0.0
  %349 = vmatpush.msra.mxu0 0.0
  %350 = vmatpush.msra.mxu0 0.0
  %351 = vmatpush.msra.mxu0 0.0
  %352 = vmatpush.msra.mxu0 0.0
  %353 = vmatpush.msra.mxu0 0.0
  %354 = vmatpush.msra.mxu0 0.0
  %355 = vmatpush.msra.mxu0 0.0
  %356 = vmatpush.msra.mxu0 0.0
  %357 = vmatpush.msra.mxu0 0.0
  %358 = vmatpush.msra.mxu0 0.0
  %359 = vmatpush.msra.mxu0 0.0
  %360 = vmatpush.msra.mxu0 0.0
  %361 = vmatpush.msra.mxu0 0.0
  %362 = vmatpush.msra.mxu0 0.0
  %363 = vmatpush.msra.mxu0 %v39
  %364 = vmatmul.f32.gmra.mxu0 %v326
  %v365 = vpop.f32.mrf.mxu0
  %v366 = vadd.f32 0.0, %v365
  %367 = vdwg.mxu0
  %v368 = vadd.f32 %v321, %v346
  %v369 = vadd.f32 %v322, %v366
  %s370 = scalar_lea.vmem %s2, 40
  %v371 = vld [vmem:[%s370] sm:$0xff]
  %v373 = vsel %vm142, %v371, 0
  %375 = vmatpush.msra.mxu0 0.0
  %376 = vmatpush.msra.mxu0 0.0
  %377 = vmatpush.msra.mxu0 0.0
  %378 = vmatpush.msra.mxu0 0.0
  %379 = vmatpush.msra.mxu0 0.0
  %380 = vmatpush.msra.mxu0 0.0
  %381 = vmatpush.msra.mxu0 0.0
  %382 = vmatpush.msra.mxu0 0.0
  %383 = vmatpush.msra.mxu0 0.0
  %384 = vmatpush.msra.mxu0 0.0
  %385 = vmatpush.msra.mxu0 0.0
  %386 = vmatpush.msra.mxu0 0.0
  %387 = vmatpush.msra.mxu0 0.0
  %388 = vmatpush.msra.mxu0 0.0
  %389 = vmatpush.msra.mxu0 0.0
  %390 = vmatpush.msra.mxu0 %v101
  %391 = vmatmul.f32.gmra.mxu0 %v373
  %v392 = vpop.f32.mrf.mxu0
  %v393 = vadd.f32 0.0, %v392
  %394 = vdwg.mxu0
  %395 = vmatpush.msra.mxu0 0.0
  %396 = vmatpush.msra.mxu0 0.0
  %397 = vmatpush.msra.mxu0 0.0
  %398 = vmatpush.msra.mxu0 0.0
  %399 = vmatpush.msra.mxu0 0.0
  %400 = vmatpush.msra.mxu0 0.0
  %401 = vmatpush.msra.mxu0 0.0
  %402 = vmatpush.msra.mxu0 0.0
  %403 = vmatpush.msra.mxu0 0.0
  %404 = vmatpush.msra.mxu0 0.0
  %405 = vmatpush.msra.mxu0 0.0
  %406 = vmatpush.msra.mxu0 0.0
  %407 = vmatpush.msra.mxu0 0.0
  %408 = vmatpush.msra.mxu0 0.0
  %409 = vmatpush.msra.mxu0 0.0
  %410 = vmatpush.msra.mxu0 %v102
  %411 = vmatmul.f32.gmra.mxu0 %v373
  %v412 = vpop.f32.mrf.mxu0
  %v413 = vadd.f32 0.0, %v412
  %414 = vdwg.mxu0
  %v415 = vadd.f32 %v368, %v393
  %v416 = vadd.f32 %v369, %v413
  %s417 = scalar_lea.vmem %s2, 48
  %v418 = vld [vmem:[%s417] sm:$0xff]
  %v420 = vsel %vm142, %v418, 0
  %422 = vmatpush.msra.mxu0 0.0
  %423 = vmatpush.msra.mxu0 0.0
  %424 = vmatpush.msra.mxu0 0.0
  %425 = vmatpush.msra.mxu0 0.0
  %426 = vmatpush.msra.mxu0 0.0
  %427 = vmatpush.msra.mxu0 0.0
  %428 = vmatpush.msra.mxu0 0.0
  %429 = vmatpush.msra.mxu0 0.0
  %430 = vmatpush.msra.mxu0 0.0
  %431 = vmatpush.msra.mxu0 0.0
  %432 = vmatpush.msra.mxu0 0.0
  %433 = vmatpush.msra.mxu0 0.0
  %434 = vmatpush.msra.mxu0 0.0
  %435 = vmatpush.msra.mxu0 0.0
  %436 = vmatpush.msra.mxu0 0.0
  %437 = vmatpush.msra.mxu0 %v113
  %438 = vmatmul.f32.gmra.mxu0 %v420
  %v439 = vpop.f32.mrf.mxu0
  %v440 = vadd.f32 0.0, %v439
  %441 = vdwg.mxu0
  %442 = vmatpush.msra.mxu0 0.0
  %443 = vmatpush.msra.mxu0 0.0
  %444 = vmatpush.msra.mxu0 0.0
  %445 = vmatpush.msra.mxu0 0.0
  %446 = vmatpush.msra.mxu0 0.0
  %447 = vmatpush.msra.mxu0 0.0
  %448 = vmatpush.msra.mxu0 0.0
  %449 = vmatpush.msra.mxu0 0.0
  %450 = vmatpush.msra.mxu0 0.0
  %451 = vmatpush.msra.mxu0 0.0
  %452 = vmatpush.msra.mxu0 0.0
  %453 = vmatpush.msra.mxu0 0.0
  %454 = vmatpush.msra.mxu0 0.0
  %455 = vmatpush.msra.mxu0 0.0
  %456 = vmatpush.msra.mxu0 0.0
  %457 = vmatpush.msra.mxu0 %v114
  %458 = vmatmul.f32.gmra.mxu0 %v420
  %v459 = vpop.f32.mrf.mxu0
  %v460 = vadd.f32 0.0, %v459
  %461 = vdwg.mxu0
  %v462 = vadd.f32 %v415, %v440
  %v463 = vadd.f32 %v416, %v460
  %s464 = scalar_lea.vmem %s2, 56
  %v465 = vld [vmem:[%s464] sm:$0xff]
  %v467 = vsel %vm142, %v465, 0
  %469 = vmatpush.msra.mxu0 0.0
  %470 = vmatpush.msra.mxu0 0.0
  %471 = vmatpush.msra.mxu0 0.0
  %472 = vmatpush.msra.mxu0 0.0
  %473 = vmatpush.msra.mxu0 0.0
  %474 = vmatpush.msra.mxu0 0.0
  %475 = vmatpush.msra.mxu0 0.0
  %476 = vmatpush.msra.mxu0 0.0
  %477 = vmatpush.msra.mxu0 0.0
  %478 = vmatpush.msra.mxu0 0.0
  %479 = vmatpush.msra.mxu0 0.0
  %480 = vmatpush.msra.mxu0 0.0
  %481 = vmatpush.msra.mxu0 0.0
  %482 = vmatpush.msra.mxu0 0.0
  %483 = vmatpush.msra.mxu0 0.0
  %484 = vmatpush.msra.mxu0 %v125
  %485 = vmatmul.f32.gmra.mxu0 %v467
  %v486 = vpop.f32.mrf.mxu0
  %v487 = vadd.f32 0.0, %v486
  %488 = vdwg.mxu0
  %489 = vmatpush.msra.mxu0 0.0
  %490 = vmatpush.msra.mxu0 0.0
  %491 = vmatpush.msra.mxu0 0.0
  %492 = vmatpush.msra.mxu0 0.0
  %493 = vmatpush.msra.mxu0 0.0
  %494 = vmatpush.msra.mxu0 0.0
  %495 = vmatpush.msra.mxu0 0.0
  %496 = vmatpush.msra.mxu0 0.0
  %497 = vmatpush.msra.mxu0 0.0
  %498 = vmatpush.msra.mxu0 0.0
  %499 = vmatpush.msra.mxu0 0.0
  %500 = vmatpush.msra.mxu0 0.0
  %501 = vmatpush.msra.mxu0 0.0
  %502 = vmatpush.msra.mxu0 0.0
  %503 = vmatpush.msra.mxu0 0.0
  %504 = vmatpush.msra.mxu0 %v126
  %505 = vmatmul.f32.gmra.mxu0 %v467
  %v506 = vpop.f32.mrf.mxu0
  %v507 = vadd.f32 0.0, %v506
  %508 = vdwg.mxu0
  %v509 = vadd.f32 %v462, %v487
  %v510 = vadd.f32 %v463, %v507
  %s511 = scalar_lea.vmem %s2, 64
  %v512 = vld [vmem:[%s511] sm:$0xff]
  %v514 = vsel %vm142, %v512, 0
  %516 = vmatpush.msra.mxu0 0.0
  %517 = vmatpush.msra.mxu0 0.0
  %518 = vmatpush.msra.mxu0 0.0
  %519 = vmatpush.msra.mxu0 0.0
  %520 = vmatpush.msra.mxu0 0.0
  %521 = vmatpush.msra.mxu0 0.0
  %522 = vmatpush.msra.mxu0 0.0
  %523 = vmatpush.msra.mxu0 0.0
  %524 = vmatpush.msra.mxu0 0.0
  %525 = vmatpush.msra.mxu0 0.0
  %526 = vmatpush.msra.mxu0 0.0
  %527 = vmatpush.msra.mxu0 0.0
  %528 = vmatpush.msra.mxu0 0.0
  %529 = vmatpush.msra.mxu0 0.0
  %530 = vmatpush.msra.mxu0 0.0
  %531 = vmatpush.msra.mxu0 %v137
  %532 = vmatmul.f32.gmra.mxu0 %v514
  %v533 = vpop.f32.mrf.mxu0
  %v534 = vadd.f32 0.0, %v533
  %535 = vdwg.mxu0
  %536 = vmatpush.msra.mxu0 0.0
  %537 = vmatpush.msra.mxu0 0.0
  %538 = vmatpush.msra.mxu0 0.0
  %539 = vmatpush.msra.mxu0 0.0
  %540 = vmatpush.msra.mxu0 0.0
  %541 = vmatpush.msra.mxu0 0.0
  %542 = vmatpush.msra.mxu0 0.0
  %543 = vmatpush.msra.mxu0 0.0
  %544 = vmatpush.msra.mxu0 0.0
  %545 = vmatpush.msra.mxu0 0.0
  %546 = vmatpush.msra.mxu0 0.0
  %547 = vmatpush.msra.mxu0 0.0
  %548 = vmatpush.msra.mxu0 0.0
  %549 = vmatpush.msra.mxu0 0.0
  %550 = vmatpush.msra.mxu0 0.0
  %551 = vmatpush.msra.mxu0 %v138
  %552 = vmatmul.f32.gmra.mxu0 %v514
  %v553 = vpop.f32.mrf.mxu0
  %v554 = vadd.f32 0.0, %v553
  %555 = vdwg.mxu0
  %v556 = vadd.f32 %v509, %v534
  %v557 = vadd.f32 %v510, %v554
  %v558 = vadd.f32 %v556, %v557
  %559 = vadd.xlane.f32.xlu0 %v558
  %v560 = vpop.xlane.xlu0 %559
  %v561 = vrcp.pop 256.0
  %v562 = vmul.f32 256.0, %v561
  %v563 = vsub.f32 1.0, %v562
  %v564 = vmul.f32 %v561, %v563
  %v565 = vadd.f32 %v561, %v564
  %vm566 = vweird.f32 %v561
  %v567 = vsel %vm566, %v561, %v565
  %v568 = vmul.f32 %v560, %v567
  %v569 = vsub.f32 %v556, %v568
  %v570 = vsub.f32 %v557, %v568
  %v571 = vmul.f32 %v569, %v569
  %v572 = vmul.f32 %v570, %v570
  %v573 = vadd.f32 %v571, %v572
  %574 = vadd.xlane.f32.xlu0 %v573
  %v575 = vpop.xlane.xlu0 %574
  %v576 = vmul.f32 %v575, %v567
  %v577 = vadd.f32 %v576, 1e-05
  %v578 = vrsqrt.pop %v577
  %v579 = vmul.f32 %v578, %v577
  %v580 = vmul.f32 %v579, %v578
  %v581 = vmul.f32 0.5, %v580
  %v582 = vsub.f32 1.5, %v581
  %v583 = vmul.f32 %v578, %v582
  %vm584 = vweird.f32 %v577
  %vm585 = vweird.f32 %v578
  %vm586 = vmor %vm584, %vm585
  %v587 = vsel %vm586, %v578, %v583
  %v588 = vmul.f32 %v569, %v587
  %v589 = vmul.f32 %v570, %v587
  %vm590 = vcmp.ge.f32.partialorder %v588, 0.0
  %vm591 = vcmp.ge.f32.partialorder %v589, 0.0
  %v592 = vmul.f32 %v588, 0.01
  %v593 = vmul.f32 %v589, 0.01
  %v594 = vsel %vm590, %v588, %v592
  %v595 = vsel %vm591, %v589, %v593
  %596 = vrot.lane.b32.xlu0 %v594, 17
  %v597 = vpop.permute.xlu0 %596
  %598 = vrot.lane.b32.xlu0 %v595, 17
  %v599 = vpop.permute.xlu0 %598
  %v600 = vsel %vm48, %v597, %v599
  %v601 = vsel %vm48, %v599, %v597
  %v602 = vmul.f32 %v601, %v51
  %v603 = vmul.f32 %v600, %v52
  %604 = vrot.lane.b32.xlu0 %v594, 16
  %v605 = vpop.permute.xlu0 %604
  %606 = vrot.lane.b32.xlu0 %v595, 16
  %v607 = vpop.permute.xlu0 %606
  %v608 = vsel %vm59, %v605, %v607
  %v609 = vsel %vm59, %v607, %v605
  %v610 = vmul.f32 %v609, %v63
  %v611 = vmul.f32 %v608, %v64
  %612 = vrot.lane.b32.xlu0 %v594, 15
  %v613 = vpop.permute.xlu0 %612
  %614 = vrot.lane.b32.xlu0 %v595, 15
  %v615 = vpop.permute.xlu0 %614
  %v616 = vsel %vm71, %v613, %v615
  %v617 = vsel %vm71, %v615, %v613
  %v618 = vmul.f32 %v617, %v75
  %v619 = vmul.f32 %v616, %v76
  %620 = vrot.lane.b32.xlu0 %v594, 1
  %v621 = vpop.permute.xlu0 %620
  %622 = vrot.lane.b32.xlu0 %v595, 1
  %v623 = vpop.permute.xlu0 %622
  %v624 = vsel %vm83, %v621, %v623
  %v625 = vsel %vm83, %v623, %v621
  %v626 = vmul.f32 %v625, %v87
  %v627 = vmul.f32 %v624, %v88
  %628 = vrot.lane.b32.xlu0 %v594, 127
  %v629 = vpop.permute.xlu0 %628
  %630 = vrot.lane.b32.xlu0 %v595, 127
  %v631 = vpop.permute.xlu0 %630
  %v632 = vsel %vm95, %v629, %v631
  %v633 = vsel %vm95, %v631, %v629
  %v634 = vmul.f32 %v632, %v99
  %v635 = vmul.f32 %v633, %v100
  %636 = vrot.lane.b32.xlu0 %v594, 113
  %v637 = vpop.permute.xlu0 %636
  %638 = vrot.lane.b32.xlu0 %v595, 113
  %v639 = vpop.permute.xlu0 %638
  %v640 = vsel %vm107, %v637, %v639
  %v641 = vsel %vm107, %v639, %v637
  %v642 = vmul.f32 %v640, %v111
  %v643 = vmul.f32 %v641, %v112
  %644 = vrot.lane.b32.xlu0 %v594, 112
  %v645 = vpop.permute.xlu0 %644
  %646 = vrot.lane.b32.xlu0 %v595, 112
  %v647 = vpop.permute.xlu0 %646
  %v648 = vsel %vm119, %v645, %v647
  %v649 = vsel %vm119, %v647, %v645
  %v650 = vmul.f32 %v648, %v123
  %v651 = vmul.f32 %v649, %v124
  %652 = vrot.lane.b32.xlu0 %v594, 111
  %v653 = vpop.permute.xlu0 %652
  %654 = vrot.lane.b32.xlu0 %v595, 111
  %v655 = vpop.permute.xlu0 %654
  %v656 = vsel %vm131, %v653, %v655
  %v657 = vsel %vm131, %v655, %v653
  %v658 = vmul.f32 %v656, %v135
  %v659 = vmul.f32 %v657, %v136
  %v660 = vld [vmem:[%s3] sm:$0xff]
  %s661 = scalar_lea.vmem %s3, 8
  %v662 = vld [vmem:[%s661] sm:$0xff]
  %v664 = vsel %vm142, %v662, 0
  %666 = vmatpush.msra.mxu0 0.0
  %667 = vmatpush.msra.mxu0 0.0
  %668 = vmatpush.msra.mxu0 0.0
  %669 = vmatpush.msra.mxu0 0.0
  %670 = vmatpush.msra.mxu0 0.0
  %671 = vmatpush.msra.mxu0 0.0
  %672 = vmatpush.msra.mxu0 0.0
  %673 = vmatpush.msra.mxu0 0.0
  %674 = vmatpush.msra.mxu0 0.0
  %675 = vmatpush.msra.mxu0 0.0
  %676 = vmatpush.msra.mxu0 0.0
  %677 = vmatpush.msra.mxu0 0.0
  %678 = vmatpush.msra.mxu0 0.0
  %679 = vmatpush.msra.mxu0 0.0
  %680 = vmatpush.msra.mxu0 0.0
  %681 = vmatpush.msra.mxu0 %v610
  %682 = vmatmul.f32.gmra.mxu0 %v664
  %v683 = vpop.f32.mrf.mxu0
  %v684 = vadd.f32 0.0, %v683
  %685 = vdwg.mxu0
  %686 = vmatpush.msra.mxu0 0.0
  %687 = vmatpush.msra.mxu0 0.0
  %688 = vmatpush.msra.mxu0 0.0
  %689 = vmatpush.msra.mxu0 0.0
  %690 = vmatpush.msra.mxu0 0.0
  %691 = vmatpush.msra.mxu0 0.0
  %692 = vmatpush.msra.mxu0 0.0
  %693 = vmatpush.msra.mxu0 0.0
  %694 = vmatpush.msra.mxu0 0.0
  %695 = vmatpush.msra.mxu0 0.0
  %696 = vmatpush.msra.mxu0 0.0
  %697 = vmatpush.msra.mxu0 0.0
  %698 = vmatpush.msra.mxu0 0.0
  %699 = vmatpush.msra.mxu0 0.0
  %700 = vmatpush.msra.mxu0 0.0
  %701 = vmatpush.msra.mxu0 %v611
  %702 = vmatmul.f32.gmra.mxu0 %v664
  %v703 = vpop.f32.mrf.mxu0
  %v704 = vadd.f32 0.0, %v703
  %705 = vdwg.mxu0
  %v707 = vsel %vm142, %v660, 0
  %709 = vmatpush.msra.mxu0 0.0
  %710 = vmatpush.msra.mxu0 0.0
  %711 = vmatpush.msra.mxu0 0.0
  %712 = vmatpush.msra.mxu0 0.0
  %713 = vmatpush.msra.mxu0 0.0
  %714 = vmatpush.msra.mxu0 0.0
  %715 = vmatpush.msra.mxu0 0.0
  %716 = vmatpush.msra.mxu0 0.0
  %717 = vmatpush.msra.mxu0 0.0
  %718 = vmatpush.msra.mxu0 0.0
  %719 = vmatpush.msra.mxu0 0.0
  %720 = vmatpush.msra.mxu0 0.0
  %721 = vmatpush.msra.mxu0 0.0
  %722 = vmatpush.msra.mxu0 0.0
  %723 = vmatpush.msra.mxu0 0.0
  %724 = vmatpush.msra.mxu0 %v602
  %725 = vmatmul.f32.gmra.mxu0 %v707
  %v726 = vpop.f32.mrf.mxu0
  %v727 = vadd.f32 %v684, %v726
  %728 = vdwg.mxu0
  %729 = vmatpush.msra.mxu0 0.0
  %730 = vmatpush.msra.mxu0 0.0
  %731 = vmatpush.msra.mxu0 0.0
  %732 = vmatpush.msra.mxu0 0.0
  %733 = vmatpush.msra.mxu0 0.0
  %734 = vmatpush.msra.mxu0 0.0
  %735 = vmatpush.msra.mxu0 0.0
  %736 = vmatpush.msra.mxu0 0.0
  %737 = vmatpush.msra.mxu0 0.0
  %738 = vmatpush.msra.mxu0 0.0
  %739 = vmatpush.msra.mxu0 0.0
  %740 = vmatpush.msra.mxu0 0.0
  %741 = vmatpush.msra.mxu0 0.0
  %742 = vmatpush.msra.mxu0 0.0
  %743 = vmatpush.msra.mxu0 0.0
  %744 = vmatpush.msra.mxu0 %v603
  %745 = vmatmul.f32.gmra.mxu0 %v707
  %v746 = vpop.f32.mrf.mxu0
  %v747 = vadd.f32 %v704, %v746
  %748 = vdwg.mxu0
  %s749 = scalar_lea.vmem %s3, 16
  %v750 = vld [vmem:[%s749] sm:$0xff]
  %v752 = vsel %vm142, %v750, 0
  %754 = vmatpush.msra.mxu0 0.0
  %755 = vmatpush.msra.mxu0 0.0
  %756 = vmatpush.msra.mxu0 0.0
  %757 = vmatpush.msra.mxu0 0.0
  %758 = vmatpush.msra.mxu0 0.0
  %759 = vmatpush.msra.mxu0 0.0
  %760 = vmatpush.msra.mxu0 0.0
  %761 = vmatpush.msra.mxu0 0.0
  %762 = vmatpush.msra.mxu0 0.0
  %763 = vmatpush.msra.mxu0 0.0
  %764 = vmatpush.msra.mxu0 0.0
  %765 = vmatpush.msra.mxu0 0.0
  %766 = vmatpush.msra.mxu0 0.0
  %767 = vmatpush.msra.mxu0 0.0
  %768 = vmatpush.msra.mxu0 0.0
  %769 = vmatpush.msra.mxu0 %v618
  %770 = vmatmul.f32.gmra.mxu0 %v752
  %v771 = vpop.f32.mrf.mxu0
  %v772 = vadd.f32 0.0, %v771
  %773 = vdwg.mxu0
  %774 = vmatpush.msra.mxu0 0.0
  %775 = vmatpush.msra.mxu0 0.0
  %776 = vmatpush.msra.mxu0 0.0
  %777 = vmatpush.msra.mxu0 0.0
  %778 = vmatpush.msra.mxu0 0.0
  %779 = vmatpush.msra.mxu0 0.0
  %780 = vmatpush.msra.mxu0 0.0
  %781 = vmatpush.msra.mxu0 0.0
  %782 = vmatpush.msra.mxu0 0.0
  %783 = vmatpush.msra.mxu0 0.0
  %784 = vmatpush.msra.mxu0 0.0
  %785 = vmatpush.msra.mxu0 0.0
  %786 = vmatpush.msra.mxu0 0.0
  %787 = vmatpush.msra.mxu0 0.0
  %788 = vmatpush.msra.mxu0 0.0
  %789 = vmatpush.msra.mxu0 %v619
  %790 = vmatmul.f32.gmra.mxu0 %v752
  %v791 = vpop.f32.mrf.mxu0
  %v792 = vadd.f32 0.0, %v791
  %793 = vdwg.mxu0
  %v794 = vadd.f32 %v727, %v772
  %v795 = vadd.f32 %v747, %v792
  %s796 = scalar_lea.vmem %s3, 24
  %v797 = vld [vmem:[%s796] sm:$0xff]
  %v799 = vsel %vm142, %v797, 0
  %801 = vmatpush.msra.mxu0 0.0
  %802 = vmatpush.msra.mxu0 0.0
  %803 = vmatpush.msra.mxu0 0.0
  %804 = vmatpush.msra.mxu0 0.0
  %805 = vmatpush.msra.mxu0 0.0
  %806 = vmatpush.msra.mxu0 0.0
  %807 = vmatpush.msra.mxu0 0.0
  %808 = vmatpush.msra.mxu0 0.0
  %809 = vmatpush.msra.mxu0 0.0
  %810 = vmatpush.msra.mxu0 0.0
  %811 = vmatpush.msra.mxu0 0.0
  %812 = vmatpush.msra.mxu0 0.0
  %813 = vmatpush.msra.mxu0 0.0
  %814 = vmatpush.msra.mxu0 0.0
  %815 = vmatpush.msra.mxu0 0.0
  %816 = vmatpush.msra.mxu0 %v626
  %817 = vmatmul.f32.gmra.mxu0 %v799
  %v818 = vpop.f32.mrf.mxu0
  %v819 = vadd.f32 0.0, %v818
  %820 = vdwg.mxu0
  %821 = vmatpush.msra.mxu0 0.0
  %822 = vmatpush.msra.mxu0 0.0
  %823 = vmatpush.msra.mxu0 0.0
  %824 = vmatpush.msra.mxu0 0.0
  %825 = vmatpush.msra.mxu0 0.0
  %826 = vmatpush.msra.mxu0 0.0
  %827 = vmatpush.msra.mxu0 0.0
  %828 = vmatpush.msra.mxu0 0.0
  %829 = vmatpush.msra.mxu0 0.0
  %830 = vmatpush.msra.mxu0 0.0
  %831 = vmatpush.msra.mxu0 0.0
  %832 = vmatpush.msra.mxu0 0.0
  %833 = vmatpush.msra.mxu0 0.0
  %834 = vmatpush.msra.mxu0 0.0
  %835 = vmatpush.msra.mxu0 0.0
  %836 = vmatpush.msra.mxu0 %v627
  %837 = vmatmul.f32.gmra.mxu0 %v799
  %v838 = vpop.f32.mrf.mxu0
  %v839 = vadd.f32 0.0, %v838
  %840 = vdwg.mxu0
  %v841 = vadd.f32 %v794, %v819
  %v842 = vadd.f32 %v795, %v839
  %s843 = scalar_lea.vmem %s3, 32
  %v844 = vld [vmem:[%s843] sm:$0xff]
  %v846 = vsel %vm142, %v844, 0
  %848 = vmatpush.msra.mxu0 0.0
  %849 = vmatpush.msra.mxu0 0.0
  %850 = vmatpush.msra.mxu0 0.0
  %851 = vmatpush.msra.mxu0 0.0
  %852 = vmatpush.msra.mxu0 0.0
  %853 = vmatpush.msra.mxu0 0.0
  %854 = vmatpush.msra.mxu0 0.0
  %855 = vmatpush.msra.mxu0 0.0
  %856 = vmatpush.msra.mxu0 0.0
  %857 = vmatpush.msra.mxu0 0.0
  %858 = vmatpush.msra.mxu0 0.0
  %859 = vmatpush.msra.mxu0 0.0
  %860 = vmatpush.msra.mxu0 0.0
  %861 = vmatpush.msra.mxu0 0.0
  %862 = vmatpush.msra.mxu0 0.0
  %863 = vmatpush.msra.mxu0 %v594
  %864 = vmatmul.f32.gmra.mxu0 %v846
  %v865 = vpop.f32.mrf.mxu0
  %v866 = vadd.f32 0.0, %v865
  %867 = vdwg.mxu0
  %868 = vmatpush.msra.mxu0 0.0
  %869 = vmatpush.msra.mxu0 0.0
  %870 = vmatpush.msra.mxu0 0.0
  %871 = vmatpush.msra.mxu0 0.0
  %872 = vmatpush.msra.mxu0 0.0
  %873 = vmatpush.msra.mxu0 0.0
  %874 = vmatpush.msra.mxu0 0.0
  %875 = vmatpush.msra.mxu0 0.0
  %876 = vmatpush.msra.mxu0 0.0
  %877 = vmatpush.msra.mxu0 0.0
  %878 = vmatpush.msra.mxu0 0.0
  %879 = vmatpush.msra.mxu0 0.0
  %880 = vmatpush.msra.mxu0 0.0
  %881 = vmatpush.msra.mxu0 0.0
  %882 = vmatpush.msra.mxu0 0.0
  %883 = vmatpush.msra.mxu0 %v595
  %884 = vmatmul.f32.gmra.mxu0 %v846
  %v885 = vpop.f32.mrf.mxu0
  %v886 = vadd.f32 0.0, %v885
  %887 = vdwg.mxu0
  %v888 = vadd.f32 %v841, %v866
  %v889 = vadd.f32 %v842, %v886
  %s890 = scalar_lea.vmem %s3, 40
  %v891 = vld [vmem:[%s890] sm:$0xff]
  %v893 = vsel %vm142, %v891, 0
  %895 = vmatpush.msra.mxu0 0.0
  %896 = vmatpush.msra.mxu0 0.0
  %897 = vmatpush.msra.mxu0 0.0
  %898 = vmatpush.msra.mxu0 0.0
  %899 = vmatpush.msra.mxu0 0.0
  %900 = vmatpush.msra.mxu0 0.0
  %901 = vmatpush.msra.mxu0 0.0
  %902 = vmatpush.msra.mxu0 0.0
  %903 = vmatpush.msra.mxu0 0.0
  %904 = vmatpush.msra.mxu0 0.0
  %905 = vmatpush.msra.mxu0 0.0
  %906 = vmatpush.msra.mxu0 0.0
  %907 = vmatpush.msra.mxu0 0.0
  %908 = vmatpush.msra.mxu0 0.0
  %909 = vmatpush.msra.mxu0 0.0
  %910 = vmatpush.msra.mxu0 %v634
  %911 = vmatmul.f32.gmra.mxu0 %v893
  %v912 = vpop.f32.mrf.mxu0
  %v913 = vadd.f32 0.0, %v912
  %914 = vdwg.mxu0
  %915 = vmatpush.msra.mxu0 0.0
  %916 = vmatpush.msra.mxu0 0.0
  %917 = vmatpush.msra.mxu0 0.0
  %918 = vmatpush.msra.mxu0 0.0
  %919 = vmatpush.msra.mxu0 0.0
  %920 = vmatpush.msra.mxu0 0.0
  %921 = vmatpush.msra.mxu0 0.0
  %922 = vmatpush.msra.mxu0 0.0
  %923 = vmatpush.msra.mxu0 0.0
  %924 = vmatpush.msra.mxu0 0.0
  %925 = vmatpush.msra.mxu0 0.0
  %926 = vmatpush.msra.mxu0 0.0
  %927 = vmatpush.msra.mxu0 0.0
  %928 = vmatpush.msra.mxu0 0.0
  %929 = vmatpush.msra.mxu0 0.0
  %930 = vmatpush.msra.mxu0 %v635
  %931 = vmatmul.f32.gmra.mxu0 %v893
  %v932 = vpop.f32.mrf.mxu0
  %v933 = vadd.f32 0.0, %v932
  %934 = vdwg.mxu0
  %v935 = vadd.f32 %v888, %v913
  %v936 = vadd.f32 %v889, %v933
  %s937 = scalar_lea.vmem %s3, 48
  %v938 = vld [vmem:[%s937] sm:$0xff]
  %v940 = vsel %vm142, %v938, 0
  %942 = vmatpush.msra.mxu0 0.0
  %943 = vmatpush.msra.mxu0 0.0
  %944 = vmatpush.msra.mxu0 0.0
  %945 = vmatpush.msra.mxu0 0.0
  %946 = vmatpush.msra.mxu0 0.0
  %947 = vmatpush.msra.mxu0 0.0
  %948 = vmatpush.msra.mxu0 0.0
  %949 = vmatpush.msra.mxu0 0.0
  %950 = vmatpush.msra.mxu0 0.0
  %951 = vmatpush.msra.mxu0 0.0
  %952 = vmatpush.msra.mxu0 0.0
  %953 = vmatpush.msra.mxu0 0.0
  %954 = vmatpush.msra.mxu0 0.0
  %955 = vmatpush.msra.mxu0 0.0
  %956 = vmatpush.msra.mxu0 0.0
  %957 = vmatpush.msra.mxu0 %v642
  %958 = vmatmul.f32.gmra.mxu0 %v940
  %v959 = vpop.f32.mrf.mxu0
  %v960 = vadd.f32 0.0, %v959
  %961 = vdwg.mxu0
  %962 = vmatpush.msra.mxu0 0.0
  %963 = vmatpush.msra.mxu0 0.0
  %964 = vmatpush.msra.mxu0 0.0
  %965 = vmatpush.msra.mxu0 0.0
  %966 = vmatpush.msra.mxu0 0.0
  %967 = vmatpush.msra.mxu0 0.0
  %968 = vmatpush.msra.mxu0 0.0
  %969 = vmatpush.msra.mxu0 0.0
  %970 = vmatpush.msra.mxu0 0.0
  %971 = vmatpush.msra.mxu0 0.0
  %972 = vmatpush.msra.mxu0 0.0
  %973 = vmatpush.msra.mxu0 0.0
  %974 = vmatpush.msra.mxu0 0.0
  %975 = vmatpush.msra.mxu0 0.0
  %976 = vmatpush.msra.mxu0 0.0
  %977 = vmatpush.msra.mxu0 %v643
  %978 = vmatmul.f32.gmra.mxu0 %v940
  %v979 = vpop.f32.mrf.mxu0
  %v980 = vadd.f32 0.0, %v979
  %981 = vdwg.mxu0
  %v982 = vadd.f32 %v935, %v960
  %v983 = vadd.f32 %v936, %v980
  %s984 = scalar_lea.vmem %s3, 56
  %v985 = vld [vmem:[%s984] sm:$0xff]
  %v987 = vsel %vm142, %v985, 0
  %989 = vmatpush.msra.mxu0 0.0
  %990 = vmatpush.msra.mxu0 0.0
  %991 = vmatpush.msra.mxu0 0.0
  %992 = vmatpush.msra.mxu0 0.0
  %993 = vmatpush.msra.mxu0 0.0
  %994 = vmatpush.msra.mxu0 0.0
  %995 = vmatpush.msra.mxu0 0.0
  %996 = vmatpush.msra.mxu0 0.0
  %997 = vmatpush.msra.mxu0 0.0
  %998 = vmatpush.msra.mxu0 0.0
  %999 = vmatpush.msra.mxu0 0.0
  %1000 = vmatpush.msra.mxu0 0.0
  %1001 = vmatpush.msra.mxu0 0.0
  %1002 = vmatpush.msra.mxu0 0.0
  %1003 = vmatpush.msra.mxu0 0.0
  %1004 = vmatpush.msra.mxu0 %v650
  %1005 = vmatmul.f32.gmra.mxu0 %v987
  %v1006 = vpop.f32.mrf.mxu0
  %v1007 = vadd.f32 0.0, %v1006
  %1008 = vdwg.mxu0
  %1009 = vmatpush.msra.mxu0 0.0
  %1010 = vmatpush.msra.mxu0 0.0
  %1011 = vmatpush.msra.mxu0 0.0
  %1012 = vmatpush.msra.mxu0 0.0
  %1013 = vmatpush.msra.mxu0 0.0
  %1014 = vmatpush.msra.mxu0 0.0
  %1015 = vmatpush.msra.mxu0 0.0
  %1016 = vmatpush.msra.mxu0 0.0
  %1017 = vmatpush.msra.mxu0 0.0
  %1018 = vmatpush.msra.mxu0 0.0
  %1019 = vmatpush.msra.mxu0 0.0
  %1020 = vmatpush.msra.mxu0 0.0
  %1021 = vmatpush.msra.mxu0 0.0
  %1022 = vmatpush.msra.mxu0 0.0
  %1023 = vmatpush.msra.mxu0 0.0
  %1024 = vmatpush.msra.mxu0 %v651
  %1025 = vmatmul.f32.gmra.mxu0 %v987
  %v1026 = vpop.f32.mrf.mxu0
  %v1027 = vadd.f32 0.0, %v1026
  %1028 = vdwg.mxu0
  %v1029 = vadd.f32 %v982, %v1007
  %v1030 = vadd.f32 %v983, %v1027
  %s1031 = scalar_lea.vmem %s3, 64
  %v1032 = vld [vmem:[%s1031] sm:$0xff]
  %v1034 = vsel %vm142, %v1032, 0
  %1036 = vmatpush.msra.mxu0 0.0
  %1037 = vmatpush.msra.mxu0 0.0
  %1038 = vmatpush.msra.mxu0 0.0
  %1039 = vmatpush.msra.mxu0 0.0
  %1040 = vmatpush.msra.mxu0 0.0
  %1041 = vmatpush.msra.mxu0 0.0
  %1042 = vmatpush.msra.mxu0 0.0
  %1043 = vmatpush.msra.mxu0 0.0
  %1044 = vmatpush.msra.mxu0 0.0
  %1045 = vmatpush.msra.mxu0 0.0
  %1046 = vmatpush.msra.mxu0 0.0
  %1047 = vmatpush.msra.mxu0 0.0
  %1048 = vmatpush.msra.mxu0 0.0
  %1049 = vmatpush.msra.mxu0 0.0
  %1050 = vmatpush.msra.mxu0 0.0
  %1051 = vmatpush.msra.mxu0 %v658
  %1052 = vmatmul.f32.gmra.mxu0 %v1034
  %v1053 = vpop.f32.mrf.mxu0
  %v1054 = vadd.f32 0.0, %v1053
  %1055 = vdwg.mxu0
  %1056 = vmatpush.msra.mxu0 0.0
  %1057 = vmatpush.msra.mxu0 0.0
  %1058 = vmatpush.msra.mxu0 0.0
  %1059 = vmatpush.msra.mxu0 0.0
  %1060 = vmatpush.msra.mxu0 0.0
  %1061 = vmatpush.msra.mxu0 0.0
  %1062 = vmatpush.msra.mxu0 0.0
  %1063 = vmatpush.msra.mxu0 0.0
  %1064 = vmatpush.msra.mxu0 0.0
  %1065 = vmatpush.msra.mxu0 0.0
  %1066 = vmatpush.msra.mxu0 0.0
  %1067 = vmatpush.msra.mxu0 0.0
  %1068 = vmatpush.msra.mxu0 0.0
  %1069 = vmatpush.msra.mxu0 0.0
  %1070 = vmatpush.msra.mxu0 0.0
  %1071 = vmatpush.msra.mxu0 %v659
  %1072 = vmatmul.f32.gmra.mxu0 %v1034
  %v1073 = vpop.f32.mrf.mxu0
  %v1074 = vadd.f32 0.0, %v1073
  %1075 = vdwg.mxu0
  %v1076 = vadd.f32 %v1029, %v1054
  %v1077 = vadd.f32 %v1030, %v1074
  %v1078 = vadd.f32 %v1076, %v1077
  %1079 = vadd.xlane.f32.xlu0 %v1078
  %v1080 = vpop.xlane.xlu0 %1079
  %v1081 = vmul.f32 %v1080, %v567
  %v1082 = vsub.f32 %v1076, %v1081
  %v1083 = vsub.f32 %v1077, %v1081
  %v1084 = vmul.f32 %v1082, %v1082
  %v1085 = vmul.f32 %v1083, %v1083
  %v1086 = vadd.f32 %v1084, %v1085
  %1087 = vadd.xlane.f32.xlu0 %v1086
  %v1088 = vpop.xlane.xlu0 %1087
  %v1089 = vmul.f32 %v1088, %v567
  %v1090 = vadd.f32 %v1089, 1e-05
  %v1091 = vrsqrt.pop %v1090
  %v1092 = vmul.f32 %v1091, %v1090
  %v1093 = vmul.f32 %v1092, %v1091
  %v1094 = vmul.f32 0.5, %v1093
  %v1095 = vsub.f32 1.5, %v1094
  %v1096 = vmul.f32 %v1091, %v1095
  %vm1097 = vweird.f32 %v1090
  %vm1098 = vweird.f32 %v1091
  %vm1099 = vmor %vm1097, %vm1098
  %v1100 = vsel %vm1099, %v1091, %v1096
  %v1101 = vmul.f32 %v1082, %v1100
  %v1102 = vmul.f32 %v1083, %v1100
  %vm1103 = vcmp.ge.f32.partialorder %v1101, 0.0
  %vm1104 = vcmp.ge.f32.partialorder %v1102, 0.0
  %v1105 = vmul.f32 %v1101, 0.01
  %v1106 = vmul.f32 %v1102, 0.01
  %v1107 = vsel %vm1103, %v1101, %v1105
  %v1108 = vsel %vm1104, %v1102, %v1106
  %1109 = vst [vmem:[%s11 + $0x10] sm:$0xff] %v1107
  %1110 = vst [vmem:[%s11 + $0x18] sm:$0xff] %v1108
  %1111 = vrot.lane.b32.xlu0 %v1107, 17
  %v1112 = vpop.permute.xlu0 %1111
  %1113 = vrot.lane.b32.xlu0 %v1108, 17
  %v1114 = vpop.permute.xlu0 %1113
  %v1115 = vsel %vm48, %v1112, %v1114
  %v1116 = vsel %vm48, %v1114, %v1112
  %v1117 = vld [vmem:[%s1] sm:$0xff]
  %v1118 = vld [vmem:[%s1 + $0x8] sm:$0xff]
  %v1119 = vmul.f32 %v1116, %v1117
  %v1120 = vmul.f32 %v1115, %v1118
  %1121 = vrot.lane.b32.xlu0 %v1107, 16
  %v1122 = vpop.permute.xlu0 %1121
  %1123 = vrot.lane.b32.xlu0 %v1108, 16
  %v1124 = vpop.permute.xlu0 %1123
  %v1125 = vsel %vm59, %v1122, %v1124
  %v1126 = vsel %vm59, %v1124, %v1122
  %v1127 = vld [vmem:[%s62] sm:$0xff]
  %v1128 = vld [vmem:[%s62 + $0x8] sm:$0xff]
  %v1129 = vmul.f32 %v1126, %v1127
  %v1130 = vmul.f32 %v1125, %v1128
  %1131 = vrot.lane.b32.xlu0 %v1107, 15
  %v1132 = vpop.permute.xlu0 %1131
  %1133 = vrot.lane.b32.xlu0 %v1108, 15
  %v1134 = vpop.permute.xlu0 %1133
  %v1135 = vsel %vm71, %v1132, %v1134
  %v1136 = vsel %vm71, %v1134, %v1132
  %v1137 = vld [vmem:[%s74] sm:$0xff]
  %v1138 = vld [vmem:[%s74 + $0x8] sm:$0xff]
  %v1139 = vmul.f32 %v1136, %v1137
  %v1140 = vmul.f32 %v1135, %v1138
  %1141 = vrot.lane.b32.xlu0 %v1107, 1
  %v1142 = vpop.permute.xlu0 %1141
  %1143 = vrot.lane.b32.xlu0 %v1108, 1
  %v1144 = vpop.permute.xlu0 %1143
  %v1145 = vsel %vm83, %v1142, %v1144
  %v1146 = vsel %vm83, %v1144, %v1142
  %v1147 = vld [vmem:[%s86] sm:$0xff]
  %v1148 = vld [vmem:[%s86 + $0x8] sm:$0xff]
  %v1149 = vmul.f32 %v1146, %v1147
  %v1150 = vmul.f32 %v1145, %v1148
  %1151 = vrot.lane.b32.xlu0 %v1107, 127
  %v1152 = vpop.permute.xlu0 %1151
  %1153 = vrot.lane.b32.xlu0 %v1108, 127
  %v1154 = vpop.permute.xlu0 %1153
  %v1155 = vsel %vm95, %v1152, %v1154
  %v1156 = vsel %vm95, %v1154, %v1152
  %v1157 = vld [vmem:[%s98] sm:$0xff]
  %v1158 = vld [vmem:[%s98 + $0x8] sm:$0xff]
  %v1159 = vmul.f32 %v1155, %v1157
  %v1160 = vmul.f32 %v1156, %v1158
  %1161 = vrot.lane.b32.xlu0 %v1107, 113
  %v1162 = vpop.permute.xlu0 %1161
  %1163 = vrot.lane.b32.xlu0 %v1108, 113
  %v1164 = vpop.permute.xlu0 %1163
  %v1165 = vsel %vm107, %v1162, %v1164
  %v1166 = vsel %vm107, %v1164, %v1162
  %v1167 = vld [vmem:[%s110] sm:$0xff]
  %v1168 = vld [vmem:[%s110 + $0x8] sm:$0xff]
  %v1169 = vmul.f32 %v1165, %v1167
  %v1170 = vmul.f32 %v1166, %v1168
  %1171 = vrot.lane.b32.xlu0 %v1107, 112
  %v1172 = vpop.permute.xlu0 %1171
  %1173 = vrot.lane.b32.xlu0 %v1108, 112
  %v1174 = vpop.permute.xlu0 %1173
  %v1175 = vsel %vm119, %v1172, %v1174
  %v1176 = vsel %vm119, %v1174, %v1172
  %v1177 = vld [vmem:[%s122] sm:$0xff]
  %v1178 = vld [vmem:[%s122 + $0x8] sm:$0xff]
  %v1179 = vmul.f32 %v1175, %v1177
  %v1180 = vmul.f32 %v1176, %v1178
  %1181 = vrot.lane.b32.xlu0 %v1107, 111
  %v1182 = vpop.permute.xlu0 %1181
  %1183 = vrot.lane.b32.xlu0 %v1108, 111
  %v1184 = vpop.permute.xlu0 %1183
  %v1185 = vsel %vm131, %v1182, %v1184
  %v1186 = vsel %vm131, %v1184, %v1182
  %v1187 = vld [vmem:[%s134] sm:$0xff]
  %v1188 = vld [vmem:[%s134 + $0x8] sm:$0xff]
  %v1189 = vmul.f32 %v1185, %v1187
  %v1190 = vmul.f32 %v1186, %v1188
  %v1191 = vld [vmem:[%s4] sm:$0xff]
  %s1192 = scalar_lea.vmem %s4, 8
  %v1193 = vld [vmem:[%s1192] sm:$0xff]
  %v1195 = vsel %vm142, %v1193, 0
  %1197 = vmatpush.msra.mxu0 0.0
  %1198 = vmatpush.msra.mxu0 0.0
  %1199 = vmatpush.msra.mxu0 0.0
  %1200 = vmatpush.msra.mxu0 0.0
  %1201 = vmatpush.msra.mxu0 0.0
  %1202 = vmatpush.msra.mxu0 0.0
  %1203 = vmatpush.msra.mxu0 0.0
  %1204 = vmatpush.msra.mxu0 0.0
  %1205 = vmatpush.msra.mxu0 0.0
  %1206 = vmatpush.msra.mxu0 0.0
  %1207 = vmatpush.msra.mxu0 0.0
  %1208 = vmatpush.msra.mxu0 0.0
  %1209 = vmatpush.msra.mxu0 0.0
  %1210 = vmatpush.msra.mxu0 0.0
  %1211 = vmatpush.msra.mxu0 0.0
  %1212 = vmatpush.msra.mxu0 %v65
  %1213 = vmatmul.f32.gmra.mxu0 %v1195
  %v1214 = vpop.f32.mrf.mxu0
  %v1215 = vadd.f32 0.0, %v1214
  %1216 = vdwg.mxu0
  %1217 = vmatpush.msra.mxu0 0.0
  %1218 = vmatpush.msra.mxu0 0.0
  %1219 = vmatpush.msra.mxu0 0.0
  %1220 = vmatpush.msra.mxu0 0.0
  %1221 = vmatpush.msra.mxu0 0.0
  %1222 = vmatpush.msra.mxu0 0.0
  %1223 = vmatpush.msra.mxu0 0.0
  %1224 = vmatpush.msra.mxu0 0.0
  %1225 = vmatpush.msra.mxu0 0.0
  %1226 = vmatpush.msra.mxu0 0.0
  %1227 = vmatpush.msra.mxu0 0.0
  %1228 = vmatpush.msra.mxu0 0.0
  %1229 = vmatpush.msra.mxu0 0.0
  %1230 = vmatpush.msra.mxu0 0.0
  %1231 = vmatpush.msra.mxu0 0.0
  %1232 = vmatpush.msra.mxu0 %v66
  %1233 = vmatmul.f32.gmra.mxu0 %v1195
  %v1234 = vpop.f32.mrf.mxu0
  %v1235 = vadd.f32 0.0, %v1234
  %1236 = vdwg.mxu0
  %v1238 = vsel %vm142, %v1191, 0
  %1240 = vmatpush.msra.mxu0 0.0
  %1241 = vmatpush.msra.mxu0 0.0
  %1242 = vmatpush.msra.mxu0 0.0
  %1243 = vmatpush.msra.mxu0 0.0
  %1244 = vmatpush.msra.mxu0 0.0
  %1245 = vmatpush.msra.mxu0 0.0
  %1246 = vmatpush.msra.mxu0 0.0
  %1247 = vmatpush.msra.mxu0 0.0
  %1248 = vmatpush.msra.mxu0 0.0
  %1249 = vmatpush.msra.mxu0 0.0
  %1250 = vmatpush.msra.mxu0 0.0
  %1251 = vmatpush.msra.mxu0 0.0
  %1252 = vmatpush.msra.mxu0 0.0
  %1253 = vmatpush.msra.mxu0 0.0
  %1254 = vmatpush.msra.mxu0 0.0
  %1255 = vmatpush.msra.mxu0 %v53
  %1256 = vmatmul.f32.gmra.mxu0 %v1238
  %v1257 = vpop.f32.mrf.mxu0
  %v1258 = vadd.f32 %v1215, %v1257
  %1259 = vdwg.mxu0
  %1260 = vmatpush.msra.mxu0 0.0
  %1261 = vmatpush.msra.mxu0 0.0
  %1262 = vmatpush.msra.mxu0 0.0
  %1263 = vmatpush.msra.mxu0 0.0
  %1264 = vmatpush.msra.mxu0 0.0
  %1265 = vmatpush.msra.mxu0 0.0
  %1266 = vmatpush.msra.mxu0 0.0
  %1267 = vmatpush.msra.mxu0 0.0
  %1268 = vmatpush.msra.mxu0 0.0
  %1269 = vmatpush.msra.mxu0 0.0
  %1270 = vmatpush.msra.mxu0 0.0
  %1271 = vmatpush.msra.mxu0 0.0
  %1272 = vmatpush.msra.mxu0 0.0
  %1273 = vmatpush.msra.mxu0 0.0
  %1274 = vmatpush.msra.mxu0 0.0
  %1275 = vmatpush.msra.mxu0 %v54
  %1276 = vmatmul.f32.gmra.mxu0 %v1238
  %v1277 = vpop.f32.mrf.mxu0
  %v1278 = vadd.f32 %v1235, %v1277
  %1279 = vdwg.mxu0
  %s1280 = scalar_lea.vmem %s4, 16
  %v1281 = vld [vmem:[%s1280] sm:$0xff]
  %v1283 = vsel %vm142, %v1281, 0
  %1285 = vmatpush.msra.mxu0 0.0
  %1286 = vmatpush.msra.mxu0 0.0
  %1287 = vmatpush.msra.mxu0 0.0
  %1288 = vmatpush.msra.mxu0 0.0
  %1289 = vmatpush.msra.mxu0 0.0
  %1290 = vmatpush.msra.mxu0 0.0
  %1291 = vmatpush.msra.mxu0 0.0
  %1292 = vmatpush.msra.mxu0 0.0
  %1293 = vmatpush.msra.mxu0 0.0
  %1294 = vmatpush.msra.mxu0 0.0
  %1295 = vmatpush.msra.mxu0 0.0
  %1296 = vmatpush.msra.mxu0 0.0
  %1297 = vmatpush.msra.mxu0 0.0
  %1298 = vmatpush.msra.mxu0 0.0
  %1299 = vmatpush.msra.mxu0 0.0
  %1300 = vmatpush.msra.mxu0 %v77
  %1301 = vmatmul.f32.gmra.mxu0 %v1283
  %v1302 = vpop.f32.mrf.mxu0
  %v1303 = vadd.f32 0.0, %v1302
  %1304 = vdwg.mxu0
  %1305 = vmatpush.msra.mxu0 0.0
  %1306 = vmatpush.msra.mxu0 0.0
  %1307 = vmatpush.msra.mxu0 0.0
  %1308 = vmatpush.msra.mxu0 0.0
  %1309 = vmatpush.msra.mxu0 0.0
  %1310 = vmatpush.msra.mxu0 0.0
  %1311 = vmatpush.msra.mxu0 0.0
  %1312 = vmatpush.msra.mxu0 0.0
  %1313 = vmatpush.msra.mxu0 0.0
  %1314 = vmatpush.msra.mxu0 0.0
  %1315 = vmatpush.msra.mxu0 0.0
  %1316 = vmatpush.msra.mxu0 0.0
  %1317 = vmatpush.msra.mxu0 0.0
  %1318 = vmatpush.msra.mxu0 0.0
  %1319 = vmatpush.msra.mxu0 0.0
  %1320 = vmatpush.msra.mxu0 %v78
  %1321 = vmatmul.f32.gmra.mxu0 %v1283
  %v1322 = vpop.f32.mrf.mxu0
  %v1323 = vadd.f32 0.0, %v1322
  %1324 = vdwg.mxu0
  %v1325 = vadd.f32 %v1258, %v1303
  %v1326 = vadd.f32 %v1278, %v1323
  %s1327 = scalar_lea.vmem %s4, 24
  %v1328 = vld [vmem:[%s1327] sm:$0xff]
  %v1330 = vsel %vm142, %v1328, 0
  %1332 = vmatpush.msra.mxu0 0.0
  %1333 = vmatpush.msra.mxu0 0.0
  %1334 = vmatpush.msra.mxu0 0.0
  %1335 = vmatpush.msra.mxu0 0.0
  %1336 = vmatpush.msra.mxu0 0.0
  %1337 = vmatpush.msra.mxu0 0.0
  %1338 = vmatpush.msra.mxu0 0.0
  %1339 = vmatpush.msra.mxu0 0.0
  %1340 = vmatpush.msra.mxu0 0.0
  %1341 = vmatpush.msra.mxu0 0.0
  %1342 = vmatpush.msra.mxu0 0.0
  %1343 = vmatpush.msra.mxu0 0.0
  %1344 = vmatpush.msra.mxu0 0.0
  %1345 = vmatpush.msra.mxu0 0.0
  %1346 = vmatpush.msra.mxu0 0.0
  %1347 = vmatpush.msra.mxu0 %v89
  %1348 = vmatmul.f32.gmra.mxu0 %v1330
  %v1349 = vpop.f32.mrf.mxu0
  %v1350 = vadd.f32 0.0, %v1349
  %1351 = vdwg.mxu0
  %1352 = vmatpush.msra.mxu0 0.0
  %1353 = vmatpush.msra.mxu0 0.0
  %1354 = vmatpush.msra.mxu0 0.0
  %1355 = vmatpush.msra.mxu0 0.0
  %1356 = vmatpush.msra.mxu0 0.0
  %1357 = vmatpush.msra.mxu0 0.0
  %1358 = vmatpush.msra.mxu0 0.0
  %1359 = vmatpush.msra.mxu0 0.0
  %1360 = vmatpush.msra.mxu0 0.0
  %1361 = vmatpush.msra.mxu0 0.0
  %1362 = vmatpush.msra.mxu0 0.0
  %1363 = vmatpush.msra.mxu0 0.0
  %1364 = vmatpush.msra.mxu0 0.0
  %1365 = vmatpush.msra.mxu0 0.0
  %1366 = vmatpush.msra.mxu0 0.0
  %1367 = vmatpush.msra.mxu0 %v90
  %1368 = vmatmul.f32.gmra.mxu0 %v1330
  %v1369 = vpop.f32.mrf.mxu0
  %v1370 = vadd.f32 0.0, %v1369
  %1371 = vdwg.mxu0
  %v1372 = vadd.f32 %v1325, %v1350
  %v1373 = vadd.f32 %v1326, %v1370
  %s1374 = scalar_lea.vmem %s4, 32
  %v1375 = vld [vmem:[%s1374] sm:$0xff]
  %v1377 = vsel %vm142, %v1375, 0
  %1379 = vmatpush.msra.mxu0 0.0
  %1380 = vmatpush.msra.mxu0 0.0
  %1381 = vmatpush.msra.mxu0 0.0
  %1382 = vmatpush.msra.mxu0 0.0
  %1383 = vmatpush.msra.mxu0 0.0
  %1384 = vmatpush.msra.mxu0 0.0
  %1385 = vmatpush.msra.mxu0 0.0
  %1386 = vmatpush.msra.mxu0 0.0
  %1387 = vmatpush.msra.mxu0 0.0
  %1388 = vmatpush.msra.mxu0 0.0
  %1389 = vmatpush.msra.mxu0 0.0
  %1390 = vmatpush.msra.mxu0 0.0
  %1391 = vmatpush.msra.mxu0 0.0
  %1392 = vmatpush.msra.mxu0 0.0
  %1393 = vmatpush.msra.mxu0 0.0
  %1394 = vmatpush.msra.mxu0 %v38
  %1395 = vmatmul.f32.gmra.mxu0 %v1377
  %v1396 = vpop.f32.mrf.mxu0
  %v1397 = vadd.f32 0.0, %v1396
  %1398 = vdwg.mxu0
  %1399 = vmatpush.msra.mxu0 0.0
  %1400 = vmatpush.msra.mxu0 0.0
  %1401 = vmatpush.msra.mxu0 0.0
  %1402 = vmatpush.msra.mxu0 0.0
  %1403 = vmatpush.msra.mxu0 0.0
  %1404 = vmatpush.msra.mxu0 0.0
  %1405 = vmatpush.msra.mxu0 0.0
  %1406 = vmatpush.msra.mxu0 0.0
  %1407 = vmatpush.msra.mxu0 0.0
  %1408 = vmatpush.msra.mxu0 0.0
  %1409 = vmatpush.msra.mxu0 0.0
  %1410 = vmatpush.msra.mxu0 0.0
  %1411 = vmatpush.msra.mxu0 0.0
  %1412 = vmatpush.msra.mxu0 0.0
  %1413 = vmatpush.msra.mxu0 0.0
  %1414 = vmatpush.msra.mxu0 %v39
  %1415 = vmatmul.f32.gmra.mxu0 %v1377
  %v1416 = vpop.f32.mrf.mxu0
  %v1417 = vadd.f32 0.0, %v1416
  %1418 = vdwg.mxu0
  %v1419 = vadd.f32 %v1372, %v1397
  %v1420 = vadd.f32 %v1373, %v1417
  %s1421 = scalar_lea.vmem %s4, 40
  %v1422 = vld [vmem:[%s1421] sm:$0xff]
  %v1424 = vsel %vm142, %v1422, 0
  %1426 = vmatpush.msra.mxu0 0.0
  %1427 = vmatpush.msra.mxu0 0.0
  %1428 = vmatpush.msra.mxu0 0.0
  %1429 = vmatpush.msra.mxu0 0.0
  %1430 = vmatpush.msra.mxu0 0.0
  %1431 = vmatpush.msra.mxu0 0.0
  %1432 = vmatpush.msra.mxu0 0.0
  %1433 = vmatpush.msra.mxu0 0.0
  %1434 = vmatpush.msra.mxu0 0.0
  %1435 = vmatpush.msra.mxu0 0.0
  %1436 = vmatpush.msra.mxu0 0.0
  %1437 = vmatpush.msra.mxu0 0.0
  %1438 = vmatpush.msra.mxu0 0.0
  %1439 = vmatpush.msra.mxu0 0.0
  %1440 = vmatpush.msra.mxu0 0.0
  %1441 = vmatpush.msra.mxu0 %v101
  %1442 = vmatmul.f32.gmra.mxu0 %v1424
  %v1443 = vpop.f32.mrf.mxu0
  %v1444 = vadd.f32 0.0, %v1443
  %1445 = vdwg.mxu0
  %1446 = vmatpush.msra.mxu0 0.0
  %1447 = vmatpush.msra.mxu0 0.0
  %1448 = vmatpush.msra.mxu0 0.0
  %1449 = vmatpush.msra.mxu0 0.0
  %1450 = vmatpush.msra.mxu0 0.0
  %1451 = vmatpush.msra.mxu0 0.0
  %1452 = vmatpush.msra.mxu0 0.0
  %1453 = vmatpush.msra.mxu0 0.0
  %1454 = vmatpush.msra.mxu0 0.0
  %1455 = vmatpush.msra.mxu0 0.0
  %1456 = vmatpush.msra.mxu0 0.0
  %1457 = vmatpush.msra.mxu0 0.0
  %1458 = vmatpush.msra.mxu0 0.0
  %1459 = vmatpush.msra.mxu0 0.0
  %1460 = vmatpush.msra.mxu0 0.0
  %1461 = vmatpush.msra.mxu0 %v102
  %1462 = vmatmul.f32.gmra.mxu0 %v1424
  %v1463 = vpop.f32.mrf.mxu0
  %v1464 = vadd.f32 0.0, %v1463
  %1465 = vdwg.mxu0
  %v1466 = vadd.f32 %v1419, %v1444
  %v1467 = vadd.f32 %v1420, %v1464
  %s1468 = scalar_lea.vmem %s4, 48
  %v1469 = vld [vmem:[%s1468] sm:$0xff]
  %v1471 = vsel %vm142, %v1469, 0
  %1473 = vmatpush.msra.mxu0 0.0
  %1474 = vmatpush.msra.mxu0 0.0
  %1475 = vmatpush.msra.mxu0 0.0
  %1476 = vmatpush.msra.mxu0 0.0
  %1477 = vmatpush.msra.mxu0 0.0
  %1478 = vmatpush.msra.mxu0 0.0
  %1479 = vmatpush.msra.mxu0 0.0
  %1480 = vmatpush.msra.mxu0 0.0
  %1481 = vmatpush.msra.mxu0 0.0
  %1482 = vmatpush.msra.mxu0 0.0
  %1483 = vmatpush.msra.mxu0 0.0
  %1484 = vmatpush.msra.mxu0 0.0
  %1485 = vmatpush.msra.mxu0 0.0
  %1486 = vmatpush.msra.mxu0 0.0
  %1487 = vmatpush.msra.mxu0 0.0
  %1488 = vmatpush.msra.mxu0 %v113
  %1489 = vmatmul.f32.gmra.mxu0 %v1471
  %v1490 = vpop.f32.mrf.mxu0
  %v1491 = vadd.f32 0.0, %v1490
  %1492 = vdwg.mxu0
  %1493 = vmatpush.msra.mxu0 0.0
  %1494 = vmatpush.msra.mxu0 0.0
  %1495 = vmatpush.msra.mxu0 0.0
  %1496 = vmatpush.msra.mxu0 0.0
  %1497 = vmatpush.msra.mxu0 0.0
  %1498 = vmatpush.msra.mxu0 0.0
  %1499 = vmatpush.msra.mxu0 0.0
  %1500 = vmatpush.msra.mxu0 0.0
  %1501 = vmatpush.msra.mxu0 0.0
  %1502 = vmatpush.msra.mxu0 0.0
  %1503 = vmatpush.msra.mxu0 0.0
  %1504 = vmatpush.msra.mxu0 0.0
  %1505 = vmatpush.msra.mxu0 0.0
  %1506 = vmatpush.msra.mxu0 0.0
  %1507 = vmatpush.msra.mxu0 0.0
  %1508 = vmatpush.msra.mxu0 %v114
  %1509 = vmatmul.f32.gmra.mxu0 %v1471
  %v1510 = vpop.f32.mrf.mxu0
  %v1511 = vadd.f32 0.0, %v1510
  %1512 = vdwg.mxu0
  %v1513 = vadd.f32 %v1466, %v1491
  %v1514 = vadd.f32 %v1467, %v1511
  %s1515 = scalar_lea.vmem %s4, 56
  %v1516 = vld [vmem:[%s1515] sm:$0xff]
  %v1518 = vsel %vm142, %v1516, 0
  %1520 = vmatpush.msra.mxu0 0.0
  %1521 = vmatpush.msra.mxu0 0.0
  %1522 = vmatpush.msra.mxu0 0.0
  %1523 = vmatpush.msra.mxu0 0.0
  %1524 = vmatpush.msra.mxu0 0.0
  %1525 = vmatpush.msra.mxu0 0.0
  %1526 = vmatpush.msra.mxu0 0.0
  %1527 = vmatpush.msra.mxu0 0.0
  %1528 = vmatpush.msra.mxu0 0.0
  %1529 = vmatpush.msra.mxu0 0.0
  %1530 = vmatpush.msra.mxu0 0.0
  %1531 = vmatpush.msra.mxu0 0.0
  %1532 = vmatpush.msra.mxu0 0.0
  %1533 = vmatpush.msra.mxu0 0.0
  %1534 = vmatpush.msra.mxu0 0.0
  %1535 = vmatpush.msra.mxu0 %v125
  %1536 = vmatmul.f32.gmra.mxu0 %v1518
  %v1537 = vpop.f32.mrf.mxu0
  %v1538 = vadd.f32 0.0, %v1537
  %1539 = vdwg.mxu0
  %1540 = vmatpush.msra.mxu0 0.0
  %1541 = vmatpush.msra.mxu0 0.0
  %1542 = vmatpush.msra.mxu0 0.0
  %1543 = vmatpush.msra.mxu0 0.0
  %1544 = vmatpush.msra.mxu0 0.0
  %1545 = vmatpush.msra.mxu0 0.0
  %1546 = vmatpush.msra.mxu0 0.0
  %1547 = vmatpush.msra.mxu0 0.0
  %1548 = vmatpush.msra.mxu0 0.0
  %1549 = vmatpush.msra.mxu0 0.0
  %1550 = vmatpush.msra.mxu0 0.0
  %1551 = vmatpush.msra.mxu0 0.0
  %1552 = vmatpush.msra.mxu0 0.0
  %1553 = vmatpush.msra.mxu0 0.0
  %1554 = vmatpush.msra.mxu0 0.0
  %1555 = vmatpush.msra.mxu0 %v126
  %1556 = vmatmul.f32.gmra.mxu0 %v1518
  %v1557 = vpop.f32.mrf.mxu0
  %v1558 = vadd.f32 0.0, %v1557
  %1559 = vdwg.mxu0
  %v1560 = vadd.f32 %v1513, %v1538
  %v1561 = vadd.f32 %v1514, %v1558
  %s1562 = scalar_lea.vmem %s4, 64
  %v1563 = vld [vmem:[%s1562] sm:$0xff]
  %v1565 = vsel %vm142, %v1563, 0
  %1567 = vmatpush.msra.mxu0 0.0
  %1568 = vmatpush.msra.mxu0 0.0
  %1569 = vmatpush.msra.mxu0 0.0
  %1570 = vmatpush.msra.mxu0 0.0
  %1571 = vmatpush.msra.mxu0 0.0
  %1572 = vmatpush.msra.mxu0 0.0
  %1573 = vmatpush.msra.mxu0 0.0
  %1574 = vmatpush.msra.mxu0 0.0
  %1575 = vmatpush.msra.mxu0 0.0
  %1576 = vmatpush.msra.mxu0 0.0
  %1577 = vmatpush.msra.mxu0 0.0
  %1578 = vmatpush.msra.mxu0 0.0
  %1579 = vmatpush.msra.mxu0 0.0
  %1580 = vmatpush.msra.mxu0 0.0
  %1581 = vmatpush.msra.mxu0 0.0
  %1582 = vmatpush.msra.mxu0 %v137
  %1583 = vmatmul.f32.gmra.mxu0 %v1565
  %v1584 = vpop.f32.mrf.mxu0
  %v1585 = vadd.f32 0.0, %v1584
  %1586 = vdwg.mxu0
  %1587 = vmatpush.msra.mxu0 0.0
  %1588 = vmatpush.msra.mxu0 0.0
  %1589 = vmatpush.msra.mxu0 0.0
  %1590 = vmatpush.msra.mxu0 0.0
  %1591 = vmatpush.msra.mxu0 0.0
  %1592 = vmatpush.msra.mxu0 0.0
  %1593 = vmatpush.msra.mxu0 0.0
  %1594 = vmatpush.msra.mxu0 0.0
  %1595 = vmatpush.msra.mxu0 0.0
  %1596 = vmatpush.msra.mxu0 0.0
  %1597 = vmatpush.msra.mxu0 0.0
  %1598 = vmatpush.msra.mxu0 0.0
  %1599 = vmatpush.msra.mxu0 0.0
  %1600 = vmatpush.msra.mxu0 0.0
  %1601 = vmatpush.msra.mxu0 0.0
  %1602 = vmatpush.msra.mxu0 %v138
  %1603 = vmatmul.f32.gmra.mxu0 %v1565
  %v1604 = vpop.f32.mrf.mxu0
  %v1605 = vadd.f32 0.0, %v1604
  %1606 = vdwg.mxu0
  %v1607 = vadd.f32 %v1560, %v1585
  %v1608 = vadd.f32 %v1561, %v1605
  %v1609 = vld [vmem:[%s5] sm:$0xff]
  %v1611 = vsel %vm142, %v1609, 0
  %1613 = vmatpush.msra.mxu0 0.0
  %1614 = vmatpush.msra.mxu0 0.0
  %1615 = vmatpush.msra.mxu0 0.0
  %1616 = vmatpush.msra.mxu0 0.0
  %1617 = vmatpush.msra.mxu0 0.0
  %1618 = vmatpush.msra.mxu0 0.0
  %1619 = vmatpush.msra.mxu0 0.0
  %1620 = vmatpush.msra.mxu0 0.0
  %1621 = vmatpush.msra.mxu0 0.0
  %1622 = vmatpush.msra.mxu0 0.0
  %1623 = vmatpush.msra.mxu0 0.0
  %1624 = vmatpush.msra.mxu0 0.0
  %1625 = vmatpush.msra.mxu0 0.0
  %1626 = vmatpush.msra.mxu0 0.0
  %1627 = vmatpush.msra.mxu0 0.0
  %1628 = vmatpush.msra.mxu0 %v1119
  %1629 = vmatmul.f32.gmra.mxu0 %v1611
  %v1630 = vpop.f32.mrf.mxu0
  %v1631 = vadd.f32 0.0, %v1630
  %1632 = vdwg.mxu0
  %1633 = vmatpush.msra.mxu0 0.0
  %1634 = vmatpush.msra.mxu0 0.0
  %1635 = vmatpush.msra.mxu0 0.0
  %1636 = vmatpush.msra.mxu0 0.0
  %1637 = vmatpush.msra.mxu0 0.0
  %1638 = vmatpush.msra.mxu0 0.0
  %1639 = vmatpush.msra.mxu0 0.0
  %1640 = vmatpush.msra.mxu0 0.0
  %1641 = vmatpush.msra.mxu0 0.0
  %1642 = vmatpush.msra.mxu0 0.0
  %1643 = vmatpush.msra.mxu0 0.0
  %1644 = vmatpush.msra.mxu0 0.0
  %1645 = vmatpush.msra.mxu0 0.0
  %1646 = vmatpush.msra.mxu0 0.0
  %1647 = vmatpush.msra.mxu0 0.0
  %1648 = vmatpush.msra.mxu0 %v1120
  %1649 = vmatmul.f32.gmra.mxu0 %v1611
  %v1650 = vpop.f32.mrf.mxu0
  %v1651 = vadd.f32 0.0, %v1650
  %1652 = vdwg.mxu0
  %v1653 = vadd.f32 %v1607, %v1631
  %v1654 = vadd.f32 %v1608, %v1651
  %s1655 = scalar_lea.vmem %s5, 8
  %v1656 = vld [vmem:[%s1655] sm:$0xff]
  %v1658 = vsel %vm142, %v1656, 0
  %1660 = vmatpush.msra.mxu0 0.0
  %1661 = vmatpush.msra.mxu0 0.0
  %1662 = vmatpush.msra.mxu0 0.0
  %1663 = vmatpush.msra.mxu0 0.0
  %1664 = vmatpush.msra.mxu0 0.0
  %1665 = vmatpush.msra.mxu0 0.0
  %1666 = vmatpush.msra.mxu0 0.0
  %1667 = vmatpush.msra.mxu0 0.0
  %1668 = vmatpush.msra.mxu0 0.0
  %1669 = vmatpush.msra.mxu0 0.0
  %1670 = vmatpush.msra.mxu0 0.0
  %1671 = vmatpush.msra.mxu0 0.0
  %1672 = vmatpush.msra.mxu0 0.0
  %1673 = vmatpush.msra.mxu0 0.0
  %1674 = vmatpush.msra.mxu0 0.0
  %1675 = vmatpush.msra.mxu0 %v1129
  %1676 = vmatmul.f32.gmra.mxu0 %v1658
  %v1677 = vpop.f32.mrf.mxu0
  %v1678 = vadd.f32 0.0, %v1677
  %1679 = vdwg.mxu0
  %1680 = vmatpush.msra.mxu0 0.0
  %1681 = vmatpush.msra.mxu0 0.0
  %1682 = vmatpush.msra.mxu0 0.0
  %1683 = vmatpush.msra.mxu0 0.0
  %1684 = vmatpush.msra.mxu0 0.0
  %1685 = vmatpush.msra.mxu0 0.0
  %1686 = vmatpush.msra.mxu0 0.0
  %1687 = vmatpush.msra.mxu0 0.0
  %1688 = vmatpush.msra.mxu0 0.0
  %1689 = vmatpush.msra.mxu0 0.0
  %1690 = vmatpush.msra.mxu0 0.0
  %1691 = vmatpush.msra.mxu0 0.0
  %1692 = vmatpush.msra.mxu0 0.0
  %1693 = vmatpush.msra.mxu0 0.0
  %1694 = vmatpush.msra.mxu0 0.0
  %1695 = vmatpush.msra.mxu0 %v1130
  %1696 = vmatmul.f32.gmra.mxu0 %v1658
  %v1697 = vpop.f32.mrf.mxu0
  %v1698 = vadd.f32 0.0, %v1697
  %1699 = vdwg.mxu0
  %v1700 = vadd.f32 %v1653, %v1678
  %v1701 = vadd.f32 %v1654, %v1698
  %s1702 = scalar_lea.vmem %s5, 16
  %v1703 = vld [vmem:[%s1702] sm:$0xff]
  %v1705 = vsel %vm142, %v1703, 0
  %1707 = vmatpush.msra.mxu0 0.0
  %1708 = vmatpush.msra.mxu0 0.0
  %1709 = vmatpush.msra.mxu0 0.0
  %1710 = vmatpush.msra.mxu0 0.0
  %1711 = vmatpush.msra.mxu0 0.0
  %1712 = vmatpush.msra.mxu0 0.0
  %1713 = vmatpush.msra.mxu0 0.0
  %1714 = vmatpush.msra.mxu0 0.0
  %1715 = vmatpush.msra.mxu0 0.0
  %1716 = vmatpush.msra.mxu0 0.0
  %1717 = vmatpush.msra.mxu0 0.0
  %1718 = vmatpush.msra.mxu0 0.0
  %1719 = vmatpush.msra.mxu0 0.0
  %1720 = vmatpush.msra.mxu0 0.0
  %1721 = vmatpush.msra.mxu0 0.0
  %1722 = vmatpush.msra.mxu0 %v1139
  %1723 = vmatmul.f32.gmra.mxu0 %v1705
  %v1724 = vpop.f32.mrf.mxu0
  %v1725 = vadd.f32 0.0, %v1724
  %1726 = vdwg.mxu0
  %1727 = vmatpush.msra.mxu0 0.0
  %1728 = vmatpush.msra.mxu0 0.0
  %1729 = vmatpush.msra.mxu0 0.0
  %1730 = vmatpush.msra.mxu0 0.0
  %1731 = vmatpush.msra.mxu0 0.0
  %1732 = vmatpush.msra.mxu0 0.0
  %1733 = vmatpush.msra.mxu0 0.0
  %1734 = vmatpush.msra.mxu0 0.0
  %1735 = vmatpush.msra.mxu0 0.0
  %1736 = vmatpush.msra.mxu0 0.0
  %1737 = vmatpush.msra.mxu0 0.0
  %1738 = vmatpush.msra.mxu0 0.0
  %1739 = vmatpush.msra.mxu0 0.0
  %1740 = vmatpush.msra.mxu0 0.0
  %1741 = vmatpush.msra.mxu0 0.0
  %1742 = vmatpush.msra.mxu0 %v1140
  %1743 = vmatmul.f32.gmra.mxu0 %v1705
  %v1744 = vpop.f32.mrf.mxu0
  %v1745 = vadd.f32 0.0, %v1744
  %1746 = vdwg.mxu0
  %v1747 = vadd.f32 %v1700, %v1725
  %v1748 = vadd.f32 %v1701, %v1745
  %s1749 = scalar_lea.vmem %s5, 24
  %v1750 = vld [vmem:[%s1749] sm:$0xff]
  %v1752 = vsel %vm142, %v1750, 0
  %1754 = vmatpush.msra.mxu0 0.0
  %1755 = vmatpush.msra.mxu0 0.0
  %1756 = vmatpush.msra.mxu0 0.0
  %1757 = vmatpush.msra.mxu0 0.0
  %1758 = vmatpush.msra.mxu0 0.0
  %1759 = vmatpush.msra.mxu0 0.0
  %1760 = vmatpush.msra.mxu0 0.0
  %1761 = vmatpush.msra.mxu0 0.0
  %1762 = vmatpush.msra.mxu0 0.0
  %1763 = vmatpush.msra.mxu0 0.0
  %1764 = vmatpush.msra.mxu0 0.0
  %1765 = vmatpush.msra.mxu0 0.0
  %1766 = vmatpush.msra.mxu0 0.0
  %1767 = vmatpush.msra.mxu0 0.0
  %1768 = vmatpush.msra.mxu0 0.0
  %1769 = vmatpush.msra.mxu0 %v1149
  %1770 = vmatmul.f32.gmra.mxu0 %v1752
  %v1771 = vpop.f32.mrf.mxu0
  %v1772 = vadd.f32 0.0, %v1771
  %1773 = vdwg.mxu0
  %1774 = vmatpush.msra.mxu0 0.0
  %1775 = vmatpush.msra.mxu0 0.0
  %1776 = vmatpush.msra.mxu0 0.0
  %1777 = vmatpush.msra.mxu0 0.0
  %1778 = vmatpush.msra.mxu0 0.0
  %1779 = vmatpush.msra.mxu0 0.0
  %1780 = vmatpush.msra.mxu0 0.0
  %1781 = vmatpush.msra.mxu0 0.0
  %1782 = vmatpush.msra.mxu0 0.0
  %1783 = vmatpush.msra.mxu0 0.0
  %1784 = vmatpush.msra.mxu0 0.0
  %1785 = vmatpush.msra.mxu0 0.0
  %1786 = vmatpush.msra.mxu0 0.0
  %1787 = vmatpush.msra.mxu0 0.0
  %1788 = vmatpush.msra.mxu0 0.0
  %1789 = vmatpush.msra.mxu0 %v1150
  %1790 = vmatmul.f32.gmra.mxu0 %v1752
  %v1791 = vpop.f32.mrf.mxu0
  %v1792 = vadd.f32 0.0, %v1791
  %1793 = vdwg.mxu0
  %v1794 = vadd.f32 %v1747, %v1772
  %v1795 = vadd.f32 %v1748, %v1792
  %s1796 = scalar_lea.vmem %s5, 32
  %v1797 = vld [vmem:[%s1796] sm:$0xff]
  %v1799 = vsel %vm142, %v1797, 0
  %1801 = vmatpush.msra.mxu0 0.0
  %1802 = vmatpush.msra.mxu0 0.0
  %1803 = vmatpush.msra.mxu0 0.0
  %1804 = vmatpush.msra.mxu0 0.0
  %1805 = vmatpush.msra.mxu0 0.0
  %1806 = vmatpush.msra.mxu0 0.0
  %1807 = vmatpush.msra.mxu0 0.0
  %1808 = vmatpush.msra.mxu0 0.0
  %1809 = vmatpush.msra.mxu0 0.0
  %1810 = vmatpush.msra.mxu0 0.0
  %1811 = vmatpush.msra.mxu0 0.0
  %1812 = vmatpush.msra.mxu0 0.0
  %1813 = vmatpush.msra.mxu0 0.0
  %1814 = vmatpush.msra.mxu0 0.0
  %1815 = vmatpush.msra.mxu0 0.0
  %1816 = vmatpush.msra.mxu0 %v1107
  %1817 = vmatmul.f32.gmra.mxu0 %v1799
  %v1818 = vpop.f32.mrf.mxu0
  %v1819 = vadd.f32 0.0, %v1818
  %1820 = vdwg.mxu0
  %1821 = vmatpush.msra.mxu0 0.0
  %1822 = vmatpush.msra.mxu0 0.0
  %1823 = vmatpush.msra.mxu0 0.0
  %1824 = vmatpush.msra.mxu0 0.0
  %1825 = vmatpush.msra.mxu0 0.0
  %1826 = vmatpush.msra.mxu0 0.0
  %1827 = vmatpush.msra.mxu0 0.0
  %1828 = vmatpush.msra.mxu0 0.0
  %1829 = vmatpush.msra.mxu0 0.0
  %1830 = vmatpush.msra.mxu0 0.0
  %1831 = vmatpush.msra.mxu0 0.0
  %1832 = vmatpush.msra.mxu0 0.0
  %1833 = vmatpush.msra.mxu0 0.0
  %1834 = vmatpush.msra.mxu0 0.0
  %1835 = vmatpush.msra.mxu0 0.0
  %1836 = vmatpush.msra.mxu0 %v1108
  %1837 = vmatmul.f32.gmra.mxu0 %v1799
  %v1838 = vpop.f32.mrf.mxu0
  %v1839 = vadd.f32 0.0, %v1838
  %1840 = vdwg.mxu0
  %v1841 = vadd.f32 %v1794, %v1819
  %v1842 = vadd.f32 %v1795, %v1839
  %s1843 = scalar_lea.vmem %s5, 40
  %v1844 = vld [vmem:[%s1843] sm:$0xff]
  %v1846 = vsel %vm142, %v1844, 0
  %1848 = vmatpush.msra.mxu0 0.0
  %1849 = vmatpush.msra.mxu0 0.0
  %1850 = vmatpush.msra.mxu0 0.0
  %1851 = vmatpush.msra.mxu0 0.0
  %1852 = vmatpush.msra.mxu0 0.0
  %1853 = vmatpush.msra.mxu0 0.0
  %1854 = vmatpush.msra.mxu0 0.0
  %1855 = vmatpush.msra.mxu0 0.0
  %1856 = vmatpush.msra.mxu0 0.0
  %1857 = vmatpush.msra.mxu0 0.0
  %1858 = vmatpush.msra.mxu0 0.0
  %1859 = vmatpush.msra.mxu0 0.0
  %1860 = vmatpush.msra.mxu0 0.0
  %1861 = vmatpush.msra.mxu0 0.0
  %1862 = vmatpush.msra.mxu0 0.0
  %1863 = vmatpush.msra.mxu0 %v1159
  %1864 = vmatmul.f32.gmra.mxu0 %v1846
  %v1865 = vpop.f32.mrf.mxu0
  %v1866 = vadd.f32 0.0, %v1865
  %1867 = vdwg.mxu0
  %1868 = vmatpush.msra.mxu0 0.0
  %1869 = vmatpush.msra.mxu0 0.0
  %1870 = vmatpush.msra.mxu0 0.0
  %1871 = vmatpush.msra.mxu0 0.0
  %1872 = vmatpush.msra.mxu0 0.0
  %1873 = vmatpush.msra.mxu0 0.0
  %1874 = vmatpush.msra.mxu0 0.0
  %1875 = vmatpush.msra.mxu0 0.0
  %1876 = vmatpush.msra.mxu0 0.0
  %1877 = vmatpush.msra.mxu0 0.0
  %1878 = vmatpush.msra.mxu0 0.0
  %1879 = vmatpush.msra.mxu0 0.0
  %1880 = vmatpush.msra.mxu0 0.0
  %1881 = vmatpush.msra.mxu0 0.0
  %1882 = vmatpush.msra.mxu0 0.0
  %1883 = vmatpush.msra.mxu0 %v1160
  %1884 = vmatmul.f32.gmra.mxu0 %v1846
  %v1885 = vpop.f32.mrf.mxu0
  %v1886 = vadd.f32 0.0, %v1885
  %1887 = vdwg.mxu0
  %v1888 = vadd.f32 %v1841, %v1866
  %v1889 = vadd.f32 %v1842, %v1886
  %s1890 = scalar_lea.vmem %s5, 48
  %v1891 = vld [vmem:[%s1890] sm:$0xff]
  %v1893 = vsel %vm142, %v1891, 0
  %1895 = vmatpush.msra.mxu0 0.0
  %1896 = vmatpush.msra.mxu0 0.0
  %1897 = vmatpush.msra.mxu0 0.0
  %1898 = vmatpush.msra.mxu0 0.0
  %1899 = vmatpush.msra.mxu0 0.0
  %1900 = vmatpush.msra.mxu0 0.0
  %1901 = vmatpush.msra.mxu0 0.0
  %1902 = vmatpush.msra.mxu0 0.0
  %1903 = vmatpush.msra.mxu0 0.0
  %1904 = vmatpush.msra.mxu0 0.0
  %1905 = vmatpush.msra.mxu0 0.0
  %1906 = vmatpush.msra.mxu0 0.0
  %1907 = vmatpush.msra.mxu0 0.0
  %1908 = vmatpush.msra.mxu0 0.0
  %1909 = vmatpush.msra.mxu0 0.0
  %1910 = vmatpush.msra.mxu0 %v1169
  %1911 = vmatmul.f32.gmra.mxu0 %v1893
  %v1912 = vpop.f32.mrf.mxu0
  %v1913 = vadd.f32 0.0, %v1912
  %1914 = vdwg.mxu0
  %1915 = vmatpush.msra.mxu0 0.0
  %1916 = vmatpush.msra.mxu0 0.0
  %1917 = vmatpush.msra.mxu0 0.0
  %1918 = vmatpush.msra.mxu0 0.0
  %1919 = vmatpush.msra.mxu0 0.0
  %1920 = vmatpush.msra.mxu0 0.0
  %1921 = vmatpush.msra.mxu0 0.0
  %1922 = vmatpush.msra.mxu0 0.0
  %1923 = vmatpush.msra.mxu0 0.0
  %1924 = vmatpush.msra.mxu0 0.0
  %1925 = vmatpush.msra.mxu0 0.0
  %1926 = vmatpush.msra.mxu0 0.0
  %1927 = vmatpush.msra.mxu0 0.0
  %1928 = vmatpush.msra.mxu0 0.0
  %1929 = vmatpush.msra.mxu0 0.0
  %1930 = vmatpush.msra.mxu0 %v1170
  %1931 = vmatmul.f32.gmra.mxu0 %v1893
  %v1932 = vpop.f32.mrf.mxu0
  %v1933 = vadd.f32 0.0, %v1932
  %1934 = vdwg.mxu0
  %v1935 = vadd.f32 %v1888, %v1913
  %v1936 = vadd.f32 %v1889, %v1933
  %s1937 = scalar_lea.vmem %s5, 56
  %v1938 = vld [vmem:[%s1937] sm:$0xff]
  %v1940 = vsel %vm142, %v1938, 0
  %1942 = vmatpush.msra.mxu0 0.0
  %1943 = vmatpush.msra.mxu0 0.0
  %1944 = vmatpush.msra.mxu0 0.0
  %1945 = vmatpush.msra.mxu0 0.0
  %1946 = vmatpush.msra.mxu0 0.0
  %1947 = vmatpush.msra.mxu0 0.0
  %1948 = vmatpush.msra.mxu0 0.0
  %1949 = vmatpush.msra.mxu0 0.0
  %1950 = vmatpush.msra.mxu0 0.0
  %1951 = vmatpush.msra.mxu0 0.0
  %1952 = vmatpush.msra.mxu0 0.0
  %1953 = vmatpush.msra.mxu0 0.0
  %1954 = vmatpush.msra.mxu0 0.0
  %1955 = vmatpush.msra.mxu0 0.0
  %1956 = vmatpush.msra.mxu0 0.0
  %1957 = vmatpush.msra.mxu0 %v1179
  %1958 = vmatmul.f32.gmra.mxu0 %v1940
  %v1959 = vpop.f32.mrf.mxu0
  %v1960 = vadd.f32 0.0, %v1959
  %1961 = vdwg.mxu0
  %1962 = vmatpush.msra.mxu0 0.0
  %1963 = vmatpush.msra.mxu0 0.0
  %1964 = vmatpush.msra.mxu0 0.0
  %1965 = vmatpush.msra.mxu0 0.0
  %1966 = vmatpush.msra.mxu0 0.0
  %1967 = vmatpush.msra.mxu0 0.0
  %1968 = vmatpush.msra.mxu0 0.0
  %1969 = vmatpush.msra.mxu0 0.0
  %1970 = vmatpush.msra.mxu0 0.0
  %1971 = vmatpush.msra.mxu0 0.0
  %1972 = vmatpush.msra.mxu0 0.0
  %1973 = vmatpush.msra.mxu0 0.0
  %1974 = vmatpush.msra.mxu0 0.0
  %1975 = vmatpush.msra.mxu0 0.0
  %1976 = vmatpush.msra.mxu0 0.0
  %1977 = vmatpush.msra.mxu0 %v1180
  %1978 = vmatmul.f32.gmra.mxu0 %v1940
  %v1979 = vpop.f32.mrf.mxu0
  %v1980 = vadd.f32 0.0, %v1979
  %1981 = vdwg.mxu0
  %v1982 = vadd.f32 %v1935, %v1960
  %v1983 = vadd.f32 %v1936, %v1980
  %s1984 = scalar_lea.vmem %s5, 64
  %v1985 = vld [vmem:[%s1984] sm:$0xff]
  %v1987 = vsel %vm142, %v1985, 0
  %1989 = vmatpush.msra.mxu0 0.0
  %1990 = vmatpush.msra.mxu0 0.0
  %1991 = vmatpush.msra.mxu0 0.0
  %1992 = vmatpush.msra.mxu0 0.0
  %1993 = vmatpush.msra.mxu0 0.0
  %1994 = vmatpush.msra.mxu0 0.0
  %1995 = vmatpush.msra.mxu0 0.0
  %1996 = vmatpush.msra.mxu0 0.0
  %1997 = vmatpush.msra.mxu0 0.0
  %1998 = vmatpush.msra.mxu0 0.0
  %1999 = vmatpush.msra.mxu0 0.0
  %2000 = vmatpush.msra.mxu0 0.0
  %2001 = vmatpush.msra.mxu0 0.0
  %2002 = vmatpush.msra.mxu0 0.0
  %2003 = vmatpush.msra.mxu0 0.0
  %2004 = vmatpush.msra.mxu0 %v1189
  %2005 = vmatmul.f32.gmra.mxu0 %v1987
  %v2006 = vpop.f32.mrf.mxu0
  %v2007 = vadd.f32 0.0, %v2006
  %2008 = vdwg.mxu0
  %2009 = vmatpush.msra.mxu0 0.0
  %2010 = vmatpush.msra.mxu0 0.0
  %2011 = vmatpush.msra.mxu0 0.0
  %2012 = vmatpush.msra.mxu0 0.0
  %2013 = vmatpush.msra.mxu0 0.0
  %2014 = vmatpush.msra.mxu0 0.0
  %2015 = vmatpush.msra.mxu0 0.0
  %2016 = vmatpush.msra.mxu0 0.0
  %2017 = vmatpush.msra.mxu0 0.0
  %2018 = vmatpush.msra.mxu0 0.0
  %2019 = vmatpush.msra.mxu0 0.0
  %2020 = vmatpush.msra.mxu0 0.0
  %2021 = vmatpush.msra.mxu0 0.0
  %2022 = vmatpush.msra.mxu0 0.0
  %2023 = vmatpush.msra.mxu0 0.0
  %2024 = vmatpush.msra.mxu0 %v1190
  %2025 = vmatmul.f32.gmra.mxu0 %v1987
  %v2026 = vpop.f32.mrf.mxu0
  %v2027 = vadd.f32 0.0, %v2026
  %2028 = vdwg.mxu0
  %v2029 = vadd.f32 %v1982, %v2007
  %v2030 = vadd.f32 %v1983, %v2027
  %v2031 = vadd.f32 %v2029, %v2030
  %2032 = vadd.xlane.f32.xlu0 %v2031
  %v2033 = vpop.xlane.xlu0 %2032
  %v2034 = vmul.f32 %v2033, %v567
  %v2035 = vsub.f32 %v2029, %v2034
  %v2036 = vsub.f32 %v2030, %v2034
  %v2037 = vmul.f32 %v2035, %v2035
  %v2038 = vmul.f32 %v2036, %v2036
  %v2039 = vadd.f32 %v2037, %v2038
  %2040 = vadd.xlane.f32.xlu0 %v2039
  %v2041 = vpop.xlane.xlu0 %2040
  %v2042 = vmul.f32 %v2041, %v567
  %v2043 = vadd.f32 %v2042, 1e-05
  %v2044 = vrsqrt.pop %v2043
  %v2045 = vmul.f32 %v2044, %v2043
  %v2046 = vmul.f32 %v2045, %v2044
  %v2047 = vmul.f32 0.5, %v2046
  %v2048 = vsub.f32 1.5, %v2047
  %v2049 = vmul.f32 %v2044, %v2048
  %vm2050 = vweird.f32 %v2043
  %vm2051 = vweird.f32 %v2044
  %vm2052 = vmor %vm2050, %vm2051
  %v2053 = vsel %vm2052, %v2044, %v2049
  %v2054 = vmul.f32 %v2035, %v2053
  %v2055 = vmul.f32 %v2036, %v2053
  %vm2056 = vcmp.ge.f32.partialorder %v2054, 0.0
  %vm2057 = vcmp.ge.f32.partialorder %v2055, 0.0
  %v2058 = vmul.f32 %v2054, 0.01
  %v2059 = vmul.f32 %v2055, 0.01
  %v2060 = vsel %vm2056, %v2054, %v2058
  %v2061 = vsel %vm2057, %v2055, %v2059
  %2062 = vrot.lane.b32.xlu0 %v2060, 17
  %v2063 = vpop.permute.xlu0 %2062
  %2064 = vrot.lane.b32.xlu0 %v2061, 17
  %v2065 = vpop.permute.xlu0 %2064
  %v2066 = vsel %vm48, %v2063, %v2065
  %v2067 = vsel %vm48, %v2065, %v2063
  %v2068 = vmul.f32 %v2067, %v1117
  %v2069 = vmul.f32 %v2066, %v1118
  %2070 = vrot.lane.b32.xlu0 %v2060, 16
  %v2071 = vpop.permute.xlu0 %2070
  %2072 = vrot.lane.b32.xlu0 %v2061, 16
  %v2073 = vpop.permute.xlu0 %2072
  %v2074 = vsel %vm59, %v2071, %v2073
  %v2075 = vsel %vm59, %v2073, %v2071
  %v2076 = vmul.f32 %v2075, %v1127
  %v2077 = vmul.f32 %v2074, %v1128
  %2078 = vrot.lane.b32.xlu0 %v2060, 15
  %v2079 = vpop.permute.xlu0 %2078
  %2080 = vrot.lane.b32.xlu0 %v2061, 15
  %v2081 = vpop.permute.xlu0 %2080
  %v2082 = vsel %vm71, %v2079, %v2081
  %v2083 = vsel %vm71, %v2081, %v2079
  %v2084 = vmul.f32 %v2083, %v1137
  %v2085 = vmul.f32 %v2082, %v1138
  %2086 = vrot.lane.b32.xlu0 %v2060, 1
  %v2087 = vpop.permute.xlu0 %2086
  %2088 = vrot.lane.b32.xlu0 %v2061, 1
  %v2089 = vpop.permute.xlu0 %2088
  %v2090 = vsel %vm83, %v2087, %v2089
  %v2091 = vsel %vm83, %v2089, %v2087
  %v2092 = vmul.f32 %v2091, %v1147
  %v2093 = vmul.f32 %v2090, %v1148
  %2094 = vrot.lane.b32.xlu0 %v2060, 127
  %v2095 = vpop.permute.xlu0 %2094
  %2096 = vrot.lane.b32.xlu0 %v2061, 127
  %v2097 = vpop.permute.xlu0 %2096
  %v2098 = vsel %vm95, %v2095, %v2097
  %v2099 = vsel %vm95, %v2097, %v2095
  %v2100 = vmul.f32 %v2098, %v1157
  %v2101 = vmul.f32 %v2099, %v1158
  %2102 = vrot.lane.b32.xlu0 %v2060, 113
  %v2103 = vpop.permute.xlu0 %2102
  %2104 = vrot.lane.b32.xlu0 %v2061, 113
  %v2105 = vpop.permute.xlu0 %2104
  %v2106 = vsel %vm107, %v2103, %v2105
  %v2107 = vsel %vm107, %v2105, %v2103
  %v2108 = vmul.f32 %v2106, %v1167
  %v2109 = vmul.f32 %v2107, %v1168
  %2110 = vrot.lane.b32.xlu0 %v2060, 112
  %v2111 = vpop.permute.xlu0 %2110
  %2112 = vrot.lane.b32.xlu0 %v2061, 112
  %v2113 = vpop.permute.xlu0 %2112
  %v2114 = vsel %vm119, %v2111, %v2113
  %v2115 = vsel %vm119, %v2113, %v2111
  %v2116 = vmul.f32 %v2114, %v1177
  %v2117 = vmul.f32 %v2115, %v1178
  %2118 = vrot.lane.b32.xlu0 %v2060, 111
  %v2119 = vpop.permute.xlu0 %2118
  %2120 = vrot.lane.b32.xlu0 %v2061, 111
  %v2121 = vpop.permute.xlu0 %2120
  %v2122 = vsel %vm131, %v2119, %v2121
  %v2123 = vsel %vm131, %v2121, %v2119
  %v2124 = vmul.f32 %v2122, %v1187
  %v2125 = vmul.f32 %v2123, %v1188
  %v2126 = vld [vmem:[%s6] sm:$0xff]
  %s2127 = scalar_lea.vmem %s6, 8
  %v2128 = vld [vmem:[%s2127] sm:$0xff]
  %v2130 = vsel %vm142, %v2128, 0
  %2132 = vmatpush.msra.mxu0 0.0
  %2133 = vmatpush.msra.mxu0 0.0
  %2134 = vmatpush.msra.mxu0 0.0
  %2135 = vmatpush.msra.mxu0 0.0
  %2136 = vmatpush.msra.mxu0 0.0
  %2137 = vmatpush.msra.mxu0 0.0
  %2138 = vmatpush.msra.mxu0 0.0
  %2139 = vmatpush.msra.mxu0 0.0
  %2140 = vmatpush.msra.mxu0 0.0
  %2141 = vmatpush.msra.mxu0 0.0
  %2142 = vmatpush.msra.mxu0 0.0
  %2143 = vmatpush.msra.mxu0 0.0
  %2144 = vmatpush.msra.mxu0 0.0
  %2145 = vmatpush.msra.mxu0 0.0
  %2146 = vmatpush.msra.mxu0 0.0
  %2147 = vmatpush.msra.mxu0 %v2076
  %2148 = vmatmul.f32.gmra.mxu0 %v2130
  %v2149 = vpop.f32.mrf.mxu0
  %v2150 = vadd.f32 0.0, %v2149
  %2151 = vdwg.mxu0
  %2152 = vmatpush.msra.mxu0 0.0
  %2153 = vmatpush.msra.mxu0 0.0
  %2154 = vmatpush.msra.mxu0 0.0
  %2155 = vmatpush.msra.mxu0 0.0
  %2156 = vmatpush.msra.mxu0 0.0
  %2157 = vmatpush.msra.mxu0 0.0
  %2158 = vmatpush.msra.mxu0 0.0
  %2159 = vmatpush.msra.mxu0 0.0
  %2160 = vmatpush.msra.mxu0 0.0
  %2161 = vmatpush.msra.mxu0 0.0
  %2162 = vmatpush.msra.mxu0 0.0
  %2163 = vmatpush.msra.mxu0 0.0
  %2164 = vmatpush.msra.mxu0 0.0
  %2165 = vmatpush.msra.mxu0 0.0
  %2166 = vmatpush.msra.mxu0 0.0
  %2167 = vmatpush.msra.mxu0 %v2077
  %2168 = vmatmul.f32.gmra.mxu0 %v2130
  %v2169 = vpop.f32.mrf.mxu0
  %v2170 = vadd.f32 0.0, %v2169
  %2171 = vdwg.mxu0
  %v2173 = vsel %vm142, %v2126, 0
  %2175 = vmatpush.msra.mxu0 0.0
  %2176 = vmatpush.msra.mxu0 0.0
  %2177 = vmatpush.msra.mxu0 0.0
  %2178 = vmatpush.msra.mxu0 0.0
  %2179 = vmatpush.msra.mxu0 0.0
  %2180 = vmatpush.msra.mxu0 0.0
  %2181 = vmatpush.msra.mxu0 0.0
  %2182 = vmatpush.msra.mxu0 0.0
  %2183 = vmatpush.msra.mxu0 0.0
  %2184 = vmatpush.msra.mxu0 0.0
  %2185 = vmatpush.msra.mxu0 0.0
  %2186 = vmatpush.msra.mxu0 0.0
  %2187 = vmatpush.msra.mxu0 0.0
  %2188 = vmatpush.msra.mxu0 0.0
  %2189 = vmatpush.msra.mxu0 0.0
  %2190 = vmatpush.msra.mxu0 %v2068
  %2191 = vmatmul.f32.gmra.mxu0 %v2173
  %v2192 = vpop.f32.mrf.mxu0
  %v2193 = vadd.f32 %v2150, %v2192
  %2194 = vdwg.mxu0
  %2195 = vmatpush.msra.mxu0 0.0
  %2196 = vmatpush.msra.mxu0 0.0
  %2197 = vmatpush.msra.mxu0 0.0
  %2198 = vmatpush.msra.mxu0 0.0
  %2199 = vmatpush.msra.mxu0 0.0
  %2200 = vmatpush.msra.mxu0 0.0
  %2201 = vmatpush.msra.mxu0 0.0
  %2202 = vmatpush.msra.mxu0 0.0
  %2203 = vmatpush.msra.mxu0 0.0
  %2204 = vmatpush.msra.mxu0 0.0
  %2205 = vmatpush.msra.mxu0 0.0
  %2206 = vmatpush.msra.mxu0 0.0
  %2207 = vmatpush.msra.mxu0 0.0
  %2208 = vmatpush.msra.mxu0 0.0
  %2209 = vmatpush.msra.mxu0 0.0
  %2210 = vmatpush.msra.mxu0 %v2069
  %2211 = vmatmul.f32.gmra.mxu0 %v2173
  %v2212 = vpop.f32.mrf.mxu0
  %v2213 = vadd.f32 %v2170, %v2212
  %2214 = vdwg.mxu0
  %s2215 = scalar_lea.vmem %s6, 16
  %v2216 = vld [vmem:[%s2215] sm:$0xff]
  %v2218 = vsel %vm142, %v2216, 0
  %2220 = vmatpush.msra.mxu0 0.0
  %2221 = vmatpush.msra.mxu0 0.0
  %2222 = vmatpush.msra.mxu0 0.0
  %2223 = vmatpush.msra.mxu0 0.0
  %2224 = vmatpush.msra.mxu0 0.0
  %2225 = vmatpush.msra.mxu0 0.0
  %2226 = vmatpush.msra.mxu0 0.0
  %2227 = vmatpush.msra.mxu0 0.0
  %2228 = vmatpush.msra.mxu0 0.0
  %2229 = vmatpush.msra.mxu0 0.0
  %2230 = vmatpush.msra.mxu0 0.0
  %2231 = vmatpush.msra.mxu0 0.0
  %2232 = vmatpush.msra.mxu0 0.0
  %2233 = vmatpush.msra.mxu0 0.0
  %2234 = vmatpush.msra.mxu0 0.0
  %2235 = vmatpush.msra.mxu0 %v2084
  %2236 = vmatmul.f32.gmra.mxu0 %v2218
  %v2237 = vpop.f32.mrf.mxu0
  %v2238 = vadd.f32 0.0, %v2237
  %2239 = vdwg.mxu0
  %2240 = vmatpush.msra.mxu0 0.0
  %2241 = vmatpush.msra.mxu0 0.0
  %2242 = vmatpush.msra.mxu0 0.0
  %2243 = vmatpush.msra.mxu0 0.0
  %2244 = vmatpush.msra.mxu0 0.0
  %2245 = vmatpush.msra.mxu0 0.0
  %2246 = vmatpush.msra.mxu0 0.0
  %2247 = vmatpush.msra.mxu0 0.0
  %2248 = vmatpush.msra.mxu0 0.0
  %2249 = vmatpush.msra.mxu0 0.0
  %2250 = vmatpush.msra.mxu0 0.0
  %2251 = vmatpush.msra.mxu0 0.0
  %2252 = vmatpush.msra.mxu0 0.0
  %2253 = vmatpush.msra.mxu0 0.0
  %2254 = vmatpush.msra.mxu0 0.0
  %2255 = vmatpush.msra.mxu0 %v2085
  %2256 = vmatmul.f32.gmra.mxu0 %v2218
  %v2257 = vpop.f32.mrf.mxu0
  %v2258 = vadd.f32 0.0, %v2257
  %2259 = vdwg.mxu0
  %v2260 = vadd.f32 %v2193, %v2238
  %v2261 = vadd.f32 %v2213, %v2258
  %s2262 = scalar_lea.vmem %s6, 24
  %v2263 = vld [vmem:[%s2262] sm:$0xff]
  %v2265 = vsel %vm142, %v2263, 0
  %2267 = vmatpush.msra.mxu0 0.0
  %2268 = vmatpush.msra.mxu0 0.0
  %2269 = vmatpush.msra.mxu0 0.0
  %2270 = vmatpush.msra.mxu0 0.0
  %2271 = vmatpush.msra.mxu0 0.0
  %2272 = vmatpush.msra.mxu0 0.0
  %2273 = vmatpush.msra.mxu0 0.0
  %2274 = vmatpush.msra.mxu0 0.0
  %2275 = vmatpush.msra.mxu0 0.0
  %2276 = vmatpush.msra.mxu0 0.0
  %2277 = vmatpush.msra.mxu0 0.0
  %2278 = vmatpush.msra.mxu0 0.0
  %2279 = vmatpush.msra.mxu0 0.0
  %2280 = vmatpush.msra.mxu0 0.0
  %2281 = vmatpush.msra.mxu0 0.0
  %2282 = vmatpush.msra.mxu0 %v2092
  %2283 = vmatmul.f32.gmra.mxu0 %v2265
  %v2284 = vpop.f32.mrf.mxu0
  %v2285 = vadd.f32 0.0, %v2284
  %2286 = vdwg.mxu0
  %2287 = vmatpush.msra.mxu0 0.0
  %2288 = vmatpush.msra.mxu0 0.0
  %2289 = vmatpush.msra.mxu0 0.0
  %2290 = vmatpush.msra.mxu0 0.0
  %2291 = vmatpush.msra.mxu0 0.0
  %2292 = vmatpush.msra.mxu0 0.0
  %2293 = vmatpush.msra.mxu0 0.0
  %2294 = vmatpush.msra.mxu0 0.0
  %2295 = vmatpush.msra.mxu0 0.0
  %2296 = vmatpush.msra.mxu0 0.0
  %2297 = vmatpush.msra.mxu0 0.0
  %2298 = vmatpush.msra.mxu0 0.0
  %2299 = vmatpush.msra.mxu0 0.0
  %2300 = vmatpush.msra.mxu0 0.0
  %2301 = vmatpush.msra.mxu0 0.0
  %2302 = vmatpush.msra.mxu0 %v2093
  %2303 = vmatmul.f32.gmra.mxu0 %v2265
  %v2304 = vpop.f32.mrf.mxu0
  %v2305 = vadd.f32 0.0, %v2304
  %2306 = vdwg.mxu0
  %v2307 = vadd.f32 %v2260, %v2285
  %v2308 = vadd.f32 %v2261, %v2305
  %s2309 = scalar_lea.vmem %s6, 32
  %v2310 = vld [vmem:[%s2309] sm:$0xff]
  %v2312 = vsel %vm142, %v2310, 0
  %2314 = vmatpush.msra.mxu0 0.0
  %2315 = vmatpush.msra.mxu0 0.0
  %2316 = vmatpush.msra.mxu0 0.0
  %2317 = vmatpush.msra.mxu0 0.0
  %2318 = vmatpush.msra.mxu0 0.0
  %2319 = vmatpush.msra.mxu0 0.0
  %2320 = vmatpush.msra.mxu0 0.0
  %2321 = vmatpush.msra.mxu0 0.0
  %2322 = vmatpush.msra.mxu0 0.0
  %2323 = vmatpush.msra.mxu0 0.0
  %2324 = vmatpush.msra.mxu0 0.0
  %2325 = vmatpush.msra.mxu0 0.0
  %2326 = vmatpush.msra.mxu0 0.0
  %2327 = vmatpush.msra.mxu0 0.0
  %2328 = vmatpush.msra.mxu0 0.0
  %2329 = vmatpush.msra.mxu0 %v2060
  %2330 = vmatmul.f32.gmra.mxu0 %v2312
  %v2331 = vpop.f32.mrf.mxu0
  %v2332 = vadd.f32 0.0, %v2331
  %2333 = vdwg.mxu0
  %2334 = vmatpush.msra.mxu0 0.0
  %2335 = vmatpush.msra.mxu0 0.0
  %2336 = vmatpush.msra.mxu0 0.0
  %2337 = vmatpush.msra.mxu0 0.0
  %2338 = vmatpush.msra.mxu0 0.0
  %2339 = vmatpush.msra.mxu0 0.0
  %2340 = vmatpush.msra.mxu0 0.0
  %2341 = vmatpush.msra.mxu0 0.0
  %2342 = vmatpush.msra.mxu0 0.0
  %2343 = vmatpush.msra.mxu0 0.0
  %2344 = vmatpush.msra.mxu0 0.0
  %2345 = vmatpush.msra.mxu0 0.0
  %2346 = vmatpush.msra.mxu0 0.0
  %2347 = vmatpush.msra.mxu0 0.0
  %2348 = vmatpush.msra.mxu0 0.0
  %2349 = vmatpush.msra.mxu0 %v2061
  %2350 = vmatmul.f32.gmra.mxu0 %v2312
  %v2351 = vpop.f32.mrf.mxu0
  %v2352 = vadd.f32 0.0, %v2351
  %2353 = vdwg.mxu0
  %v2354 = vadd.f32 %v2307, %v2332
  %v2355 = vadd.f32 %v2308, %v2352
  %s2356 = scalar_lea.vmem %s6, 40
  %v2357 = vld [vmem:[%s2356] sm:$0xff]
  %v2359 = vsel %vm142, %v2357, 0
  %2361 = vmatpush.msra.mxu0 0.0
  %2362 = vmatpush.msra.mxu0 0.0
  %2363 = vmatpush.msra.mxu0 0.0
  %2364 = vmatpush.msra.mxu0 0.0
  %2365 = vmatpush.msra.mxu0 0.0
  %2366 = vmatpush.msra.mxu0 0.0
  %2367 = vmatpush.msra.mxu0 0.0
  %2368 = vmatpush.msra.mxu0 0.0
  %2369 = vmatpush.msra.mxu0 0.0
  %2370 = vmatpush.msra.mxu0 0.0
  %2371 = vmatpush.msra.mxu0 0.0
  %2372 = vmatpush.msra.mxu0 0.0
  %2373 = vmatpush.msra.mxu0 0.0
  %2374 = vmatpush.msra.mxu0 0.0
  %2375 = vmatpush.msra.mxu0 0.0
  %2376 = vmatpush.msra.mxu0 %v2100
  %2377 = vmatmul.f32.gmra.mxu0 %v2359
  %v2378 = vpop.f32.mrf.mxu0
  %v2379 = vadd.f32 0.0, %v2378
  %2380 = vdwg.mxu0
  %2381 = vmatpush.msra.mxu0 0.0
  %2382 = vmatpush.msra.mxu0 0.0
  %2383 = vmatpush.msra.mxu0 0.0
  %2384 = vmatpush.msra.mxu0 0.0
  %2385 = vmatpush.msra.mxu0 0.0
  %2386 = vmatpush.msra.mxu0 0.0
  %2387 = vmatpush.msra.mxu0 0.0
  %2388 = vmatpush.msra.mxu0 0.0
  %2389 = vmatpush.msra.mxu0 0.0
  %2390 = vmatpush.msra.mxu0 0.0
  %2391 = vmatpush.msra.mxu0 0.0
  %2392 = vmatpush.msra.mxu0 0.0
  %2393 = vmatpush.msra.mxu0 0.0
  %2394 = vmatpush.msra.mxu0 0.0
  %2395 = vmatpush.msra.mxu0 0.0
  %2396 = vmatpush.msra.mxu0 %v2101
  %2397 = vmatmul.f32.gmra.mxu0 %v2359
  %v2398 = vpop.f32.mrf.mxu0
  %v2399 = vadd.f32 0.0, %v2398
  %2400 = vdwg.mxu0
  %v2401 = vadd.f32 %v2354, %v2379
  %v2402 = vadd.f32 %v2355, %v2399
  %s2403 = scalar_lea.vmem %s6, 48
  %v2404 = vld [vmem:[%s2403] sm:$0xff]
  %v2406 = vsel %vm142, %v2404, 0
  %2408 = vmatpush.msra.mxu0 0.0
  %2409 = vmatpush.msra.mxu0 0.0
  %2410 = vmatpush.msra.mxu0 0.0
  %2411 = vmatpush.msra.mxu0 0.0
  %2412 = vmatpush.msra.mxu0 0.0
  %2413 = vmatpush.msra.mxu0 0.0
  %2414 = vmatpush.msra.mxu0 0.0
  %2415 = vmatpush.msra.mxu0 0.0
  %2416 = vmatpush.msra.mxu0 0.0
  %2417 = vmatpush.msra.mxu0 0.0
  %2418 = vmatpush.msra.mxu0 0.0
  %2419 = vmatpush.msra.mxu0 0.0
  %2420 = vmatpush.msra.mxu0 0.0
  %2421 = vmatpush.msra.mxu0 0.0
  %2422 = vmatpush.msra.mxu0 0.0
  %2423 = vmatpush.msra.mxu0 %v2108
  %2424 = vmatmul.f32.gmra.mxu0 %v2406
  %v2425 = vpop.f32.mrf.mxu0
  %v2426 = vadd.f32 0.0, %v2425
  %2427 = vdwg.mxu0
  %2428 = vmatpush.msra.mxu0 0.0
  %2429 = vmatpush.msra.mxu0 0.0
  %2430 = vmatpush.msra.mxu0 0.0
  %2431 = vmatpush.msra.mxu0 0.0
  %2432 = vmatpush.msra.mxu0 0.0
  %2433 = vmatpush.msra.mxu0 0.0
  %2434 = vmatpush.msra.mxu0 0.0
  %2435 = vmatpush.msra.mxu0 0.0
  %2436 = vmatpush.msra.mxu0 0.0
  %2437 = vmatpush.msra.mxu0 0.0
  %2438 = vmatpush.msra.mxu0 0.0
  %2439 = vmatpush.msra.mxu0 0.0
  %2440 = vmatpush.msra.mxu0 0.0
  %2441 = vmatpush.msra.mxu0 0.0
  %2442 = vmatpush.msra.mxu0 0.0
  %2443 = vmatpush.msra.mxu0 %v2109
  %2444 = vmatmul.f32.gmra.mxu0 %v2406
  %v2445 = vpop.f32.mrf.mxu0
  %v2446 = vadd.f32 0.0, %v2445
  %2447 = vdwg.mxu0
  %v2448 = vadd.f32 %v2401, %v2426
  %v2449 = vadd.f32 %v2402, %v2446
  %s2450 = scalar_lea.vmem %s6, 56
  %v2451 = vld [vmem:[%s2450] sm:$0xff]
  %v2453 = vsel %vm142, %v2451, 0
  %2455 = vmatpush.msra.mxu0 0.0
  %2456 = vmatpush.msra.mxu0 0.0
  %2457 = vmatpush.msra.mxu0 0.0
  %2458 = vmatpush.msra.mxu0 0.0
  %2459 = vmatpush.msra.mxu0 0.0
  %2460 = vmatpush.msra.mxu0 0.0
  %2461 = vmatpush.msra.mxu0 0.0
  %2462 = vmatpush.msra.mxu0 0.0
  %2463 = vmatpush.msra.mxu0 0.0
  %2464 = vmatpush.msra.mxu0 0.0
  %2465 = vmatpush.msra.mxu0 0.0
  %2466 = vmatpush.msra.mxu0 0.0
  %2467 = vmatpush.msra.mxu0 0.0
  %2468 = vmatpush.msra.mxu0 0.0
  %2469 = vmatpush.msra.mxu0 0.0
  %2470 = vmatpush.msra.mxu0 %v2116
  %2471 = vmatmul.f32.gmra.mxu0 %v2453
  %v2472 = vpop.f32.mrf.mxu0
  %v2473 = vadd.f32 0.0, %v2472
  %2474 = vdwg.mxu0
  %2475 = vmatpush.msra.mxu0 0.0
  %2476 = vmatpush.msra.mxu0 0.0
  %2477 = vmatpush.msra.mxu0 0.0
  %2478 = vmatpush.msra.mxu0 0.0
  %2479 = vmatpush.msra.mxu0 0.0
  %2480 = vmatpush.msra.mxu0 0.0
  %2481 = vmatpush.msra.mxu0 0.0
  %2482 = vmatpush.msra.mxu0 0.0
  %2483 = vmatpush.msra.mxu0 0.0
  %2484 = vmatpush.msra.mxu0 0.0
  %2485 = vmatpush.msra.mxu0 0.0
  %2486 = vmatpush.msra.mxu0 0.0
  %2487 = vmatpush.msra.mxu0 0.0
  %2488 = vmatpush.msra.mxu0 0.0
  %2489 = vmatpush.msra.mxu0 0.0
  %2490 = vmatpush.msra.mxu0 %v2117
  %2491 = vmatmul.f32.gmra.mxu0 %v2453
  %v2492 = vpop.f32.mrf.mxu0
  %v2493 = vadd.f32 0.0, %v2492
  %2494 = vdwg.mxu0
  %v2495 = vadd.f32 %v2448, %v2473
  %v2496 = vadd.f32 %v2449, %v2493
  %s2497 = scalar_lea.vmem %s6, 64
  %v2498 = vld [vmem:[%s2497] sm:$0xff]
  %v2500 = vsel %vm142, %v2498, 0
  %2502 = vmatpush.msra.mxu0 0.0
  %2503 = vmatpush.msra.mxu0 0.0
  %2504 = vmatpush.msra.mxu0 0.0
  %2505 = vmatpush.msra.mxu0 0.0
  %2506 = vmatpush.msra.mxu0 0.0
  %2507 = vmatpush.msra.mxu0 0.0
  %2508 = vmatpush.msra.mxu0 0.0
  %2509 = vmatpush.msra.mxu0 0.0
  %2510 = vmatpush.msra.mxu0 0.0
  %2511 = vmatpush.msra.mxu0 0.0
  %2512 = vmatpush.msra.mxu0 0.0
  %2513 = vmatpush.msra.mxu0 0.0
  %2514 = vmatpush.msra.mxu0 0.0
  %2515 = vmatpush.msra.mxu0 0.0
  %2516 = vmatpush.msra.mxu0 0.0
  %2517 = vmatpush.msra.mxu0 %v2124
  %2518 = vmatmul.f32.gmra.mxu0 %v2500
  %v2519 = vpop.f32.mrf.mxu0
  %v2520 = vadd.f32 0.0, %v2519
  %2521 = vdwg.mxu0
  %2522 = vmatpush.msra.mxu0 0.0
  %2523 = vmatpush.msra.mxu0 0.0
  %2524 = vmatpush.msra.mxu0 0.0
  %2525 = vmatpush.msra.mxu0 0.0
  %2526 = vmatpush.msra.mxu0 0.0
  %2527 = vmatpush.msra.mxu0 0.0
  %2528 = vmatpush.msra.mxu0 0.0
  %2529 = vmatpush.msra.mxu0 0.0
  %2530 = vmatpush.msra.mxu0 0.0
  %2531 = vmatpush.msra.mxu0 0.0
  %2532 = vmatpush.msra.mxu0 0.0
  %2533 = vmatpush.msra.mxu0 0.0
  %2534 = vmatpush.msra.mxu0 0.0
  %2535 = vmatpush.msra.mxu0 0.0
  %2536 = vmatpush.msra.mxu0 0.0
  %2537 = vmatpush.msra.mxu0 %v2125
  %2538 = vmatmul.f32.gmra.mxu0 %v2500
  %v2539 = vpop.f32.mrf.mxu0
  %v2540 = vadd.f32 0.0, %v2539
  %2541 = vdwg.mxu0
  %v2542 = vadd.f32 %v2495, %v2520
  %v2543 = vadd.f32 %v2496, %v2540
  %v2544 = vadd.f32 %v2542, %v2543
  %2545 = vadd.xlane.f32.xlu0 %v2544
  %v2546 = vpop.xlane.xlu0 %2545
  %v2547 = vmul.f32 %v2546, %v567
  %v2548 = vsub.f32 %v2542, %v2547
  %v2549 = vsub.f32 %v2543, %v2547
  %v2550 = vmul.f32 %v2548, %v2548
  %v2551 = vmul.f32 %v2549, %v2549
  %v2552 = vadd.f32 %v2550, %v2551
  %2553 = vadd.xlane.f32.xlu0 %v2552
  %v2554 = vpop.xlane.xlu0 %2553
  %v2555 = vmul.f32 %v2554, %v567
  %v2556 = vadd.f32 %v2555, 1e-05
  %v2557 = vrsqrt.pop %v2556
  %v2558 = vmul.f32 %v2557, %v2556
  %v2559 = vmul.f32 %v2558, %v2557
  %v2560 = vmul.f32 0.5, %v2559
  %v2561 = vsub.f32 1.5, %v2560
  %v2562 = vmul.f32 %v2557, %v2561
  %vm2563 = vweird.f32 %v2556
  %vm2564 = vweird.f32 %v2557
  %vm2565 = vmor %vm2563, %vm2564
  %v2566 = vsel %vm2565, %v2557, %v2562
  %v2567 = vmul.f32 %v2548, %v2566
  %v2568 = vmul.f32 %v2549, %v2566
  %vm2569 = vcmp.ge.f32.partialorder %v2567, 0.0
  %vm2570 = vcmp.ge.f32.partialorder %v2568, 0.0
  %v2571 = vmul.f32 %v2567, 0.01
  %v2572 = vmul.f32 %v2568, 0.01
  %v2573 = vsel %vm2569, %v2567, %v2571
  %v2574 = vsel %vm2570, %v2568, %v2572
  %2575 = vst [vmem:[%s11 + $0x20] sm:$0xff] %v2573
  %2576 = vst [vmem:[%s11 + $0x28] sm:$0xff] %v2574
  %2577 = vrot.lane.b32.xlu0 %v2573, 17
  %v2578 = vpop.permute.xlu0 %2577
  %2579 = vrot.lane.b32.xlu0 %v2574, 17
  %v2580 = vpop.permute.xlu0 %2579
  %v2581 = vsel %vm48, %v2578, %v2580
  %v2582 = vsel %vm48, %v2580, %v2578
  %v2583 = vld [vmem:[%s1] sm:$0xff]
  %v2584 = vld [vmem:[%s1 + $0x8] sm:$0xff]
  %v2585 = vmul.f32 %v2582, %v2583
  %v2586 = vmul.f32 %v2581, %v2584
  %2587 = vrot.lane.b32.xlu0 %v2573, 16
  %v2588 = vpop.permute.xlu0 %2587
  %2589 = vrot.lane.b32.xlu0 %v2574, 16
  %v2590 = vpop.permute.xlu0 %2589
  %v2591 = vsel %vm59, %v2588, %v2590
  %v2592 = vsel %vm59, %v2590, %v2588
  %v2593 = vld [vmem:[%s62] sm:$0xff]
  %v2594 = vld [vmem:[%s62 + $0x8] sm:$0xff]
  %v2595 = vmul.f32 %v2592, %v2593
  %v2596 = vmul.f32 %v2591, %v2594
  %2597 = vrot.lane.b32.xlu0 %v2573, 15
  %v2598 = vpop.permute.xlu0 %2597
  %2599 = vrot.lane.b32.xlu0 %v2574, 15
  %v2600 = vpop.permute.xlu0 %2599
  %v2601 = vsel %vm71, %v2598, %v2600
  %v2602 = vsel %vm71, %v2600, %v2598
  %v2603 = vld [vmem:[%s74] sm:$0xff]
  %v2604 = vld [vmem:[%s74 + $0x8] sm:$0xff]
  %v2605 = vmul.f32 %v2602, %v2603
  %v2606 = vmul.f32 %v2601, %v2604
  %2607 = vrot.lane.b32.xlu0 %v2573, 1
  %v2608 = vpop.permute.xlu0 %2607
  %2609 = vrot.lane.b32.xlu0 %v2574, 1
  %v2610 = vpop.permute.xlu0 %2609
  %v2611 = vsel %vm83, %v2608, %v2610
  %v2612 = vsel %vm83, %v2610, %v2608
  %v2613 = vld [vmem:[%s86] sm:$0xff]
  %v2614 = vld [vmem:[%s86 + $0x8] sm:$0xff]
  %v2615 = vmul.f32 %v2612, %v2613
  %v2616 = vmul.f32 %v2611, %v2614
  %2617 = vrot.lane.b32.xlu0 %v2573, 127
  %v2618 = vpop.permute.xlu0 %2617
  %2619 = vrot.lane.b32.xlu0 %v2574, 127
  %v2620 = vpop.permute.xlu0 %2619
  %v2621 = vsel %vm95, %v2618, %v2620
  %v2622 = vsel %vm95, %v2620, %v2618
  %v2623 = vld [vmem:[%s98] sm:$0xff]
  %v2624 = vld [vmem:[%s98 + $0x8] sm:$0xff]
  %v2625 = vmul.f32 %v2621, %v2623
  %v2626 = vmul.f32 %v2622, %v2624
  %2627 = vrot.lane.b32.xlu0 %v2573, 113
  %v2628 = vpop.permute.xlu0 %2627
  %2629 = vrot.lane.b32.xlu0 %v2574, 113
  %v2630 = vpop.permute.xlu0 %2629
  %v2631 = vsel %vm107, %v2628, %v2630
  %v2632 = vsel %vm107, %v2630, %v2628
  %v2633 = vld [vmem:[%s110] sm:$0xff]
  %v2634 = vld [vmem:[%s110 + $0x8] sm:$0xff]
  %v2635 = vmul.f32 %v2631, %v2633
  %v2636 = vmul.f32 %v2632, %v2634
  %2637 = vrot.lane.b32.xlu0 %v2573, 112
  %v2638 = vpop.permute.xlu0 %2637
  %2639 = vrot.lane.b32.xlu0 %v2574, 112
  %v2640 = vpop.permute.xlu0 %2639
  %v2641 = vsel %vm119, %v2638, %v2640
  %v2642 = vsel %vm119, %v2640, %v2638
  %v2643 = vld [vmem:[%s122] sm:$0xff]
  %v2644 = vld [vmem:[%s122 + $0x8] sm:$0xff]
  %v2645 = vmul.f32 %v2641, %v2643
  %v2646 = vmul.f32 %v2642, %v2644
  %2647 = vrot.lane.b32.xlu0 %v2573, 111
  %v2648 = vpop.permute.xlu0 %2647
  %2649 = vrot.lane.b32.xlu0 %v2574, 111
  %v2650 = vpop.permute.xlu0 %2649
  %v2651 = vsel %vm131, %v2648, %v2650
  %v2652 = vsel %vm131, %v2650, %v2648
  %v2653 = vld [vmem:[%s134] sm:$0xff]
  %v2654 = vld [vmem:[%s134 + $0x8] sm:$0xff]
  %v2655 = vmul.f32 %v2651, %v2653
  %v2656 = vmul.f32 %v2652, %v2654
  %v2657 = vld [vmem:[%s7] sm:$0xff]
  %s2658 = scalar_lea.vmem %s7, 8
  %v2659 = vld [vmem:[%s2658] sm:$0xff]
  %v2661 = vsel %vm142, %v2659, 0
  %2663 = vmatpush.msra.mxu0 0.0
  %2664 = vmatpush.msra.mxu0 0.0
  %2665 = vmatpush.msra.mxu0 0.0
  %2666 = vmatpush.msra.mxu0 0.0
  %2667 = vmatpush.msra.mxu0 0.0
  %2668 = vmatpush.msra.mxu0 0.0
  %2669 = vmatpush.msra.mxu0 0.0
  %2670 = vmatpush.msra.mxu0 0.0
  %2671 = vmatpush.msra.mxu0 0.0
  %2672 = vmatpush.msra.mxu0 0.0
  %2673 = vmatpush.msra.mxu0 0.0
  %2674 = vmatpush.msra.mxu0 0.0
  %2675 = vmatpush.msra.mxu0 0.0
  %2676 = vmatpush.msra.mxu0 0.0
  %2677 = vmatpush.msra.mxu0 0.0
  %2678 = vmatpush.msra.mxu0 %v65
  %2679 = vmatmul.f32.gmra.mxu0 %v2661
  %v2680 = vpop.f32.mrf.mxu0
  %v2681 = vadd.f32 0.0, %v2680
  %2682 = vdwg.mxu0
  %2683 = vmatpush.msra.mxu0 0.0
  %2684 = vmatpush.msra.mxu0 0.0
  %2685 = vmatpush.msra.mxu0 0.0
  %2686 = vmatpush.msra.mxu0 0.0
  %2687 = vmatpush.msra.mxu0 0.0
  %2688 = vmatpush.msra.mxu0 0.0
  %2689 = vmatpush.msra.mxu0 0.0
  %2690 = vmatpush.msra.mxu0 0.0
  %2691 = vmatpush.msra.mxu0 0.0
  %2692 = vmatpush.msra.mxu0 0.0
  %2693 = vmatpush.msra.mxu0 0.0
  %2694 = vmatpush.msra.mxu0 0.0
  %2695 = vmatpush.msra.mxu0 0.0
  %2696 = vmatpush.msra.mxu0 0.0
  %2697 = vmatpush.msra.mxu0 0.0
  %2698 = vmatpush.msra.mxu0 %v66
  %2699 = vmatmul.f32.gmra.mxu0 %v2661
  %v2700 = vpop.f32.mrf.mxu0
  %v2701 = vadd.f32 0.0, %v2700
  %2702 = vdwg.mxu0
  %v2704 = vsel %vm142, %v2657, 0
  %2706 = vmatpush.msra.mxu0 0.0
  %2707 = vmatpush.msra.mxu0 0.0
  %2708 = vmatpush.msra.mxu0 0.0
  %2709 = vmatpush.msra.mxu0 0.0
  %2710 = vmatpush.msra.mxu0 0.0
  %2711 = vmatpush.msra.mxu0 0.0
  %2712 = vmatpush.msra.mxu0 0.0
  %2713 = vmatpush.msra.mxu0 0.0
  %2714 = vmatpush.msra.mxu0 0.0
  %2715 = vmatpush.msra.mxu0 0.0
  %2716 = vmatpush.msra.mxu0 0.0
  %2717 = vmatpush.msra.mxu0 0.0
  %2718 = vmatpush.msra.mxu0 0.0
  %2719 = vmatpush.msra.mxu0 0.0
  %2720 = vmatpush.msra.mxu0 0.0
  %2721 = vmatpush.msra.mxu0 %v53
  %2722 = vmatmul.f32.gmra.mxu0 %v2704
  %v2723 = vpop.f32.mrf.mxu0
  %v2724 = vadd.f32 %v2681, %v2723
  %2725 = vdwg.mxu0
  %2726 = vmatpush.msra.mxu0 0.0
  %2727 = vmatpush.msra.mxu0 0.0
  %2728 = vmatpush.msra.mxu0 0.0
  %2729 = vmatpush.msra.mxu0 0.0
  %2730 = vmatpush.msra.mxu0 0.0
  %2731 = vmatpush.msra.mxu0 0.0
  %2732 = vmatpush.msra.mxu0 0.0
  %2733 = vmatpush.msra.mxu0 0.0
  %2734 = vmatpush.msra.mxu0 0.0
  %2735 = vmatpush.msra.mxu0 0.0
  %2736 = vmatpush.msra.mxu0 0.0
  %2737 = vmatpush.msra.mxu0 0.0
  %2738 = vmatpush.msra.mxu0 0.0
  %2739 = vmatpush.msra.mxu0 0.0
  %2740 = vmatpush.msra.mxu0 0.0
  %2741 = vmatpush.msra.mxu0 %v54
  %2742 = vmatmul.f32.gmra.mxu0 %v2704
  %v2743 = vpop.f32.mrf.mxu0
  %v2744 = vadd.f32 %v2701, %v2743
  %2745 = vdwg.mxu0
  %s2746 = scalar_lea.vmem %s7, 16
  %v2747 = vld [vmem:[%s2746] sm:$0xff]
  %v2749 = vsel %vm142, %v2747, 0
  %2751 = vmatpush.msra.mxu0 0.0
  %2752 = vmatpush.msra.mxu0 0.0
  %2753 = vmatpush.msra.mxu0 0.0
  %2754 = vmatpush.msra.mxu0 0.0
  %2755 = vmatpush.msra.mxu0 0.0
  %2756 = vmatpush.msra.mxu0 0.0
  %2757 = vmatpush.msra.mxu0 0.0
  %2758 = vmatpush.msra.mxu0 0.0
  %2759 = vmatpush.msra.mxu0 0.0
  %2760 = vmatpush.msra.mxu0 0.0
  %2761 = vmatpush.msra.mxu0 0.0
  %2762 = vmatpush.msra.mxu0 0.0
  %2763 = vmatpush.msra.mxu0 0.0
  %2764 = vmatpush.msra.mxu0 0.0
  %2765 = vmatpush.msra.mxu0 0.0
  %2766 = vmatpush.msra.mxu0 %v77
  %2767 = vmatmul.f32.gmra.mxu0 %v2749
  %v2768 = vpop.f32.mrf.mxu0
  %v2769 = vadd.f32 0.0, %v2768
  %2770 = vdwg.mxu0
  %2771 = vmatpush.msra.mxu0 0.0
  %2772 = vmatpush.msra.mxu0 0.0
  %2773 = vmatpush.msra.mxu0 0.0
  %2774 = vmatpush.msra.mxu0 0.0
  %2775 = vmatpush.msra.mxu0 0.0
  %2776 = vmatpush.msra.mxu0 0.0
  %2777 = vmatpush.msra.mxu0 0.0
  %2778 = vmatpush.msra.mxu0 0.0
  %2779 = vmatpush.msra.mxu0 0.0
  %2780 = vmatpush.msra.mxu0 0.0
  %2781 = vmatpush.msra.mxu0 0.0
  %2782 = vmatpush.msra.mxu0 0.0
  %2783 = vmatpush.msra.mxu0 0.0
  %2784 = vmatpush.msra.mxu0 0.0
  %2785 = vmatpush.msra.mxu0 0.0
  %2786 = vmatpush.msra.mxu0 %v78
  %2787 = vmatmul.f32.gmra.mxu0 %v2749
  %v2788 = vpop.f32.mrf.mxu0
  %v2789 = vadd.f32 0.0, %v2788
  %2790 = vdwg.mxu0
  %v2791 = vadd.f32 %v2724, %v2769
  %v2792 = vadd.f32 %v2744, %v2789
  %s2793 = scalar_lea.vmem %s7, 24
  %v2794 = vld [vmem:[%s2793] sm:$0xff]
  %v2796 = vsel %vm142, %v2794, 0
  %2798 = vmatpush.msra.mxu0 0.0
  %2799 = vmatpush.msra.mxu0 0.0
  %2800 = vmatpush.msra.mxu0 0.0
  %2801 = vmatpush.msra.mxu0 0.0
  %2802 = vmatpush.msra.mxu0 0.0
  %2803 = vmatpush.msra.mxu0 0.0
  %2804 = vmatpush.msra.mxu0 0.0
  %2805 = vmatpush.msra.mxu0 0.0
  %2806 = vmatpush.msra.mxu0 0.0
  %2807 = vmatpush.msra.mxu0 0.0
  %2808 = vmatpush.msra.mxu0 0.0
  %2809 = vmatpush.msra.mxu0 0.0
  %2810 = vmatpush.msra.mxu0 0.0
  %2811 = vmatpush.msra.mxu0 0.0
  %2812 = vmatpush.msra.mxu0 0.0
  %2813 = vmatpush.msra.mxu0 %v89
  %2814 = vmatmul.f32.gmra.mxu0 %v2796
  %v2815 = vpop.f32.mrf.mxu0
  %v2816 = vadd.f32 0.0, %v2815
  %2817 = vdwg.mxu0
  %2818 = vmatpush.msra.mxu0 0.0
  %2819 = vmatpush.msra.mxu0 0.0
  %2820 = vmatpush.msra.mxu0 0.0
  %2821 = vmatpush.msra.mxu0 0.0
  %2822 = vmatpush.msra.mxu0 0.0
  %2823 = vmatpush.msra.mxu0 0.0
  %2824 = vmatpush.msra.mxu0 0.0
  %2825 = vmatpush.msra.mxu0 0.0
  %2826 = vmatpush.msra.mxu0 0.0
  %2827 = vmatpush.msra.mxu0 0.0
  %2828 = vmatpush.msra.mxu0 0.0
  %2829 = vmatpush.msra.mxu0 0.0
  %2830 = vmatpush.msra.mxu0 0.0
  %2831 = vmatpush.msra.mxu0 0.0
  %2832 = vmatpush.msra.mxu0 0.0
  %2833 = vmatpush.msra.mxu0 %v90
  %2834 = vmatmul.f32.gmra.mxu0 %v2796
  %v2835 = vpop.f32.mrf.mxu0
  %v2836 = vadd.f32 0.0, %v2835
  %2837 = vdwg.mxu0
  %v2838 = vadd.f32 %v2791, %v2816
  %v2839 = vadd.f32 %v2792, %v2836
  %s2840 = scalar_lea.vmem %s7, 32
  %v2841 = vld [vmem:[%s2840] sm:$0xff]
  %v2843 = vsel %vm142, %v2841, 0
  %2845 = vmatpush.msra.mxu0 0.0
  %2846 = vmatpush.msra.mxu0 0.0
  %2847 = vmatpush.msra.mxu0 0.0
  %2848 = vmatpush.msra.mxu0 0.0
  %2849 = vmatpush.msra.mxu0 0.0
  %2850 = vmatpush.msra.mxu0 0.0
  %2851 = vmatpush.msra.mxu0 0.0
  %2852 = vmatpush.msra.mxu0 0.0
  %2853 = vmatpush.msra.mxu0 0.0
  %2854 = vmatpush.msra.mxu0 0.0
  %2855 = vmatpush.msra.mxu0 0.0
  %2856 = vmatpush.msra.mxu0 0.0
  %2857 = vmatpush.msra.mxu0 0.0
  %2858 = vmatpush.msra.mxu0 0.0
  %2859 = vmatpush.msra.mxu0 0.0
  %2860 = vmatpush.msra.mxu0 %v38
  %2861 = vmatmul.f32.gmra.mxu0 %v2843
  %v2862 = vpop.f32.mrf.mxu0
  %v2863 = vadd.f32 0.0, %v2862
  %2864 = vdwg.mxu0
  %2865 = vmatpush.msra.mxu0 0.0
  %2866 = vmatpush.msra.mxu0 0.0
  %2867 = vmatpush.msra.mxu0 0.0
  %2868 = vmatpush.msra.mxu0 0.0
  %2869 = vmatpush.msra.mxu0 0.0
  %2870 = vmatpush.msra.mxu0 0.0
  %2871 = vmatpush.msra.mxu0 0.0
  %2872 = vmatpush.msra.mxu0 0.0
  %2873 = vmatpush.msra.mxu0 0.0
  %2874 = vmatpush.msra.mxu0 0.0
  %2875 = vmatpush.msra.mxu0 0.0
  %2876 = vmatpush.msra.mxu0 0.0
  %2877 = vmatpush.msra.mxu0 0.0
  %2878 = vmatpush.msra.mxu0 0.0
  %2879 = vmatpush.msra.mxu0 0.0
  %2880 = vmatpush.msra.mxu0 %v39
  %2881 = vmatmul.f32.gmra.mxu0 %v2843
  %v2882 = vpop.f32.mrf.mxu0
  %v2883 = vadd.f32 0.0, %v2882
  %2884 = vdwg.mxu0
  %v2885 = vadd.f32 %v2838, %v2863
  %v2886 = vadd.f32 %v2839, %v2883
  %s2887 = scalar_lea.vmem %s7, 40
  %v2888 = vld [vmem:[%s2887] sm:$0xff]
  %v2890 = vsel %vm142, %v2888, 0
  %2892 = vmatpush.msra.mxu0 0.0
  %2893 = vmatpush.msra.mxu0 0.0
  %2894 = vmatpush.msra.mxu0 0.0
  %2895 = vmatpush.msra.mxu0 0.0
  %2896 = vmatpush.msra.mxu0 0.0
  %2897 = vmatpush.msra.mxu0 0.0
  %2898 = vmatpush.msra.mxu0 0.0
  %2899 = vmatpush.msra.mxu0 0.0
  %2900 = vmatpush.msra.mxu0 0.0
  %2901 = vmatpush.msra.mxu0 0.0
  %2902 = vmatpush.msra.mxu0 0.0
  %2903 = vmatpush.msra.mxu0 0.0
  %2904 = vmatpush.msra.mxu0 0.0
  %2905 = vmatpush.msra.mxu0 0.0
  %2906 = vmatpush.msra.mxu0 0.0
  %2907 = vmatpush.msra.mxu0 %v101
  %2908 = vmatmul.f32.gmra.mxu0 %v2890
  %v2909 = vpop.f32.mrf.mxu0
  %v2910 = vadd.f32 0.0, %v2909
  %2911 = vdwg.mxu0
  %2912 = vmatpush.msra.mxu0 0.0
  %2913 = vmatpush.msra.mxu0 0.0
  %2914 = vmatpush.msra.mxu0 0.0
  %2915 = vmatpush.msra.mxu0 0.0
  %2916 = vmatpush.msra.mxu0 0.0
  %2917 = vmatpush.msra.mxu0 0.0
  %2918 = vmatpush.msra.mxu0 0.0
  %2919 = vmatpush.msra.mxu0 0.0
  %2920 = vmatpush.msra.mxu0 0.0
  %2921 = vmatpush.msra.mxu0 0.0
  %2922 = vmatpush.msra.mxu0 0.0
  %2923 = vmatpush.msra.mxu0 0.0
  %2924 = vmatpush.msra.mxu0 0.0
  %2925 = vmatpush.msra.mxu0 0.0
  %2926 = vmatpush.msra.mxu0 0.0
  %2927 = vmatpush.msra.mxu0 %v102
  %2928 = vmatmul.f32.gmra.mxu0 %v2890
  %v2929 = vpop.f32.mrf.mxu0
  %v2930 = vadd.f32 0.0, %v2929
  %2931 = vdwg.mxu0
  %v2932 = vadd.f32 %v2885, %v2910
  %v2933 = vadd.f32 %v2886, %v2930
  %s2934 = scalar_lea.vmem %s7, 48
  %v2935 = vld [vmem:[%s2934] sm:$0xff]
  %v2937 = vsel %vm142, %v2935, 0
  %2939 = vmatpush.msra.mxu0 0.0
  %2940 = vmatpush.msra.mxu0 0.0
  %2941 = vmatpush.msra.mxu0 0.0
  %2942 = vmatpush.msra.mxu0 0.0
  %2943 = vmatpush.msra.mxu0 0.0
  %2944 = vmatpush.msra.mxu0 0.0
  %2945 = vmatpush.msra.mxu0 0.0
  %2946 = vmatpush.msra.mxu0 0.0
  %2947 = vmatpush.msra.mxu0 0.0
  %2948 = vmatpush.msra.mxu0 0.0
  %2949 = vmatpush.msra.mxu0 0.0
  %2950 = vmatpush.msra.mxu0 0.0
  %2951 = vmatpush.msra.mxu0 0.0
  %2952 = vmatpush.msra.mxu0 0.0
  %2953 = vmatpush.msra.mxu0 0.0
  %2954 = vmatpush.msra.mxu0 %v113
  %2955 = vmatmul.f32.gmra.mxu0 %v2937
  %v2956 = vpop.f32.mrf.mxu0
  %v2957 = vadd.f32 0.0, %v2956
  %2958 = vdwg.mxu0
  %2959 = vmatpush.msra.mxu0 0.0
  %2960 = vmatpush.msra.mxu0 0.0
  %2961 = vmatpush.msra.mxu0 0.0
  %2962 = vmatpush.msra.mxu0 0.0
  %2963 = vmatpush.msra.mxu0 0.0
  %2964 = vmatpush.msra.mxu0 0.0
  %2965 = vmatpush.msra.mxu0 0.0
  %2966 = vmatpush.msra.mxu0 0.0
  %2967 = vmatpush.msra.mxu0 0.0
  %2968 = vmatpush.msra.mxu0 0.0
  %2969 = vmatpush.msra.mxu0 0.0
  %2970 = vmatpush.msra.mxu0 0.0
  %2971 = vmatpush.msra.mxu0 0.0
  %2972 = vmatpush.msra.mxu0 0.0
  %2973 = vmatpush.msra.mxu0 0.0
  %2974 = vmatpush.msra.mxu0 %v114
  %2975 = vmatmul.f32.gmra.mxu0 %v2937
  %v2976 = vpop.f32.mrf.mxu0
  %v2977 = vadd.f32 0.0, %v2976
  %2978 = vdwg.mxu0
  %v2979 = vadd.f32 %v2932, %v2957
  %v2980 = vadd.f32 %v2933, %v2977
  %s2981 = scalar_lea.vmem %s7, 56
  %v2982 = vld [vmem:[%s2981] sm:$0xff]
  %v2984 = vsel %vm142, %v2982, 0
  %2986 = vmatpush.msra.mxu0 0.0
  %2987 = vmatpush.msra.mxu0 0.0
  %2988 = vmatpush.msra.mxu0 0.0
  %2989 = vmatpush.msra.mxu0 0.0
  %2990 = vmatpush.msra.mxu0 0.0
  %2991 = vmatpush.msra.mxu0 0.0
  %2992 = vmatpush.msra.mxu0 0.0
  %2993 = vmatpush.msra.mxu0 0.0
  %2994 = vmatpush.msra.mxu0 0.0
  %2995 = vmatpush.msra.mxu0 0.0
  %2996 = vmatpush.msra.mxu0 0.0
  %2997 = vmatpush.msra.mxu0 0.0
  %2998 = vmatpush.msra.mxu0 0.0
  %2999 = vmatpush.msra.mxu0 0.0
  %3000 = vmatpush.msra.mxu0 0.0
  %3001 = vmatpush.msra.mxu0 %v125
  %3002 = vmatmul.f32.gmra.mxu0 %v2984
  %v3003 = vpop.f32.mrf.mxu0
  %v3004 = vadd.f32 0.0, %v3003
  %3005 = vdwg.mxu0
  %3006 = vmatpush.msra.mxu0 0.0
  %3007 = vmatpush.msra.mxu0 0.0
  %3008 = vmatpush.msra.mxu0 0.0
  %3009 = vmatpush.msra.mxu0 0.0
  %3010 = vmatpush.msra.mxu0 0.0
  %3011 = vmatpush.msra.mxu0 0.0
  %3012 = vmatpush.msra.mxu0 0.0
  %3013 = vmatpush.msra.mxu0 0.0
  %3014 = vmatpush.msra.mxu0 0.0
  %3015 = vmatpush.msra.mxu0 0.0
  %3016 = vmatpush.msra.mxu0 0.0
  %3017 = vmatpush.msra.mxu0 0.0
  %3018 = vmatpush.msra.mxu0 0.0
  %3019 = vmatpush.msra.mxu0 0.0
  %3020 = vmatpush.msra.mxu0 0.0
  %3021 = vmatpush.msra.mxu0 %v126
  %3022 = vmatmul.f32.gmra.mxu0 %v2984
  %v3023 = vpop.f32.mrf.mxu0
  %v3024 = vadd.f32 0.0, %v3023
  %3025 = vdwg.mxu0
  %v3026 = vadd.f32 %v2979, %v3004
  %v3027 = vadd.f32 %v2980, %v3024
  %s3028 = scalar_lea.vmem %s7, 64
  %v3029 = vld [vmem:[%s3028] sm:$0xff]
  %v3031 = vsel %vm142, %v3029, 0
  %3033 = vmatpush.msra.mxu0 0.0
  %3034 = vmatpush.msra.mxu0 0.0
  %3035 = vmatpush.msra.mxu0 0.0
  %3036 = vmatpush.msra.mxu0 0.0
  %3037 = vmatpush.msra.mxu0 0.0
  %3038 = vmatpush.msra.mxu0 0.0
  %3039 = vmatpush.msra.mxu0 0.0
  %3040 = vmatpush.msra.mxu0 0.0
  %3041 = vmatpush.msra.mxu0 0.0
  %3042 = vmatpush.msra.mxu0 0.0
  %3043 = vmatpush.msra.mxu0 0.0
  %3044 = vmatpush.msra.mxu0 0.0
  %3045 = vmatpush.msra.mxu0 0.0
  %3046 = vmatpush.msra.mxu0 0.0
  %3047 = vmatpush.msra.mxu0 0.0
  %3048 = vmatpush.msra.mxu0 %v137
  %3049 = vmatmul.f32.gmra.mxu0 %v3031
  %v3050 = vpop.f32.mrf.mxu0
  %v3051 = vadd.f32 0.0, %v3050
  %3052 = vdwg.mxu0
  %3053 = vmatpush.msra.mxu0 0.0
  %3054 = vmatpush.msra.mxu0 0.0
  %3055 = vmatpush.msra.mxu0 0.0
  %3056 = vmatpush.msra.mxu0 0.0
  %3057 = vmatpush.msra.mxu0 0.0
  %3058 = vmatpush.msra.mxu0 0.0
  %3059 = vmatpush.msra.mxu0 0.0
  %3060 = vmatpush.msra.mxu0 0.0
  %3061 = vmatpush.msra.mxu0 0.0
  %3062 = vmatpush.msra.mxu0 0.0
  %3063 = vmatpush.msra.mxu0 0.0
  %3064 = vmatpush.msra.mxu0 0.0
  %3065 = vmatpush.msra.mxu0 0.0
  %3066 = vmatpush.msra.mxu0 0.0
  %3067 = vmatpush.msra.mxu0 0.0
  %3068 = vmatpush.msra.mxu0 %v138
  %3069 = vmatmul.f32.gmra.mxu0 %v3031
  %v3070 = vpop.f32.mrf.mxu0
  %v3071 = vadd.f32 0.0, %v3070
  %3072 = vdwg.mxu0
  %v3073 = vadd.f32 %v3026, %v3051
  %v3074 = vadd.f32 %v3027, %v3071
  %v3075 = vld [vmem:[%s8] sm:$0xff]
  %v3077 = vsel %vm142, %v3075, 0
  %3079 = vmatpush.msra.mxu0 0.0
  %3080 = vmatpush.msra.mxu0 0.0
  %3081 = vmatpush.msra.mxu0 0.0
  %3082 = vmatpush.msra.mxu0 0.0
  %3083 = vmatpush.msra.mxu0 0.0
  %3084 = vmatpush.msra.mxu0 0.0
  %3085 = vmatpush.msra.mxu0 0.0
  %3086 = vmatpush.msra.mxu0 0.0
  %3087 = vmatpush.msra.mxu0 0.0
  %3088 = vmatpush.msra.mxu0 0.0
  %3089 = vmatpush.msra.mxu0 0.0
  %3090 = vmatpush.msra.mxu0 0.0
  %3091 = vmatpush.msra.mxu0 0.0
  %3092 = vmatpush.msra.mxu0 0.0
  %3093 = vmatpush.msra.mxu0 0.0
  %3094 = vmatpush.msra.mxu0 %v1119
  %3095 = vmatmul.f32.gmra.mxu0 %v3077
  %v3096 = vpop.f32.mrf.mxu0
  %v3097 = vadd.f32 0.0, %v3096
  %3098 = vdwg.mxu0
  %3099 = vmatpush.msra.mxu0 0.0
  %3100 = vmatpush.msra.mxu0 0.0
  %3101 = vmatpush.msra.mxu0 0.0
  %3102 = vmatpush.msra.mxu0 0.0
  %3103 = vmatpush.msra.mxu0 0.0
  %3104 = vmatpush.msra.mxu0 0.0
  %3105 = vmatpush.msra.mxu0 0.0
  %3106 = vmatpush.msra.mxu0 0.0
  %3107 = vmatpush.msra.mxu0 0.0
  %3108 = vmatpush.msra.mxu0 0.0
  %3109 = vmatpush.msra.mxu0 0.0
  %3110 = vmatpush.msra.mxu0 0.0
  %3111 = vmatpush.msra.mxu0 0.0
  %3112 = vmatpush.msra.mxu0 0.0
  %3113 = vmatpush.msra.mxu0 0.0
  %3114 = vmatpush.msra.mxu0 %v1120
  %3115 = vmatmul.f32.gmra.mxu0 %v3077
  %v3116 = vpop.f32.mrf.mxu0
  %v3117 = vadd.f32 0.0, %v3116
  %3118 = vdwg.mxu0
  %v3119 = vadd.f32 %v3073, %v3097
  %v3120 = vadd.f32 %v3074, %v3117
  %s3121 = scalar_lea.vmem %s8, 8
  %v3122 = vld [vmem:[%s3121] sm:$0xff]
  %v3124 = vsel %vm142, %v3122, 0
  %3126 = vmatpush.msra.mxu0 0.0
  %3127 = vmatpush.msra.mxu0 0.0
  %3128 = vmatpush.msra.mxu0 0.0
  %3129 = vmatpush.msra.mxu0 0.0
  %3130 = vmatpush.msra.mxu0 0.0
  %3131 = vmatpush.msra.mxu0 0.0
  %3132 = vmatpush.msra.mxu0 0.0
  %3133 = vmatpush.msra.mxu0 0.0
  %3134 = vmatpush.msra.mxu0 0.0
  %3135 = vmatpush.msra.mxu0 0.0
  %3136 = vmatpush.msra.mxu0 0.0
  %3137 = vmatpush.msra.mxu0 0.0
  %3138 = vmatpush.msra.mxu0 0.0
  %3139 = vmatpush.msra.mxu0 0.0
  %3140 = vmatpush.msra.mxu0 0.0
  %3141 = vmatpush.msra.mxu0 %v1129
  %3142 = vmatmul.f32.gmra.mxu0 %v3124
  %v3143 = vpop.f32.mrf.mxu0
  %v3144 = vadd.f32 0.0, %v3143
  %3145 = vdwg.mxu0
  %3146 = vmatpush.msra.mxu0 0.0
  %3147 = vmatpush.msra.mxu0 0.0
  %3148 = vmatpush.msra.mxu0 0.0
  %3149 = vmatpush.msra.mxu0 0.0
  %3150 = vmatpush.msra.mxu0 0.0
  %3151 = vmatpush.msra.mxu0 0.0
  %3152 = vmatpush.msra.mxu0 0.0
  %3153 = vmatpush.msra.mxu0 0.0
  %3154 = vmatpush.msra.mxu0 0.0
  %3155 = vmatpush.msra.mxu0 0.0
  %3156 = vmatpush.msra.mxu0 0.0
  %3157 = vmatpush.msra.mxu0 0.0
  %3158 = vmatpush.msra.mxu0 0.0
  %3159 = vmatpush.msra.mxu0 0.0
  %3160 = vmatpush.msra.mxu0 0.0
  %3161 = vmatpush.msra.mxu0 %v1130
  %3162 = vmatmul.f32.gmra.mxu0 %v3124
  %v3163 = vpop.f32.mrf.mxu0
  %v3164 = vadd.f32 0.0, %v3163
  %3165 = vdwg.mxu0
  %v3166 = vadd.f32 %v3119, %v3144
  %v3167 = vadd.f32 %v3120, %v3164
  %s3168 = scalar_lea.vmem %s8, 16
  %v3169 = vld [vmem:[%s3168] sm:$0xff]
  %v3171 = vsel %vm142, %v3169, 0
  %3173 = vmatpush.msra.mxu0 0.0
  %3174 = vmatpush.msra.mxu0 0.0
  %3175 = vmatpush.msra.mxu0 0.0
  %3176 = vmatpush.msra.mxu0 0.0
  %3177 = vmatpush.msra.mxu0 0.0
  %3178 = vmatpush.msra.mxu0 0.0
  %3179 = vmatpush.msra.mxu0 0.0
  %3180 = vmatpush.msra.mxu0 0.0
  %3181 = vmatpush.msra.mxu0 0.0
  %3182 = vmatpush.msra.mxu0 0.0
  %3183 = vmatpush.msra.mxu0 0.0
  %3184 = vmatpush.msra.mxu0 0.0
  %3185 = vmatpush.msra.mxu0 0.0
  %3186 = vmatpush.msra.mxu0 0.0
  %3187 = vmatpush.msra.mxu0 0.0
  %3188 = vmatpush.msra.mxu0 %v1139
  %3189 = vmatmul.f32.gmra.mxu0 %v3171
  %v3190 = vpop.f32.mrf.mxu0
  %v3191 = vadd.f32 0.0, %v3190
  %3192 = vdwg.mxu0
  %3193 = vmatpush.msra.mxu0 0.0
  %3194 = vmatpush.msra.mxu0 0.0
  %3195 = vmatpush.msra.mxu0 0.0
  %3196 = vmatpush.msra.mxu0 0.0
  %3197 = vmatpush.msra.mxu0 0.0
  %3198 = vmatpush.msra.mxu0 0.0
  %3199 = vmatpush.msra.mxu0 0.0
  %3200 = vmatpush.msra.mxu0 0.0
  %3201 = vmatpush.msra.mxu0 0.0
  %3202 = vmatpush.msra.mxu0 0.0
  %3203 = vmatpush.msra.mxu0 0.0
  %3204 = vmatpush.msra.mxu0 0.0
  %3205 = vmatpush.msra.mxu0 0.0
  %3206 = vmatpush.msra.mxu0 0.0
  %3207 = vmatpush.msra.mxu0 0.0
  %3208 = vmatpush.msra.mxu0 %v1140
  %3209 = vmatmul.f32.gmra.mxu0 %v3171
  %v3210 = vpop.f32.mrf.mxu0
  %v3211 = vadd.f32 0.0, %v3210
  %3212 = vdwg.mxu0
  %v3213 = vadd.f32 %v3166, %v3191
  %v3214 = vadd.f32 %v3167, %v3211
  %s3215 = scalar_lea.vmem %s8, 24
  %v3216 = vld [vmem:[%s3215] sm:$0xff]
  %v3218 = vsel %vm142, %v3216, 0
  %3220 = vmatpush.msra.mxu0 0.0
  %3221 = vmatpush.msra.mxu0 0.0
  %3222 = vmatpush.msra.mxu0 0.0
  %3223 = vmatpush.msra.mxu0 0.0
  %3224 = vmatpush.msra.mxu0 0.0
  %3225 = vmatpush.msra.mxu0 0.0
  %3226 = vmatpush.msra.mxu0 0.0
  %3227 = vmatpush.msra.mxu0 0.0
  %3228 = vmatpush.msra.mxu0 0.0
  %3229 = vmatpush.msra.mxu0 0.0
  %3230 = vmatpush.msra.mxu0 0.0
  %3231 = vmatpush.msra.mxu0 0.0
  %3232 = vmatpush.msra.mxu0 0.0
  %3233 = vmatpush.msra.mxu0 0.0
  %3234 = vmatpush.msra.mxu0 0.0
  %3235 = vmatpush.msra.mxu0 %v1149
  %3236 = vmatmul.f32.gmra.mxu0 %v3218
  %v3237 = vpop.f32.mrf.mxu0
  %v3238 = vadd.f32 0.0, %v3237
  %3239 = vdwg.mxu0
  %3240 = vmatpush.msra.mxu0 0.0
  %3241 = vmatpush.msra.mxu0 0.0
  %3242 = vmatpush.msra.mxu0 0.0
  %3243 = vmatpush.msra.mxu0 0.0
  %3244 = vmatpush.msra.mxu0 0.0
  %3245 = vmatpush.msra.mxu0 0.0
  %3246 = vmatpush.msra.mxu0 0.0
  %3247 = vmatpush.msra.mxu0 0.0
  %3248 = vmatpush.msra.mxu0 0.0
  %3249 = vmatpush.msra.mxu0 0.0
  %3250 = vmatpush.msra.mxu0 0.0
  %3251 = vmatpush.msra.mxu0 0.0
  %3252 = vmatpush.msra.mxu0 0.0
  %3253 = vmatpush.msra.mxu0 0.0
  %3254 = vmatpush.msra.mxu0 0.0
  %3255 = vmatpush.msra.mxu0 %v1150
  %3256 = vmatmul.f32.gmra.mxu0 %v3218
  %v3257 = vpop.f32.mrf.mxu0
  %v3258 = vadd.f32 0.0, %v3257
  %3259 = vdwg.mxu0
  %v3260 = vadd.f32 %v3213, %v3238
  %v3261 = vadd.f32 %v3214, %v3258
  %s3262 = scalar_lea.vmem %s8, 32
  %v3263 = vld [vmem:[%s3262] sm:$0xff]
  %v3265 = vsel %vm142, %v3263, 0
  %3267 = vmatpush.msra.mxu0 0.0
  %3268 = vmatpush.msra.mxu0 0.0
  %3269 = vmatpush.msra.mxu0 0.0
  %3270 = vmatpush.msra.mxu0 0.0
  %3271 = vmatpush.msra.mxu0 0.0
  %3272 = vmatpush.msra.mxu0 0.0
  %3273 = vmatpush.msra.mxu0 0.0
  %3274 = vmatpush.msra.mxu0 0.0
  %3275 = vmatpush.msra.mxu0 0.0
  %3276 = vmatpush.msra.mxu0 0.0
  %3277 = vmatpush.msra.mxu0 0.0
  %3278 = vmatpush.msra.mxu0 0.0
  %3279 = vmatpush.msra.mxu0 0.0
  %3280 = vmatpush.msra.mxu0 0.0
  %3281 = vmatpush.msra.mxu0 0.0
  %3282 = vmatpush.msra.mxu0 %v1107
  %3283 = vmatmul.f32.gmra.mxu0 %v3265
  %v3284 = vpop.f32.mrf.mxu0
  %v3285 = vadd.f32 0.0, %v3284
  %3286 = vdwg.mxu0
  %3287 = vmatpush.msra.mxu0 0.0
  %3288 = vmatpush.msra.mxu0 0.0
  %3289 = vmatpush.msra.mxu0 0.0
  %3290 = vmatpush.msra.mxu0 0.0
  %3291 = vmatpush.msra.mxu0 0.0
  %3292 = vmatpush.msra.mxu0 0.0
  %3293 = vmatpush.msra.mxu0 0.0
  %3294 = vmatpush.msra.mxu0 0.0
  %3295 = vmatpush.msra.mxu0 0.0
  %3296 = vmatpush.msra.mxu0 0.0
  %3297 = vmatpush.msra.mxu0 0.0
  %3298 = vmatpush.msra.mxu0 0.0
  %3299 = vmatpush.msra.mxu0 0.0
  %3300 = vmatpush.msra.mxu0 0.0
  %3301 = vmatpush.msra.mxu0 0.0
  %3302 = vmatpush.msra.mxu0 %v1108
  %3303 = vmatmul.f32.gmra.mxu0 %v3265
  %v3304 = vpop.f32.mrf.mxu0
  %v3305 = vadd.f32 0.0, %v3304
  %3306 = vdwg.mxu0
  %v3307 = vadd.f32 %v3260, %v3285
  %v3308 = vadd.f32 %v3261, %v3305
  %s3309 = scalar_lea.vmem %s8, 40
  %v3310 = vld [vmem:[%s3309] sm:$0xff]
  %v3312 = vsel %vm142, %v3310, 0
  %3314 = vmatpush.msra.mxu0 0.0
  %3315 = vmatpush.msra.mxu0 0.0
  %3316 = vmatpush.msra.mxu0 0.0
  %3317 = vmatpush.msra.mxu0 0.0
  %3318 = vmatpush.msra.mxu0 0.0
  %3319 = vmatpush.msra.mxu0 0.0
  %3320 = vmatpush.msra.mxu0 0.0
  %3321 = vmatpush.msra.mxu0 0.0
  %3322 = vmatpush.msra.mxu0 0.0
  %3323 = vmatpush.msra.mxu0 0.0
  %3324 = vmatpush.msra.mxu0 0.0
  %3325 = vmatpush.msra.mxu0 0.0
  %3326 = vmatpush.msra.mxu0 0.0
  %3327 = vmatpush.msra.mxu0 0.0
  %3328 = vmatpush.msra.mxu0 0.0
  %3329 = vmatpush.msra.mxu0 %v1159
  %3330 = vmatmul.f32.gmra.mxu0 %v3312
  %v3331 = vpop.f32.mrf.mxu0
  %v3332 = vadd.f32 0.0, %v3331
  %3333 = vdwg.mxu0
  %3334 = vmatpush.msra.mxu0 0.0
  %3335 = vmatpush.msra.mxu0 0.0
  %3336 = vmatpush.msra.mxu0 0.0
  %3337 = vmatpush.msra.mxu0 0.0
  %3338 = vmatpush.msra.mxu0 0.0
  %3339 = vmatpush.msra.mxu0 0.0
  %3340 = vmatpush.msra.mxu0 0.0
  %3341 = vmatpush.msra.mxu0 0.0
  %3342 = vmatpush.msra.mxu0 0.0
  %3343 = vmatpush.msra.mxu0 0.0
  %3344 = vmatpush.msra.mxu0 0.0
  %3345 = vmatpush.msra.mxu0 0.0
  %3346 = vmatpush.msra.mxu0 0.0
  %3347 = vmatpush.msra.mxu0 0.0
  %3348 = vmatpush.msra.mxu0 0.0
  %3349 = vmatpush.msra.mxu0 %v1160
  %3350 = vmatmul.f32.gmra.mxu0 %v3312
  %v3351 = vpop.f32.mrf.mxu0
  %v3352 = vadd.f32 0.0, %v3351
  %3353 = vdwg.mxu0
  %v3354 = vadd.f32 %v3307, %v3332
  %v3355 = vadd.f32 %v3308, %v3352
  %s3356 = scalar_lea.vmem %s8, 48
  %v3357 = vld [vmem:[%s3356] sm:$0xff]
  %v3359 = vsel %vm142, %v3357, 0
  %3361 = vmatpush.msra.mxu0 0.0
  %3362 = vmatpush.msra.mxu0 0.0
  %3363 = vmatpush.msra.mxu0 0.0
  %3364 = vmatpush.msra.mxu0 0.0
  %3365 = vmatpush.msra.mxu0 0.0
  %3366 = vmatpush.msra.mxu0 0.0
  %3367 = vmatpush.msra.mxu0 0.0
  %3368 = vmatpush.msra.mxu0 0.0
  %3369 = vmatpush.msra.mxu0 0.0
  %3370 = vmatpush.msra.mxu0 0.0
  %3371 = vmatpush.msra.mxu0 0.0
  %3372 = vmatpush.msra.mxu0 0.0
  %3373 = vmatpush.msra.mxu0 0.0
  %3374 = vmatpush.msra.mxu0 0.0
  %3375 = vmatpush.msra.mxu0 0.0
  %3376 = vmatpush.msra.mxu0 %v1169
  %3377 = vmatmul.f32.gmra.mxu0 %v3359
  %v3378 = vpop.f32.mrf.mxu0
  %v3379 = vadd.f32 0.0, %v3378
  %3380 = vdwg.mxu0
  %3381 = vmatpush.msra.mxu0 0.0
  %3382 = vmatpush.msra.mxu0 0.0
  %3383 = vmatpush.msra.mxu0 0.0
  %3384 = vmatpush.msra.mxu0 0.0
  %3385 = vmatpush.msra.mxu0 0.0
  %3386 = vmatpush.msra.mxu0 0.0
  %3387 = vmatpush.msra.mxu0 0.0
  %3388 = vmatpush.msra.mxu0 0.0
  %3389 = vmatpush.msra.mxu0 0.0
  %3390 = vmatpush.msra.mxu0 0.0
  %3391 = vmatpush.msra.mxu0 0.0
  %3392 = vmatpush.msra.mxu0 0.0
  %3393 = vmatpush.msra.mxu0 0.0
  %3394 = vmatpush.msra.mxu0 0.0
  %3395 = vmatpush.msra.mxu0 0.0
  %3396 = vmatpush.msra.mxu0 %v1170
  %3397 = vmatmul.f32.gmra.mxu0 %v3359
  %v3398 = vpop.f32.mrf.mxu0
  %v3399 = vadd.f32 0.0, %v3398
  %3400 = vdwg.mxu0
  %v3401 = vadd.f32 %v3354, %v3379
  %v3402 = vadd.f32 %v3355, %v3399
  %s3403 = scalar_lea.vmem %s8, 56
  %v3404 = vld [vmem:[%s3403] sm:$0xff]
  %v3406 = vsel %vm142, %v3404, 0
  %3408 = vmatpush.msra.mxu0 0.0
  %3409 = vmatpush.msra.mxu0 0.0
  %3410 = vmatpush.msra.mxu0 0.0
  %3411 = vmatpush.msra.mxu0 0.0
  %3412 = vmatpush.msra.mxu0 0.0
  %3413 = vmatpush.msra.mxu0 0.0
  %3414 = vmatpush.msra.mxu0 0.0
  %3415 = vmatpush.msra.mxu0 0.0
  %3416 = vmatpush.msra.mxu0 0.0
  %3417 = vmatpush.msra.mxu0 0.0
  %3418 = vmatpush.msra.mxu0 0.0
  %3419 = vmatpush.msra.mxu0 0.0
  %3420 = vmatpush.msra.mxu0 0.0
  %3421 = vmatpush.msra.mxu0 0.0
  %3422 = vmatpush.msra.mxu0 0.0
  %3423 = vmatpush.msra.mxu0 %v1179
  %3424 = vmatmul.f32.gmra.mxu0 %v3406
  %v3425 = vpop.f32.mrf.mxu0
  %v3426 = vadd.f32 0.0, %v3425
  %3427 = vdwg.mxu0
  %3428 = vmatpush.msra.mxu0 0.0
  %3429 = vmatpush.msra.mxu0 0.0
  %3430 = vmatpush.msra.mxu0 0.0
  %3431 = vmatpush.msra.mxu0 0.0
  %3432 = vmatpush.msra.mxu0 0.0
  %3433 = vmatpush.msra.mxu0 0.0
  %3434 = vmatpush.msra.mxu0 0.0
  %3435 = vmatpush.msra.mxu0 0.0
  %3436 = vmatpush.msra.mxu0 0.0
  %3437 = vmatpush.msra.mxu0 0.0
  %3438 = vmatpush.msra.mxu0 0.0
  %3439 = vmatpush.msra.mxu0 0.0
  %3440 = vmatpush.msra.mxu0 0.0
  %3441 = vmatpush.msra.mxu0 0.0
  %3442 = vmatpush.msra.mxu0 0.0
  %3443 = vmatpush.msra.mxu0 %v1180
  %3444 = vmatmul.f32.gmra.mxu0 %v3406
  %v3445 = vpop.f32.mrf.mxu0
  %v3446 = vadd.f32 0.0, %v3445
  %3447 = vdwg.mxu0
  %v3448 = vadd.f32 %v3401, %v3426
  %v3449 = vadd.f32 %v3402, %v3446
  %s3450 = scalar_lea.vmem %s8, 64
  %v3451 = vld [vmem:[%s3450] sm:$0xff]
  %v3453 = vsel %vm142, %v3451, 0
  %3455 = vmatpush.msra.mxu0 0.0
  %3456 = vmatpush.msra.mxu0 0.0
  %3457 = vmatpush.msra.mxu0 0.0
  %3458 = vmatpush.msra.mxu0 0.0
  %3459 = vmatpush.msra.mxu0 0.0
  %3460 = vmatpush.msra.mxu0 0.0
  %3461 = vmatpush.msra.mxu0 0.0
  %3462 = vmatpush.msra.mxu0 0.0
  %3463 = vmatpush.msra.mxu0 0.0
  %3464 = vmatpush.msra.mxu0 0.0
  %3465 = vmatpush.msra.mxu0 0.0
  %3466 = vmatpush.msra.mxu0 0.0
  %3467 = vmatpush.msra.mxu0 0.0
  %3468 = vmatpush.msra.mxu0 0.0
  %3469 = vmatpush.msra.mxu0 0.0
  %3470 = vmatpush.msra.mxu0 %v1189
  %3471 = vmatmul.f32.gmra.mxu0 %v3453
  %v3472 = vpop.f32.mrf.mxu0
  %v3473 = vadd.f32 0.0, %v3472
  %3474 = vdwg.mxu0
  %3475 = vmatpush.msra.mxu0 0.0
  %3476 = vmatpush.msra.mxu0 0.0
  %3477 = vmatpush.msra.mxu0 0.0
  %3478 = vmatpush.msra.mxu0 0.0
  %3479 = vmatpush.msra.mxu0 0.0
  %3480 = vmatpush.msra.mxu0 0.0
  %3481 = vmatpush.msra.mxu0 0.0
  %3482 = vmatpush.msra.mxu0 0.0
  %3483 = vmatpush.msra.mxu0 0.0
  %3484 = vmatpush.msra.mxu0 0.0
  %3485 = vmatpush.msra.mxu0 0.0
  %3486 = vmatpush.msra.mxu0 0.0
  %3487 = vmatpush.msra.mxu0 0.0
  %3488 = vmatpush.msra.mxu0 0.0
  %3489 = vmatpush.msra.mxu0 0.0
  %3490 = vmatpush.msra.mxu0 %v1190
  %3491 = vmatmul.f32.gmra.mxu0 %v3453
  %v3492 = vpop.f32.mrf.mxu0
  %v3493 = vadd.f32 0.0, %v3492
  %3494 = vdwg.mxu0
  %v3495 = vadd.f32 %v3448, %v3473
  %v3496 = vadd.f32 %v3449, %v3493
  %v3497 = vld [vmem:[%s9] sm:$0xff]
  %v3499 = vsel %vm142, %v3497, 0
  %3501 = vmatpush.msra.mxu0 0.0
  %3502 = vmatpush.msra.mxu0 0.0
  %3503 = vmatpush.msra.mxu0 0.0
  %3504 = vmatpush.msra.mxu0 0.0
  %3505 = vmatpush.msra.mxu0 0.0
  %3506 = vmatpush.msra.mxu0 0.0
  %3507 = vmatpush.msra.mxu0 0.0
  %3508 = vmatpush.msra.mxu0 0.0
  %3509 = vmatpush.msra.mxu0 0.0
  %3510 = vmatpush.msra.mxu0 0.0
  %3511 = vmatpush.msra.mxu0 0.0
  %3512 = vmatpush.msra.mxu0 0.0
  %3513 = vmatpush.msra.mxu0 0.0
  %3514 = vmatpush.msra.mxu0 0.0
  %3515 = vmatpush.msra.mxu0 0.0
  %3516 = vmatpush.msra.mxu0 %v2585
  %3517 = vmatmul.f32.gmra.mxu0 %v3499
  %v3518 = vpop.f32.mrf.mxu0
  %v3519 = vadd.f32 0.0, %v3518
  %3520 = vdwg.mxu0
  %3521 = vmatpush.msra.mxu0 0.0
  %3522 = vmatpush.msra.mxu0 0.0
  %3523 = vmatpush.msra.mxu0 0.0
  %3524 = vmatpush.msra.mxu0 0.0
  %3525 = vmatpush.msra.mxu0 0.0
  %3526 = vmatpush.msra.mxu0 0.0
  %3527 = vmatpush.msra.mxu0 0.0
  %3528 = vmatpush.msra.mxu0 0.0
  %3529 = vmatpush.msra.mxu0 0.0
  %3530 = vmatpush.msra.mxu0 0.0
  %3531 = vmatpush.msra.mxu0 0.0
  %3532 = vmatpush.msra.mxu0 0.0
  %3533 = vmatpush.msra.mxu0 0.0
  %3534 = vmatpush.msra.mxu0 0.0
  %3535 = vmatpush.msra.mxu0 0.0
  %3536 = vmatpush.msra.mxu0 %v2586
  %3537 = vmatmul.f32.gmra.mxu0 %v3499
  %v3538 = vpop.f32.mrf.mxu0
  %v3539 = vadd.f32 0.0, %v3538
  %3540 = vdwg.mxu0
  %v3541 = vadd.f32 %v3495, %v3519
  %v3542 = vadd.f32 %v3496, %v3539
  %s3543 = scalar_lea.vmem %s9, 8
  %v3544 = vld [vmem:[%s3543] sm:$0xff]
  %v3546 = vsel %vm142, %v3544, 0
  %3548 = vmatpush.msra.mxu0 0.0
  %3549 = vmatpush.msra.mxu0 0.0
  %3550 = vmatpush.msra.mxu0 0.0
  %3551 = vmatpush.msra.mxu0 0.0
  %3552 = vmatpush.msra.mxu0 0.0
  %3553 = vmatpush.msra.mxu0 0.0
  %3554 = vmatpush.msra.mxu0 0.0
  %3555 = vmatpush.msra.mxu0 0.0
  %3556 = vmatpush.msra.mxu0 0.0
  %3557 = vmatpush.msra.mxu0 0.0
  %3558 = vmatpush.msra.mxu0 0.0
  %3559 = vmatpush.msra.mxu0 0.0
  %3560 = vmatpush.msra.mxu0 0.0
  %3561 = vmatpush.msra.mxu0 0.0
  %3562 = vmatpush.msra.mxu0 0.0
  %3563 = vmatpush.msra.mxu0 %v2595
  %3564 = vmatmul.f32.gmra.mxu0 %v3546
  %v3565 = vpop.f32.mrf.mxu0
  %v3566 = vadd.f32 0.0, %v3565
  %3567 = vdwg.mxu0
  %3568 = vmatpush.msra.mxu0 0.0
  %3569 = vmatpush.msra.mxu0 0.0
  %3570 = vmatpush.msra.mxu0 0.0
  %3571 = vmatpush.msra.mxu0 0.0
  %3572 = vmatpush.msra.mxu0 0.0
  %3573 = vmatpush.msra.mxu0 0.0
  %3574 = vmatpush.msra.mxu0 0.0
  %3575 = vmatpush.msra.mxu0 0.0
  %3576 = vmatpush.msra.mxu0 0.0
  %3577 = vmatpush.msra.mxu0 0.0
  %3578 = vmatpush.msra.mxu0 0.0
  %3579 = vmatpush.msra.mxu0 0.0
  %3580 = vmatpush.msra.mxu0 0.0
  %3581 = vmatpush.msra.mxu0 0.0
  %3582 = vmatpush.msra.mxu0 0.0
  %3583 = vmatpush.msra.mxu0 %v2596
  %3584 = vmatmul.f32.gmra.mxu0 %v3546
  %v3585 = vpop.f32.mrf.mxu0
  %v3586 = vadd.f32 0.0, %v3585
  %3587 = vdwg.mxu0
  %v3588 = vadd.f32 %v3541, %v3566
  %v3589 = vadd.f32 %v3542, %v3586
  %s3590 = scalar_lea.vmem %s9, 16
  %v3591 = vld [vmem:[%s3590] sm:$0xff]
  %v3593 = vsel %vm142, %v3591, 0
  %3595 = vmatpush.msra.mxu0 0.0
  %3596 = vmatpush.msra.mxu0 0.0
  %3597 = vmatpush.msra.mxu0 0.0
  %3598 = vmatpush.msra.mxu0 0.0
  %3599 = vmatpush.msra.mxu0 0.0
  %3600 = vmatpush.msra.mxu0 0.0
  %3601 = vmatpush.msra.mxu0 0.0
  %3602 = vmatpush.msra.mxu0 0.0
  %3603 = vmatpush.msra.mxu0 0.0
  %3604 = vmatpush.msra.mxu0 0.0
  %3605 = vmatpush.msra.mxu0 0.0
  %3606 = vmatpush.msra.mxu0 0.0
  %3607 = vmatpush.msra.mxu0 0.0
  %3608 = vmatpush.msra.mxu0 0.0
  %3609 = vmatpush.msra.mxu0 0.0
  %3610 = vmatpush.msra.mxu0 %v2605
  %3611 = vmatmul.f32.gmra.mxu0 %v3593
  %v3612 = vpop.f32.mrf.mxu0
  %v3613 = vadd.f32 0.0, %v3612
  %3614 = vdwg.mxu0
  %3615 = vmatpush.msra.mxu0 0.0
  %3616 = vmatpush.msra.mxu0 0.0
  %3617 = vmatpush.msra.mxu0 0.0
  %3618 = vmatpush.msra.mxu0 0.0
  %3619 = vmatpush.msra.mxu0 0.0
  %3620 = vmatpush.msra.mxu0 0.0
  %3621 = vmatpush.msra.mxu0 0.0
  %3622 = vmatpush.msra.mxu0 0.0
  %3623 = vmatpush.msra.mxu0 0.0
  %3624 = vmatpush.msra.mxu0 0.0
  %3625 = vmatpush.msra.mxu0 0.0
  %3626 = vmatpush.msra.mxu0 0.0
  %3627 = vmatpush.msra.mxu0 0.0
  %3628 = vmatpush.msra.mxu0 0.0
  %3629 = vmatpush.msra.mxu0 0.0
  %3630 = vmatpush.msra.mxu0 %v2606
  %3631 = vmatmul.f32.gmra.mxu0 %v3593
  %v3632 = vpop.f32.mrf.mxu0
  %v3633 = vadd.f32 0.0, %v3632
  %3634 = vdwg.mxu0
  %v3635 = vadd.f32 %v3588, %v3613
  %v3636 = vadd.f32 %v3589, %v3633
  %s3637 = scalar_lea.vmem %s9, 24
  %v3638 = vld [vmem:[%s3637] sm:$0xff]
  %v3640 = vsel %vm142, %v3638, 0
  %3642 = vmatpush.msra.mxu0 0.0
  %3643 = vmatpush.msra.mxu0 0.0
  %3644 = vmatpush.msra.mxu0 0.0
  %3645 = vmatpush.msra.mxu0 0.0
  %3646 = vmatpush.msra.mxu0 0.0
  %3647 = vmatpush.msra.mxu0 0.0
  %3648 = vmatpush.msra.mxu0 0.0
  %3649 = vmatpush.msra.mxu0 0.0
  %3650 = vmatpush.msra.mxu0 0.0
  %3651 = vmatpush.msra.mxu0 0.0
  %3652 = vmatpush.msra.mxu0 0.0
  %3653 = vmatpush.msra.mxu0 0.0
  %3654 = vmatpush.msra.mxu0 0.0
  %3655 = vmatpush.msra.mxu0 0.0
  %3656 = vmatpush.msra.mxu0 0.0
  %3657 = vmatpush.msra.mxu0 %v2615
  %3658 = vmatmul.f32.gmra.mxu0 %v3640
  %v3659 = vpop.f32.mrf.mxu0
  %v3660 = vadd.f32 0.0, %v3659
  %3661 = vdwg.mxu0
  %3662 = vmatpush.msra.mxu0 0.0
  %3663 = vmatpush.msra.mxu0 0.0
  %3664 = vmatpush.msra.mxu0 0.0
  %3665 = vmatpush.msra.mxu0 0.0
  %3666 = vmatpush.msra.mxu0 0.0
  %3667 = vmatpush.msra.mxu0 0.0
  %3668 = vmatpush.msra.mxu0 0.0
  %3669 = vmatpush.msra.mxu0 0.0
  %3670 = vmatpush.msra.mxu0 0.0
  %3671 = vmatpush.msra.mxu0 0.0
  %3672 = vmatpush.msra.mxu0 0.0
  %3673 = vmatpush.msra.mxu0 0.0
  %3674 = vmatpush.msra.mxu0 0.0
  %3675 = vmatpush.msra.mxu0 0.0
  %3676 = vmatpush.msra.mxu0 0.0
  %3677 = vmatpush.msra.mxu0 %v2616
  %3678 = vmatmul.f32.gmra.mxu0 %v3640
  %v3679 = vpop.f32.mrf.mxu0
  %v3680 = vadd.f32 0.0, %v3679
  %3681 = vdwg.mxu0
  %v3682 = vadd.f32 %v3635, %v3660
  %v3683 = vadd.f32 %v3636, %v3680
  %s3684 = scalar_lea.vmem %s9, 32
  %v3685 = vld [vmem:[%s3684] sm:$0xff]
  %v3687 = vsel %vm142, %v3685, 0
  %3689 = vmatpush.msra.mxu0 0.0
  %3690 = vmatpush.msra.mxu0 0.0
  %3691 = vmatpush.msra.mxu0 0.0
  %3692 = vmatpush.msra.mxu0 0.0
  %3693 = vmatpush.msra.mxu0 0.0
  %3694 = vmatpush.msra.mxu0 0.0
  %3695 = vmatpush.msra.mxu0 0.0
  %3696 = vmatpush.msra.mxu0 0.0
  %3697 = vmatpush.msra.mxu0 0.0
  %3698 = vmatpush.msra.mxu0 0.0
  %3699 = vmatpush.msra.mxu0 0.0
  %3700 = vmatpush.msra.mxu0 0.0
  %3701 = vmatpush.msra.mxu0 0.0
  %3702 = vmatpush.msra.mxu0 0.0
  %3703 = vmatpush.msra.mxu0 0.0
  %3704 = vmatpush.msra.mxu0 %v2573
  %3705 = vmatmul.f32.gmra.mxu0 %v3687
  %v3706 = vpop.f32.mrf.mxu0
  %v3707 = vadd.f32 0.0, %v3706
  %3708 = vdwg.mxu0
  %3709 = vmatpush.msra.mxu0 0.0
  %3710 = vmatpush.msra.mxu0 0.0
  %3711 = vmatpush.msra.mxu0 0.0
  %3712 = vmatpush.msra.mxu0 0.0
  %3713 = vmatpush.msra.mxu0 0.0
  %3714 = vmatpush.msra.mxu0 0.0
  %3715 = vmatpush.msra.mxu0 0.0
  %3716 = vmatpush.msra.mxu0 0.0
  %3717 = vmatpush.msra.mxu0 0.0
  %3718 = vmatpush.msra.mxu0 0.0
  %3719 = vmatpush.msra.mxu0 0.0
  %3720 = vmatpush.msra.mxu0 0.0
  %3721 = vmatpush.msra.mxu0 0.0
  %3722 = vmatpush.msra.mxu0 0.0
  %3723 = vmatpush.msra.mxu0 0.0
  %3724 = vmatpush.msra.mxu0 %v2574
  %3725 = vmatmul.f32.gmra.mxu0 %v3687
  %v3726 = vpop.f32.mrf.mxu0
  %v3727 = vadd.f32 0.0, %v3726
  %3728 = vdwg.mxu0
  %v3729 = vadd.f32 %v3682, %v3707
  %v3730 = vadd.f32 %v3683, %v3727
  %s3731 = scalar_lea.vmem %s9, 40
  %v3732 = vld [vmem:[%s3731] sm:$0xff]
  %v3734 = vsel %vm142, %v3732, 0
  %3736 = vmatpush.msra.mxu0 0.0
  %3737 = vmatpush.msra.mxu0 0.0
  %3738 = vmatpush.msra.mxu0 0.0
  %3739 = vmatpush.msra.mxu0 0.0
  %3740 = vmatpush.msra.mxu0 0.0
  %3741 = vmatpush.msra.mxu0 0.0
  %3742 = vmatpush.msra.mxu0 0.0
  %3743 = vmatpush.msra.mxu0 0.0
  %3744 = vmatpush.msra.mxu0 0.0
  %3745 = vmatpush.msra.mxu0 0.0
  %3746 = vmatpush.msra.mxu0 0.0
  %3747 = vmatpush.msra.mxu0 0.0
  %3748 = vmatpush.msra.mxu0 0.0
  %3749 = vmatpush.msra.mxu0 0.0
  %3750 = vmatpush.msra.mxu0 0.0
  %3751 = vmatpush.msra.mxu0 %v2625
  %3752 = vmatmul.f32.gmra.mxu0 %v3734
  %v3753 = vpop.f32.mrf.mxu0
  %v3754 = vadd.f32 0.0, %v3753
  %3755 = vdwg.mxu0
  %3756 = vmatpush.msra.mxu0 0.0
  %3757 = vmatpush.msra.mxu0 0.0
  %3758 = vmatpush.msra.mxu0 0.0
  %3759 = vmatpush.msra.mxu0 0.0
  %3760 = vmatpush.msra.mxu0 0.0
  %3761 = vmatpush.msra.mxu0 0.0
  %3762 = vmatpush.msra.mxu0 0.0
  %3763 = vmatpush.msra.mxu0 0.0
  %3764 = vmatpush.msra.mxu0 0.0
  %3765 = vmatpush.msra.mxu0 0.0
  %3766 = vmatpush.msra.mxu0 0.0
  %3767 = vmatpush.msra.mxu0 0.0
  %3768 = vmatpush.msra.mxu0 0.0
  %3769 = vmatpush.msra.mxu0 0.0
  %3770 = vmatpush.msra.mxu0 0.0
  %3771 = vmatpush.msra.mxu0 %v2626
  %3772 = vmatmul.f32.gmra.mxu0 %v3734
  %v3773 = vpop.f32.mrf.mxu0
  %v3774 = vadd.f32 0.0, %v3773
  %3775 = vdwg.mxu0
  %v3776 = vadd.f32 %v3729, %v3754
  %v3777 = vadd.f32 %v3730, %v3774
  %s3778 = scalar_lea.vmem %s9, 48
  %v3779 = vld [vmem:[%s3778] sm:$0xff]
  %v3781 = vsel %vm142, %v3779, 0
  %3783 = vmatpush.msra.mxu0 0.0
  %3784 = vmatpush.msra.mxu0 0.0
  %3785 = vmatpush.msra.mxu0 0.0
  %3786 = vmatpush.msra.mxu0 0.0
  %3787 = vmatpush.msra.mxu0 0.0
  %3788 = vmatpush.msra.mxu0 0.0
  %3789 = vmatpush.msra.mxu0 0.0
  %3790 = vmatpush.msra.mxu0 0.0
  %3791 = vmatpush.msra.mxu0 0.0
  %3792 = vmatpush.msra.mxu0 0.0
  %3793 = vmatpush.msra.mxu0 0.0
  %3794 = vmatpush.msra.mxu0 0.0
  %3795 = vmatpush.msra.mxu0 0.0
  %3796 = vmatpush.msra.mxu0 0.0
  %3797 = vmatpush.msra.mxu0 0.0
  %3798 = vmatpush.msra.mxu0 %v2635
  %3799 = vmatmul.f32.gmra.mxu0 %v3781
  %v3800 = vpop.f32.mrf.mxu0
  %v3801 = vadd.f32 0.0, %v3800
  %3802 = vdwg.mxu0
  %3803 = vmatpush.msra.mxu0 0.0
  %3804 = vmatpush.msra.mxu0 0.0
  %3805 = vmatpush.msra.mxu0 0.0
  %3806 = vmatpush.msra.mxu0 0.0
  %3807 = vmatpush.msra.mxu0 0.0
  %3808 = vmatpush.msra.mxu0 0.0
  %3809 = vmatpush.msra.mxu0 0.0
  %3810 = vmatpush.msra.mxu0 0.0
  %3811 = vmatpush.msra.mxu0 0.0
  %3812 = vmatpush.msra.mxu0 0.0
  %3813 = vmatpush.msra.mxu0 0.0
  %3814 = vmatpush.msra.mxu0 0.0
  %3815 = vmatpush.msra.mxu0 0.0
  %3816 = vmatpush.msra.mxu0 0.0
  %3817 = vmatpush.msra.mxu0 0.0
  %3818 = vmatpush.msra.mxu0 %v2636
  %3819 = vmatmul.f32.gmra.mxu0 %v3781
  %v3820 = vpop.f32.mrf.mxu0
  %v3821 = vadd.f32 0.0, %v3820
  %3822 = vdwg.mxu0
  %v3823 = vadd.f32 %v3776, %v3801
  %v3824 = vadd.f32 %v3777, %v3821
  %s3825 = scalar_lea.vmem %s9, 56
  %v3826 = vld [vmem:[%s3825] sm:$0xff]
  %v3828 = vsel %vm142, %v3826, 0
  %3830 = vmatpush.msra.mxu0 0.0
  %3831 = vmatpush.msra.mxu0 0.0
  %3832 = vmatpush.msra.mxu0 0.0
  %3833 = vmatpush.msra.mxu0 0.0
  %3834 = vmatpush.msra.mxu0 0.0
  %3835 = vmatpush.msra.mxu0 0.0
  %3836 = vmatpush.msra.mxu0 0.0
  %3837 = vmatpush.msra.mxu0 0.0
  %3838 = vmatpush.msra.mxu0 0.0
  %3839 = vmatpush.msra.mxu0 0.0
  %3840 = vmatpush.msra.mxu0 0.0
  %3841 = vmatpush.msra.mxu0 0.0
  %3842 = vmatpush.msra.mxu0 0.0
  %3843 = vmatpush.msra.mxu0 0.0
  %3844 = vmatpush.msra.mxu0 0.0
  %3845 = vmatpush.msra.mxu0 %v2645
  %3846 = vmatmul.f32.gmra.mxu0 %v3828
  %v3847 = vpop.f32.mrf.mxu0
  %v3848 = vadd.f32 0.0, %v3847
  %3849 = vdwg.mxu0
  %3850 = vmatpush.msra.mxu0 0.0
  %3851 = vmatpush.msra.mxu0 0.0
  %3852 = vmatpush.msra.mxu0 0.0
  %3853 = vmatpush.msra.mxu0 0.0
  %3854 = vmatpush.msra.mxu0 0.0
  %3855 = vmatpush.msra.mxu0 0.0
  %3856 = vmatpush.msra.mxu0 0.0
  %3857 = vmatpush.msra.mxu0 0.0
  %3858 = vmatpush.msra.mxu0 0.0
  %3859 = vmatpush.msra.mxu0 0.0
  %3860 = vmatpush.msra.mxu0 0.0
  %3861 = vmatpush.msra.mxu0 0.0
  %3862 = vmatpush.msra.mxu0 0.0
  %3863 = vmatpush.msra.mxu0 0.0
  %3864 = vmatpush.msra.mxu0 0.0
  %3865 = vmatpush.msra.mxu0 %v2646
  %3866 = vmatmul.f32.gmra.mxu0 %v3828
  %v3867 = vpop.f32.mrf.mxu0
  %v3868 = vadd.f32 0.0, %v3867
  %3869 = vdwg.mxu0
  %v3870 = vadd.f32 %v3823, %v3848
  %v3871 = vadd.f32 %v3824, %v3868
  %s3872 = scalar_lea.vmem %s9, 64
  %v3873 = vld [vmem:[%s3872] sm:$0xff]
  %v3875 = vsel %vm142, %v3873, 0
  %3877 = vmatpush.msra.mxu0 0.0
  %3878 = vmatpush.msra.mxu0 0.0
  %3879 = vmatpush.msra.mxu0 0.0
  %3880 = vmatpush.msra.mxu0 0.0
  %3881 = vmatpush.msra.mxu0 0.0
  %3882 = vmatpush.msra.mxu0 0.0
  %3883 = vmatpush.msra.mxu0 0.0
  %3884 = vmatpush.msra.mxu0 0.0
  %3885 = vmatpush.msra.mxu0 0.0
  %3886 = vmatpush.msra.mxu0 0.0
  %3887 = vmatpush.msra.mxu0 0.0
  %3888 = vmatpush.msra.mxu0 0.0
  %3889 = vmatpush.msra.mxu0 0.0
  %3890 = vmatpush.msra.mxu0 0.0
  %3891 = vmatpush.msra.mxu0 0.0
  %3892 = vmatpush.msra.mxu0 %v2655
  %3893 = vmatmul.f32.gmra.mxu0 %v3875
  %v3894 = vpop.f32.mrf.mxu0
  %v3895 = vadd.f32 0.0, %v3894
  %3896 = vdwg.mxu0
  %3897 = vmatpush.msra.mxu0 0.0
  %3898 = vmatpush.msra.mxu0 0.0
  %3899 = vmatpush.msra.mxu0 0.0
  %3900 = vmatpush.msra.mxu0 0.0
  %3901 = vmatpush.msra.mxu0 0.0
  %3902 = vmatpush.msra.mxu0 0.0
  %3903 = vmatpush.msra.mxu0 0.0
  %3904 = vmatpush.msra.mxu0 0.0
  %3905 = vmatpush.msra.mxu0 0.0
  %3906 = vmatpush.msra.mxu0 0.0
  %3907 = vmatpush.msra.mxu0 0.0
  %3908 = vmatpush.msra.mxu0 0.0
  %3909 = vmatpush.msra.mxu0 0.0
  %3910 = vmatpush.msra.mxu0 0.0
  %3911 = vmatpush.msra.mxu0 0.0
  %3912 = vmatpush.msra.mxu0 %v2656
  %3913 = vmatmul.f32.gmra.mxu0 %v3875
  %v3914 = vpop.f32.mrf.mxu0
  %v3915 = vadd.f32 0.0, %v3914
  %3916 = vdwg.mxu0
  %v3917 = vadd.f32 %v3870, %v3895
  %v3918 = vadd.f32 %v3871, %v3915
  %v3919 = vadd.f32 %v3917, %v3918
  %3920 = vadd.xlane.f32.xlu0 %v3919
  %v3921 = vpop.xlane.xlu0 %3920
  %v3922 = vmul.f32 %v3921, %v567
  %v3923 = vsub.f32 %v3917, %v3922
  %v3924 = vsub.f32 %v3918, %v3922
  %v3925 = vmul.f32 %v3923, %v3923
  %v3926 = vmul.f32 %v3924, %v3924
  %v3927 = vadd.f32 %v3925, %v3926
  %3928 = vadd.xlane.f32.xlu0 %v3927
  %v3929 = vpop.xlane.xlu0 %3928
  %v3930 = vmul.f32 %v3929, %v567
  %v3931 = vadd.f32 %v3930, 1e-05
  %v3932 = vrsqrt.pop %v3931
  %v3933 = vmul.f32 %v3932, %v3931
  %v3934 = vmul.f32 %v3933, %v3932
  %v3935 = vmul.f32 0.5, %v3934
  %v3936 = vsub.f32 1.5, %v3935
  %v3937 = vmul.f32 %v3932, %v3936
  %vm3938 = vweird.f32 %v3931
  %vm3939 = vweird.f32 %v3932
  %vm3940 = vmor %vm3938, %vm3939
  %v3941 = vsel %vm3940, %v3932, %v3937
  %v3942 = vmul.f32 %v3923, %v3941
  %v3943 = vmul.f32 %v3924, %v3941
  %vm3944 = vcmp.ge.f32.partialorder %v3942, 0.0
  %vm3945 = vcmp.ge.f32.partialorder %v3943, 0.0
  %v3946 = vmul.f32 %v3942, 0.01
  %v3947 = vmul.f32 %v3943, 0.01
  %v3948 = vsel %vm3944, %v3942, %v3946
  %v3949 = vsel %vm3945, %v3943, %v3947
  %3950 = vrot.lane.b32.xlu0 %v3948, 17
  %v3951 = vpop.permute.xlu0 %3950
  %3952 = vrot.lane.b32.xlu0 %v3949, 17
  %v3953 = vpop.permute.xlu0 %3952
  %v3954 = vsel %vm48, %v3951, %v3953
  %v3955 = vsel %vm48, %v3953, %v3951
  %v3956 = vmul.f32 %v3955, %v2583
  %v3957 = vmul.f32 %v3954, %v2584
  %3958 = vrot.lane.b32.xlu0 %v3948, 16
  %v3959 = vpop.permute.xlu0 %3958
  %3960 = vrot.lane.b32.xlu0 %v3949, 16
  %v3961 = vpop.permute.xlu0 %3960
  %v3962 = vsel %vm59, %v3959, %v3961
  %v3963 = vsel %vm59, %v3961, %v3959
  %v3964 = vmul.f32 %v3963, %v2593
  %v3965 = vmul.f32 %v3962, %v2594
  %3966 = vrot.lane.b32.xlu0 %v3948, 15
  %v3967 = vpop.permute.xlu0 %3966
  %3968 = vrot.lane.b32.xlu0 %v3949, 15
  %v3969 = vpop.permute.xlu0 %3968
  %v3970 = vsel %vm71, %v3967, %v3969
  %v3971 = vsel %vm71, %v3969, %v3967
  %v3972 = vmul.f32 %v3971, %v2603
  %v3973 = vmul.f32 %v3970, %v2604
  %3974 = vrot.lane.b32.xlu0 %v3948, 1
  %v3975 = vpop.permute.xlu0 %3974
  %3976 = vrot.lane.b32.xlu0 %v3949, 1
  %v3977 = vpop.permute.xlu0 %3976
  %v3978 = vsel %vm83, %v3975, %v3977
  %v3979 = vsel %vm83, %v3977, %v3975
  %v3980 = vmul.f32 %v3979, %v2613
  %v3981 = vmul.f32 %v3978, %v2614
  %3982 = vrot.lane.b32.xlu0 %v3948, 127
  %v3983 = vpop.permute.xlu0 %3982
  %3984 = vrot.lane.b32.xlu0 %v3949, 127
  %v3985 = vpop.permute.xlu0 %3984
  %v3986 = vsel %vm95, %v3983, %v3985
  %v3987 = vsel %vm95, %v3985, %v3983
  %v3988 = vmul.f32 %v3986, %v2623
  %v3989 = vmul.f32 %v3987, %v2624
  %3990 = vrot.lane.b32.xlu0 %v3948, 113
  %v3991 = vpop.permute.xlu0 %3990
  %3992 = vrot.lane.b32.xlu0 %v3949, 113
  %v3993 = vpop.permute.xlu0 %3992
  %v3994 = vsel %vm107, %v3991, %v3993
  %v3995 = vsel %vm107, %v3993, %v3991
  %v3996 = vmul.f32 %v3994, %v2633
  %v3997 = vmul.f32 %v3995, %v2634
  %3998 = vrot.lane.b32.xlu0 %v3948, 112
  %v3999 = vpop.permute.xlu0 %3998
  %4000 = vrot.lane.b32.xlu0 %v3949, 112
  %v4001 = vpop.permute.xlu0 %4000
  %v4002 = vsel %vm119, %v3999, %v4001
  %v4003 = vsel %vm119, %v4001, %v3999
  %v4004 = vmul.f32 %v4002, %v2643
  %v4005 = vmul.f32 %v4003, %v2644
  %4006 = vrot.lane.b32.xlu0 %v3948, 111
  %v4007 = vpop.permute.xlu0 %4006
  %4008 = vrot.lane.b32.xlu0 %v3949, 111
  %v4009 = vpop.permute.xlu0 %4008
  %v4010 = vsel %vm131, %v4007, %v4009
  %v4011 = vsel %vm131, %v4009, %v4007
  %v4012 = vmul.f32 %v4010, %v2653
  %v4013 = vmul.f32 %v4011, %v2654
  %v4014 = vld [vmem:[%s10] sm:$0xff]
  %s4015 = scalar_lea.vmem %s10, 8
  %v4016 = vld [vmem:[%s4015] sm:$0xff]
  %v4018 = vsel %vm142, %v4016, 0
  %4020 = vmatpush.msra.mxu0 0.0
  %4021 = vmatpush.msra.mxu0 0.0
  %4022 = vmatpush.msra.mxu0 0.0
  %4023 = vmatpush.msra.mxu0 0.0
  %4024 = vmatpush.msra.mxu0 0.0
  %4025 = vmatpush.msra.mxu0 0.0
  %4026 = vmatpush.msra.mxu0 0.0
  %4027 = vmatpush.msra.mxu0 0.0
  %4028 = vmatpush.msra.mxu0 0.0
  %4029 = vmatpush.msra.mxu0 0.0
  %4030 = vmatpush.msra.mxu0 0.0
  %4031 = vmatpush.msra.mxu0 0.0
  %4032 = vmatpush.msra.mxu0 0.0
  %4033 = vmatpush.msra.mxu0 0.0
  %4034 = vmatpush.msra.mxu0 0.0
  %4035 = vmatpush.msra.mxu0 %v3964
  %4036 = vmatmul.f32.gmra.mxu0 %v4018
  %v4037 = vpop.f32.mrf.mxu0
  %v4038 = vadd.f32 0.0, %v4037
  %4039 = vdwg.mxu0
  %4040 = vmatpush.msra.mxu0 0.0
  %4041 = vmatpush.msra.mxu0 0.0
  %4042 = vmatpush.msra.mxu0 0.0
  %4043 = vmatpush.msra.mxu0 0.0
  %4044 = vmatpush.msra.mxu0 0.0
  %4045 = vmatpush.msra.mxu0 0.0
  %4046 = vmatpush.msra.mxu0 0.0
  %4047 = vmatpush.msra.mxu0 0.0
  %4048 = vmatpush.msra.mxu0 0.0
  %4049 = vmatpush.msra.mxu0 0.0
  %4050 = vmatpush.msra.mxu0 0.0
  %4051 = vmatpush.msra.mxu0 0.0
  %4052 = vmatpush.msra.mxu0 0.0
  %4053 = vmatpush.msra.mxu0 0.0
  %4054 = vmatpush.msra.mxu0 0.0
  %4055 = vmatpush.msra.mxu0 %v3965
  %4056 = vmatmul.f32.gmra.mxu0 %v4018
  %v4057 = vpop.f32.mrf.mxu0
  %v4058 = vadd.f32 0.0, %v4057
  %4059 = vdwg.mxu0
  %v4061 = vsel %vm142, %v4014, 0
  %4063 = vmatpush.msra.mxu0 0.0
  %4064 = vmatpush.msra.mxu0 0.0
  %4065 = vmatpush.msra.mxu0 0.0
  %4066 = vmatpush.msra.mxu0 0.0
  %4067 = vmatpush.msra.mxu0 0.0
  %4068 = vmatpush.msra.mxu0 0.0
  %4069 = vmatpush.msra.mxu0 0.0
  %4070 = vmatpush.msra.mxu0 0.0
  %4071 = vmatpush.msra.mxu0 0.0
  %4072 = vmatpush.msra.mxu0 0.0
  %4073 = vmatpush.msra.mxu0 0.0
  %4074 = vmatpush.msra.mxu0 0.0
  %4075 = vmatpush.msra.mxu0 0.0
  %4076 = vmatpush.msra.mxu0 0.0
  %4077 = vmatpush.msra.mxu0 0.0
  %4078 = vmatpush.msra.mxu0 %v3956
  %4079 = vmatmul.f32.gmra.mxu0 %v4061
  %v4080 = vpop.f32.mrf.mxu0
  %v4081 = vadd.f32 %v4038, %v4080
  %4082 = vdwg.mxu0
  %4083 = vmatpush.msra.mxu0 0.0
  %4084 = vmatpush.msra.mxu0 0.0
  %4085 = vmatpush.msra.mxu0 0.0
  %4086 = vmatpush.msra.mxu0 0.0
  %4087 = vmatpush.msra.mxu0 0.0
  %4088 = vmatpush.msra.mxu0 0.0
  %4089 = vmatpush.msra.mxu0 0.0
  %4090 = vmatpush.msra.mxu0 0.0
  %4091 = vmatpush.msra.mxu0 0.0
  %4092 = vmatpush.msra.mxu0 0.0
  %4093 = vmatpush.msra.mxu0 0.0
  %4094 = vmatpush.msra.mxu0 0.0
  %4095 = vmatpush.msra.mxu0 0.0
  %4096 = vmatpush.msra.mxu0 0.0
  %4097 = vmatpush.msra.mxu0 0.0
  %4098 = vmatpush.msra.mxu0 %v3957
  %4099 = vmatmul.f32.gmra.mxu0 %v4061
  %v4100 = vpop.f32.mrf.mxu0
  %v4101 = vadd.f32 %v4058, %v4100
  %4102 = vdwg.mxu0
  %s4103 = scalar_lea.vmem %s10, 16
  %v4104 = vld [vmem:[%s4103] sm:$0xff]
  %v4106 = vsel %vm142, %v4104, 0
  %4108 = vmatpush.msra.mxu0 0.0
  %4109 = vmatpush.msra.mxu0 0.0
  %4110 = vmatpush.msra.mxu0 0.0
  %4111 = vmatpush.msra.mxu0 0.0
  %4112 = vmatpush.msra.mxu0 0.0
  %4113 = vmatpush.msra.mxu0 0.0
  %4114 = vmatpush.msra.mxu0 0.0
  %4115 = vmatpush.msra.mxu0 0.0
  %4116 = vmatpush.msra.mxu0 0.0
  %4117 = vmatpush.msra.mxu0 0.0
  %4118 = vmatpush.msra.mxu0 0.0
  %4119 = vmatpush.msra.mxu0 0.0
  %4120 = vmatpush.msra.mxu0 0.0
  %4121 = vmatpush.msra.mxu0 0.0
  %4122 = vmatpush.msra.mxu0 0.0
  %4123 = vmatpush.msra.mxu0 %v3972
  %4124 = vmatmul.f32.gmra.mxu0 %v4106
  %v4125 = vpop.f32.mrf.mxu0
  %v4126 = vadd.f32 0.0, %v4125
  %4127 = vdwg.mxu0
  %4128 = vmatpush.msra.mxu0 0.0
  %4129 = vmatpush.msra.mxu0 0.0
  %4130 = vmatpush.msra.mxu0 0.0
  %4131 = vmatpush.msra.mxu0 0.0
  %4132 = vmatpush.msra.mxu0 0.0
  %4133 = vmatpush.msra.mxu0 0.0
  %4134 = vmatpush.msra.mxu0 0.0
  %4135 = vmatpush.msra.mxu0 0.0
  %4136 = vmatpush.msra.mxu0 0.0
  %4137 = vmatpush.msra.mxu0 0.0
  %4138 = vmatpush.msra.mxu0 0.0
  %4139 = vmatpush.msra.mxu0 0.0
  %4140 = vmatpush.msra.mxu0 0.0
  %4141 = vmatpush.msra.mxu0 0.0
  %4142 = vmatpush.msra.mxu0 0.0
  %4143 = vmatpush.msra.mxu0 %v3973
  %4144 = vmatmul.f32.gmra.mxu0 %v4106
  %v4145 = vpop.f32.mrf.mxu0
  %v4146 = vadd.f32 0.0, %v4145
  %4147 = vdwg.mxu0
  %v4148 = vadd.f32 %v4081, %v4126
  %v4149 = vadd.f32 %v4101, %v4146
  %s4150 = scalar_lea.vmem %s10, 24
  %v4151 = vld [vmem:[%s4150] sm:$0xff]
  %v4153 = vsel %vm142, %v4151, 0
  %4155 = vmatpush.msra.mxu0 0.0
  %4156 = vmatpush.msra.mxu0 0.0
  %4157 = vmatpush.msra.mxu0 0.0
  %4158 = vmatpush.msra.mxu0 0.0
  %4159 = vmatpush.msra.mxu0 0.0
  %4160 = vmatpush.msra.mxu0 0.0
  %4161 = vmatpush.msra.mxu0 0.0
  %4162 = vmatpush.msra.mxu0 0.0
  %4163 = vmatpush.msra.mxu0 0.0
  %4164 = vmatpush.msra.mxu0 0.0
  %4165 = vmatpush.msra.mxu0 0.0
  %4166 = vmatpush.msra.mxu0 0.0
  %4167 = vmatpush.msra.mxu0 0.0
  %4168 = vmatpush.msra.mxu0 0.0
  %4169 = vmatpush.msra.mxu0 0.0
  %4170 = vmatpush.msra.mxu0 %v3980
  %4171 = vmatmul.f32.gmra.mxu0 %v4153
  %v4172 = vpop.f32.mrf.mxu0
  %v4173 = vadd.f32 0.0, %v4172
  %4174 = vdwg.mxu0
  %4175 = vmatpush.msra.mxu0 0.0
  %4176 = vmatpush.msra.mxu0 0.0
  %4177 = vmatpush.msra.mxu0 0.0
  %4178 = vmatpush.msra.mxu0 0.0
  %4179 = vmatpush.msra.mxu0 0.0
  %4180 = vmatpush.msra.mxu0 0.0
  %4181 = vmatpush.msra.mxu0 0.0
  %4182 = vmatpush.msra.mxu0 0.0
  %4183 = vmatpush.msra.mxu0 0.0
  %4184 = vmatpush.msra.mxu0 0.0
  %4185 = vmatpush.msra.mxu0 0.0
  %4186 = vmatpush.msra.mxu0 0.0
  %4187 = vmatpush.msra.mxu0 0.0
  %4188 = vmatpush.msra.mxu0 0.0
  %4189 = vmatpush.msra.mxu0 0.0
  %4190 = vmatpush.msra.mxu0 %v3981
  %4191 = vmatmul.f32.gmra.mxu0 %v4153
  %v4192 = vpop.f32.mrf.mxu0
  %v4193 = vadd.f32 0.0, %v4192
  %4194 = vdwg.mxu0
  %v4195 = vadd.f32 %v4148, %v4173
  %v4196 = vadd.f32 %v4149, %v4193
  %s4197 = scalar_lea.vmem %s10, 32
  %v4198 = vld [vmem:[%s4197] sm:$0xff]
  %v4200 = vsel %vm142, %v4198, 0
  %4202 = vmatpush.msra.mxu0 0.0
  %4203 = vmatpush.msra.mxu0 0.0
  %4204 = vmatpush.msra.mxu0 0.0
  %4205 = vmatpush.msra.mxu0 0.0
  %4206 = vmatpush.msra.mxu0 0.0
  %4207 = vmatpush.msra.mxu0 0.0
  %4208 = vmatpush.msra.mxu0 0.0
  %4209 = vmatpush.msra.mxu0 0.0
  %4210 = vmatpush.msra.mxu0 0.0
  %4211 = vmatpush.msra.mxu0 0.0
  %4212 = vmatpush.msra.mxu0 0.0
  %4213 = vmatpush.msra.mxu0 0.0
  %4214 = vmatpush.msra.mxu0 0.0
  %4215 = vmatpush.msra.mxu0 0.0
  %4216 = vmatpush.msra.mxu0 0.0
  %4217 = vmatpush.msra.mxu0 %v3948
  %4218 = vmatmul.f32.gmra.mxu0 %v4200
  %v4219 = vpop.f32.mrf.mxu0
  %v4220 = vadd.f32 0.0, %v4219
  %4221 = vdwg.mxu0
  %4222 = vmatpush.msra.mxu0 0.0
  %4223 = vmatpush.msra.mxu0 0.0
  %4224 = vmatpush.msra.mxu0 0.0
  %4225 = vmatpush.msra.mxu0 0.0
  %4226 = vmatpush.msra.mxu0 0.0
  %4227 = vmatpush.msra.mxu0 0.0
  %4228 = vmatpush.msra.mxu0 0.0
  %4229 = vmatpush.msra.mxu0 0.0
  %4230 = vmatpush.msra.mxu0 0.0
  %4231 = vmatpush.msra.mxu0 0.0
  %4232 = vmatpush.msra.mxu0 0.0
  %4233 = vmatpush.msra.mxu0 0.0
  %4234 = vmatpush.msra.mxu0 0.0
  %4235 = vmatpush.msra.mxu0 0.0
  %4236 = vmatpush.msra.mxu0 0.0
  %4237 = vmatpush.msra.mxu0 %v3949
  %4238 = vmatmul.f32.gmra.mxu0 %v4200
  %v4239 = vpop.f32.mrf.mxu0
  %v4240 = vadd.f32 0.0, %v4239
  %4241 = vdwg.mxu0
  %v4242 = vadd.f32 %v4195, %v4220
  %v4243 = vadd.f32 %v4196, %v4240
  %s4244 = scalar_lea.vmem %s10, 40
  %v4245 = vld [vmem:[%s4244] sm:$0xff]
  %v4247 = vsel %vm142, %v4245, 0
  %4249 = vmatpush.msra.mxu0 0.0
  %4250 = vmatpush.msra.mxu0 0.0
  %4251 = vmatpush.msra.mxu0 0.0
  %4252 = vmatpush.msra.mxu0 0.0
  %4253 = vmatpush.msra.mxu0 0.0
  %4254 = vmatpush.msra.mxu0 0.0
  %4255 = vmatpush.msra.mxu0 0.0
  %4256 = vmatpush.msra.mxu0 0.0
  %4257 = vmatpush.msra.mxu0 0.0
  %4258 = vmatpush.msra.mxu0 0.0
  %4259 = vmatpush.msra.mxu0 0.0
  %4260 = vmatpush.msra.mxu0 0.0
  %4261 = vmatpush.msra.mxu0 0.0
  %4262 = vmatpush.msra.mxu0 0.0
  %4263 = vmatpush.msra.mxu0 0.0
  %4264 = vmatpush.msra.mxu0 %v3988
  %4265 = vmatmul.f32.gmra.mxu0 %v4247
  %v4266 = vpop.f32.mrf.mxu0
  %v4267 = vadd.f32 0.0, %v4266
  %4268 = vdwg.mxu0
  %4269 = vmatpush.msra.mxu0 0.0
  %4270 = vmatpush.msra.mxu0 0.0
  %4271 = vmatpush.msra.mxu0 0.0
  %4272 = vmatpush.msra.mxu0 0.0
  %4273 = vmatpush.msra.mxu0 0.0
  %4274 = vmatpush.msra.mxu0 0.0
  %4275 = vmatpush.msra.mxu0 0.0
  %4276 = vmatpush.msra.mxu0 0.0
  %4277 = vmatpush.msra.mxu0 0.0
  %4278 = vmatpush.msra.mxu0 0.0
  %4279 = vmatpush.msra.mxu0 0.0
  %4280 = vmatpush.msra.mxu0 0.0
  %4281 = vmatpush.msra.mxu0 0.0
  %4282 = vmatpush.msra.mxu0 0.0
  %4283 = vmatpush.msra.mxu0 0.0
  %4284 = vmatpush.msra.mxu0 %v3989
  %4285 = vmatmul.f32.gmra.mxu0 %v4247
  %v4286 = vpop.f32.mrf.mxu0
  %v4287 = vadd.f32 0.0, %v4286
  %4288 = vdwg.mxu0
  %v4289 = vadd.f32 %v4242, %v4267
  %v4290 = vadd.f32 %v4243, %v4287
  %s4291 = scalar_lea.vmem %s10, 48
  %v4292 = vld [vmem:[%s4291] sm:$0xff]
  %v4294 = vsel %vm142, %v4292, 0
  %4296 = vmatpush.msra.mxu0 0.0
  %4297 = vmatpush.msra.mxu0 0.0
  %4298 = vmatpush.msra.mxu0 0.0
  %4299 = vmatpush.msra.mxu0 0.0
  %4300 = vmatpush.msra.mxu0 0.0
  %4301 = vmatpush.msra.mxu0 0.0
  %4302 = vmatpush.msra.mxu0 0.0
  %4303 = vmatpush.msra.mxu0 0.0
  %4304 = vmatpush.msra.mxu0 0.0
  %4305 = vmatpush.msra.mxu0 0.0
  %4306 = vmatpush.msra.mxu0 0.0
  %4307 = vmatpush.msra.mxu0 0.0
  %4308 = vmatpush.msra.mxu0 0.0
  %4309 = vmatpush.msra.mxu0 0.0
  %4310 = vmatpush.msra.mxu0 0.0
  %4311 = vmatpush.msra.mxu0 %v3996
  %4312 = vmatmul.f32.gmra.mxu0 %v4294
  %v4313 = vpop.f32.mrf.mxu0
  %v4314 = vadd.f32 0.0, %v4313
  %4315 = vdwg.mxu0
  %4316 = vmatpush.msra.mxu0 0.0
  %4317 = vmatpush.msra.mxu0 0.0
  %4318 = vmatpush.msra.mxu0 0.0
  %4319 = vmatpush.msra.mxu0 0.0
  %4320 = vmatpush.msra.mxu0 0.0
  %4321 = vmatpush.msra.mxu0 0.0
  %4322 = vmatpush.msra.mxu0 0.0
  %4323 = vmatpush.msra.mxu0 0.0
  %4324 = vmatpush.msra.mxu0 0.0
  %4325 = vmatpush.msra.mxu0 0.0
  %4326 = vmatpush.msra.mxu0 0.0
  %4327 = vmatpush.msra.mxu0 0.0
  %4328 = vmatpush.msra.mxu0 0.0
  %4329 = vmatpush.msra.mxu0 0.0
  %4330 = vmatpush.msra.mxu0 0.0
  %4331 = vmatpush.msra.mxu0 %v3997
  %4332 = vmatmul.f32.gmra.mxu0 %v4294
  %v4333 = vpop.f32.mrf.mxu0
  %v4334 = vadd.f32 0.0, %v4333
  %4335 = vdwg.mxu0
  %v4336 = vadd.f32 %v4289, %v4314
  %v4337 = vadd.f32 %v4290, %v4334
  %s4338 = scalar_lea.vmem %s10, 56
  %v4339 = vld [vmem:[%s4338] sm:$0xff]
  %v4341 = vsel %vm142, %v4339, 0
  %4343 = vmatpush.msra.mxu0 0.0
  %4344 = vmatpush.msra.mxu0 0.0
  %4345 = vmatpush.msra.mxu0 0.0
  %4346 = vmatpush.msra.mxu0 0.0
  %4347 = vmatpush.msra.mxu0 0.0
  %4348 = vmatpush.msra.mxu0 0.0
  %4349 = vmatpush.msra.mxu0 0.0
  %4350 = vmatpush.msra.mxu0 0.0
  %4351 = vmatpush.msra.mxu0 0.0
  %4352 = vmatpush.msra.mxu0 0.0
  %4353 = vmatpush.msra.mxu0 0.0
  %4354 = vmatpush.msra.mxu0 0.0
  %4355 = vmatpush.msra.mxu0 0.0
  %4356 = vmatpush.msra.mxu0 0.0
  %4357 = vmatpush.msra.mxu0 0.0
  %4358 = vmatpush.msra.mxu0 %v4004
  %4359 = vmatmul.f32.gmra.mxu0 %v4341
  %v4360 = vpop.f32.mrf.mxu0
  %v4361 = vadd.f32 0.0, %v4360
  %4362 = vdwg.mxu0
  %4363 = vmatpush.msra.mxu0 0.0
  %4364 = vmatpush.msra.mxu0 0.0
  %4365 = vmatpush.msra.mxu0 0.0
  %4366 = vmatpush.msra.mxu0 0.0
  %4367 = vmatpush.msra.mxu0 0.0
  %4368 = vmatpush.msra.mxu0 0.0
  %4369 = vmatpush.msra.mxu0 0.0
  %4370 = vmatpush.msra.mxu0 0.0
  %4371 = vmatpush.msra.mxu0 0.0
  %4372 = vmatpush.msra.mxu0 0.0
  %4373 = vmatpush.msra.mxu0 0.0
  %4374 = vmatpush.msra.mxu0 0.0
  %4375 = vmatpush.msra.mxu0 0.0
  %4376 = vmatpush.msra.mxu0 0.0
  %4377 = vmatpush.msra.mxu0 0.0
  %4378 = vmatpush.msra.mxu0 %v4005
  %4379 = vmatmul.f32.gmra.mxu0 %v4341
  %v4380 = vpop.f32.mrf.mxu0
  %v4381 = vadd.f32 0.0, %v4380
  %4382 = vdwg.mxu0
  %v4383 = vadd.f32 %v4336, %v4361
  %v4384 = vadd.f32 %v4337, %v4381
  %s4385 = scalar_lea.vmem %s10, 64
  %v4386 = vld [vmem:[%s4385] sm:$0xff]
  %v4388 = vsel %vm142, %v4386, 0
  %4390 = vmatpush.msra.mxu0 0.0
  %4391 = vmatpush.msra.mxu0 0.0
  %4392 = vmatpush.msra.mxu0 0.0
  %4393 = vmatpush.msra.mxu0 0.0
  %4394 = vmatpush.msra.mxu0 0.0
  %4395 = vmatpush.msra.mxu0 0.0
  %4396 = vmatpush.msra.mxu0 0.0
  %4397 = vmatpush.msra.mxu0 0.0
  %4398 = vmatpush.msra.mxu0 0.0
  %4399 = vmatpush.msra.mxu0 0.0
  %4400 = vmatpush.msra.mxu0 0.0
  %4401 = vmatpush.msra.mxu0 0.0
  %4402 = vmatpush.msra.mxu0 0.0
  %4403 = vmatpush.msra.mxu0 0.0
  %4404 = vmatpush.msra.mxu0 0.0
  %4405 = vmatpush.msra.mxu0 %v4012
  %4406 = vmatmul.f32.gmra.mxu0 %v4388
  %v4407 = vpop.f32.mrf.mxu0
  %v4408 = vadd.f32 0.0, %v4407
  %4409 = vdwg.mxu0
  %4410 = vmatpush.msra.mxu0 0.0
  %4411 = vmatpush.msra.mxu0 0.0
  %4412 = vmatpush.msra.mxu0 0.0
  %4413 = vmatpush.msra.mxu0 0.0
  %4414 = vmatpush.msra.mxu0 0.0
  %4415 = vmatpush.msra.mxu0 0.0
  %4416 = vmatpush.msra.mxu0 0.0
  %4417 = vmatpush.msra.mxu0 0.0
  %4418 = vmatpush.msra.mxu0 0.0
  %4419 = vmatpush.msra.mxu0 0.0
  %4420 = vmatpush.msra.mxu0 0.0
  %4421 = vmatpush.msra.mxu0 0.0
  %4422 = vmatpush.msra.mxu0 0.0
  %4423 = vmatpush.msra.mxu0 0.0
  %4424 = vmatpush.msra.mxu0 0.0
  %4425 = vmatpush.msra.mxu0 %v4013
  %4426 = vmatmul.f32.gmra.mxu0 %v4388
  %v4427 = vpop.f32.mrf.mxu0
  %v4428 = vadd.f32 0.0, %v4427
  %4429 = vdwg.mxu0
  %v4430 = vadd.f32 %v4383, %v4408
  %v4431 = vadd.f32 %v4384, %v4428
  %v4432 = vadd.f32 %v4430, %v4431
  %4433 = vadd.xlane.f32.xlu0 %v4432
  %v4434 = vpop.xlane.xlu0 %4433
  %v4435 = vmul.f32 %v4434, %v567
  %v4436 = vsub.f32 %v4430, %v4435
  %v4437 = vsub.f32 %v4431, %v4435
  %v4438 = vmul.f32 %v4436, %v4436
  %v4439 = vmul.f32 %v4437, %v4437
  %v4440 = vadd.f32 %v4438, %v4439
  %4441 = vadd.xlane.f32.xlu0 %v4440
  %v4442 = vpop.xlane.xlu0 %4441
  %v4443 = vmul.f32 %v4442, %v567
  %v4444 = vadd.f32 %v4443, 1e-05
  %v4445 = vrsqrt.pop %v4444
  %v4446 = vmul.f32 %v4445, %v4444
  %v4447 = vmul.f32 %v4446, %v4445
  %v4448 = vmul.f32 0.5, %v4447
  %v4449 = vsub.f32 1.5, %v4448
  %v4450 = vmul.f32 %v4445, %v4449
  %vm4451 = vweird.f32 %v4444
  %vm4452 = vweird.f32 %v4445
  %vm4453 = vmor %vm4451, %vm4452
  %v4454 = vsel %vm4453, %v4445, %v4450
  %v4455 = vmul.f32 %v4436, %v4454
  %v4456 = vmul.f32 %v4437, %v4454
  %vm4457 = vcmp.ge.f32.partialorder %v4455, 0.0
  %vm4458 = vcmp.ge.f32.partialorder %v4456, 0.0
  %v4459 = vmul.f32 %v4455, 0.01
  %v4460 = vmul.f32 %v4456, 0.01
  %v4461 = vsel %vm4457, %v4455, %v4459
  %v4462 = vsel %vm4458, %v4456, %v4460
  %4463 = vst [vmem:[%s11 + $0x30] sm:$0xff] %v4461
  %4464 = vst [vmem:[%s11 + $0x38] sm:$0xff] %v4462
  %s4465 = scalar_lea.vmem %s0, 16
  %v4466 = vld [vmem:[%s4465] sm:$0xff]
  %v4467 = vld [vmem:[%s4465 + $0x8] sm:$0xff]
  %s4468 = scalar_lea.vmem %s11, 64
  %4469 = vst [vmem:[%s4468] sm:$0xff] %v4466
  %4470 = vst [vmem:[%s4468 + $0x8] sm:$0xff] %v4467
  %4471 = vrot.lane.b32.xlu0 %v4466, 17
  %v4472 = vpop.permute.xlu0 %4471
  %4473 = vrot.lane.b32.xlu0 %v4467, 17
  %v4474 = vpop.permute.xlu0 %4473
  %v4475 = vsel %vm48, %v4472, %v4474
  %v4476 = vsel %vm48, %v4474, %v4472
  %v4477 = vld [vmem:[%s1] sm:$0xff]
  %v4478 = vld [vmem:[%s1 + $0x8] sm:$0xff]
  %v4479 = vmul.f32 %v4476, %v4477
  %v4480 = vmul.f32 %v4475, %v4478
  %4481 = vrot.lane.b32.xlu0 %v4466, 16
  %v4482 = vpop.permute.xlu0 %4481
  %4483 = vrot.lane.b32.xlu0 %v4467, 16
  %v4484 = vpop.permute.xlu0 %4483
  %v4485 = vsel %vm59, %v4482, %v4484
  %v4486 = vsel %vm59, %v4484, %v4482
  %v4487 = vld [vmem:[%s62] sm:$0xff]
  %v4488 = vld [vmem:[%s62 + $0x8] sm:$0xff]
  %v4489 = vmul.f32 %v4486, %v4487
  %v4490 = vmul.f32 %v4485, %v4488
  %4491 = vrot.lane.b32.xlu0 %v4466, 15
  %v4492 = vpop.permute.xlu0 %4491
  %4493 = vrot.lane.b32.xlu0 %v4467, 15
  %v4494 = vpop.permute.xlu0 %4493
  %v4495 = vsel %vm71, %v4492, %v4494
  %v4496 = vsel %vm71, %v4494, %v4492
  %v4497 = vld [vmem:[%s74] sm:$0xff]
  %v4498 = vld [vmem:[%s74 + $0x8] sm:$0xff]
  %v4499 = vmul.f32 %v4496, %v4497
  %v4500 = vmul.f32 %v4495, %v4498
  %4501 = vrot.lane.b32.xlu0 %v4466, 1
  %v4502 = vpop.permute.xlu0 %4501
  %4503 = vrot.lane.b32.xlu0 %v4467, 1
  %v4504 = vpop.permute.xlu0 %4503
  %v4505 = vsel %vm83, %v4502, %v4504
  %v4506 = vsel %vm83, %v4504, %v4502
  %v4507 = vld [vmem:[%s86] sm:$0xff]
  %v4508 = vld [vmem:[%s86 + $0x8] sm:$0xff]
  %v4509 = vmul.f32 %v4506, %v4507
  %v4510 = vmul.f32 %v4505, %v4508
  %4511 = vrot.lane.b32.xlu0 %v4466, 127
  %v4512 = vpop.permute.xlu0 %4511
  %4513 = vrot.lane.b32.xlu0 %v4467, 127
  %v4514 = vpop.permute.xlu0 %4513
  %v4515 = vsel %vm95, %v4512, %v4514
  %v4516 = vsel %vm95, %v4514, %v4512
  %v4517 = vld [vmem:[%s98] sm:$0xff]
  %v4518 = vld [vmem:[%s98 + $0x8] sm:$0xff]
  %v4519 = vmul.f32 %v4515, %v4517
  %v4520 = vmul.f32 %v4516, %v4518
  %4521 = vrot.lane.b32.xlu0 %v4466, 113
  %v4522 = vpop.permute.xlu0 %4521
  %4523 = vrot.lane.b32.xlu0 %v4467, 113
  %v4524 = vpop.permute.xlu0 %4523
  %v4525 = vsel %vm107, %v4522, %v4524
  %v4526 = vsel %vm107, %v4524, %v4522
  %v4527 = vld [vmem:[%s110] sm:$0xff]
  %v4528 = vld [vmem:[%s110 + $0x8] sm:$0xff]
  %v4529 = vmul.f32 %v4525, %v4527
  %v4530 = vmul.f32 %v4526, %v4528
  %4531 = vrot.lane.b32.xlu0 %v4466, 112
  %v4532 = vpop.permute.xlu0 %4531
  %4533 = vrot.lane.b32.xlu0 %v4467, 112
  %v4534 = vpop.permute.xlu0 %4533
  %v4535 = vsel %vm119, %v4532, %v4534
  %v4536 = vsel %vm119, %v4534, %v4532
  %v4537 = vld [vmem:[%s122] sm:$0xff]
  %v4538 = vld [vmem:[%s122 + $0x8] sm:$0xff]
  %v4539 = vmul.f32 %v4535, %v4537
  %v4540 = vmul.f32 %v4536, %v4538
  %4541 = vrot.lane.b32.xlu0 %v4466, 111
  %v4542 = vpop.permute.xlu0 %4541
  %4543 = vrot.lane.b32.xlu0 %v4467, 111
  %v4544 = vpop.permute.xlu0 %4543
  %v4545 = vsel %vm131, %v4542, %v4544
  %v4546 = vsel %vm131, %v4544, %v4542
  %v4547 = vld [vmem:[%s134] sm:$0xff]
  %v4548 = vld [vmem:[%s134 + $0x8] sm:$0xff]
  %v4549 = vmul.f32 %v4545, %v4547
  %v4550 = vmul.f32 %v4546, %v4548
  %v4551 = vld [vmem:[%s2] sm:$0xff]
  %v4552 = vld [vmem:[%s140] sm:$0xff]
  %v4554 = vsel %vm142, %v4552, 0
  %4556 = vmatpush.msra.mxu0 0.0
  %4557 = vmatpush.msra.mxu0 0.0
  %4558 = vmatpush.msra.mxu0 0.0
  %4559 = vmatpush.msra.mxu0 0.0
  %4560 = vmatpush.msra.mxu0 0.0
  %4561 = vmatpush.msra.mxu0 0.0
  %4562 = vmatpush.msra.mxu0 0.0
  %4563 = vmatpush.msra.mxu0 0.0
  %4564 = vmatpush.msra.mxu0 0.0
  %4565 = vmatpush.msra.mxu0 0.0
  %4566 = vmatpush.msra.mxu0 0.0
  %4567 = vmatpush.msra.mxu0 0.0
  %4568 = vmatpush.msra.mxu0 0.0
  %4569 = vmatpush.msra.mxu0 0.0
  %4570 = vmatpush.msra.mxu0 0.0
  %4571 = vmatpush.msra.mxu0 %v4489
  %4572 = vmatmul.f32.gmra.mxu0 %v4554
  %v4573 = vpop.f32.mrf.mxu0
  %v4574 = vadd.f32 0.0, %v4573
  %4575 = vdwg.mxu0
  %4576 = vmatpush.msra.mxu0 0.0
  %4577 = vmatpush.msra.mxu0 0.0
  %4578 = vmatpush.msra.mxu0 0.0
  %4579 = vmatpush.msra.mxu0 0.0
  %4580 = vmatpush.msra.mxu0 0.0
  %4581 = vmatpush.msra.mxu0 0.0
  %4582 = vmatpush.msra.mxu0 0.0
  %4583 = vmatpush.msra.mxu0 0.0
  %4584 = vmatpush.msra.mxu0 0.0
  %4585 = vmatpush.msra.mxu0 0.0
  %4586 = vmatpush.msra.mxu0 0.0
  %4587 = vmatpush.msra.mxu0 0.0
  %4588 = vmatpush.msra.mxu0 0.0
  %4589 = vmatpush.msra.mxu0 0.0
  %4590 = vmatpush.msra.mxu0 0.0
  %4591 = vmatpush.msra.mxu0 %v4490
  %4592 = vmatmul.f32.gmra.mxu0 %v4554
  %v4593 = vpop.f32.mrf.mxu0
  %v4594 = vadd.f32 0.0, %v4593
  %4595 = vdwg.mxu0
  %v4597 = vsel %vm142, %v4551, 0
  %4599 = vmatpush.msra.mxu0 0.0
  %4600 = vmatpush.msra.mxu0 0.0
  %4601 = vmatpush.msra.mxu0 0.0
  %4602 = vmatpush.msra.mxu0 0.0
  %4603 = vmatpush.msra.mxu0 0.0
  %4604 = vmatpush.msra.mxu0 0.0
  %4605 = vmatpush.msra.mxu0 0.0
  %4606 = vmatpush.msra.mxu0 0.0
  %4607 = vmatpush.msra.mxu0 0.0
  %4608 = vmatpush.msra.mxu0 0.0
  %4609 = vmatpush.msra.mxu0 0.0
  %4610 = vmatpush.msra.mxu0 0.0
  %4611 = vmatpush.msra.mxu0 0.0
  %4612 = vmatpush.msra.mxu0 0.0
  %4613 = vmatpush.msra.mxu0 0.0
  %4614 = vmatpush.msra.mxu0 %v4479
  %4615 = vmatmul.f32.gmra.mxu0 %v4597
  %v4616 = vpop.f32.mrf.mxu0
  %v4617 = vadd.f32 %v4574, %v4616
  %4618 = vdwg.mxu0
  %4619 = vmatpush.msra.mxu0 0.0
  %4620 = vmatpush.msra.mxu0 0.0
  %4621 = vmatpush.msra.mxu0 0.0
  %4622 = vmatpush.msra.mxu0 0.0
  %4623 = vmatpush.msra.mxu0 0.0
  %4624 = vmatpush.msra.mxu0 0.0
  %4625 = vmatpush.msra.mxu0 0.0
  %4626 = vmatpush.msra.mxu0 0.0
  %4627 = vmatpush.msra.mxu0 0.0
  %4628 = vmatpush.msra.mxu0 0.0
  %4629 = vmatpush.msra.mxu0 0.0
  %4630 = vmatpush.msra.mxu0 0.0
  %4631 = vmatpush.msra.mxu0 0.0
  %4632 = vmatpush.msra.mxu0 0.0
  %4633 = vmatpush.msra.mxu0 0.0
  %4634 = vmatpush.msra.mxu0 %v4480
  %4635 = vmatmul.f32.gmra.mxu0 %v4597
  %v4636 = vpop.f32.mrf.mxu0
  %v4637 = vadd.f32 %v4594, %v4636
  %4638 = vdwg.mxu0
  %v4639 = vld [vmem:[%s229] sm:$0xff]
  %v4641 = vsel %vm142, %v4639, 0
  %4643 = vmatpush.msra.mxu0 0.0
  %4644 = vmatpush.msra.mxu0 0.0
  %4645 = vmatpush.msra.mxu0 0.0
  %4646 = vmatpush.msra.mxu0 0.0
  %4647 = vmatpush.msra.mxu0 0.0
  %4648 = vmatpush.msra.mxu0 0.0
  %4649 = vmatpush.msra.mxu0 0.0
  %4650 = vmatpush.msra.mxu0 0.0
  %4651 = vmatpush.msra.mxu0 0.0
  %4652 = vmatpush.msra.mxu0 0.0
  %4653 = vmatpush.msra.mxu0 0.0
  %4654 = vmatpush.msra.mxu0 0.0
  %4655 = vmatpush.msra.mxu0 0.0
  %4656 = vmatpush.msra.mxu0 0.0
  %4657 = vmatpush.msra.mxu0 0.0
  %4658 = vmatpush.msra.mxu0 %v4499
  %4659 = vmatmul.f32.gmra.mxu0 %v4641
  %v4660 = vpop.f32.mrf.mxu0
  %v4661 = vadd.f32 0.0, %v4660
  %4662 = vdwg.mxu0
  %4663 = vmatpush.msra.mxu0 0.0
  %4664 = vmatpush.msra.mxu0 0.0
  %4665 = vmatpush.msra.mxu0 0.0
  %4666 = vmatpush.msra.mxu0 0.0
  %4667 = vmatpush.msra.mxu0 0.0
  %4668 = vmatpush.msra.mxu0 0.0
  %4669 = vmatpush.msra.mxu0 0.0
  %4670 = vmatpush.msra.mxu0 0.0
  %4671 = vmatpush.msra.mxu0 0.0
  %4672 = vmatpush.msra.mxu0 0.0
  %4673 = vmatpush.msra.mxu0 0.0
  %4674 = vmatpush.msra.mxu0 0.0
  %4675 = vmatpush.msra.mxu0 0.0
  %4676 = vmatpush.msra.mxu0 0.0
  %4677 = vmatpush.msra.mxu0 0.0
  %4678 = vmatpush.msra.mxu0 %v4500
  %4679 = vmatmul.f32.gmra.mxu0 %v4641
  %v4680 = vpop.f32.mrf.mxu0
  %v4681 = vadd.f32 0.0, %v4680
  %4682 = vdwg.mxu0
  %v4683 = vadd.f32 %v4617, %v4661
  %v4684 = vadd.f32 %v4637, %v4681
  %v4685 = vld [vmem:[%s276] sm:$0xff]
  %v4687 = vsel %vm142, %v4685, 0
  %4689 = vmatpush.msra.mxu0 0.0
  %4690 = vmatpush.msra.mxu0 0.0
  %4691 = vmatpush.msra.mxu0 0.0
  %4692 = vmatpush.msra.mxu0 0.0
  %4693 = vmatpush.msra.mxu0 0.0
  %4694 = vmatpush.msra.mxu0 0.0
  %4695 = vmatpush.msra.mxu0 0.0
  %4696 = vmatpush.msra.mxu0 0.0
  %4697 = vmatpush.msra.mxu0 0.0
  %4698 = vmatpush.msra.mxu0 0.0
  %4699 = vmatpush.msra.mxu0 0.0
  %4700 = vmatpush.msra.mxu0 0.0
  %4701 = vmatpush.msra.mxu0 0.0
  %4702 = vmatpush.msra.mxu0 0.0
  %4703 = vmatpush.msra.mxu0 0.0
  %4704 = vmatpush.msra.mxu0 %v4509
  %4705 = vmatmul.f32.gmra.mxu0 %v4687
  %v4706 = vpop.f32.mrf.mxu0
  %v4707 = vadd.f32 0.0, %v4706
  %4708 = vdwg.mxu0
  %4709 = vmatpush.msra.mxu0 0.0
  %4710 = vmatpush.msra.mxu0 0.0
  %4711 = vmatpush.msra.mxu0 0.0
  %4712 = vmatpush.msra.mxu0 0.0
  %4713 = vmatpush.msra.mxu0 0.0
  %4714 = vmatpush.msra.mxu0 0.0
  %4715 = vmatpush.msra.mxu0 0.0
  %4716 = vmatpush.msra.mxu0 0.0
  %4717 = vmatpush.msra.mxu0 0.0
  %4718 = vmatpush.msra.mxu0 0.0
  %4719 = vmatpush.msra.mxu0 0.0
  %4720 = vmatpush.msra.mxu0 0.0
  %4721 = vmatpush.msra.mxu0 0.0
  %4722 = vmatpush.msra.mxu0 0.0
  %4723 = vmatpush.msra.mxu0 0.0
  %4724 = vmatpush.msra.mxu0 %v4510
  %4725 = vmatmul.f32.gmra.mxu0 %v4687
  %v4726 = vpop.f32.mrf.mxu0
  %v4727 = vadd.f32 0.0, %v4726
  %4728 = vdwg.mxu0
  %v4729 = vadd.f32 %v4683, %v4707
  %v4730 = vadd.f32 %v4684, %v4727
  %v4731 = vld [vmem:[%s323] sm:$0xff]
  %v4733 = vsel %vm142, %v4731, 0
  %4735 = vmatpush.msra.mxu0 0.0
  %4736 = vmatpush.msra.mxu0 0.0
  %4737 = vmatpush.msra.mxu0 0.0
  %4738 = vmatpush.msra.mxu0 0.0
  %4739 = vmatpush.msra.mxu0 0.0
  %4740 = vmatpush.msra.mxu0 0.0
  %4741 = vmatpush.msra.mxu0 0.0
  %4742 = vmatpush.msra.mxu0 0.0
  %4743 = vmatpush.msra.mxu0 0.0
  %4744 = vmatpush.msra.mxu0 0.0
  %4745 = vmatpush.msra.mxu0 0.0
  %4746 = vmatpush.msra.mxu0 0.0
  %4747 = vmatpush.msra.mxu0 0.0
  %4748 = vmatpush.msra.mxu0 0.0
  %4749 = vmatpush.msra.mxu0 0.0
  %4750 = vmatpush.msra.mxu0 %v4466
  %4751 = vmatmul.f32.gmra.mxu0 %v4733
  %v4752 = vpop.f32.mrf.mxu0
  %v4753 = vadd.f32 0.0, %v4752
  %4754 = vdwg.mxu0
  %4755 = vmatpush.msra.mxu0 0.0
  %4756 = vmatpush.msra.mxu0 0.0
  %4757 = vmatpush.msra.mxu0 0.0
  %4758 = vmatpush.msra.mxu0 0.0
  %4759 = vmatpush.msra.mxu0 0.0
  %4760 = vmatpush.msra.mxu0 0.0
  %4761 = vmatpush.msra.mxu0 0.0
  %4762 = vmatpush.msra.mxu0 0.0
  %4763 = vmatpush.msra.mxu0 0.0
  %4764 = vmatpush.msra.mxu0 0.0
  %4765 = vmatpush.msra.mxu0 0.0
  %4766 = vmatpush.msra.mxu0 0.0
  %4767 = vmatpush.msra.mxu0 0.0
  %4768 = vmatpush.msra.mxu0 0.0
  %4769 = vmatpush.msra.mxu0 0.0
  %4770 = vmatpush.msra.mxu0 %v4467
  %4771 = vmatmul.f32.gmra.mxu0 %v4733
  %v4772 = vpop.f32.mrf.mxu0
  %v4773 = vadd.f32 0.0, %v4772
  %4774 = vdwg.mxu0
  %v4775 = vadd.f32 %v4729, %v4753
  %v4776 = vadd.f32 %v4730, %v4773
  %v4777 = vld [vmem:[%s370] sm:$0xff]
  %v4779 = vsel %vm142, %v4777, 0
  %4781 = vmatpush.msra.mxu0 0.0
  %4782 = vmatpush.msra.mxu0 0.0
  %4783 = vmatpush.msra.mxu0 0.0
  %4784 = vmatpush.msra.mxu0 0.0
  %4785 = vmatpush.msra.mxu0 0.0
  %4786 = vmatpush.msra.mxu0 0.0
  %4787 = vmatpush.msra.mxu0 0.0
  %4788 = vmatpush.msra.mxu0 0.0
  %4789 = vmatpush.msra.mxu0 0.0
  %4790 = vmatpush.msra.mxu0 0.0
  %4791 = vmatpush.msra.mxu0 0.0
  %4792 = vmatpush.msra.mxu0 0.0
  %4793 = vmatpush.msra.mxu0 0.0
  %4794 = vmatpush.msra.mxu0 0.0
  %4795 = vmatpush.msra.mxu0 0.0
  %4796 = vmatpush.msra.mxu0 %v4519
  %4797 = vmatmul.f32.gmra.mxu0 %v4779
  %v4798 = vpop.f32.mrf.mxu0
  %v4799 = vadd.f32 0.0, %v4798
  %4800 = vdwg.mxu0
  %4801 = vmatpush.msra.mxu0 0.0
  %4802 = vmatpush.msra.mxu0 0.0
  %4803 = vmatpush.msra.mxu0 0.0
  %4804 = vmatpush.msra.mxu0 0.0
  %4805 = vmatpush.msra.mxu0 0.0
  %4806 = vmatpush.msra.mxu0 0.0
  %4807 = vmatpush.msra.mxu0 0.0
  %4808 = vmatpush.msra.mxu0 0.0
  %4809 = vmatpush.msra.mxu0 0.0
  %4810 = vmatpush.msra.mxu0 0.0
  %4811 = vmatpush.msra.mxu0 0.0
  %4812 = vmatpush.msra.mxu0 0.0
  %4813 = vmatpush.msra.mxu0 0.0
  %4814 = vmatpush.msra.mxu0 0.0
  %4815 = vmatpush.msra.mxu0 0.0
  %4816 = vmatpush.msra.mxu0 %v4520
  %4817 = vmatmul.f32.gmra.mxu0 %v4779
  %v4818 = vpop.f32.mrf.mxu0
  %v4819 = vadd.f32 0.0, %v4818
  %4820 = vdwg.mxu0
  %v4821 = vadd.f32 %v4775, %v4799
  %v4822 = vadd.f32 %v4776, %v4819
  %v4823 = vld [vmem:[%s417] sm:$0xff]
  %v4825 = vsel %vm142, %v4823, 0
  %4827 = vmatpush.msra.mxu0 0.0
  %4828 = vmatpush.msra.mxu0 0.0
  %4829 = vmatpush.msra.mxu0 0.0
  %4830 = vmatpush.msra.mxu0 0.0
  %4831 = vmatpush.msra.mxu0 0.0
  %4832 = vmatpush.msra.mxu0 0.0
  %4833 = vmatpush.msra.mxu0 0.0
  %4834 = vmatpush.msra.mxu0 0.0
  %4835 = vmatpush.msra.mxu0 0.0
  %4836 = vmatpush.msra.mxu0 0.0
  %4837 = vmatpush.msra.mxu0 0.0
  %4838 = vmatpush.msra.mxu0 0.0
  %4839 = vmatpush.msra.mxu0 0.0
  %4840 = vmatpush.msra.mxu0 0.0
  %4841 = vmatpush.msra.mxu0 0.0
  %4842 = vmatpush.msra.mxu0 %v4529
  %4843 = vmatmul.f32.gmra.mxu0 %v4825
  %v4844 = vpop.f32.mrf.mxu0
  %v4845 = vadd.f32 0.0, %v4844
  %4846 = vdwg.mxu0
  %4847 = vmatpush.msra.mxu0 0.0
  %4848 = vmatpush.msra.mxu0 0.0
  %4849 = vmatpush.msra.mxu0 0.0
  %4850 = vmatpush.msra.mxu0 0.0
  %4851 = vmatpush.msra.mxu0 0.0
  %4852 = vmatpush.msra.mxu0 0.0
  %4853 = vmatpush.msra.mxu0 0.0
  %4854 = vmatpush.msra.mxu0 0.0
  %4855 = vmatpush.msra.mxu0 0.0
  %4856 = vmatpush.msra.mxu0 0.0
  %4857 = vmatpush.msra.mxu0 0.0
  %4858 = vmatpush.msra.mxu0 0.0
  %4859 = vmatpush.msra.mxu0 0.0
  %4860 = vmatpush.msra.mxu0 0.0
  %4861 = vmatpush.msra.mxu0 0.0
  %4862 = vmatpush.msra.mxu0 %v4530
  %4863 = vmatmul.f32.gmra.mxu0 %v4825
  %v4864 = vpop.f32.mrf.mxu0
  %v4865 = vadd.f32 0.0, %v4864
  %4866 = vdwg.mxu0
  %v4867 = vadd.f32 %v4821, %v4845
  %v4868 = vadd.f32 %v4822, %v4865
  %v4869 = vld [vmem:[%s464] sm:$0xff]
  %v4871 = vsel %vm142, %v4869, 0
  %4873 = vmatpush.msra.mxu0 0.0
  %4874 = vmatpush.msra.mxu0 0.0
  %4875 = vmatpush.msra.mxu0 0.0
  %4876 = vmatpush.msra.mxu0 0.0
  %4877 = vmatpush.msra.mxu0 0.0
  %4878 = vmatpush.msra.mxu0 0.0
  %4879 = vmatpush.msra.mxu0 0.0
  %4880 = vmatpush.msra.mxu0 0.0
  %4881 = vmatpush.msra.mxu0 0.0
  %4882 = vmatpush.msra.mxu0 0.0
  %4883 = vmatpush.msra.mxu0 0.0
  %4884 = vmatpush.msra.mxu0 0.0
  %4885 = vmatpush.msra.mxu0 0.0
  %4886 = vmatpush.msra.mxu0 0.0
  %4887 = vmatpush.msra.mxu0 0.0
  %4888 = vmatpush.msra.mxu0 %v4539
  %4889 = vmatmul.f32.gmra.mxu0 %v4871
  %v4890 = vpop.f32.mrf.mxu0
  %v4891 = vadd.f32 0.0, %v4890
  %4892 = vdwg.mxu0
  %4893 = vmatpush.msra.mxu0 0.0
  %4894 = vmatpush.msra.mxu0 0.0
  %4895 = vmatpush.msra.mxu0 0.0
  %4896 = vmatpush.msra.mxu0 0.0
  %4897 = vmatpush.msra.mxu0 0.0
  %4898 = vmatpush.msra.mxu0 0.0
  %4899 = vmatpush.msra.mxu0 0.0
  %4900 = vmatpush.msra.mxu0 0.0
  %4901 = vmatpush.msra.mxu0 0.0
  %4902 = vmatpush.msra.mxu0 0.0
  %4903 = vmatpush.msra.mxu0 0.0
  %4904 = vmatpush.msra.mxu0 0.0
  %4905 = vmatpush.msra.mxu0 0.0
  %4906 = vmatpush.msra.mxu0 0.0
  %4907 = vmatpush.msra.mxu0 0.0
  %4908 = vmatpush.msra.mxu0 %v4540
  %4909 = vmatmul.f32.gmra.mxu0 %v4871
  %v4910 = vpop.f32.mrf.mxu0
  %v4911 = vadd.f32 0.0, %v4910
  %4912 = vdwg.mxu0
  %v4913 = vadd.f32 %v4867, %v4891
  %v4914 = vadd.f32 %v4868, %v4911
  %v4915 = vld [vmem:[%s511] sm:$0xff]
  %v4917 = vsel %vm142, %v4915, 0
  %4919 = vmatpush.msra.mxu0 0.0
  %4920 = vmatpush.msra.mxu0 0.0
  %4921 = vmatpush.msra.mxu0 0.0
  %4922 = vmatpush.msra.mxu0 0.0
  %4923 = vmatpush.msra.mxu0 0.0
  %4924 = vmatpush.msra.mxu0 0.0
  %4925 = vmatpush.msra.mxu0 0.0
  %4926 = vmatpush.msra.mxu0 0.0
  %4927 = vmatpush.msra.mxu0 0.0
  %4928 = vmatpush.msra.mxu0 0.0
  %4929 = vmatpush.msra.mxu0 0.0
  %4930 = vmatpush.msra.mxu0 0.0
  %4931 = vmatpush.msra.mxu0 0.0
  %4932 = vmatpush.msra.mxu0 0.0
  %4933 = vmatpush.msra.mxu0 0.0
  %4934 = vmatpush.msra.mxu0 %v4549
  %4935 = vmatmul.f32.gmra.mxu0 %v4917
  %v4936 = vpop.f32.mrf.mxu0
  %v4937 = vadd.f32 0.0, %v4936
  %4938 = vdwg.mxu0
  %4939 = vmatpush.msra.mxu0 0.0
  %4940 = vmatpush.msra.mxu0 0.0
  %4941 = vmatpush.msra.mxu0 0.0
  %4942 = vmatpush.msra.mxu0 0.0
  %4943 = vmatpush.msra.mxu0 0.0
  %4944 = vmatpush.msra.mxu0 0.0
  %4945 = vmatpush.msra.mxu0 0.0
  %4946 = vmatpush.msra.mxu0 0.0
  %4947 = vmatpush.msra.mxu0 0.0
  %4948 = vmatpush.msra.mxu0 0.0
  %4949 = vmatpush.msra.mxu0 0.0
  %4950 = vmatpush.msra.mxu0 0.0
  %4951 = vmatpush.msra.mxu0 0.0
  %4952 = vmatpush.msra.mxu0 0.0
  %4953 = vmatpush.msra.mxu0 0.0
  %4954 = vmatpush.msra.mxu0 %v4550
  %4955 = vmatmul.f32.gmra.mxu0 %v4917
  %v4956 = vpop.f32.mrf.mxu0
  %v4957 = vadd.f32 0.0, %v4956
  %4958 = vdwg.mxu0
  %v4959 = vadd.f32 %v4913, %v4937
  %v4960 = vadd.f32 %v4914, %v4957
  %v4961 = vadd.f32 %v4959, %v4960
  %4962 = vadd.xlane.f32.xlu0 %v4961
  %v4963 = vpop.xlane.xlu0 %4962
  %v4964 = vmul.f32 %v4963, %v567
  %v4965 = vsub.f32 %v4959, %v4964
  %v4966 = vsub.f32 %v4960, %v4964
  %v4967 = vmul.f32 %v4965, %v4965
  %v4968 = vmul.f32 %v4966, %v4966
  %v4969 = vadd.f32 %v4967, %v4968
  %4970 = vadd.xlane.f32.xlu0 %v4969
  %v4971 = vpop.xlane.xlu0 %4970
  %v4972 = vmul.f32 %v4971, %v567
  %v4973 = vadd.f32 %v4972, 1e-05
  %v4974 = vrsqrt.pop %v4973
  %v4975 = vmul.f32 %v4974, %v4973
  %v4976 = vmul.f32 %v4975, %v4974
  %v4977 = vmul.f32 0.5, %v4976
  %v4978 = vsub.f32 1.5, %v4977
  %v4979 = vmul.f32 %v4974, %v4978
  %vm4980 = vweird.f32 %v4973
  %vm4981 = vweird.f32 %v4974
  %vm4982 = vmor %vm4980, %vm4981
  %v4983 = vsel %vm4982, %v4974, %v4979
  %v4984 = vmul.f32 %v4965, %v4983
  %v4985 = vmul.f32 %v4966, %v4983
  %vm4986 = vcmp.ge.f32.partialorder %v4984, 0.0
  %vm4987 = vcmp.ge.f32.partialorder %v4985, 0.0
  %v4988 = vmul.f32 %v4984, 0.01
  %v4989 = vmul.f32 %v4985, 0.01
  %v4990 = vsel %vm4986, %v4984, %v4988
  %v4991 = vsel %vm4987, %v4985, %v4989
  %4992 = vrot.lane.b32.xlu0 %v4990, 17
  %v4993 = vpop.permute.xlu0 %4992
  %4994 = vrot.lane.b32.xlu0 %v4991, 17
  %v4995 = vpop.permute.xlu0 %4994
  %v4996 = vsel %vm48, %v4993, %v4995
  %v4997 = vsel %vm48, %v4995, %v4993
  %v4998 = vmul.f32 %v4997, %v4477
  %v4999 = vmul.f32 %v4996, %v4478
  %5000 = vrot.lane.b32.xlu0 %v4990, 16
  %v5001 = vpop.permute.xlu0 %5000
  %5002 = vrot.lane.b32.xlu0 %v4991, 16
  %v5003 = vpop.permute.xlu0 %5002
  %v5004 = vsel %vm59, %v5001, %v5003
  %v5005 = vsel %vm59, %v5003, %v5001
  %v5006 = vmul.f32 %v5005, %v4487
  %v5007 = vmul.f32 %v5004, %v4488
  %5008 = vrot.lane.b32.xlu0 %v4990, 15
  %v5009 = vpop.permute.xlu0 %5008
  %5010 = vrot.lane.b32.xlu0 %v4991, 15
  %v5011 = vpop.permute.xlu0 %5010
  %v5012 = vsel %vm71, %v5009, %v5011
  %v5013 = vsel %vm71, %v5011, %v5009
  %v5014 = vmul.f32 %v5013, %v4497
  %v5015 = vmul.f32 %v5012, %v4498
  %5016 = vrot.lane.b32.xlu0 %v4990, 1
  %v5017 = vpop.permute.xlu0 %5016
  %5018 = vrot.lane.b32.xlu0 %v4991, 1
  %v5019 = vpop.permute.xlu0 %5018
  %v5020 = vsel %vm83, %v5017, %v5019
  %v5021 = vsel %vm83, %v5019, %v5017
  %v5022 = vmul.f32 %v5021, %v4507
  %v5023 = vmul.f32 %v5020, %v4508
  %5024 = vrot.lane.b32.xlu0 %v4990, 127
  %v5025 = vpop.permute.xlu0 %5024
  %5026 = vrot.lane.b32.xlu0 %v4991, 127
  %v5027 = vpop.permute.xlu0 %5026
  %v5028 = vsel %vm95, %v5025, %v5027
  %v5029 = vsel %vm95, %v5027, %v5025
  %v5030 = vmul.f32 %v5028, %v4517
  %v5031 = vmul.f32 %v5029, %v4518
  %5032 = vrot.lane.b32.xlu0 %v4990, 113
  %v5033 = vpop.permute.xlu0 %5032
  %5034 = vrot.lane.b32.xlu0 %v4991, 113
  %v5035 = vpop.permute.xlu0 %5034
  %v5036 = vsel %vm107, %v5033, %v5035
  %v5037 = vsel %vm107, %v5035, %v5033
  %v5038 = vmul.f32 %v5036, %v4527
  %v5039 = vmul.f32 %v5037, %v4528
  %5040 = vrot.lane.b32.xlu0 %v4990, 112
  %v5041 = vpop.permute.xlu0 %5040
  %5042 = vrot.lane.b32.xlu0 %v4991, 112
  %v5043 = vpop.permute.xlu0 %5042
  %v5044 = vsel %vm119, %v5041, %v5043
  %v5045 = vsel %vm119, %v5043, %v5041
  %v5046 = vmul.f32 %v5044, %v4537
  %v5047 = vmul.f32 %v5045, %v4538
  %5048 = vrot.lane.b32.xlu0 %v4990, 111
  %v5049 = vpop.permute.xlu0 %5048
  %5050 = vrot.lane.b32.xlu0 %v4991, 111
  %v5051 = vpop.permute.xlu0 %5050
  %v5052 = vsel %vm131, %v5049, %v5051
  %v5053 = vsel %vm131, %v5051, %v5049
  %v5054 = vmul.f32 %v5052, %v4547
  %v5055 = vmul.f32 %v5053, %v4548
  %v5056 = vld [vmem:[%s3] sm:$0xff]
  %v5057 = vld [vmem:[%s661] sm:$0xff]
  %v5059 = vsel %vm142, %v5057, 0
  %5061 = vmatpush.msra.mxu0 0.0
  %5062 = vmatpush.msra.mxu0 0.0
  %5063 = vmatpush.msra.mxu0 0.0
  %5064 = vmatpush.msra.mxu0 0.0
  %5065 = vmatpush.msra.mxu0 0.0
  %5066 = vmatpush.msra.mxu0 0.0
  %5067 = vmatpush.msra.mxu0 0.0
  %5068 = vmatpush.msra.mxu0 0.0
  %5069 = vmatpush.msra.mxu0 0.0
  %5070 = vmatpush.msra.mxu0 0.0
  %5071 = vmatpush.msra.mxu0 0.0
  %5072 = vmatpush.msra.mxu0 0.0
  %5073 = vmatpush.msra.mxu0 0.0
  %5074 = vmatpush.msra.mxu0 0.0
  %5075 = vmatpush.msra.mxu0 0.0
  %5076 = vmatpush.msra.mxu0 %v5006
  %5077 = vmatmul.f32.gmra.mxu0 %v5059
  %v5078 = vpop.f32.mrf.mxu0
  %v5079 = vadd.f32 0.0, %v5078
  %5080 = vdwg.mxu0
  %5081 = vmatpush.msra.mxu0 0.0
  %5082 = vmatpush.msra.mxu0 0.0
  %5083 = vmatpush.msra.mxu0 0.0
  %5084 = vmatpush.msra.mxu0 0.0
  %5085 = vmatpush.msra.mxu0 0.0
  %5086 = vmatpush.msra.mxu0 0.0
  %5087 = vmatpush.msra.mxu0 0.0
  %5088 = vmatpush.msra.mxu0 0.0
  %5089 = vmatpush.msra.mxu0 0.0
  %5090 = vmatpush.msra.mxu0 0.0
  %5091 = vmatpush.msra.mxu0 0.0
  %5092 = vmatpush.msra.mxu0 0.0
  %5093 = vmatpush.msra.mxu0 0.0
  %5094 = vmatpush.msra.mxu0 0.0
  %5095 = vmatpush.msra.mxu0 0.0
  %5096 = vmatpush.msra.mxu0 %v5007
  %5097 = vmatmul.f32.gmra.mxu0 %v5059
  %v5098 = vpop.f32.mrf.mxu0
  %v5099 = vadd.f32 0.0, %v5098
  %5100 = vdwg.mxu0
  %v5102 = vsel %vm142, %v5056, 0
  %5104 = vmatpush.msra.mxu0 0.0
  %5105 = vmatpush.msra.mxu0 0.0
  %5106 = vmatpush.msra.mxu0 0.0
  %5107 = vmatpush.msra.mxu0 0.0
  %5108 = vmatpush.msra.mxu0 0.0
  %5109 = vmatpush.msra.mxu0 0.0
  %5110 = vmatpush.msra.mxu0 0.0
  %5111 = vmatpush.msra.mxu0 0.0
  %5112 = vmatpush.msra.mxu0 0.0
  %5113 = vmatpush.msra.mxu0 0.0
  %5114 = vmatpush.msra.mxu0 0.0
  %5115 = vmatpush.msra.mxu0 0.0
  %5116 = vmatpush.msra.mxu0 0.0
  %5117 = vmatpush.msra.mxu0 0.0
  %5118 = vmatpush.msra.mxu0 0.0
  %5119 = vmatpush.msra.mxu0 %v4998
  %5120 = vmatmul.f32.gmra.mxu0 %v5102
  %v5121 = vpop.f32.mrf.mxu0
  %v5122 = vadd.f32 %v5079, %v5121
  %5123 = vdwg.mxu0
  %5124 = vmatpush.msra.mxu0 0.0
  %5125 = vmatpush.msra.mxu0 0.0
  %5126 = vmatpush.msra.mxu0 0.0
  %5127 = vmatpush.msra.mxu0 0.0
  %5128 = vmatpush.msra.mxu0 0.0
  %5129 = vmatpush.msra.mxu0 0.0
  %5130 = vmatpush.msra.mxu0 0.0
  %5131 = vmatpush.msra.mxu0 0.0
  %5132 = vmatpush.msra.mxu0 0.0
  %5133 = vmatpush.msra.mxu0 0.0
  %5134 = vmatpush.msra.mxu0 0.0
  %5135 = vmatpush.msra.mxu0 0.0
  %5136 = vmatpush.msra.mxu0 0.0
  %5137 = vmatpush.msra.mxu0 0.0
  %5138 = vmatpush.msra.mxu0 0.0
  %5139 = vmatpush.msra.mxu0 %v4999
  %5140 = vmatmul.f32.gmra.mxu0 %v5102
  %v5141 = vpop.f32.mrf.mxu0
  %v5142 = vadd.f32 %v5099, %v5141
  %5143 = vdwg.mxu0
  %v5144 = vld [vmem:[%s749] sm:$0xff]
  %v5146 = vsel %vm142, %v5144, 0
  %5148 = vmatpush.msra.mxu0 0.0
  %5149 = vmatpush.msra.mxu0 0.0
  %5150 = vmatpush.msra.mxu0 0.0
  %5151 = vmatpush.msra.mxu0 0.0
  %5152 = vmatpush.msra.mxu0 0.0
  %5153 = vmatpush.msra.mxu0 0.0
  %5154 = vmatpush.msra.mxu0 0.0
  %5155 = vmatpush.msra.mxu0 0.0
  %5156 = vmatpush.msra.mxu0 0.0
  %5157 = vmatpush.msra.mxu0 0.0
  %5158 = vmatpush.msra.mxu0 0.0
  %5159 = vmatpush.msra.mxu0 0.0
  %5160 = vmatpush.msra.mxu0 0.0
  %5161 = vmatpush.msra.mxu0 0.0
  %5162 = vmatpush.msra.mxu0 0.0
  %5163 = vmatpush.msra.mxu0 %v5014
  %5164 = vmatmul.f32.gmra.mxu0 %v5146
  %v5165 = vpop.f32.mrf.mxu0
  %v5166 = vadd.f32 0.0, %v5165
  %5167 = vdwg.mxu0
  %5168 = vmatpush.msra.mxu0 0.0
  %5169 = vmatpush.msra.mxu0 0.0
  %5170 = vmatpush.msra.mxu0 0.0
  %5171 = vmatpush.msra.mxu0 0.0
  %5172 = vmatpush.msra.mxu0 0.0
  %5173 = vmatpush.msra.mxu0 0.0
  %5174 = vmatpush.msra.mxu0 0.0
  %5175 = vmatpush.msra.mxu0 0.0
  %5176 = vmatpush.msra.mxu0 0.0
  %5177 = vmatpush.msra.mxu0 0.0
  %5178 = vmatpush.msra.mxu0 0.0
  %5179 = vmatpush.msra.mxu0 0.0
  %5180 = vmatpush.msra.mxu0 0.0
  %5181 = vmatpush.msra.mxu0 0.0
  %5182 = vmatpush.msra.mxu0 0.0
  %5183 = vmatpush.msra.mxu0 %v5015
  %5184 = vmatmul.f32.gmra.mxu0 %v5146
  %v5185 = vpop.f32.mrf.mxu0
  %v5186 = vadd.f32 0.0, %v5185
  %5187 = vdwg.mxu0
  %v5188 = vadd.f32 %v5122, %v5166
  %v5189 = vadd.f32 %v5142, %v5186
  %v5190 = vld [vmem:[%s796] sm:$0xff]
  %v5192 = vsel %vm142, %v5190, 0
  %5194 = vmatpush.msra.mxu0 0.0
  %5195 = vmatpush.msra.mxu0 0.0
  %5196 = vmatpush.msra.mxu0 0.0
  %5197 = vmatpush.msra.mxu0 0.0
  %5198 = vmatpush.msra.mxu0 0.0
  %5199 = vmatpush.msra.mxu0 0.0
  %5200 = vmatpush.msra.mxu0 0.0
  %5201 = vmatpush.msra.mxu0 0.0
  %5202 = vmatpush.msra.mxu0 0.0
  %5203 = vmatpush.msra.mxu0 0.0
  %5204 = vmatpush.msra.mxu0 0.0
  %5205 = vmatpush.msra.mxu0 0.0
  %5206 = vmatpush.msra.mxu0 0.0
  %5207 = vmatpush.msra.mxu0 0.0
  %5208 = vmatpush.msra.mxu0 0.0
  %5209 = vmatpush.msra.mxu0 %v5022
  %5210 = vmatmul.f32.gmra.mxu0 %v5192
  %v5211 = vpop.f32.mrf.mxu0
  %v5212 = vadd.f32 0.0, %v5211
  %5213 = vdwg.mxu0
  %5214 = vmatpush.msra.mxu0 0.0
  %5215 = vmatpush.msra.mxu0 0.0
  %5216 = vmatpush.msra.mxu0 0.0
  %5217 = vmatpush.msra.mxu0 0.0
  %5218 = vmatpush.msra.mxu0 0.0
  %5219 = vmatpush.msra.mxu0 0.0
  %5220 = vmatpush.msra.mxu0 0.0
  %5221 = vmatpush.msra.mxu0 0.0
  %5222 = vmatpush.msra.mxu0 0.0
  %5223 = vmatpush.msra.mxu0 0.0
  %5224 = vmatpush.msra.mxu0 0.0
  %5225 = vmatpush.msra.mxu0 0.0
  %5226 = vmatpush.msra.mxu0 0.0
  %5227 = vmatpush.msra.mxu0 0.0
  %5228 = vmatpush.msra.mxu0 0.0
  %5229 = vmatpush.msra.mxu0 %v5023
  %5230 = vmatmul.f32.gmra.mxu0 %v5192
  %v5231 = vpop.f32.mrf.mxu0
  %v5232 = vadd.f32 0.0, %v5231
  %5233 = vdwg.mxu0
  %v5234 = vadd.f32 %v5188, %v5212
  %v5235 = vadd.f32 %v5189, %v5232
  %v5236 = vld [vmem:[%s843] sm:$0xff]
  %v5238 = vsel %vm142, %v5236, 0
  %5240 = vmatpush.msra.mxu0 0.0
  %5241 = vmatpush.msra.mxu0 0.0
  %5242 = vmatpush.msra.mxu0 0.0
  %5243 = vmatpush.msra.mxu0 0.0
  %5244 = vmatpush.msra.mxu0 0.0
  %5245 = vmatpush.msra.mxu0 0.0
  %5246 = vmatpush.msra.mxu0 0.0
  %5247 = vmatpush.msra.mxu0 0.0
  %5248 = vmatpush.msra.mxu0 0.0
  %5249 = vmatpush.msra.mxu0 0.0
  %5250 = vmatpush.msra.mxu0 0.0
  %5251 = vmatpush.msra.mxu0 0.0
  %5252 = vmatpush.msra.mxu0 0.0
  %5253 = vmatpush.msra.mxu0 0.0
  %5254 = vmatpush.msra.mxu0 0.0
  %5255 = vmatpush.msra.mxu0 %v4990
  %5256 = vmatmul.f32.gmra.mxu0 %v5238
  %v5257 = vpop.f32.mrf.mxu0
  %v5258 = vadd.f32 0.0, %v5257
  %5259 = vdwg.mxu0
  %5260 = vmatpush.msra.mxu0 0.0
  %5261 = vmatpush.msra.mxu0 0.0
  %5262 = vmatpush.msra.mxu0 0.0
  %5263 = vmatpush.msra.mxu0 0.0
  %5264 = vmatpush.msra.mxu0 0.0
  %5265 = vmatpush.msra.mxu0 0.0
  %5266 = vmatpush.msra.mxu0 0.0
  %5267 = vmatpush.msra.mxu0 0.0
  %5268 = vmatpush.msra.mxu0 0.0
  %5269 = vmatpush.msra.mxu0 0.0
  %5270 = vmatpush.msra.mxu0 0.0
  %5271 = vmatpush.msra.mxu0 0.0
  %5272 = vmatpush.msra.mxu0 0.0
  %5273 = vmatpush.msra.mxu0 0.0
  %5274 = vmatpush.msra.mxu0 0.0
  %5275 = vmatpush.msra.mxu0 %v4991
  %5276 = vmatmul.f32.gmra.mxu0 %v5238
  %v5277 = vpop.f32.mrf.mxu0
  %v5278 = vadd.f32 0.0, %v5277
  %5279 = vdwg.mxu0
  %v5280 = vadd.f32 %v5234, %v5258
  %v5281 = vadd.f32 %v5235, %v5278
  %v5282 = vld [vmem:[%s890] sm:$0xff]
  %v5284 = vsel %vm142, %v5282, 0
  %5286 = vmatpush.msra.mxu0 0.0
  %5287 = vmatpush.msra.mxu0 0.0
  %5288 = vmatpush.msra.mxu0 0.0
  %5289 = vmatpush.msra.mxu0 0.0
  %5290 = vmatpush.msra.mxu0 0.0
  %5291 = vmatpush.msra.mxu0 0.0
  %5292 = vmatpush.msra.mxu0 0.0
  %5293 = vmatpush.msra.mxu0 0.0
  %5294 = vmatpush.msra.mxu0 0.0
  %5295 = vmatpush.msra.mxu0 0.0
  %5296 = vmatpush.msra.mxu0 0.0
  %5297 = vmatpush.msra.mxu0 0.0
  %5298 = vmatpush.msra.mxu0 0.0
  %5299 = vmatpush.msra.mxu0 0.0
  %5300 = vmatpush.msra.mxu0 0.0
  %5301 = vmatpush.msra.mxu0 %v5030
  %5302 = vmatmul.f32.gmra.mxu0 %v5284
  %v5303 = vpop.f32.mrf.mxu0
  %v5304 = vadd.f32 0.0, %v5303
  %5305 = vdwg.mxu0
  %5306 = vmatpush.msra.mxu0 0.0
  %5307 = vmatpush.msra.mxu0 0.0
  %5308 = vmatpush.msra.mxu0 0.0
  %5309 = vmatpush.msra.mxu0 0.0
  %5310 = vmatpush.msra.mxu0 0.0
  %5311 = vmatpush.msra.mxu0 0.0
  %5312 = vmatpush.msra.mxu0 0.0
  %5313 = vmatpush.msra.mxu0 0.0
  %5314 = vmatpush.msra.mxu0 0.0
  %5315 = vmatpush.msra.mxu0 0.0
  %5316 = vmatpush.msra.mxu0 0.0
  %5317 = vmatpush.msra.mxu0 0.0
  %5318 = vmatpush.msra.mxu0 0.0
  %5319 = vmatpush.msra.mxu0 0.0
  %5320 = vmatpush.msra.mxu0 0.0
  %5321 = vmatpush.msra.mxu0 %v5031
  %5322 = vmatmul.f32.gmra.mxu0 %v5284
  %v5323 = vpop.f32.mrf.mxu0
  %v5324 = vadd.f32 0.0, %v5323
  %5325 = vdwg.mxu0
  %v5326 = vadd.f32 %v5280, %v5304
  %v5327 = vadd.f32 %v5281, %v5324
  %v5328 = vld [vmem:[%s937] sm:$0xff]
  %v5330 = vsel %vm142, %v5328, 0
  %5332 = vmatpush.msra.mxu0 0.0
  %5333 = vmatpush.msra.mxu0 0.0
  %5334 = vmatpush.msra.mxu0 0.0
  %5335 = vmatpush.msra.mxu0 0.0
  %5336 = vmatpush.msra.mxu0 0.0
  %5337 = vmatpush.msra.mxu0 0.0
  %5338 = vmatpush.msra.mxu0 0.0
  %5339 = vmatpush.msra.mxu0 0.0
  %5340 = vmatpush.msra.mxu0 0.0
  %5341 = vmatpush.msra.mxu0 0.0
  %5342 = vmatpush.msra.mxu0 0.0
  %5343 = vmatpush.msra.mxu0 0.0
  %5344 = vmatpush.msra.mxu0 0.0
  %5345 = vmatpush.msra.mxu0 0.0
  %5346 = vmatpush.msra.mxu0 0.0
  %5347 = vmatpush.msra.mxu0 %v5038
  %5348 = vmatmul.f32.gmra.mxu0 %v5330
  %v5349 = vpop.f32.mrf.mxu0
  %v5350 = vadd.f32 0.0, %v5349
  %5351 = vdwg.mxu0
  %5352 = vmatpush.msra.mxu0 0.0
  %5353 = vmatpush.msra.mxu0 0.0
  %5354 = vmatpush.msra.mxu0 0.0
  %5355 = vmatpush.msra.mxu0 0.0
  %5356 = vmatpush.msra.mxu0 0.0
  %5357 = vmatpush.msra.mxu0 0.0
  %5358 = vmatpush.msra.mxu0 0.0
  %5359 = vmatpush.msra.mxu0 0.0
  %5360 = vmatpush.msra.mxu0 0.0
  %5361 = vmatpush.msra.mxu0 0.0
  %5362 = vmatpush.msra.mxu0 0.0
  %5363 = vmatpush.msra.mxu0 0.0
  %5364 = vmatpush.msra.mxu0 0.0
  %5365 = vmatpush.msra.mxu0 0.0
  %5366 = vmatpush.msra.mxu0 0.0
  %5367 = vmatpush.msra.mxu0 %v5039
  %5368 = vmatmul.f32.gmra.mxu0 %v5330
  %v5369 = vpop.f32.mrf.mxu0
  %v5370 = vadd.f32 0.0, %v5369
  %5371 = vdwg.mxu0
  %v5372 = vadd.f32 %v5326, %v5350
  %v5373 = vadd.f32 %v5327, %v5370
  %v5374 = vld [vmem:[%s984] sm:$0xff]
  %v5376 = vsel %vm142, %v5374, 0
  %5378 = vmatpush.msra.mxu0 0.0
  %5379 = vmatpush.msra.mxu0 0.0
  %5380 = vmatpush.msra.mxu0 0.0
  %5381 = vmatpush.msra.mxu0 0.0
  %5382 = vmatpush.msra.mxu0 0.0
  %5383 = vmatpush.msra.mxu0 0.0
  %5384 = vmatpush.msra.mxu0 0.0
  %5385 = vmatpush.msra.mxu0 0.0
  %5386 = vmatpush.msra.mxu0 0.0
  %5387 = vmatpush.msra.mxu0 0.0
  %5388 = vmatpush.msra.mxu0 0.0
  %5389 = vmatpush.msra.mxu0 0.0
  %5390 = vmatpush.msra.mxu0 0.0
  %5391 = vmatpush.msra.mxu0 0.0
  %5392 = vmatpush.msra.mxu0 0.0
  %5393 = vmatpush.msra.mxu0 %v5046
  %5394 = vmatmul.f32.gmra.mxu0 %v5376
  %v5395 = vpop.f32.mrf.mxu0
  %v5396 = vadd.f32 0.0, %v5395
  %5397 = vdwg.mxu0
  %5398 = vmatpush.msra.mxu0 0.0
  %5399 = vmatpush.msra.mxu0 0.0
  %5400 = vmatpush.msra.mxu0 0.0
  %5401 = vmatpush.msra.mxu0 0.0
  %5402 = vmatpush.msra.mxu0 0.0
  %5403 = vmatpush.msra.mxu0 0.0
  %5404 = vmatpush.msra.mxu0 0.0
  %5405 = vmatpush.msra.mxu0 0.0
  %5406 = vmatpush.msra.mxu0 0.0
  %5407 = vmatpush.msra.mxu0 0.0
  %5408 = vmatpush.msra.mxu0 0.0
  %5409 = vmatpush.msra.mxu0 0.0
  %5410 = vmatpush.msra.mxu0 0.0
  %5411 = vmatpush.msra.mxu0 0.0
  %5412 = vmatpush.msra.mxu0 0.0
  %5413 = vmatpush.msra.mxu0 %v5047
  %5414 = vmatmul.f32.gmra.mxu0 %v5376
  %v5415 = vpop.f32.mrf.mxu0
  %v5416 = vadd.f32 0.0, %v5415
  %5417 = vdwg.mxu0
  %v5418 = vadd.f32 %v5372, %v5396
  %v5419 = vadd.f32 %v5373, %v5416
  %v5420 = vld [vmem:[%s1031] sm:$0xff]
  %v5422 = vsel %vm142, %v5420, 0
  %5424 = vmatpush.msra.mxu0 0.0
  %5425 = vmatpush.msra.mxu0 0.0
  %5426 = vmatpush.msra.mxu0 0.0
  %5427 = vmatpush.msra.mxu0 0.0
  %5428 = vmatpush.msra.mxu0 0.0
  %5429 = vmatpush.msra.mxu0 0.0
  %5430 = vmatpush.msra.mxu0 0.0
  %5431 = vmatpush.msra.mxu0 0.0
  %5432 = vmatpush.msra.mxu0 0.0
  %5433 = vmatpush.msra.mxu0 0.0
  %5434 = vmatpush.msra.mxu0 0.0
  %5435 = vmatpush.msra.mxu0 0.0
  %5436 = vmatpush.msra.mxu0 0.0
  %5437 = vmatpush.msra.mxu0 0.0
  %5438 = vmatpush.msra.mxu0 0.0
  %5439 = vmatpush.msra.mxu0 %v5054
  %5440 = vmatmul.f32.gmra.mxu0 %v5422
  %v5441 = vpop.f32.mrf.mxu0
  %v5442 = vadd.f32 0.0, %v5441
  %5443 = vdwg.mxu0
  %5444 = vmatpush.msra.mxu0 0.0
  %5445 = vmatpush.msra.mxu0 0.0
  %5446 = vmatpush.msra.mxu0 0.0
  %5447 = vmatpush.msra.mxu0 0.0
  %5448 = vmatpush.msra.mxu0 0.0
  %5449 = vmatpush.msra.mxu0 0.0
  %5450 = vmatpush.msra.mxu0 0.0
  %5451 = vmatpush.msra.mxu0 0.0
  %5452 = vmatpush.msra.mxu0 0.0
  %5453 = vmatpush.msra.mxu0 0.0
  %5454 = vmatpush.msra.mxu0 0.0
  %5455 = vmatpush.msra.mxu0 0.0
  %5456 = vmatpush.msra.mxu0 0.0
  %5457 = vmatpush.msra.mxu0 0.0
  %5458 = vmatpush.msra.mxu0 0.0
  %5459 = vmatpush.msra.mxu0 %v5055
  %5460 = vmatmul.f32.gmra.mxu0 %v5422
  %v5461 = vpop.f32.mrf.mxu0
  %v5462 = vadd.f32 0.0, %v5461
  %5463 = vdwg.mxu0
  %v5464 = vadd.f32 %v5418, %v5442
  %v5465 = vadd.f32 %v5419, %v5462
  %v5466 = vadd.f32 %v5464, %v5465
  %5467 = vadd.xlane.f32.xlu0 %v5466
  %v5468 = vpop.xlane.xlu0 %5467
  %v5469 = vmul.f32 %v5468, %v567
  %v5470 = vsub.f32 %v5464, %v5469
  %v5471 = vsub.f32 %v5465, %v5469
  %v5472 = vmul.f32 %v5470, %v5470
  %v5473 = vmul.f32 %v5471, %v5471
  %v5474 = vadd.f32 %v5472, %v5473
  %5475 = vadd.xlane.f32.xlu0 %v5474
  %v5476 = vpop.xlane.xlu0 %5475
  %v5477 = vmul.f32 %v5476, %v567
  %v5478 = vadd.f32 %v5477, 1e-05
  %v5479 = vrsqrt.pop %v5478
  %v5480 = vmul.f32 %v5479, %v5478
  %v5481 = vmul.f32 %v5480, %v5479
  %v5482 = vmul.f32 0.5, %v5481
  %v5483 = vsub.f32 1.5, %v5482
  %v5484 = vmul.f32 %v5479, %v5483
  %vm5485 = vweird.f32 %v5478
  %vm5486 = vweird.f32 %v5479
  %vm5487 = vmor %vm5485, %vm5486
  %v5488 = vsel %vm5487, %v5479, %v5484
  %v5489 = vmul.f32 %v5470, %v5488
  %v5490 = vmul.f32 %v5471, %v5488
  %vm5491 = vcmp.ge.f32.partialorder %v5489, 0.0
  %vm5492 = vcmp.ge.f32.partialorder %v5490, 0.0
  %v5493 = vmul.f32 %v5489, 0.01
  %v5494 = vmul.f32 %v5490, 0.01
  %v5495 = vsel %vm5491, %v5489, %v5493
  %v5496 = vsel %vm5492, %v5490, %v5494
  %5497 = vst [vmem:[%s4468 + $0x10] sm:$0xff] %v5495
  %5498 = vst [vmem:[%s4468 + $0x18] sm:$0xff] %v5496
  %5499 = vrot.lane.b32.xlu0 %v5495, 17
  %v5500 = vpop.permute.xlu0 %5499
  %5501 = vrot.lane.b32.xlu0 %v5496, 17
  %v5502 = vpop.permute.xlu0 %5501
  %v5503 = vsel %vm48, %v5500, %v5502
  %v5504 = vsel %vm48, %v5502, %v5500
  %v5505 = vld [vmem:[%s1] sm:$0xff]
  %v5506 = vld [vmem:[%s1 + $0x8] sm:$0xff]
  %v5507 = vmul.f32 %v5504, %v5505
  %v5508 = vmul.f32 %v5503, %v5506
  %5509 = vrot.lane.b32.xlu0 %v5495, 16
  %v5510 = vpop.permute.xlu0 %5509
  %5511 = vrot.lane.b32.xlu0 %v5496, 16
  %v5512 = vpop.permute.xlu0 %5511
  %v5513 = vsel %vm59, %v5510, %v5512
  %v5514 = vsel %vm59, %v5512, %v5510
  %v5515 = vld [vmem:[%s62] sm:$0xff]
  %v5516 = vld [vmem:[%s62 + $0x8] sm:$0xff]
  %v5517 = vmul.f32 %v5514, %v5515
  %v5518 = vmul.f32 %v5513, %v5516
  %5519 = vrot.lane.b32.xlu0 %v5495, 15
  %v5520 = vpop.permute.xlu0 %5519
  %5521 = vrot.lane.b32.xlu0 %v5496, 15
  %v5522 = vpop.permute.xlu0 %5521
  %v5523 = vsel %vm71, %v5520, %v5522
  %v5524 = vsel %vm71, %v5522, %v5520
  %v5525 = vld [vmem:[%s74] sm:$0xff]
  %v5526 = vld [vmem:[%s74 + $0x8] sm:$0xff]
  %v5527 = vmul.f32 %v5524, %v5525
  %v5528 = vmul.f32 %v5523, %v5526
  %5529 = vrot.lane.b32.xlu0 %v5495, 1
  %v5530 = vpop.permute.xlu0 %5529
  %5531 = vrot.lane.b32.xlu0 %v5496, 1
  %v5532 = vpop.permute.xlu0 %5531
  %v5533 = vsel %vm83, %v5530, %v5532
  %v5534 = vsel %vm83, %v5532, %v5530
  %v5535 = vld [vmem:[%s86] sm:$0xff]
  %v5536 = vld [vmem:[%s86 + $0x8] sm:$0xff]
  %v5537 = vmul.f32 %v5534, %v5535
  %v5538 = vmul.f32 %v5533, %v5536
  %5539 = vrot.lane.b32.xlu0 %v5495, 127
  %v5540 = vpop.permute.xlu0 %5539
  %5541 = vrot.lane.b32.xlu0 %v5496, 127
  %v5542 = vpop.permute.xlu0 %5541
  %v5543 = vsel %vm95, %v5540, %v5542
  %v5544 = vsel %vm95, %v5542, %v5540
  %v5545 = vld [vmem:[%s98] sm:$0xff]
  %v5546 = vld [vmem:[%s98 + $0x8] sm:$0xff]
  %v5547 = vmul.f32 %v5543, %v5545
  %v5548 = vmul.f32 %v5544, %v5546
  %5549 = vrot.lane.b32.xlu0 %v5495, 113
  %v5550 = vpop.permute.xlu0 %5549
  %5551 = vrot.lane.b32.xlu0 %v5496, 113
  %v5552 = vpop.permute.xlu0 %5551
  %v5553 = vsel %vm107, %v5550, %v5552
  %v5554 = vsel %vm107, %v5552, %v5550
  %v5555 = vld [vmem:[%s110] sm:$0xff]
  %v5556 = vld [vmem:[%s110 + $0x8] sm:$0xff]
  %v5557 = vmul.f32 %v5553, %v5555
  %v5558 = vmul.f32 %v5554, %v5556
  %5559 = vrot.lane.b32.xlu0 %v5495, 112
  %v5560 = vpop.permute.xlu0 %5559
  %5561 = vrot.lane.b32.xlu0 %v5496, 112
  %v5562 = vpop.permute.xlu0 %5561
  %v5563 = vsel %vm119, %v5560, %v5562
  %v5564 = vsel %vm119, %v5562, %v5560
  %v5565 = vld [vmem:[%s122] sm:$0xff]
  %v5566 = vld [vmem:[%s122 + $0x8] sm:$0xff]
  %v5567 = vmul.f32 %v5563, %v5565
  %v5568 = vmul.f32 %v5564, %v5566
  %5569 = vrot.lane.b32.xlu0 %v5495, 111
  %v5570 = vpop.permute.xlu0 %5569
  %5571 = vrot.lane.b32.xlu0 %v5496, 111
  %v5572 = vpop.permute.xlu0 %5571
  %v5573 = vsel %vm131, %v5570, %v5572
  %v5574 = vsel %vm131, %v5572, %v5570
  %v5575 = vld [vmem:[%s134] sm:$0xff]
  %v5576 = vld [vmem:[%s134 + $0x8] sm:$0xff]
  %v5577 = vmul.f32 %v5573, %v5575
  %v5578 = vmul.f32 %v5574, %v5576
  %v5579 = vld [vmem:[%s4] sm:$0xff]
  %v5580 = vld [vmem:[%s1192] sm:$0xff]
  %v5582 = vsel %vm142, %v5580, 0
  %5584 = vmatpush.msra.mxu0 0.0
  %5585 = vmatpush.msra.mxu0 0.0
  %5586 = vmatpush.msra.mxu0 0.0
  %5587 = vmatpush.msra.mxu0 0.0
  %5588 = vmatpush.msra.mxu0 0.0
  %5589 = vmatpush.msra.mxu0 0.0
  %5590 = vmatpush.msra.mxu0 0.0
  %5591 = vmatpush.msra.mxu0 0.0
  %5592 = vmatpush.msra.mxu0 0.0
  %5593 = vmatpush.msra.mxu0 0.0
  %5594 = vmatpush.msra.mxu0 0.0
  %5595 = vmatpush.msra.mxu0 0.0
  %5596 = vmatpush.msra.mxu0 0.0
  %5597 = vmatpush.msra.mxu0 0.0
  %5598 = vmatpush.msra.mxu0 0.0
  %5599 = vmatpush.msra.mxu0 %v4489
  %5600 = vmatmul.f32.gmra.mxu0 %v5582
  %v5601 = vpop.f32.mrf.mxu0
  %v5602 = vadd.f32 0.0, %v5601
  %5603 = vdwg.mxu0
  %5604 = vmatpush.msra.mxu0 0.0
  %5605 = vmatpush.msra.mxu0 0.0
  %5606 = vmatpush.msra.mxu0 0.0
  %5607 = vmatpush.msra.mxu0 0.0
  %5608 = vmatpush.msra.mxu0 0.0
  %5609 = vmatpush.msra.mxu0 0.0
  %5610 = vmatpush.msra.mxu0 0.0
  %5611 = vmatpush.msra.mxu0 0.0
  %5612 = vmatpush.msra.mxu0 0.0
  %5613 = vmatpush.msra.mxu0 0.0
  %5614 = vmatpush.msra.mxu0 0.0
  %5615 = vmatpush.msra.mxu0 0.0
  %5616 = vmatpush.msra.mxu0 0.0
  %5617 = vmatpush.msra.mxu0 0.0
  %5618 = vmatpush.msra.mxu0 0.0
  %5619 = vmatpush.msra.mxu0 %v4490
  %5620 = vmatmul.f32.gmra.mxu0 %v5582
  %v5621 = vpop.f32.mrf.mxu0
  %v5622 = vadd.f32 0.0, %v5621
  %5623 = vdwg.mxu0
  %v5625 = vsel %vm142, %v5579, 0
  %5627 = vmatpush.msra.mxu0 0.0
  %5628 = vmatpush.msra.mxu0 0.0
  %5629 = vmatpush.msra.mxu0 0.0
  %5630 = vmatpush.msra.mxu0 0.0
  %5631 = vmatpush.msra.mxu0 0.0
  %5632 = vmatpush.msra.mxu0 0.0
  %5633 = vmatpush.msra.mxu0 0.0
  %5634 = vmatpush.msra.mxu0 0.0
  %5635 = vmatpush.msra.mxu0 0.0
  %5636 = vmatpush.msra.mxu0 0.0
  %5637 = vmatpush.msra.mxu0 0.0
  %5638 = vmatpush.msra.mxu0 0.0
  %5639 = vmatpush.msra.mxu0 0.0
  %5640 = vmatpush.msra.mxu0 0.0
  %5641 = vmatpush.msra.mxu0 0.0
  %5642 = vmatpush.msra.mxu0 %v4479
  %5643 = vmatmul.f32.gmra.mxu0 %v5625
  %v5644 = vpop.f32.mrf.mxu0
  %v5645 = vadd.f32 %v5602, %v5644
  %5646 = vdwg.mxu0
  %5647 = vmatpush.msra.mxu0 0.0
  %5648 = vmatpush.msra.mxu0 0.0
  %5649 = vmatpush.msra.mxu0 0.0
  %5650 = vmatpush.msra.mxu0 0.0
  %5651 = vmatpush.msra.mxu0 0.0
  %5652 = vmatpush.msra.mxu0 0.0
  %5653 = vmatpush.msra.mxu0 0.0
  %5654 = vmatpush.msra.mxu0 0.0
  %5655 = vmatpush.msra.mxu0 0.0
  %5656 = vmatpush.msra.mxu0 0.0
  %5657 = vmatpush.msra.mxu0 0.0
  %5658 = vmatpush.msra.mxu0 0.0
  %5659 = vmatpush.msra.mxu0 0.0
  %5660 = vmatpush.msra.mxu0 0.0
  %5661 = vmatpush.msra.mxu0 0.0
  %5662 = vmatpush.msra.mxu0 %v4480
  %5663 = vmatmul.f32.gmra.mxu0 %v5625
  %v5664 = vpop.f32.mrf.mxu0
  %v5665 = vadd.f32 %v5622, %v5664
  %5666 = vdwg.mxu0
  %v5667 = vld [vmem:[%s1280] sm:$0xff]
  %v5669 = vsel %vm142, %v5667, 0
  %5671 = vmatpush.msra.mxu0 0.0
  %5672 = vmatpush.msra.mxu0 0.0
  %5673 = vmatpush.msra.mxu0 0.0
  %5674 = vmatpush.msra.mxu0 0.0
  %5675 = vmatpush.msra.mxu0 0.0
  %5676 = vmatpush.msra.mxu0 0.0
  %5677 = vmatpush.msra.mxu0 0.0
  %5678 = vmatpush.msra.mxu0 0.0
  %5679 = vmatpush.msra.mxu0 0.0
  %5680 = vmatpush.msra.mxu0 0.0
  %5681 = vmatpush.msra.mxu0 0.0
  %5682 = vmatpush.msra.mxu0 0.0
  %5683 = vmatpush.msra.mxu0 0.0
  %5684 = vmatpush.msra.mxu0 0.0
  %5685 = vmatpush.msra.mxu0 0.0
  %5686 = vmatpush.msra.mxu0 %v4499
  %5687 = vmatmul.f32.gmra.mxu0 %v5669
  %v5688 = vpop.f32.mrf.mxu0
  %v5689 = vadd.f32 0.0, %v5688
  %5690 = vdwg.mxu0
  %5691 = vmatpush.msra.mxu0 0.0
  %5692 = vmatpush.msra.mxu0 0.0
  %5693 = vmatpush.msra.mxu0 0.0
  %5694 = vmatpush.msra.mxu0 0.0
  %5695 = vmatpush.msra.mxu0 0.0
  %5696 = vmatpush.msra.mxu0 0.0
  %5697 = vmatpush.msra.mxu0 0.0
  %5698 = vmatpush.msra.mxu0 0.0
  %5699 = vmatpush.msra.mxu0 0.0
  %5700 = vmatpush.msra.mxu0 0.0
  %5701 = vmatpush.msra.mxu0 0.0
  %5702 = vmatpush.msra.mxu0 0.0
  %5703 = vmatpush.msra.mxu0 0.0
  %5704 = vmatpush.msra.mxu0 0.0
  %5705 = vmatpush.msra.mxu0 0.0
  %5706 = vmatpush.msra.mxu0 %v4500
  %5707 = vmatmul.f32.gmra.mxu0 %v5669
  %v5708 = vpop.f32.mrf.mxu0
  %v5709 = vadd.f32 0.0, %v5708
  %5710 = vdwg.mxu0
  %v5711 = vadd.f32 %v5645, %v5689
  %v5712 = vadd.f32 %v5665, %v5709
  %v5713 = vld [vmem:[%s1327] sm:$0xff]
  %v5715 = vsel %vm142, %v5713, 0
  %5717 = vmatpush.msra.mxu0 0.0
  %5718 = vmatpush.msra.mxu0 0.0
  %5719 = vmatpush.msra.mxu0 0.0
  %5720 = vmatpush.msra.mxu0 0.0
  %5721 = vmatpush.msra.mxu0 0.0
  %5722 = vmatpush.msra.mxu0 0.0
  %5723 = vmatpush.msra.mxu0 0.0
  %5724 = vmatpush.msra.mxu0 0.0
  %5725 = vmatpush.msra.mxu0 0.0
  %5726 = vmatpush.msra.mxu0 0.0
  %5727 = vmatpush.msra.mxu0 0.0
  %5728 = vmatpush.msra.mxu0 0.0
  %5729 = vmatpush.msra.mxu0 0.0
  %5730 = vmatpush.msra.mxu0 0.0
  %5731 = vmatpush.msra.mxu0 0.0
  %5732 = vmatpush.msra.mxu0 %v4509
  %5733 = vmatmul.f32.gmra.mxu0 %v5715
  %v5734 = vpop.f32.mrf.mxu0
  %v5735 = vadd.f32 0.0, %v5734
  %5736 = vdwg.mxu0
  %5737 = vmatpush.msra.mxu0 0.0
  %5738 = vmatpush.msra.mxu0 0.0
  %5739 = vmatpush.msra.mxu0 0.0
  %5740 = vmatpush.msra.mxu0 0.0
  %5741 = vmatpush.msra.mxu0 0.0
  %5742 = vmatpush.msra.mxu0 0.0
  %5743 = vmatpush.msra.mxu0 0.0
  %5744 = vmatpush.msra.mxu0 0.0
  %5745 = vmatpush.msra.mxu0 0.0
  %5746 = vmatpush.msra.mxu0 0.0
  %5747 = vmatpush.msra.mxu0 0.0
  %5748 = vmatpush.msra.mxu0 0.0
  %5749 = vmatpush.msra.mxu0 0.0
  %5750 = vmatpush.msra.mxu0 0.0
  %5751 = vmatpush.msra.mxu0 0.0
  %5752 = vmatpush.msra.mxu0 %v4510
  %5753 = vmatmul.f32.gmra.mxu0 %v5715
  %v5754 = vpop.f32.mrf.mxu0
  %v5755 = vadd.f32 0.0, %v5754
  %5756 = vdwg.mxu0
  %v5757 = vadd.f32 %v5711, %v5735
  %v5758 = vadd.f32 %v5712, %v5755
  %v5759 = vld [vmem:[%s1374] sm:$0xff]
  %v5761 = vsel %vm142, %v5759, 0
  %5763 = vmatpush.msra.mxu0 0.0
  %5764 = vmatpush.msra.mxu0 0.0
  %5765 = vmatpush.msra.mxu0 0.0
  %5766 = vmatpush.msra.mxu0 0.0
  %5767 = vmatpush.msra.mxu0 0.0
  %5768 = vmatpush.msra.mxu0 0.0
  %5769 = vmatpush.msra.mxu0 0.0
  %5770 = vmatpush.msra.mxu0 0.0
  %5771 = vmatpush.msra.mxu0 0.0
  %5772 = vmatpush.msra.mxu0 0.0
  %5773 = vmatpush.msra.mxu0 0.0
  %5774 = vmatpush.msra.mxu0 0.0
  %5775 = vmatpush.msra.mxu0 0.0
  %5776 = vmatpush.msra.mxu0 0.0
  %5777 = vmatpush.msra.mxu0 0.0
  %5778 = vmatpush.msra.mxu0 %v4466
  %5779 = vmatmul.f32.gmra.mxu0 %v5761
  %v5780 = vpop.f32.mrf.mxu0
  %v5781 = vadd.f32 0.0, %v5780
  %5782 = vdwg.mxu0
  %5783 = vmatpush.msra.mxu0 0.0
  %5784 = vmatpush.msra.mxu0 0.0
  %5785 = vmatpush.msra.mxu0 0.0
  %5786 = vmatpush.msra.mxu0 0.0
  %5787 = vmatpush.msra.mxu0 0.0
  %5788 = vmatpush.msra.mxu0 0.0
  %5789 = vmatpush.msra.mxu0 0.0
  %5790 = vmatpush.msra.mxu0 0.0
  %5791 = vmatpush.msra.mxu0 0.0
  %5792 = vmatpush.msra.mxu0 0.0
  %5793 = vmatpush.msra.mxu0 0.0
  %5794 = vmatpush.msra.mxu0 0.0
  %5795 = vmatpush.msra.mxu0 0.0
  %5796 = vmatpush.msra.mxu0 0.0
  %5797 = vmatpush.msra.mxu0 0.0
  %5798 = vmatpush.msra.mxu0 %v4467
  %5799 = vmatmul.f32.gmra.mxu0 %v5761
  %v5800 = vpop.f32.mrf.mxu0
  %v5801 = vadd.f32 0.0, %v5800
  %5802 = vdwg.mxu0
  %v5803 = vadd.f32 %v5757, %v5781
  %v5804 = vadd.f32 %v5758, %v5801
  %v5805 = vld [vmem:[%s1421] sm:$0xff]
  %v5807 = vsel %vm142, %v5805, 0
  %5809 = vmatpush.msra.mxu0 0.0
  %5810 = vmatpush.msra.mxu0 0.0
  %5811 = vmatpush.msra.mxu0 0.0
  %5812 = vmatpush.msra.mxu0 0.0
  %5813 = vmatpush.msra.mxu0 0.0
  %5814 = vmatpush.msra.mxu0 0.0
  %5815 = vmatpush.msra.mxu0 0.0
  %5816 = vmatpush.msra.mxu0 0.0
  %5817 = vmatpush.msra.mxu0 0.0
  %5818 = vmatpush.msra.mxu0 0.0
  %5819 = vmatpush.msra.mxu0 0.0
  %5820 = vmatpush.msra.mxu0 0.0
  %5821 = vmatpush.msra.mxu0 0.0
  %5822 = vmatpush.msra.mxu0 0.0
  %5823 = vmatpush.msra.mxu0 0.0
  %5824 = vmatpush.msra.mxu0 %v4519
  %5825 = vmatmul.f32.gmra.mxu0 %v5807
  %v5826 = vpop.f32.mrf.mxu0
  %v5827 = vadd.f32 0.0, %v5826
  %5828 = vdwg.mxu0
  %5829 = vmatpush.msra.mxu0 0.0
  %5830 = vmatpush.msra.mxu0 0.0
  %5831 = vmatpush.msra.mxu0 0.0
  %5832 = vmatpush.msra.mxu0 0.0
  %5833 = vmatpush.msra.mxu0 0.0
  %5834 = vmatpush.msra.mxu0 0.0
  %5835 = vmatpush.msra.mxu0 0.0
  %5836 = vmatpush.msra.mxu0 0.0
  %5837 = vmatpush.msra.mxu0 0.0
  %5838 = vmatpush.msra.mxu0 0.0
  %5839 = vmatpush.msra.mxu0 0.0
  %5840 = vmatpush.msra.mxu0 0.0
  %5841 = vmatpush.msra.mxu0 0.0
  %5842 = vmatpush.msra.mxu0 0.0
  %5843 = vmatpush.msra.mxu0 0.0
  %5844 = vmatpush.msra.mxu0 %v4520
  %5845 = vmatmul.f32.gmra.mxu0 %v5807
  %v5846 = vpop.f32.mrf.mxu0
  %v5847 = vadd.f32 0.0, %v5846
  %5848 = vdwg.mxu0
  %v5849 = vadd.f32 %v5803, %v5827
  %v5850 = vadd.f32 %v5804, %v5847
  %v5851 = vld [vmem:[%s1468] sm:$0xff]
  %v5853 = vsel %vm142, %v5851, 0
  %5855 = vmatpush.msra.mxu0 0.0
  %5856 = vmatpush.msra.mxu0 0.0
  %5857 = vmatpush.msra.mxu0 0.0
  %5858 = vmatpush.msra.mxu0 0.0
  %5859 = vmatpush.msra.mxu0 0.0
  %5860 = vmatpush.msra.mxu0 0.0
  %5861 = vmatpush.msra.mxu0 0.0
  %5862 = vmatpush.msra.mxu0 0.0
  %5863 = vmatpush.msra.mxu0 0.0
  %5864 = vmatpush.msra.mxu0 0.0
  %5865 = vmatpush.msra.mxu0 0.0
  %5866 = vmatpush.msra.mxu0 0.0
  %5867 = vmatpush.msra.mxu0 0.0
  %5868 = vmatpush.msra.mxu0 0.0
  %5869 = vmatpush.msra.mxu0 0.0
  %5870 = vmatpush.msra.mxu0 %v4529
  %5871 = vmatmul.f32.gmra.mxu0 %v5853
  %v5872 = vpop.f32.mrf.mxu0
  %v5873 = vadd.f32 0.0, %v5872
  %5874 = vdwg.mxu0
  %5875 = vmatpush.msra.mxu0 0.0
  %5876 = vmatpush.msra.mxu0 0.0
  %5877 = vmatpush.msra.mxu0 0.0
  %5878 = vmatpush.msra.mxu0 0.0
  %5879 = vmatpush.msra.mxu0 0.0
  %5880 = vmatpush.msra.mxu0 0.0
  %5881 = vmatpush.msra.mxu0 0.0
  %5882 = vmatpush.msra.mxu0 0.0
  %5883 = vmatpush.msra.mxu0 0.0
  %5884 = vmatpush.msra.mxu0 0.0
  %5885 = vmatpush.msra.mxu0 0.0
  %5886 = vmatpush.msra.mxu0 0.0
  %5887 = vmatpush.msra.mxu0 0.0
  %5888 = vmatpush.msra.mxu0 0.0
  %5889 = vmatpush.msra.mxu0 0.0
  %5890 = vmatpush.msra.mxu0 %v4530
  %5891 = vmatmul.f32.gmra.mxu0 %v5853
  %v5892 = vpop.f32.mrf.mxu0
  %v5893 = vadd.f32 0.0, %v5892
  %5894 = vdwg.mxu0
  %v5895 = vadd.f32 %v5849, %v5873
  %v5896 = vadd.f32 %v5850, %v5893
  %v5897 = vld [vmem:[%s1515] sm:$0xff]
  %v5899 = vsel %vm142, %v5897, 0
  %5901 = vmatpush.msra.mxu0 0.0
  %5902 = vmatpush.msra.mxu0 0.0
  %5903 = vmatpush.msra.mxu0 0.0
  %5904 = vmatpush.msra.mxu0 0.0
  %5905 = vmatpush.msra.mxu0 0.0
  %5906 = vmatpush.msra.mxu0 0.0
  %5907 = vmatpush.msra.mxu0 0.0
  %5908 = vmatpush.msra.mxu0 0.0
  %5909 = vmatpush.msra.mxu0 0.0
  %5910 = vmatpush.msra.mxu0 0.0
  %5911 = vmatpush.msra.mxu0 0.0
  %5912 = vmatpush.msra.mxu0 0.0
  %5913 = vmatpush.msra.mxu0 0.0
  %5914 = vmatpush.msra.mxu0 0.0
  %5915 = vmatpush.msra.mxu0 0.0
  %5916 = vmatpush.msra.mxu0 %v4539
  %5917 = vmatmul.f32.gmra.mxu0 %v5899
  %v5918 = vpop.f32.mrf.mxu0
  %v5919 = vadd.f32 0.0, %v5918
  %5920 = vdwg.mxu0
  %5921 = vmatpush.msra.mxu0 0.0
  %5922 = vmatpush.msra.mxu0 0.0
  %5923 = vmatpush.msra.mxu0 0.0
  %5924 = vmatpush.msra.mxu0 0.0
  %5925 = vmatpush.msra.mxu0 0.0
  %5926 = vmatpush.msra.mxu0 0.0
  %5927 = vmatpush.msra.mxu0 0.0
  %5928 = vmatpush.msra.mxu0 0.0
  %5929 = vmatpush.msra.mxu0 0.0
  %5930 = vmatpush.msra.mxu0 0.0
  %5931 = vmatpush.msra.mxu0 0.0
  %5932 = vmatpush.msra.mxu0 0.0
  %5933 = vmatpush.msra.mxu0 0.0
  %5934 = vmatpush.msra.mxu0 0.0
  %5935 = vmatpush.msra.mxu0 0.0
  %5936 = vmatpush.msra.mxu0 %v4540
  %5937 = vmatmul.f32.gmra.mxu0 %v5899
  %v5938 = vpop.f32.mrf.mxu0
  %v5939 = vadd.f32 0.0, %v5938
  %5940 = vdwg.mxu0
  %v5941 = vadd.f32 %v5895, %v5919
  %v5942 = vadd.f32 %v5896, %v5939
  %v5943 = vld [vmem:[%s1562] sm:$0xff]
  %v5945 = vsel %vm142, %v5943, 0
  %5947 = vmatpush.msra.mxu0 0.0
  %5948 = vmatpush.msra.mxu0 0.0
  %5949 = vmatpush.msra.mxu0 0.0
  %5950 = vmatpush.msra.mxu0 0.0
  %5951 = vmatpush.msra.mxu0 0.0
  %5952 = vmatpush.msra.mxu0 0.0
  %5953 = vmatpush.msra.mxu0 0.0
  %5954 = vmatpush.msra.mxu0 0.0
  %5955 = vmatpush.msra.mxu0 0.0
  %5956 = vmatpush.msra.mxu0 0.0
  %5957 = vmatpush.msra.mxu0 0.0
  %5958 = vmatpush.msra.mxu0 0.0
  %5959 = vmatpush.msra.mxu0 0.0
  %5960 = vmatpush.msra.mxu0 0.0
  %5961 = vmatpush.msra.mxu0 0.0
  %5962 = vmatpush.msra.mxu0 %v4549
  %5963 = vmatmul.f32.gmra.mxu0 %v5945
  %v5964 = vpop.f32.mrf.mxu0
  %v5965 = vadd.f32 0.0, %v5964
  %5966 = vdwg.mxu0
  %5967 = vmatpush.msra.mxu0 0.0
  %5968 = vmatpush.msra.mxu0 0.0
  %5969 = vmatpush.msra.mxu0 0.0
  %5970 = vmatpush.msra.mxu0 0.0
  %5971 = vmatpush.msra.mxu0 0.0
  %5972 = vmatpush.msra.mxu0 0.0
  %5973 = vmatpush.msra.mxu0 0.0
  %5974 = vmatpush.msra.mxu0 0.0
  %5975 = vmatpush.msra.mxu0 0.0
  %5976 = vmatpush.msra.mxu0 0.0
  %5977 = vmatpush.msra.mxu0 0.0
  %5978 = vmatpush.msra.mxu0 0.0
  %5979 = vmatpush.msra.mxu0 0.0
  %5980 = vmatpush.msra.mxu0 0.0
  %5981 = vmatpush.msra.mxu0 0.0
  %5982 = vmatpush.msra.mxu0 %v4550
  %5983 = vmatmul.f32.gmra.mxu0 %v5945
  %v5984 = vpop.f32.mrf.mxu0
  %v5985 = vadd.f32 0.0, %v5984
  %5986 = vdwg.mxu0
  %v5987 = vadd.f32 %v5941, %v5965
  %v5988 = vadd.f32 %v5942, %v5985
  %v5989 = vld [vmem:[%s5] sm:$0xff]
  %v5991 = vsel %vm142, %v5989, 0
  %5993 = vmatpush.msra.mxu0 0.0
  %5994 = vmatpush.msra.mxu0 0.0
  %5995 = vmatpush.msra.mxu0 0.0
  %5996 = vmatpush.msra.mxu0 0.0
  %5997 = vmatpush.msra.mxu0 0.0
  %5998 = vmatpush.msra.mxu0 0.0
  %5999 = vmatpush.msra.mxu0 0.0
  %6000 = vmatpush.msra.mxu0 0.0
  %6001 = vmatpush.msra.mxu0 0.0
  %6002 = vmatpush.msra.mxu0 0.0
  %6003 = vmatpush.msra.mxu0 0.0
  %6004 = vmatpush.msra.mxu0 0.0
  %6005 = vmatpush.msra.mxu0 0.0
  %6006 = vmatpush.msra.mxu0 0.0
  %6007 = vmatpush.msra.mxu0 0.0
  %6008 = vmatpush.msra.mxu0 %v5507
  %6009 = vmatmul.f32.gmra.mxu0 %v5991
  %v6010 = vpop.f32.mrf.mxu0
  %v6011 = vadd.f32 0.0, %v6010
  %6012 = vdwg.mxu0
  %6013 = vmatpush.msra.mxu0 0.0
  %6014 = vmatpush.msra.mxu0 0.0
  %6015 = vmatpush.msra.mxu0 0.0
  %6016 = vmatpush.msra.mxu0 0.0
  %6017 = vmatpush.msra.mxu0 0.0
  %6018 = vmatpush.msra.mxu0 0.0
  %6019 = vmatpush.msra.mxu0 0.0
  %6020 = vmatpush.msra.mxu0 0.0
  %6021 = vmatpush.msra.mxu0 0.0
  %6022 = vmatpush.msra.mxu0 0.0
  %6023 = vmatpush.msra.mxu0 0.0
  %6024 = vmatpush.msra.mxu0 0.0
  %6025 = vmatpush.msra.mxu0 0.0
  %6026 = vmatpush.msra.mxu0 0.0
  %6027 = vmatpush.msra.mxu0 0.0
  %6028 = vmatpush.msra.mxu0 %v5508
  %6029 = vmatmul.f32.gmra.mxu0 %v5991
  %v6030 = vpop.f32.mrf.mxu0
  %v6031 = vadd.f32 0.0, %v6030
  %6032 = vdwg.mxu0
  %v6033 = vadd.f32 %v5987, %v6011
  %v6034 = vadd.f32 %v5988, %v6031
  %v6035 = vld [vmem:[%s1655] sm:$0xff]
  %v6037 = vsel %vm142, %v6035, 0
  %6039 = vmatpush.msra.mxu0 0.0
  %6040 = vmatpush.msra.mxu0 0.0
  %6041 = vmatpush.msra.mxu0 0.0
  %6042 = vmatpush.msra.mxu0 0.0
  %6043 = vmatpush.msra.mxu0 0.0
  %6044 = vmatpush.msra.mxu0 0.0
  %6045 = vmatpush.msra.mxu0 0.0
  %6046 = vmatpush.msra.mxu0 0.0
  %6047 = vmatpush.msra.mxu0 0.0
  %6048 = vmatpush.msra.mxu0 0.0
  %6049 = vmatpush.msra.mxu0 0.0
  %6050 = vmatpush.msra.mxu0 0.0
  %6051 = vmatpush.msra.mxu0 0.0
  %6052 = vmatpush.msra.mxu0 0.0
  %6053 = vmatpush.msra.mxu0 0.0
  %6054 = vmatpush.msra.mxu0 %v5517
  %6055 = vmatmul.f32.gmra.mxu0 %v6037
  %v6056 = vpop.f32.mrf.mxu0
  %v6057 = vadd.f32 0.0, %v6056
  %6058 = vdwg.mxu0
  %6059 = vmatpush.msra.mxu0 0.0
  %6060 = vmatpush.msra.mxu0 0.0
  %6061 = vmatpush.msra.mxu0 0.0
  %6062 = vmatpush.msra.mxu0 0.0
  %6063 = vmatpush.msra.mxu0 0.0
  %6064 = vmatpush.msra.mxu0 0.0
  %6065 = vmatpush.msra.mxu0 0.0
  %6066 = vmatpush.msra.mxu0 0.0
  %6067 = vmatpush.msra.mxu0 0.0
  %6068 = vmatpush.msra.mxu0 0.0
  %6069 = vmatpush.msra.mxu0 0.0
  %6070 = vmatpush.msra.mxu0 0.0
  %6071 = vmatpush.msra.mxu0 0.0
  %6072 = vmatpush.msra.mxu0 0.0
  %6073 = vmatpush.msra.mxu0 0.0
  %6074 = vmatpush.msra.mxu0 %v5518
  %6075 = vmatmul.f32.gmra.mxu0 %v6037
  %v6076 = vpop.f32.mrf.mxu0
  %v6077 = vadd.f32 0.0, %v6076
  %6078 = vdwg.mxu0
  %v6079 = vadd.f32 %v6033, %v6057
  %v6080 = vadd.f32 %v6034, %v6077
  %v6081 = vld [vmem:[%s1702] sm:$0xff]
  %v6083 = vsel %vm142, %v6081, 0
  %6085 = vmatpush.msra.mxu0 0.0
  %6086 = vmatpush.msra.mxu0 0.0
  %6087 = vmatpush.msra.mxu0 0.0
  %6088 = vmatpush.msra.mxu0 0.0
  %6089 = vmatpush.msra.mxu0 0.0
  %6090 = vmatpush.msra.mxu0 0.0
  %6091 = vmatpush.msra.mxu0 0.0
  %6092 = vmatpush.msra.mxu0 0.0
  %6093 = vmatpush.msra.mxu0 0.0
  %6094 = vmatpush.msra.mxu0 0.0
  %6095 = vmatpush.msra.mxu0 0.0
  %6096 = vmatpush.msra.mxu0 0.0
  %6097 = vmatpush.msra.mxu0 0.0
  %6098 = vmatpush.msra.mxu0 0.0
  %6099 = vmatpush.msra.mxu0 0.0
  %6100 = vmatpush.msra.mxu0 %v5527
  %6101 = vmatmul.f32.gmra.mxu0 %v6083
  %v6102 = vpop.f32.mrf.mxu0
  %v6103 = vadd.f32 0.0, %v6102
  %6104 = vdwg.mxu0
  %6105 = vmatpush.msra.mxu0 0.0
  %6106 = vmatpush.msra.mxu0 0.0
  %6107 = vmatpush.msra.mxu0 0.0
  %6108 = vmatpush.msra.mxu0 0.0
  %6109 = vmatpush.msra.mxu0 0.0
  %6110 = vmatpush.msra.mxu0 0.0
  %6111 = vmatpush.msra.mxu0 0.0
  %6112 = vmatpush.msra.mxu0 0.0
  %6113 = vmatpush.msra.mxu0 0.0
  %6114 = vmatpush.msra.mxu0 0.0
  %6115 = vmatpush.msra.mxu0 0.0
  %6116 = vmatpush.msra.mxu0 0.0
  %6117 = vmatpush.msra.mxu0 0.0
  %6118 = vmatpush.msra.mxu0 0.0
  %6119 = vmatpush.msra.mxu0 0.0
  %6120 = vmatpush.msra.mxu0 %v5528
  %6121 = vmatmul.f32.gmra.mxu0 %v6083
  %v6122 = vpop.f32.mrf.mxu0
  %v6123 = vadd.f32 0.0, %v6122
  %6124 = vdwg.mxu0
  %v6125 = vadd.f32 %v6079, %v6103
  %v6126 = vadd.f32 %v6080, %v6123
  %v6127 = vld [vmem:[%s1749] sm:$0xff]
  %v6129 = vsel %vm142, %v6127, 0
  %6131 = vmatpush.msra.mxu0 0.0
  %6132 = vmatpush.msra.mxu0 0.0
  %6133 = vmatpush.msra.mxu0 0.0
  %6134 = vmatpush.msra.mxu0 0.0
  %6135 = vmatpush.msra.mxu0 0.0
  %6136 = vmatpush.msra.mxu0 0.0
  %6137 = vmatpush.msra.mxu0 0.0
  %6138 = vmatpush.msra.mxu0 0.0
  %6139 = vmatpush.msra.mxu0 0.0
  %6140 = vmatpush.msra.mxu0 0.0
  %6141 = vmatpush.msra.mxu0 0.0
  %6142 = vmatpush.msra.mxu0 0.0
  %6143 = vmatpush.msra.mxu0 0.0
  %6144 = vmatpush.msra.mxu0 0.0
  %6145 = vmatpush.msra.mxu0 0.0
  %6146 = vmatpush.msra.mxu0 %v5537
  %6147 = vmatmul.f32.gmra.mxu0 %v6129
  %v6148 = vpop.f32.mrf.mxu0
  %v6149 = vadd.f32 0.0, %v6148
  %6150 = vdwg.mxu0
  %6151 = vmatpush.msra.mxu0 0.0
  %6152 = vmatpush.msra.mxu0 0.0
  %6153 = vmatpush.msra.mxu0 0.0
  %6154 = vmatpush.msra.mxu0 0.0
  %6155 = vmatpush.msra.mxu0 0.0
  %6156 = vmatpush.msra.mxu0 0.0
  %6157 = vmatpush.msra.mxu0 0.0
  %6158 = vmatpush.msra.mxu0 0.0
  %6159 = vmatpush.msra.mxu0 0.0
  %6160 = vmatpush.msra.mxu0 0.0
  %6161 = vmatpush.msra.mxu0 0.0
  %6162 = vmatpush.msra.mxu0 0.0
  %6163 = vmatpush.msra.mxu0 0.0
  %6164 = vmatpush.msra.mxu0 0.0
  %6165 = vmatpush.msra.mxu0 0.0
  %6166 = vmatpush.msra.mxu0 %v5538
  %6167 = vmatmul.f32.gmra.mxu0 %v6129
  %v6168 = vpop.f32.mrf.mxu0
  %v6169 = vadd.f32 0.0, %v6168
  %6170 = vdwg.mxu0
  %v6171 = vadd.f32 %v6125, %v6149
  %v6172 = vadd.f32 %v6126, %v6169
  %v6173 = vld [vmem:[%s1796] sm:$0xff]
  %v6175 = vsel %vm142, %v6173, 0
  %6177 = vmatpush.msra.mxu0 0.0
  %6178 = vmatpush.msra.mxu0 0.0
  %6179 = vmatpush.msra.mxu0 0.0
  %6180 = vmatpush.msra.mxu0 0.0
  %6181 = vmatpush.msra.mxu0 0.0
  %6182 = vmatpush.msra.mxu0 0.0
  %6183 = vmatpush.msra.mxu0 0.0
  %6184 = vmatpush.msra.mxu0 0.0
  %6185 = vmatpush.msra.mxu0 0.0
  %6186 = vmatpush.msra.mxu0 0.0
  %6187 = vmatpush.msra.mxu0 0.0
  %6188 = vmatpush.msra.mxu0 0.0
  %6189 = vmatpush.msra.mxu0 0.0
  %6190 = vmatpush.msra.mxu0 0.0
  %6191 = vmatpush.msra.mxu0 0.0
  %6192 = vmatpush.msra.mxu0 %v5495
  %6193 = vmatmul.f32.gmra.mxu0 %v6175
  %v6194 = vpop.f32.mrf.mxu0
  %v6195 = vadd.f32 0.0, %v6194
  %6196 = vdwg.mxu0
  %6197 = vmatpush.msra.mxu0 0.0
  %6198 = vmatpush.msra.mxu0 0.0
  %6199 = vmatpush.msra.mxu0 0.0
  %6200 = vmatpush.msra.mxu0 0.0
  %6201 = vmatpush.msra.mxu0 0.0
  %6202 = vmatpush.msra.mxu0 0.0
  %6203 = vmatpush.msra.mxu0 0.0
  %6204 = vmatpush.msra.mxu0 0.0
  %6205 = vmatpush.msra.mxu0 0.0
  %6206 = vmatpush.msra.mxu0 0.0
  %6207 = vmatpush.msra.mxu0 0.0
  %6208 = vmatpush.msra.mxu0 0.0
  %6209 = vmatpush.msra.mxu0 0.0
  %6210 = vmatpush.msra.mxu0 0.0
  %6211 = vmatpush.msra.mxu0 0.0
  %6212 = vmatpush.msra.mxu0 %v5496
  %6213 = vmatmul.f32.gmra.mxu0 %v6175
  %v6214 = vpop.f32.mrf.mxu0
  %v6215 = vadd.f32 0.0, %v6214
  %6216 = vdwg.mxu0
  %v6217 = vadd.f32 %v6171, %v6195
  %v6218 = vadd.f32 %v6172, %v6215
  %v6219 = vld [vmem:[%s1843] sm:$0xff]
  %v6221 = vsel %vm142, %v6219, 0
  %6223 = vmatpush.msra.mxu0 0.0
  %6224 = vmatpush.msra.mxu0 0.0
  %6225 = vmatpush.msra.mxu0 0.0
  %6226 = vmatpush.msra.mxu0 0.0
  %6227 = vmatpush.msra.mxu0 0.0
  %6228 = vmatpush.msra.mxu0 0.0
  %6229 = vmatpush.msra.mxu0 0.0
  %6230 = vmatpush.msra.mxu0 0.0
  %6231 = vmatpush.msra.mxu0 0.0
  %6232 = vmatpush.msra.mxu0 0.0
  %6233 = vmatpush.msra.mxu0 0.0
  %6234 = vmatpush.msra.mxu0 0.0
  %6235 = vmatpush.msra.mxu0 0.0
  %6236 = vmatpush.msra.mxu0 0.0
  %6237 = vmatpush.msra.mxu0 0.0
  %6238 = vmatpush.msra.mxu0 %v5547
  %6239 = vmatmul.f32.gmra.mxu0 %v6221
  %v6240 = vpop.f32.mrf.mxu0
  %v6241 = vadd.f32 0.0, %v6240
  %6242 = vdwg.mxu0
  %6243 = vmatpush.msra.mxu0 0.0
  %6244 = vmatpush.msra.mxu0 0.0
  %6245 = vmatpush.msra.mxu0 0.0
  %6246 = vmatpush.msra.mxu0 0.0
  %6247 = vmatpush.msra.mxu0 0.0
  %6248 = vmatpush.msra.mxu0 0.0
  %6249 = vmatpush.msra.mxu0 0.0
  %6250 = vmatpush.msra.mxu0 0.0
  %6251 = vmatpush.msra.mxu0 0.0
  %6252 = vmatpush.msra.mxu0 0.0
  %6253 = vmatpush.msra.mxu0 0.0
  %6254 = vmatpush.msra.mxu0 0.0
  %6255 = vmatpush.msra.mxu0 0.0
  %6256 = vmatpush.msra.mxu0 0.0
  %6257 = vmatpush.msra.mxu0 0.0
  %6258 = vmatpush.msra.mxu0 %v5548
  %6259 = vmatmul.f32.gmra.mxu0 %v6221
  %v6260 = vpop.f32.mrf.mxu0
  %v6261 = vadd.f32 0.0, %v6260
  %6262 = vdwg.mxu0
  %v6263 = vadd.f32 %v6217, %v6241
  %v6264 = vadd.f32 %v6218, %v6261
  %v6265 = vld [vmem:[%s1890] sm:$0xff]
  %v6267 = vsel %vm142, %v6265, 0
  %6269 = vmatpush.msra.mxu0 0.0
  %6270 = vmatpush.msra.mxu0 0.0
  %6271 = vmatpush.msra.mxu0 0.0
  %6272 = vmatpush.msra.mxu0 0.0
  %6273 = vmatpush.msra.mxu0 0.0
  %6274 = vmatpush.msra.mxu0 0.0
  %6275 = vmatpush.msra.mxu0 0.0
  %6276 = vmatpush.msra.mxu0 0.0
  %6277 = vmatpush.msra.mxu0 0.0
  %6278 = vmatpush.msra.mxu0 0.0
  %6279 = vmatpush.msra.mxu0 0.0
  %6280 = vmatpush.msra.mxu0 0.0
  %6281 = vmatpush.msra.mxu0 0.0
  %6282 = vmatpush.msra.mxu0 0.0
  %6283 = vmatpush.msra.mxu0 0.0
  %6284 = vmatpush.msra.mxu0 %v5557
  %6285 = vmatmul.f32.gmra.mxu0 %v6267
  %v6286 = vpop.f32.mrf.mxu0
  %v6287 = vadd.f32 0.0, %v6286
  %6288 = vdwg.mxu0
  %6289 = vmatpush.msra.mxu0 0.0
  %6290 = vmatpush.msra.mxu0 0.0
  %6291 = vmatpush.msra.mxu0 0.0
  %6292 = vmatpush.msra.mxu0 0.0
  %6293 = vmatpush.msra.mxu0 0.0
  %6294 = vmatpush.msra.mxu0 0.0
  %6295 = vmatpush.msra.mxu0 0.0
  %6296 = vmatpush.msra.mxu0 0.0
  %6297 = vmatpush.msra.mxu0 0.0
  %6298 = vmatpush.msra.mxu0 0.0
  %6299 = vmatpush.msra.mxu0 0.0
  %6300 = vmatpush.msra.mxu0 0.0
  %6301 = vmatpush.msra.mxu0 0.0
  %6302 = vmatpush.msra.mxu0 0.0
  %6303 = vmatpush.msra.mxu0 0.0
  %6304 = vmatpush.msra.mxu0 %v5558
  %6305 = vmatmul.f32.gmra.mxu0 %v6267
  %v6306 = vpop.f32.mrf.mxu0
  %v6307 = vadd.f32 0.0, %v6306
  %6308 = vdwg.mxu0
  %v6309 = vadd.f32 %v6263, %v6287
  %v6310 = vadd.f32 %v6264, %v6307
  %v6311 = vld [vmem:[%s1937] sm:$0xff]
  %v6313 = vsel %vm142, %v6311, 0
  %6315 = vmatpush.msra.mxu0 0.0
  %6316 = vmatpush.msra.mxu0 0.0
  %6317 = vmatpush.msra.mxu0 0.0
  %6318 = vmatpush.msra.mxu0 0.0
  %6319 = vmatpush.msra.mxu0 0.0
  %6320 = vmatpush.msra.mxu0 0.0
  %6321 = vmatpush.msra.mxu0 0.0
  %6322 = vmatpush.msra.mxu0 0.0
  %6323 = vmatpush.msra.mxu0 0.0
  %6324 = vmatpush.msra.mxu0 0.0
  %6325 = vmatpush.msra.mxu0 0.0
  %6326 = vmatpush.msra.mxu0 0.0
  %6327 = vmatpush.msra.mxu0 0.0
  %6328 = vmatpush.msra.mxu0 0.0
  %6329 = vmatpush.msra.mxu0 0.0
  %6330 = vmatpush.msra.mxu0 %v5567
  %6331 = vmatmul.f32.gmra.mxu0 %v6313
  %v6332 = vpop.f32.mrf.mxu0
  %v6333 = vadd.f32 0.0, %v6332
  %6334 = vdwg.mxu0
  %6335 = vmatpush.msra.mxu0 0.0
  %6336 = vmatpush.msra.mxu0 0.0
  %6337 = vmatpush.msra.mxu0 0.0
  %6338 = vmatpush.msra.mxu0 0.0
  %6339 = vmatpush.msra.mxu0 0.0
  %6340 = vmatpush.msra.mxu0 0.0
  %6341 = vmatpush.msra.mxu0 0.0
  %6342 = vmatpush.msra.mxu0 0.0
  %6343 = vmatpush.msra.mxu0 0.0
  %6344 = vmatpush.msra.mxu0 0.0
  %6345 = vmatpush.msra.mxu0 0.0
  %6346 = vmatpush.msra.mxu0 0.0
  %6347 = vmatpush.msra.mxu0 0.0
  %6348 = vmatpush.msra.mxu0 0.0
  %6349 = vmatpush.msra.mxu0 0.0
  %6350 = vmatpush.msra.mxu0 %v5568
  %6351 = vmatmul.f32.gmra.mxu0 %v6313
  %v6352 = vpop.f32.mrf.mxu0
  %v6353 = vadd.f32 0.0, %v6352
  %6354 = vdwg.mxu0
  %v6355 = vadd.f32 %v6309, %v6333
  %v6356 = vadd.f32 %v6310, %v6353
  %v6357 = vld [vmem:[%s1984] sm:$0xff]
  %v6359 = vsel %vm142, %v6357, 0
  %6361 = vmatpush.msra.mxu0 0.0
  %6362 = vmatpush.msra.mxu0 0.0
  %6363 = vmatpush.msra.mxu0 0.0
  %6364 = vmatpush.msra.mxu0 0.0
  %6365 = vmatpush.msra.mxu0 0.0
  %6366 = vmatpush.msra.mxu0 0.0
  %6367 = vmatpush.msra.mxu0 0.0
  %6368 = vmatpush.msra.mxu0 0.0
  %6369 = vmatpush.msra.mxu0 0.0
  %6370 = vmatpush.msra.mxu0 0.0
  %6371 = vmatpush.msra.mxu0 0.0
  %6372 = vmatpush.msra.mxu0 0.0
  %6373 = vmatpush.msra.mxu0 0.0
  %6374 = vmatpush.msra.mxu0 0.0
  %6375 = vmatpush.msra.mxu0 0.0
  %6376 = vmatpush.msra.mxu0 %v5577
  %6377 = vmatmul.f32.gmra.mxu0 %v6359
  %v6378 = vpop.f32.mrf.mxu0
  %v6379 = vadd.f32 0.0, %v6378
  %6380 = vdwg.mxu0
  %6381 = vmatpush.msra.mxu0 0.0
  %6382 = vmatpush.msra.mxu0 0.0
  %6383 = vmatpush.msra.mxu0 0.0
  %6384 = vmatpush.msra.mxu0 0.0
  %6385 = vmatpush.msra.mxu0 0.0
  %6386 = vmatpush.msra.mxu0 0.0
  %6387 = vmatpush.msra.mxu0 0.0
  %6388 = vmatpush.msra.mxu0 0.0
  %6389 = vmatpush.msra.mxu0 0.0
  %6390 = vmatpush.msra.mxu0 0.0
  %6391 = vmatpush.msra.mxu0 0.0
  %6392 = vmatpush.msra.mxu0 0.0
  %6393 = vmatpush.msra.mxu0 0.0
  %6394 = vmatpush.msra.mxu0 0.0
  %6395 = vmatpush.msra.mxu0 0.0
  %6396 = vmatpush.msra.mxu0 %v5578
  %6397 = vmatmul.f32.gmra.mxu0 %v6359
  %v6398 = vpop.f32.mrf.mxu0
  %v6399 = vadd.f32 0.0, %v6398
  %6400 = vdwg.mxu0
  %v6401 = vadd.f32 %v6355, %v6379
  %v6402 = vadd.f32 %v6356, %v6399
  %v6403 = vadd.f32 %v6401, %v6402
  %6404 = vadd.xlane.f32.xlu0 %v6403
  %v6405 = vpop.xlane.xlu0 %6404
  %v6406 = vmul.f32 %v6405, %v567
  %v6407 = vsub.f32 %v6401, %v6406
  %v6408 = vsub.f32 %v6402, %v6406
  %v6409 = vmul.f32 %v6407, %v6407
  %v6410 = vmul.f32 %v6408, %v6408
  %v6411 = vadd.f32 %v6409, %v6410
  %6412 = vadd.xlane.f32.xlu0 %v6411
  %v6413 = vpop.xlane.xlu0 %6412
  %v6414 = vmul.f32 %v6413, %v567
  %v6415 = vadd.f32 %v6414, 1e-05
  %v6416 = vrsqrt.pop %v6415
  %v6417 = vmul.f32 %v6416, %v6415
  %v6418 = vmul.f32 %v6417, %v6416
  %v6419 = vmul.f32 0.5, %v6418
  %v6420 = vsub.f32 1.5, %v6419
  %v6421 = vmul.f32 %v6416, %v6420
  %vm6422 = vweird.f32 %v6415
  %vm6423 = vweird.f32 %v6416
  %vm6424 = vmor %vm6422, %vm6423
  %v6425 = vsel %vm6424, %v6416, %v6421
  %v6426 = vmul.f32 %v6407, %v6425
  %v6427 = vmul.f32 %v6408, %v6425
  %vm6428 = vcmp.ge.f32.partialorder %v6426, 0.0
  %vm6429 = vcmp.ge.f32.partialorder %v6427, 0.0
  %v6430 = vmul.f32 %v6426, 0.01
  %v6431 = vmul.f32 %v6427, 0.01
  %v6432 = vsel %vm6428, %v6426, %v6430
  %v6433 = vsel %vm6429, %v6427, %v6431
  %6434 = vrot.lane.b32.xlu0 %v6432, 17
  %v6435 = vpop.permute.xlu0 %6434
  %6436 = vrot.lane.b32.xlu0 %v6433, 17
  %v6437 = vpop.permute.xlu0 %6436
  %v6438 = vsel %vm48, %v6435, %v6437
  %v6439 = vsel %vm48, %v6437, %v6435
  %v6440 = vmul.f32 %v6439, %v5505
  %v6441 = vmul.f32 %v6438, %v5506
  %6442 = vrot.lane.b32.xlu0 %v6432, 16
  %v6443 = vpop.permute.xlu0 %6442
  %6444 = vrot.lane.b32.xlu0 %v6433, 16
  %v6445 = vpop.permute.xlu0 %6444
  %v6446 = vsel %vm59, %v6443, %v6445
  %v6447 = vsel %vm59, %v6445, %v6443
  %v6448 = vmul.f32 %v6447, %v5515
  %v6449 = vmul.f32 %v6446, %v5516
  %6450 = vrot.lane.b32.xlu0 %v6432, 15
  %v6451 = vpop.permute.xlu0 %6450
  %6452 = vrot.lane.b32.xlu0 %v6433, 15
  %v6453 = vpop.permute.xlu0 %6452
  %v6454 = vsel %vm71, %v6451, %v6453
  %v6455 = vsel %vm71, %v6453, %v6451
  %v6456 = vmul.f32 %v6455, %v5525
  %v6457 = vmul.f32 %v6454, %v5526
  %6458 = vrot.lane.b32.xlu0 %v6432, 1
  %v6459 = vpop.permute.xlu0 %6458
  %6460 = vrot.lane.b32.xlu0 %v6433, 1
  %v6461 = vpop.permute.xlu0 %6460
  %v6462 = vsel %vm83, %v6459, %v6461
  %v6463 = vsel %vm83, %v6461, %v6459
  %v6464 = vmul.f32 %v6463, %v5535
  %v6465 = vmul.f32 %v6462, %v5536
  %6466 = vrot.lane.b32.xlu0 %v6432, 127
  %v6467 = vpop.permute.xlu0 %6466
  %6468 = vrot.lane.b32.xlu0 %v6433, 127
  %v6469 = vpop.permute.xlu0 %6468
  %v6470 = vsel %vm95, %v6467, %v6469
  %v6471 = vsel %vm95, %v6469, %v6467
  %v6472 = vmul.f32 %v6470, %v5545
  %v6473 = vmul.f32 %v6471, %v5546
  %6474 = vrot.lane.b32.xlu0 %v6432, 113
  %v6475 = vpop.permute.xlu0 %6474
  %6476 = vrot.lane.b32.xlu0 %v6433, 113
  %v6477 = vpop.permute.xlu0 %6476
  %v6478 = vsel %vm107, %v6475, %v6477
  %v6479 = vsel %vm107, %v6477, %v6475
  %v6480 = vmul.f32 %v6478, %v5555
  %v6481 = vmul.f32 %v6479, %v5556
  %6482 = vrot.lane.b32.xlu0 %v6432, 112
  %v6483 = vpop.permute.xlu0 %6482
  %6484 = vrot.lane.b32.xlu0 %v6433, 112
  %v6485 = vpop.permute.xlu0 %6484
  %v6486 = vsel %vm119, %v6483, %v6485
  %v6487 = vsel %vm119, %v6485, %v6483
  %v6488 = vmul.f32 %v6486, %v5565
  %v6489 = vmul.f32 %v6487, %v5566
  %6490 = vrot.lane.b32.xlu0 %v6432, 111
  %v6491 = vpop.permute.xlu0 %6490
  %6492 = vrot.lane.b32.xlu0 %v6433, 111
  %v6493 = vpop.permute.xlu0 %6492
  %v6494 = vsel %vm131, %v6491, %v6493
  %v6495 = vsel %vm131, %v6493, %v6491
  %v6496 = vmul.f32 %v6494, %v5575
  %v6497 = vmul.f32 %v6495, %v5576
  %v6498 = vld [vmem:[%s6] sm:$0xff]
  %v6499 = vld [vmem:[%s2127] sm:$0xff]
  %v6501 = vsel %vm142, %v6499, 0
  %6503 = vmatpush.msra.mxu0 0.0
  %6504 = vmatpush.msra.mxu0 0.0
  %6505 = vmatpush.msra.mxu0 0.0
  %6506 = vmatpush.msra.mxu0 0.0
  %6507 = vmatpush.msra.mxu0 0.0
  %6508 = vmatpush.msra.mxu0 0.0
  %6509 = vmatpush.msra.mxu0 0.0
  %6510 = vmatpush.msra.mxu0 0.0
  %6511 = vmatpush.msra.mxu0 0.0
  %6512 = vmatpush.msra.mxu0 0.0
  %6513 = vmatpush.msra.mxu0 0.0
  %6514 = vmatpush.msra.mxu0 0.0
  %6515 = vmatpush.msra.mxu0 0.0
  %6516 = vmatpush.msra.mxu0 0.0
  %6517 = vmatpush.msra.mxu0 0.0
  %6518 = vmatpush.msra.mxu0 %v6448
  %6519 = vmatmul.f32.gmra.mxu0 %v6501
  %v6520 = vpop.f32.mrf.mxu0
  %v6521 = vadd.f32 0.0, %v6520
  %6522 = vdwg.mxu0
  %6523 = vmatpush.msra.mxu0 0.0
  %6524 = vmatpush.msra.mxu0 0.0
  %6525 = vmatpush.msra.mxu0 0.0
  %6526 = vmatpush.msra.mxu0 0.0
  %6527 = vmatpush.msra.mxu0 0.0
  %6528 = vmatpush.msra.mxu0 0.0
  %6529 = vmatpush.msra.mxu0 0.0
  %6530 = vmatpush.msra.mxu0 0.0
  %6531 = vmatpush.msra.mxu0 0.0
  %6532 = vmatpush.msra.mxu0 0.0
  %6533 = vmatpush.msra.mxu0 0.0
  %6534 = vmatpush.msra.mxu0 0.0
  %6535 = vmatpush.msra.mxu0 0.0
  %6536 = vmatpush.msra.mxu0 0.0
  %6537 = vmatpush.msra.mxu0 0.0
  %6538 = vmatpush.msra.mxu0 %v6449
  %6539 = vmatmul.f32.gmra.mxu0 %v6501
  %v6540 = vpop.f32.mrf.mxu0
  %v6541 = vadd.f32 0.0, %v6540
  %6542 = vdwg.mxu0
  %v6544 = vsel %vm142, %v6498, 0
  %6546 = vmatpush.msra.mxu0 0.0
  %6547 = vmatpush.msra.mxu0 0.0
  %6548 = vmatpush.msra.mxu0 0.0
  %6549 = vmatpush.msra.mxu0 0.0
  %6550 = vmatpush.msra.mxu0 0.0
  %6551 = vmatpush.msra.mxu0 0.0
  %6552 = vmatpush.msra.mxu0 0.0
  %6553 = vmatpush.msra.mxu0 0.0
  %6554 = vmatpush.msra.mxu0 0.0
  %6555 = vmatpush.msra.mxu0 0.0
  %6556 = vmatpush.msra.mxu0 0.0
  %6557 = vmatpush.msra.mxu0 0.0
  %6558 = vmatpush.msra.mxu0 0.0
  %6559 = vmatpush.msra.mxu0 0.0
  %6560 = vmatpush.msra.mxu0 0.0
  %6561 = vmatpush.msra.mxu0 %v6440
  %6562 = vmatmul.f32.gmra.mxu0 %v6544
  %v6563 = vpop.f32.mrf.mxu0
  %v6564 = vadd.f32 %v6521, %v6563
  %6565 = vdwg.mxu0
  %6566 = vmatpush.msra.mxu0 0.0
  %6567 = vmatpush.msra.mxu0 0.0
  %6568 = vmatpush.msra.mxu0 0.0
  %6569 = vmatpush.msra.mxu0 0.0
  %6570 = vmatpush.msra.mxu0 0.0
  %6571 = vmatpush.msra.mxu0 0.0
  %6572 = vmatpush.msra.mxu0 0.0
  %6573 = vmatpush.msra.mxu0 0.0
  %6574 = vmatpush.msra.mxu0 0.0
  %6575 = vmatpush.msra.mxu0 0.0
  %6576 = vmatpush.msra.mxu0 0.0
  %6577 = vmatpush.msra.mxu0 0.0
  %6578 = vmatpush.msra.mxu0 0.0
  %6579 = vmatpush.msra.mxu0 0.0
  %6580 = vmatpush.msra.mxu0 0.0
  %6581 = vmatpush.msra.mxu0 %v6441
  %6582 = vmatmul.f32.gmra.mxu0 %v6544
  %v6583 = vpop.f32.mrf.mxu0
  %v6584 = vadd.f32 %v6541, %v6583
  %6585 = vdwg.mxu0
  %v6586 = vld [vmem:[%s2215] sm:$0xff]
  %v6588 = vsel %vm142, %v6586, 0
  %6590 = vmatpush.msra.mxu0 0.0
  %6591 = vmatpush.msra.mxu0 0.0
  %6592 = vmatpush.msra.mxu0 0.0
  %6593 = vmatpush.msra.mxu0 0.0
  %6594 = vmatpush.msra.mxu0 0.0
  %6595 = vmatpush.msra.mxu0 0.0
  %6596 = vmatpush.msra.mxu0 0.0
  %6597 = vmatpush.msra.mxu0 0.0
  %6598 = vmatpush.msra.mxu0 0.0
  %6599 = vmatpush.msra.mxu0 0.0
  %6600 = vmatpush.msra.mxu0 0.0
  %6601 = vmatpush.msra.mxu0 0.0
  %6602 = vmatpush.msra.mxu0 0.0
  %6603 = vmatpush.msra.mxu0 0.0
  %6604 = vmatpush.msra.mxu0 0.0
  %6605 = vmatpush.msra.mxu0 %v6456
  %6606 = vmatmul.f32.gmra.mxu0 %v6588
  %v6607 = vpop.f32.mrf.mxu0
  %v6608 = vadd.f32 0.0, %v6607
  %6609 = vdwg.mxu0
  %6610 = vmatpush.msra.mxu0 0.0
  %6611 = vmatpush.msra.mxu0 0.0
  %6612 = vmatpush.msra.mxu0 0.0
  %6613 = vmatpush.msra.mxu0 0.0
  %6614 = vmatpush.msra.mxu0 0.0
  %6615 = vmatpush.msra.mxu0 0.0
  %6616 = vmatpush.msra.mxu0 0.0
  %6617 = vmatpush.msra.mxu0 0.0
  %6618 = vmatpush.msra.mxu0 0.0
  %6619 = vmatpush.msra.mxu0 0.0
  %6620 = vmatpush.msra.mxu0 0.0
  %6621 = vmatpush.msra.mxu0 0.0
  %6622 = vmatpush.msra.mxu0 0.0
  %6623 = vmatpush.msra.mxu0 0.0
  %6624 = vmatpush.msra.mxu0 0.0
  %6625 = vmatpush.msra.mxu0 %v6457
  %6626 = vmatmul.f32.gmra.mxu0 %v6588
  %v6627 = vpop.f32.mrf.mxu0
  %v6628 = vadd.f32 0.0, %v6627
  %6629 = vdwg.mxu0
  %v6630 = vadd.f32 %v6564, %v6608
  %v6631 = vadd.f32 %v6584, %v6628
  %v6632 = vld [vmem:[%s2262] sm:$0xff]
  %v6634 = vsel %vm142, %v6632, 0
  %6636 = vmatpush.msra.mxu0 0.0
  %6637 = vmatpush.msra.mxu0 0.0
  %6638 = vmatpush.msra.mxu0 0.0
  %6639 = vmatpush.msra.mxu0 0.0
  %6640 = vmatpush.msra.mxu0 0.0
  %6641 = vmatpush.msra.mxu0 0.0
  %6642 = vmatpush.msra.mxu0 0.0
  %6643 = vmatpush.msra.mxu0 0.0
  %6644 = vmatpush.msra.mxu0 0.0
  %6645 = vmatpush.msra.mxu0 0.0
  %6646 = vmatpush.msra.mxu0 0.0
  %6647 = vmatpush.msra.mxu0 0.0
  %6648 = vmatpush.msra.mxu0 0.0
  %6649 = vmatpush.msra.mxu0 0.0
  %6650 = vmatpush.msra.mxu0 0.0
  %6651 = vmatpush.msra.mxu0 %v6464
  %6652 = vmatmul.f32.gmra.mxu0 %v6634
  %v6653 = vpop.f32.mrf.mxu0
  %v6654 = vadd.f32 0.0, %v6653
  %6655 = vdwg.mxu0
  %6656 = vmatpush.msra.mxu0 0.0
  %6657 = vmatpush.msra.mxu0 0.0
  %6658 = vmatpush.msra.mxu0 0.0
  %6659 = vmatpush.msra.mxu0 0.0
  %6660 = vmatpush.msra.mxu0 0.0
  %6661 = vmatpush.msra.mxu0 0.0
  %6662 = vmatpush.msra.mxu0 0.0
  %6663 = vmatpush.msra.mxu0 0.0
  %6664 = vmatpush.msra.mxu0 0.0
  %6665 = vmatpush.msra.mxu0 0.0
  %6666 = vmatpush.msra.mxu0 0.0
  %6667 = vmatpush.msra.mxu0 0.0
  %6668 = vmatpush.msra.mxu0 0.0
  %6669 = vmatpush.msra.mxu0 0.0
  %6670 = vmatpush.msra.mxu0 0.0
  %6671 = vmatpush.msra.mxu0 %v6465
  %6672 = vmatmul.f32.gmra.mxu0 %v6634
  %v6673 = vpop.f32.mrf.mxu0
  %v6674 = vadd.f32 0.0, %v6673
  %6675 = vdwg.mxu0
  %v6676 = vadd.f32 %v6630, %v6654
  %v6677 = vadd.f32 %v6631, %v6674
  %v6678 = vld [vmem:[%s2309] sm:$0xff]
  %v6680 = vsel %vm142, %v6678, 0
  %6682 = vmatpush.msra.mxu0 0.0
  %6683 = vmatpush.msra.mxu0 0.0
  %6684 = vmatpush.msra.mxu0 0.0
  %6685 = vmatpush.msra.mxu0 0.0
  %6686 = vmatpush.msra.mxu0 0.0
  %6687 = vmatpush.msra.mxu0 0.0
  %6688 = vmatpush.msra.mxu0 0.0
  %6689 = vmatpush.msra.mxu0 0.0
  %6690 = vmatpush.msra.mxu0 0.0
  %6691 = vmatpush.msra.mxu0 0.0
  %6692 = vmatpush.msra.mxu0 0.0
  %6693 = vmatpush.msra.mxu0 0.0
  %6694 = vmatpush.msra.mxu0 0.0
  %6695 = vmatpush.msra.mxu0 0.0
  %6696 = vmatpush.msra.mxu0 0.0
  %6697 = vmatpush.msra.mxu0 %v6432
  %6698 = vmatmul.f32.gmra.mxu0 %v6680
  %v6699 = vpop.f32.mrf.mxu0
  %v6700 = vadd.f32 0.0, %v6699
  %6701 = vdwg.mxu0
  %6702 = vmatpush.msra.mxu0 0.0
  %6703 = vmatpush.msra.mxu0 0.0
  %6704 = vmatpush.msra.mxu0 0.0
  %6705 = vmatpush.msra.mxu0 0.0
  %6706 = vmatpush.msra.mxu0 0.0
  %6707 = vmatpush.msra.mxu0 0.0
  %6708 = vmatpush.msra.mxu0 0.0
  %6709 = vmatpush.msra.mxu0 0.0
  %6710 = vmatpush.msra.mxu0 0.0
  %6711 = vmatpush.msra.mxu0 0.0
  %6712 = vmatpush.msra.mxu0 0.0
  %6713 = vmatpush.msra.mxu0 0.0
  %6714 = vmatpush.msra.mxu0 0.0
  %6715 = vmatpush.msra.mxu0 0.0
  %6716 = vmatpush.msra.mxu0 0.0
  %6717 = vmatpush.msra.mxu0 %v6433
  %6718 = vmatmul.f32.gmra.mxu0 %v6680
  %v6719 = vpop.f32.mrf.mxu0
  %v6720 = vadd.f32 0.0, %v6719
  %6721 = vdwg.mxu0
  %v6722 = vadd.f32 %v6676, %v6700
  %v6723 = vadd.f32 %v6677, %v6720
  %v6724 = vld [vmem:[%s2356] sm:$0xff]
  %v6726 = vsel %vm142, %v6724, 0
  %6728 = vmatpush.msra.mxu0 0.0
  %6729 = vmatpush.msra.mxu0 0.0
  %6730 = vmatpush.msra.mxu0 0.0
  %6731 = vmatpush.msra.mxu0 0.0
  %6732 = vmatpush.msra.mxu0 0.0
  %6733 = vmatpush.msra.mxu0 0.0
  %6734 = vmatpush.msra.mxu0 0.0
  %6735 = vmatpush.msra.mxu0 0.0
  %6736 = vmatpush.msra.mxu0 0.0
  %6737 = vmatpush.msra.mxu0 0.0
  %6738 = vmatpush.msra.mxu0 0.0
  %6739 = vmatpush.msra.mxu0 0.0
  %6740 = vmatpush.msra.mxu0 0.0
  %6741 = vmatpush.msra.mxu0 0.0
  %6742 = vmatpush.msra.mxu0 0.0
  %6743 = vmatpush.msra.mxu0 %v6472
  %6744 = vmatmul.f32.gmra.mxu0 %v6726
  %v6745 = vpop.f32.mrf.mxu0
  %v6746 = vadd.f32 0.0, %v6745
  %6747 = vdwg.mxu0
  %6748 = vmatpush.msra.mxu0 0.0
  %6749 = vmatpush.msra.mxu0 0.0
  %6750 = vmatpush.msra.mxu0 0.0
  %6751 = vmatpush.msra.mxu0 0.0
  %6752 = vmatpush.msra.mxu0 0.0
  %6753 = vmatpush.msra.mxu0 0.0
  %6754 = vmatpush.msra.mxu0 0.0
  %6755 = vmatpush.msra.mxu0 0.0
  %6756 = vmatpush.msra.mxu0 0.0
  %6757 = vmatpush.msra.mxu0 0.0
  %6758 = vmatpush.msra.mxu0 0.0
  %6759 = vmatpush.msra.mxu0 0.0
  %6760 = vmatpush.msra.mxu0 0.0
  %6761 = vmatpush.msra.mxu0 0.0
  %6762 = vmatpush.msra.mxu0 0.0
  %6763 = vmatpush.msra.mxu0 %v6473
  %6764 = vmatmul.f32.gmra.mxu0 %v6726
  %v6765 = vpop.f32.mrf.mxu0
  %v6766 = vadd.f32 0.0, %v6765
  %6767 = vdwg.mxu0
  %v6768 = vadd.f32 %v6722, %v6746
  %v6769 = vadd.f32 %v6723, %v6766
  %v6770 = vld [vmem:[%s2403] sm:$0xff]
  %v6772 = vsel %vm142, %v6770, 0
  %6774 = vmatpush.msra.mxu0 0.0
  %6775 = vmatpush.msra.mxu0 0.0
  %6776 = vmatpush.msra.mxu0 0.0
  %6777 = vmatpush.msra.mxu0 0.0
  %6778 = vmatpush.msra.mxu0 0.0
  %6779 = vmatpush.msra.mxu0 0.0
  %6780 = vmatpush.msra.mxu0 0.0
  %6781 = vmatpush.msra.mxu0 0.0
  %6782 = vmatpush.msra.mxu0 0.0
  %6783 = vmatpush.msra.mxu0 0.0
  %6784 = vmatpush.msra.mxu0 0.0
  %6785 = vmatpush.msra.mxu0 0.0
  %6786 = vmatpush.msra.mxu0 0.0
  %6787 = vmatpush.msra.mxu0 0.0
  %6788 = vmatpush.msra.mxu0 0.0
  %6789 = vmatpush.msra.mxu0 %v6480
  %6790 = vmatmul.f32.gmra.mxu0 %v6772
  %v6791 = vpop.f32.mrf.mxu0
  %v6792 = vadd.f32 0.0, %v6791
  %6793 = vdwg.mxu0
  %6794 = vmatpush.msra.mxu0 0.0
  %6795 = vmatpush.msra.mxu0 0.0
  %6796 = vmatpush.msra.mxu0 0.0
  %6797 = vmatpush.msra.mxu0 0.0
  %6798 = vmatpush.msra.mxu0 0.0
  %6799 = vmatpush.msra.mxu0 0.0
  %6800 = vmatpush.msra.mxu0 0.0
  %6801 = vmatpush.msra.mxu0 0.0
  %6802 = vmatpush.msra.mxu0 0.0
  %6803 = vmatpush.msra.mxu0 0.0
  %6804 = vmatpush.msra.mxu0 0.0
  %6805 = vmatpush.msra.mxu0 0.0
  %6806 = vmatpush.msra.mxu0 0.0
  %6807 = vmatpush.msra.mxu0 0.0
  %6808 = vmatpush.msra.mxu0 0.0
  %6809 = vmatpush.msra.mxu0 %v6481
  %6810 = vmatmul.f32.gmra.mxu0 %v6772
  %v6811 = vpop.f32.mrf.mxu0
  %v6812 = vadd.f32 0.0, %v6811
  %6813 = vdwg.mxu0
  %v6814 = vadd.f32 %v6768, %v6792
  %v6815 = vadd.f32 %v6769, %v6812
  %v6816 = vld [vmem:[%s2450] sm:$0xff]
  %v6818 = vsel %vm142, %v6816, 0
  %6820 = vmatpush.msra.mxu0 0.0
  %6821 = vmatpush.msra.mxu0 0.0
  %6822 = vmatpush.msra.mxu0 0.0
  %6823 = vmatpush.msra.mxu0 0.0
  %6824 = vmatpush.msra.mxu0 0.0
  %6825 = vmatpush.msra.mxu0 0.0
  %6826 = vmatpush.msra.mxu0 0.0
  %6827 = vmatpush.msra.mxu0 0.0
  %6828 = vmatpush.msra.mxu0 0.0
  %6829 = vmatpush.msra.mxu0 0.0
  %6830 = vmatpush.msra.mxu0 0.0
  %6831 = vmatpush.msra.mxu0 0.0
  %6832 = vmatpush.msra.mxu0 0.0
  %6833 = vmatpush.msra.mxu0 0.0
  %6834 = vmatpush.msra.mxu0 0.0
  %6835 = vmatpush.msra.mxu0 %v6488
  %6836 = vmatmul.f32.gmra.mxu0 %v6818
  %v6837 = vpop.f32.mrf.mxu0
  %v6838 = vadd.f32 0.0, %v6837
  %6839 = vdwg.mxu0
  %6840 = vmatpush.msra.mxu0 0.0
  %6841 = vmatpush.msra.mxu0 0.0
  %6842 = vmatpush.msra.mxu0 0.0
  %6843 = vmatpush.msra.mxu0 0.0
  %6844 = vmatpush.msra.mxu0 0.0
  %6845 = vmatpush.msra.mxu0 0.0
  %6846 = vmatpush.msra.mxu0 0.0
  %6847 = vmatpush.msra.mxu0 0.0
  %6848 = vmatpush.msra.mxu0 0.0
  %6849 = vmatpush.msra.mxu0 0.0
  %6850 = vmatpush.msra.mxu0 0.0
  %6851 = vmatpush.msra.mxu0 0.0
  %6852 = vmatpush.msra.mxu0 0.0
  %6853 = vmatpush.msra.mxu0 0.0
  %6854 = vmatpush.msra.mxu0 0.0
  %6855 = vmatpush.msra.mxu0 %v6489
  %6856 = vmatmul.f32.gmra.mxu0 %v6818
  %v6857 = vpop.f32.mrf.mxu0
  %v6858 = vadd.f32 0.0, %v6857
  %6859 = vdwg.mxu0
  %v6860 = vadd.f32 %v6814, %v6838
  %v6861 = vadd.f32 %v6815, %v6858
  %v6862 = vld [vmem:[%s2497] sm:$0xff]
  %v6864 = vsel %vm142, %v6862, 0
  %6866 = vmatpush.msra.mxu0 0.0
  %6867 = vmatpush.msra.mxu0 0.0
  %6868 = vmatpush.msra.mxu0 0.0
  %6869 = vmatpush.msra.mxu0 0.0
  %6870 = vmatpush.msra.mxu0 0.0
  %6871 = vmatpush.msra.mxu0 0.0
  %6872 = vmatpush.msra.mxu0 0.0
  %6873 = vmatpush.msra.mxu0 0.0
  %6874 = vmatpush.msra.mxu0 0.0
  %6875 = vmatpush.msra.mxu0 0.0
  %6876 = vmatpush.msra.mxu0 0.0
  %6877 = vmatpush.msra.mxu0 0.0
  %6878 = vmatpush.msra.mxu0 0.0
  %6879 = vmatpush.msra.mxu0 0.0
  %6880 = vmatpush.msra.mxu0 0.0
  %6881 = vmatpush.msra.mxu0 %v6496
  %6882 = vmatmul.f32.gmra.mxu0 %v6864
  %v6883 = vpop.f32.mrf.mxu0
  %v6884 = vadd.f32 0.0, %v6883
  %6885 = vdwg.mxu0
  %6886 = vmatpush.msra.mxu0 0.0
  %6887 = vmatpush.msra.mxu0 0.0
  %6888 = vmatpush.msra.mxu0 0.0
  %6889 = vmatpush.msra.mxu0 0.0
  %6890 = vmatpush.msra.mxu0 0.0
  %6891 = vmatpush.msra.mxu0 0.0
  %6892 = vmatpush.msra.mxu0 0.0
  %6893 = vmatpush.msra.mxu0 0.0
  %6894 = vmatpush.msra.mxu0 0.0
  %6895 = vmatpush.msra.mxu0 0.0
  %6896 = vmatpush.msra.mxu0 0.0
  %6897 = vmatpush.msra.mxu0 0.0
  %6898 = vmatpush.msra.mxu0 0.0
  %6899 = vmatpush.msra.mxu0 0.0
  %6900 = vmatpush.msra.mxu0 0.0
  %6901 = vmatpush.msra.mxu0 %v6497
  %6902 = vmatmul.f32.gmra.mxu0 %v6864
  %v6903 = vpop.f32.mrf.mxu0
  %v6904 = vadd.f32 0.0, %v6903
  %6905 = vdwg.mxu0
  %v6906 = vadd.f32 %v6860, %v6884
  %v6907 = vadd.f32 %v6861, %v6904
  %v6908 = vadd.f32 %v6906, %v6907
  %6909 = vadd.xlane.f32.xlu0 %v6908
  %v6910 = vpop.xlane.xlu0 %6909
  %v6911 = vmul.f32 %v6910, %v567
  %v6912 = vsub.f32 %v6906, %v6911
  %v6913 = vsub.f32 %v6907, %v6911
  %v6914 = vmul.f32 %v6912, %v6912
  %v6915 = vmul.f32 %v6913, %v6913
  %v6916 = vadd.f32 %v6914, %v6915
  %6917 = vadd.xlane.f32.xlu0 %v6916
  %v6918 = vpop.xlane.xlu0 %6917
  %v6919 = vmul.f32 %v6918, %v567
  %v6920 = vadd.f32 %v6919, 1e-05
  %v6921 = vrsqrt.pop %v6920
  %v6922 = vmul.f32 %v6921, %v6920
  %v6923 = vmul.f32 %v6922, %v6921
  %v6924 = vmul.f32 0.5, %v6923
  %v6925 = vsub.f32 1.5, %v6924
  %v6926 = vmul.f32 %v6921, %v6925
  %vm6927 = vweird.f32 %v6920
  %vm6928 = vweird.f32 %v6921
  %vm6929 = vmor %vm6927, %vm6928
  %v6930 = vsel %vm6929, %v6921, %v6926
  %v6931 = vmul.f32 %v6912, %v6930
  %v6932 = vmul.f32 %v6913, %v6930
  %vm6933 = vcmp.ge.f32.partialorder %v6931, 0.0
  %vm6934 = vcmp.ge.f32.partialorder %v6932, 0.0
  %v6935 = vmul.f32 %v6931, 0.01
  %v6936 = vmul.f32 %v6932, 0.01
  %v6937 = vsel %vm6933, %v6931, %v6935
  %v6938 = vsel %vm6934, %v6932, %v6936
  %6939 = vst [vmem:[%s4468 + $0x20] sm:$0xff] %v6937
  %6940 = vst [vmem:[%s4468 + $0x28] sm:$0xff] %v6938
  %6941 = vrot.lane.b32.xlu0 %v6937, 17
  %v6942 = vpop.permute.xlu0 %6941
  %6943 = vrot.lane.b32.xlu0 %v6938, 17
  %v6944 = vpop.permute.xlu0 %6943
  %v6945 = vsel %vm48, %v6942, %v6944
  %v6946 = vsel %vm48, %v6944, %v6942
  %v6947 = vld [vmem:[%s1] sm:$0xff]
  %v6948 = vld [vmem:[%s1 + $0x8] sm:$0xff]
  %v6949 = vmul.f32 %v6946, %v6947
  %v6950 = vmul.f32 %v6945, %v6948
  %6951 = vrot.lane.b32.xlu0 %v6937, 16
  %v6952 = vpop.permute.xlu0 %6951
  %6953 = vrot.lane.b32.xlu0 %v6938, 16
  %v6954 = vpop.permute.xlu0 %6953
  %v6955 = vsel %vm59, %v6952, %v6954
  %v6956 = vsel %vm59, %v6954, %v6952
  %v6957 = vld [vmem:[%s62] sm:$0xff]
  %v6958 = vld [vmem:[%s62 + $0x8] sm:$0xff]
  %v6959 = vmul.f32 %v6956, %v6957
  %v6960 = vmul.f32 %v6955, %v6958
  %6961 = vrot.lane.b32.xlu0 %v6937, 15
  %v6962 = vpop.permute.xlu0 %6961
  %6963 = vrot.lane.b32.xlu0 %v6938, 15
  %v6964 = vpop.permute.xlu0 %6963
  %v6965 = vsel %vm71, %v6962, %v6964
  %v6966 = vsel %vm71, %v6964, %v6962
  %v6967 = vld [vmem:[%s74] sm:$0xff]
  %v6968 = vld [vmem:[%s74 + $0x8] sm:$0xff]
  %v6969 = vmul.f32 %v6966, %v6967
  %v6970 = vmul.f32 %v6965, %v6968
  %6971 = vrot.lane.b32.xlu0 %v6937, 1
  %v6972 = vpop.permute.xlu0 %6971
  %6973 = vrot.lane.b32.xlu0 %v6938, 1
  %v6974 = vpop.permute.xlu0 %6973
  %v6975 = vsel %vm83, %v6972, %v6974
  %v6976 = vsel %vm83, %v6974, %v6972
  %v6977 = vld [vmem:[%s86] sm:$0xff]
  %v6978 = vld [vmem:[%s86 + $0x8] sm:$0xff]
  %v6979 = vmul.f32 %v6976, %v6977
  %v6980 = vmul.f32 %v6975, %v6978
  %6981 = vrot.lane.b32.xlu0 %v6937, 127
  %v6982 = vpop.permute.xlu0 %6981
  %6983 = vrot.lane.b32.xlu0 %v6938, 127
  %v6984 = vpop.permute.xlu0 %6983
  %v6985 = vsel %vm95, %v6982, %v6984
  %v6986 = vsel %vm95, %v6984, %v6982
  %v6987 = vld [vmem:[%s98] sm:$0xff]
  %v6988 = vld [vmem:[%s98 + $0x8] sm:$0xff]
  %v6989 = vmul.f32 %v6985, %v6987
  %v6990 = vmul.f32 %v6986, %v6988
  %6991 = vrot.lane.b32.xlu0 %v6937, 113
  %v6992 = vpop.permute.xlu0 %6991
  %6993 = vrot.lane.b32.xlu0 %v6938, 113
  %v6994 = vpop.permute.xlu0 %6993
  %v6995 = vsel %vm107, %v6992, %v6994
  %v6996 = vsel %vm107, %v6994, %v6992
  %v6997 = vld [vmem:[%s110] sm:$0xff]
  %v6998 = vld [vmem:[%s110 + $0x8] sm:$0xff]
  %v6999 = vmul.f32 %v6995, %v6997
  %v7000 = vmul.f32 %v6996, %v6998
  %7001 = vrot.lane.b32.xlu0 %v6937, 112
  %v7002 = vpop.permute.xlu0 %7001
  %7003 = vrot.lane.b32.xlu0 %v6938, 112
  %v7004 = vpop.permute.xlu0 %7003
  %v7005 = vsel %vm119, %v7002, %v7004
  %v7006 = vsel %vm119, %v7004, %v7002
  %v7007 = vld [vmem:[%s122] sm:$0xff]
  %v7008 = vld [vmem:[%s122 + $0x8] sm:$0xff]
  %v7009 = vmul.f32 %v7005, %v7007
  %v7010 = vmul.f32 %v7006, %v7008
  %7011 = vrot.lane.b32.xlu0 %v6937, 111
  %v7012 = vpop.permute.xlu0 %7011
  %7013 = vrot.lane.b32.xlu0 %v6938, 111
  %v7014 = vpop.permute.xlu0 %7013
  %v7015 = vsel %vm131, %v7012, %v7014
  %v7016 = vsel %vm131, %v7014, %v7012
  %v7017 = vld [vmem:[%s134] sm:$0xff]
  %v7018 = vld [vmem:[%s134 + $0x8] sm:$0xff]
  %v7019 = vmul.f32 %v7015, %v7017
  %v7020 = vmul.f32 %v7016, %v7018
  %v7021 = vld [vmem:[%s7] sm:$0xff]
  %v7022 = vld [vmem:[%s2658] sm:$0xff]
  %v7024 = vsel %vm142, %v7022, 0
  %7026 = vmatpush.msra.mxu0 0.0
  %7027 = vmatpush.msra.mxu0 0.0
  %7028 = vmatpush.msra.mxu0 0.0
  %7029 = vmatpush.msra.mxu0 0.0
  %7030 = vmatpush.msra.mxu0 0.0
  %7031 = vmatpush.msra.mxu0 0.0
  %7032 = vmatpush.msra.mxu0 0.0
  %7033 = vmatpush.msra.mxu0 0.0
  %7034 = vmatpush.msra.mxu0 0.0
  %7035 = vmatpush.msra.mxu0 0.0
  %7036 = vmatpush.msra.mxu0 0.0
  %7037 = vmatpush.msra.mxu0 0.0
  %7038 = vmatpush.msra.mxu0 0.0
  %7039 = vmatpush.msra.mxu0 0.0
  %7040 = vmatpush.msra.mxu0 0.0
  %7041 = vmatpush.msra.mxu0 %v4489
  %7042 = vmatmul.f32.gmra.mxu0 %v7024
  %v7043 = vpop.f32.mrf.mxu0
  %v7044 = vadd.f32 0.0, %v7043
  %7045 = vdwg.mxu0
  %7046 = vmatpush.msra.mxu0 0.0
  %7047 = vmatpush.msra.mxu0 0.0
  %7048 = vmatpush.msra.mxu0 0.0
  %7049 = vmatpush.msra.mxu0 0.0
  %7050 = vmatpush.msra.mxu0 0.0
  %7051 = vmatpush.msra.mxu0 0.0
  %7052 = vmatpush.msra.mxu0 0.0
  %7053 = vmatpush.msra.mxu0 0.0
  %7054 = vmatpush.msra.mxu0 0.0
  %7055 = vmatpush.msra.mxu0 0.0
  %7056 = vmatpush.msra.mxu0 0.0
  %7057 = vmatpush.msra.mxu0 0.0
  %7058 = vmatpush.msra.mxu0 0.0
  %7059 = vmatpush.msra.mxu0 0.0
  %7060 = vmatpush.msra.mxu0 0.0
  %7061 = vmatpush.msra.mxu0 %v4490
  %7062 = vmatmul.f32.gmra.mxu0 %v7024
  %v7063 = vpop.f32.mrf.mxu0
  %v7064 = vadd.f32 0.0, %v7063
  %7065 = vdwg.mxu0
  %v7067 = vsel %vm142, %v7021, 0
  %7069 = vmatpush.msra.mxu0 0.0
  %7070 = vmatpush.msra.mxu0 0.0
  %7071 = vmatpush.msra.mxu0 0.0
  %7072 = vmatpush.msra.mxu0 0.0
  %7073 = vmatpush.msra.mxu0 0.0
  %7074 = vmatpush.msra.mxu0 0.0
  %7075 = vmatpush.msra.mxu0 0.0
  %7076 = vmatpush.msra.mxu0 0.0
  %7077 = vmatpush.msra.mxu0 0.0
  %7078 = vmatpush.msra.mxu0 0.0
  %7079 = vmatpush.msra.mxu0 0.0
  %7080 = vmatpush.msra.mxu0 0.0
  %7081 = vmatpush.msra.mxu0 0.0
  %7082 = vmatpush.msra.mxu0 0.0
  %7083 = vmatpush.msra.mxu0 0.0
  %7084 = vmatpush.msra.mxu0 %v4479
  %7085 = vmatmul.f32.gmra.mxu0 %v7067
  %v7086 = vpop.f32.mrf.mxu0
  %v7087 = vadd.f32 %v7044, %v7086
  %7088 = vdwg.mxu0
  %7089 = vmatpush.msra.mxu0 0.0
  %7090 = vmatpush.msra.mxu0 0.0
  %7091 = vmatpush.msra.mxu0 0.0
  %7092 = vmatpush.msra.mxu0 0.0
  %7093 = vmatpush.msra.mxu0 0.0
  %7094 = vmatpush.msra.mxu0 0.0
  %7095 = vmatpush.msra.mxu0 0.0
  %7096 = vmatpush.msra.mxu0 0.0
  %7097 = vmatpush.msra.mxu0 0.0
  %7098 = vmatpush.msra.mxu0 0.0
  %7099 = vmatpush.msra.mxu0 0.0
  %7100 = vmatpush.msra.mxu0 0.0
  %7101 = vmatpush.msra.mxu0 0.0
  %7102 = vmatpush.msra.mxu0 0.0
  %7103 = vmatpush.msra.mxu0 0.0
  %7104 = vmatpush.msra.mxu0 %v4480
  %7105 = vmatmul.f32.gmra.mxu0 %v7067
  %v7106 = vpop.f32.mrf.mxu0
  %v7107 = vadd.f32 %v7064, %v7106
  %7108 = vdwg.mxu0
  %v7109 = vld [vmem:[%s2746] sm:$0xff]
  %v7111 = vsel %vm142, %v7109, 0
  %7113 = vmatpush.msra.mxu0 0.0
  %7114 = vmatpush.msra.mxu0 0.0
  %7115 = vmatpush.msra.mxu0 0.0
  %7116 = vmatpush.msra.mxu0 0.0
  %7117 = vmatpush.msra.mxu0 0.0
  %7118 = vmatpush.msra.mxu0 0.0
  %7119 = vmatpush.msra.mxu0 0.0
  %7120 = vmatpush.msra.mxu0 0.0
  %7121 = vmatpush.msra.mxu0 0.0
  %7122 = vmatpush.msra.mxu0 0.0
  %7123 = vmatpush.msra.mxu0 0.0
  %7124 = vmatpush.msra.mxu0 0.0
  %7125 = vmatpush.msra.mxu0 0.0
  %7126 = vmatpush.msra.mxu0 0.0
  %7127 = vmatpush.msra.mxu0 0.0
  %7128 = vmatpush.msra.mxu0 %v4499
  %7129 = vmatmul.f32.gmra.mxu0 %v7111
  %v7130 = vpop.f32.mrf.mxu0
  %v7131 = vadd.f32 0.0, %v7130
  %7132 = vdwg.mxu0
  %7133 = vmatpush.msra.mxu0 0.0
  %7134 = vmatpush.msra.mxu0 0.0
  %7135 = vmatpush.msra.mxu0 0.0
  %7136 = vmatpush.msra.mxu0 0.0
  %7137 = vmatpush.msra.mxu0 0.0
  %7138 = vmatpush.msra.mxu0 0.0
  %7139 = vmatpush.msra.mxu0 0.0
  %7140 = vmatpush.msra.mxu0 0.0
  %7141 = vmatpush.msra.mxu0 0.0
  %7142 = vmatpush.msra.mxu0 0.0
  %7143 = vmatpush.msra.mxu0 0.0
  %7144 = vmatpush.msra.mxu0 0.0
  %7145 = vmatpush.msra.mxu0 0.0
  %7146 = vmatpush.msra.mxu0 0.0
  %7147 = vmatpush.msra.mxu0 0.0
  %7148 = vmatpush.msra.mxu0 %v4500
  %7149 = vmatmul.f32.gmra.mxu0 %v7111
  %v7150 = vpop.f32.mrf.mxu0
  %v7151 = vadd.f32 0.0, %v7150
  %7152 = vdwg.mxu0
  %v7153 = vadd.f32 %v7087, %v7131
  %v7154 = vadd.f32 %v7107, %v7151
  %v7155 = vld [vmem:[%s2793] sm:$0xff]
  %v7157 = vsel %vm142, %v7155, 0
  %7159 = vmatpush.msra.mxu0 0.0
  %7160 = vmatpush.msra.mxu0 0.0
  %7161 = vmatpush.msra.mxu0 0.0
  %7162 = vmatpush.msra.mxu0 0.0
  %7163 = vmatpush.msra.mxu0 0.0
  %7164 = vmatpush.msra.mxu0 0.0
  %7165 = vmatpush.msra.mxu0 0.0
  %7166 = vmatpush.msra.mxu0 0.0
  %7167 = vmatpush.msra.mxu0 0.0
  %7168 = vmatpush.msra.mxu0 0.0
  %7169 = vmatpush.msra.mxu0 0.0
  %7170 = vmatpush.msra.mxu0 0.0
  %7171 = vmatpush.msra.mxu0 0.0
  %7172 = vmatpush.msra.mxu0 0.0
  %7173 = vmatpush.msra.mxu0 0.0
  %7174 = vmatpush.msra.mxu0 %v4509
  %7175 = vmatmul.f32.gmra.mxu0 %v7157
  %v7176 = vpop.f32.mrf.mxu0
  %v7177 = vadd.f32 0.0, %v7176
  %7178 = vdwg.mxu0
  %7179 = vmatpush.msra.mxu0 0.0
  %7180 = vmatpush.msra.mxu0 0.0
  %7181 = vmatpush.msra.mxu0 0.0
  %7182 = vmatpush.msra.mxu0 0.0
  %7183 = vmatpush.msra.mxu0 0.0
  %7184 = vmatpush.msra.mxu0 0.0
  %7185 = vmatpush.msra.mxu0 0.0
  %7186 = vmatpush.msra.mxu0 0.0
  %7187 = vmatpush.msra.mxu0 0.0
  %7188 = vmatpush.msra.mxu0 0.0
  %7189 = vmatpush.msra.mxu0 0.0
  %7190 = vmatpush.msra.mxu0 0.0
  %7191 = vmatpush.msra.mxu0 0.0
  %7192 = vmatpush.msra.mxu0 0.0
  %7193 = vmatpush.msra.mxu0 0.0
  %7194 = vmatpush.msra.mxu0 %v4510
  %7195 = vmatmul.f32.gmra.mxu0 %v7157
  %v7196 = vpop.f32.mrf.mxu0
  %v7197 = vadd.f32 0.0, %v7196
  %7198 = vdwg.mxu0
  %v7199 = vadd.f32 %v7153, %v7177
  %v7200 = vadd.f32 %v7154, %v7197
  %v7201 = vld [vmem:[%s2840] sm:$0xff]
  %v7203 = vsel %vm142, %v7201, 0
  %7205 = vmatpush.msra.mxu0 0.0
  %7206 = vmatpush.msra.mxu0 0.0
  %7207 = vmatpush.msra.mxu0 0.0
  %7208 = vmatpush.msra.mxu0 0.0
  %7209 = vmatpush.msra.mxu0 0.0
  %7210 = vmatpush.msra.mxu0 0.0
  %7211 = vmatpush.msra.mxu0 0.0
  %7212 = vmatpush.msra.mxu0 0.0
  %7213 = vmatpush.msra.mxu0 0.0
  %7214 = vmatpush.msra.mxu0 0.0
  %7215 = vmatpush.msra.mxu0 0.0
  %7216 = vmatpush.msra.mxu0 0.0
  %7217 = vmatpush.msra.mxu0 0.0
  %7218 = vmatpush.msra.mxu0 0.0
  %7219 = vmatpush.msra.mxu0 0.0
  %7220 = vmatpush.msra.mxu0 %v4466
  %7221 = vmatmul.f32.gmra.mxu0 %v7203
  %v7222 = vpop.f32.mrf.mxu0
  %v7223 = vadd.f32 0.0, %v7222
  %7224 = vdwg.mxu0
  %7225 = vmatpush.msra.mxu0 0.0
  %7226 = vmatpush.msra.mxu0 0.0
  %7227 = vmatpush.msra.mxu0 0.0
  %7228 = vmatpush.msra.mxu0 0.0
  %7229 = vmatpush.msra.mxu0 0.0
  %7230 = vmatpush.msra.mxu0 0.0
  %7231 = vmatpush.msra.mxu0 0.0
  %7232 = vmatpush.msra.mxu0 0.0
  %7233 = vmatpush.msra.mxu0 0.0
  %7234 = vmatpush.msra.mxu0 0.0
  %7235 = vmatpush.msra.mxu0 0.0
  %7236 = vmatpush.msra.mxu0 0.0
  %7237 = vmatpush.msra.mxu0 0.0
  %7238 = vmatpush.msra.mxu0 0.0
  %7239 = vmatpush.msra.mxu0 0.0
  %7240 = vmatpush.msra.mxu0 %v4467
  %7241 = vmatmul.f32.gmra.mxu0 %v7203
  %v7242 = vpop.f32.mrf.mxu0
  %v7243 = vadd.f32 0.0, %v7242
  %7244 = vdwg.mxu0
  %v7245 = vadd.f32 %v7199, %v7223
  %v7246 = vadd.f32 %v7200, %v7243
  %v7247 = vld [vmem:[%s2887] sm:$0xff]
  %v7249 = vsel %vm142, %v7247, 0
  %7251 = vmatpush.msra.mxu0 0.0
  %7252 = vmatpush.msra.mxu0 0.0
  %7253 = vmatpush.msra.mxu0 0.0
  %7254 = vmatpush.msra.mxu0 0.0
  %7255 = vmatpush.msra.mxu0 0.0
  %7256 = vmatpush.msra.mxu0 0.0
  %7257 = vmatpush.msra.mxu0 0.0
  %7258 = vmatpush.msra.mxu0 0.0
  %7259 = vmatpush.msra.mxu0 0.0
  %7260 = vmatpush.msra.mxu0 0.0
  %7261 = vmatpush.msra.mxu0 0.0
  %7262 = vmatpush.msra.mxu0 0.0
  %7263 = vmatpush.msra.mxu0 0.0
  %7264 = vmatpush.msra.mxu0 0.0
  %7265 = vmatpush.msra.mxu0 0.0
  %7266 = vmatpush.msra.mxu0 %v4519
  %7267 = vmatmul.f32.gmra.mxu0 %v7249
  %v7268 = vpop.f32.mrf.mxu0
  %v7269 = vadd.f32 0.0, %v7268
  %7270 = vdwg.mxu0
  %7271 = vmatpush.msra.mxu0 0.0
  %7272 = vmatpush.msra.mxu0 0.0
  %7273 = vmatpush.msra.mxu0 0.0
  %7274 = vmatpush.msra.mxu0 0.0
  %7275 = vmatpush.msra.mxu0 0.0
  %7276 = vmatpush.msra.mxu0 0.0
  %7277 = vmatpush.msra.mxu0 0.0
  %7278 = vmatpush.msra.mxu0 0.0
  %7279 = vmatpush.msra.mxu0 0.0
  %7280 = vmatpush.msra.mxu0 0.0
  %7281 = vmatpush.msra.mxu0 0.0
  %7282 = vmatpush.msra.mxu0 0.0
  %7283 = vmatpush.msra.mxu0 0.0
  %7284 = vmatpush.msra.mxu0 0.0
  %7285 = vmatpush.msra.mxu0 0.0
  %7286 = vmatpush.msra.mxu0 %v4520
  %7287 = vmatmul.f32.gmra.mxu0 %v7249
  %v7288 = vpop.f32.mrf.mxu0
  %v7289 = vadd.f32 0.0, %v7288
  %7290 = vdwg.mxu0
  %v7291 = vadd.f32 %v7245, %v7269
  %v7292 = vadd.f32 %v7246, %v7289
  %v7293 = vld [vmem:[%s2934] sm:$0xff]
  %v7295 = vsel %vm142, %v7293, 0
  %7297 = vmatpush.msra.mxu0 0.0
  %7298 = vmatpush.msra.mxu0 0.0
  %7299 = vmatpush.msra.mxu0 0.0
  %7300 = vmatpush.msra.mxu0 0.0
  %7301 = vmatpush.msra.mxu0 0.0
  %7302 = vmatpush.msra.mxu0 0.0
  %7303 = vmatpush.msra.mxu0 0.0
  %7304 = vmatpush.msra.mxu0 0.0
  %7305 = vmatpush.msra.mxu0 0.0
  %7306 = vmatpush.msra.mxu0 0.0
  %7307 = vmatpush.msra.mxu0 0.0
  %7308 = vmatpush.msra.mxu0 0.0
  %7309 = vmatpush.msra.mxu0 0.0
  %7310 = vmatpush.msra.mxu0 0.0
  %7311 = vmatpush.msra.mxu0 0.0
  %7312 = vmatpush.msra.mxu0 %v4529
  %7313 = vmatmul.f32.gmra.mxu0 %v7295
  %v7314 = vpop.f32.mrf.mxu0
  %v7315 = vadd.f32 0.0, %v7314
  %7316 = vdwg.mxu0
  %7317 = vmatpush.msra.mxu0 0.0
  %7318 = vmatpush.msra.mxu0 0.0
  %7319 = vmatpush.msra.mxu0 0.0
  %7320 = vmatpush.msra.mxu0 0.0
  %7321 = vmatpush.msra.mxu0 0.0
  %7322 = vmatpush.msra.mxu0 0.0
  %7323 = vmatpush.msra.mxu0 0.0
  %7324 = vmatpush.msra.mxu0 0.0
  %7325 = vmatpush.msra.mxu0 0.0
  %7326 = vmatpush.msra.mxu0 0.0
  %7327 = vmatpush.msra.mxu0 0.0
  %7328 = vmatpush.msra.mxu0 0.0
  %7329 = vmatpush.msra.mxu0 0.0
  %7330 = vmatpush.msra.mxu0 0.0
  %7331 = vmatpush.msra.mxu0 0.0
  %7332 = vmatpush.msra.mxu0 %v4530
  %7333 = vmatmul.f32.gmra.mxu0 %v7295
  %v7334 = vpop.f32.mrf.mxu0
  %v7335 = vadd.f32 0.0, %v7334
  %7336 = vdwg.mxu0
  %v7337 = vadd.f32 %v7291, %v7315
  %v7338 = vadd.f32 %v7292, %v7335
  %v7339 = vld [vmem:[%s2981] sm:$0xff]
  %v7341 = vsel %vm142, %v7339, 0
  %7343 = vmatpush.msra.mxu0 0.0
  %7344 = vmatpush.msra.mxu0 0.0
  %7345 = vmatpush.msra.mxu0 0.0
  %7346 = vmatpush.msra.mxu0 0.0
  %7347 = vmatpush.msra.mxu0 0.0
  %7348 = vmatpush.msra.mxu0 0.0
  %7349 = vmatpush.msra.mxu0 0.0
  %7350 = vmatpush.msra.mxu0 0.0
  %7351 = vmatpush.msra.mxu0 0.0
  %7352 = vmatpush.msra.mxu0 0.0
  %7353 = vmatpush.msra.mxu0 0.0
  %7354 = vmatpush.msra.mxu0 0.0
  %7355 = vmatpush.msra.mxu0 0.0
  %7356 = vmatpush.msra.mxu0 0.0
  %7357 = vmatpush.msra.mxu0 0.0
  %7358 = vmatpush.msra.mxu0 %v4539
  %7359 = vmatmul.f32.gmra.mxu0 %v7341
  %v7360 = vpop.f32.mrf.mxu0
  %v7361 = vadd.f32 0.0, %v7360
  %7362 = vdwg.mxu0
  %7363 = vmatpush.msra.mxu0 0.0
  %7364 = vmatpush.msra.mxu0 0.0
  %7365 = vmatpush.msra.mxu0 0.0
  %7366 = vmatpush.msra.mxu0 0.0
  %7367 = vmatpush.msra.mxu0 0.0
  %7368 = vmatpush.msra.mxu0 0.0
  %7369 = vmatpush.msra.mxu0 0.0
  %7370 = vmatpush.msra.mxu0 0.0
  %7371 = vmatpush.msra.mxu0 0.0
  %7372 = vmatpush.msra.mxu0 0.0
  %7373 = vmatpush.msra.mxu0 0.0
  %7374 = vmatpush.msra.mxu0 0.0
  %7375 = vmatpush.msra.mxu0 0.0
  %7376 = vmatpush.msra.mxu0 0.0
  %7377 = vmatpush.msra.mxu0 0.0
  %7378 = vmatpush.msra.mxu0 %v4540
  %7379 = vmatmul.f32.gmra.mxu0 %v7341
  %v7380 = vpop.f32.mrf.mxu0
  %v7381 = vadd.f32 0.0, %v7380
  %7382 = vdwg.mxu0
  %v7383 = vadd.f32 %v7337, %v7361
  %v7384 = vadd.f32 %v7338, %v7381
  %v7385 = vld [vmem:[%s3028] sm:$0xff]
  %v7387 = vsel %vm142, %v7385, 0
  %7389 = vmatpush.msra.mxu0 0.0
  %7390 = vmatpush.msra.mxu0 0.0
  %7391 = vmatpush.msra.mxu0 0.0
  %7392 = vmatpush.msra.mxu0 0.0
  %7393 = vmatpush.msra.mxu0 0.0
  %7394 = vmatpush.msra.mxu0 0.0
  %7395 = vmatpush.msra.mxu0 0.0
  %7396 = vmatpush.msra.mxu0 0.0
  %7397 = vmatpush.msra.mxu0 0.0
  %7398 = vmatpush.msra.mxu0 0.0
  %7399 = vmatpush.msra.mxu0 0.0
  %7400 = vmatpush.msra.mxu0 0.0
  %7401 = vmatpush.msra.mxu0 0.0
  %7402 = vmatpush.msra.mxu0 0.0
  %7403 = vmatpush.msra.mxu0 0.0
  %7404 = vmatpush.msra.mxu0 %v4549
  %7405 = vmatmul.f32.gmra.mxu0 %v7387
  %v7406 = vpop.f32.mrf.mxu0
  %v7407 = vadd.f32 0.0, %v7406
  %7408 = vdwg.mxu0
  %7409 = vmatpush.msra.mxu0 0.0
  %7410 = vmatpush.msra.mxu0 0.0
  %7411 = vmatpush.msra.mxu0 0.0
  %7412 = vmatpush.msra.mxu0 0.0
  %7413 = vmatpush.msra.mxu0 0.0
  %7414 = vmatpush.msra.mxu0 0.0
  %7415 = vmatpush.msra.mxu0 0.0
  %7416 = vmatpush.msra.mxu0 0.0
  %7417 = vmatpush.msra.mxu0 0.0
  %7418 = vmatpush.msra.mxu0 0.0
  %7419 = vmatpush.msra.mxu0 0.0
  %7420 = vmatpush.msra.mxu0 0.0
  %7421 = vmatpush.msra.mxu0 0.0
  %7422 = vmatpush.msra.mxu0 0.0
  %7423 = vmatpush.msra.mxu0 0.0
  %7424 = vmatpush.msra.mxu0 %v4550
  %7425 = vmatmul.f32.gmra.mxu0 %v7387
  %v7426 = vpop.f32.mrf.mxu0
  %v7427 = vadd.f32 0.0, %v7426
  %7428 = vdwg.mxu0
  %v7429 = vadd.f32 %v7383, %v7407
  %v7430 = vadd.f32 %v7384, %v7427
  %v7431 = vld [vmem:[%s8] sm:$0xff]
  %v7433 = vsel %vm142, %v7431, 0
  %7435 = vmatpush.msra.mxu0 0.0
  %7436 = vmatpush.msra.mxu0 0.0
  %7437 = vmatpush.msra.mxu0 0.0
  %7438 = vmatpush.msra.mxu0 0.0
  %7439 = vmatpush.msra.mxu0 0.0
  %7440 = vmatpush.msra.mxu0 0.0
  %7441 = vmatpush.msra.mxu0 0.0
  %7442 = vmatpush.msra.mxu0 0.0
  %7443 = vmatpush.msra.mxu0 0.0
  %7444 = vmatpush.msra.mxu0 0.0
  %7445 = vmatpush.msra.mxu0 0.0
  %7446 = vmatpush.msra.mxu0 0.0
  %7447 = vmatpush.msra.mxu0 0.0
  %7448 = vmatpush.msra.mxu0 0.0
  %7449 = vmatpush.msra.mxu0 0.0
  %7450 = vmatpush.msra.mxu0 %v5507
  %7451 = vmatmul.f32.gmra.mxu0 %v7433
  %v7452 = vpop.f32.mrf.mxu0
  %v7453 = vadd.f32 0.0, %v7452
  %7454 = vdwg.mxu0
  %7455 = vmatpush.msra.mxu0 0.0
  %7456 = vmatpush.msra.mxu0 0.0
  %7457 = vmatpush.msra.mxu0 0.0
  %7458 = vmatpush.msra.mxu0 0.0
  %7459 = vmatpush.msra.mxu0 0.0
  %7460 = vmatpush.msra.mxu0 0.0
  %7461 = vmatpush.msra.mxu0 0.0
  %7462 = vmatpush.msra.mxu0 0.0
  %7463 = vmatpush.msra.mxu0 0.0
  %7464 = vmatpush.msra.mxu0 0.0
  %7465 = vmatpush.msra.mxu0 0.0
  %7466 = vmatpush.msra.mxu0 0.0
  %7467 = vmatpush.msra.mxu0 0.0
  %7468 = vmatpush.msra.mxu0 0.0
  %7469 = vmatpush.msra.mxu0 0.0
  %7470 = vmatpush.msra.mxu0 %v5508
  %7471 = vmatmul.f32.gmra.mxu0 %v7433
  %v7472 = vpop.f32.mrf.mxu0
  %v7473 = vadd.f32 0.0, %v7472
  %7474 = vdwg.mxu0
  %v7475 = vadd.f32 %v7429, %v7453
  %v7476 = vadd.f32 %v7430, %v7473
  %v7477 = vld [vmem:[%s3121] sm:$0xff]
  %v7479 = vsel %vm142, %v7477, 0
  %7481 = vmatpush.msra.mxu0 0.0
  %7482 = vmatpush.msra.mxu0 0.0
  %7483 = vmatpush.msra.mxu0 0.0
  %7484 = vmatpush.msra.mxu0 0.0
  %7485 = vmatpush.msra.mxu0 0.0
  %7486 = vmatpush.msra.mxu0 0.0
  %7487 = vmatpush.msra.mxu0 0.0
  %7488 = vmatpush.msra.mxu0 0.0
  %7489 = vmatpush.msra.mxu0 0.0
  %7490 = vmatpush.msra.mxu0 0.0
  %7491 = vmatpush.msra.mxu0 0.0
  %7492 = vmatpush.msra.mxu0 0.0
  %7493 = vmatpush.msra.mxu0 0.0
  %7494 = vmatpush.msra.mxu0 0.0
  %7495 = vmatpush.msra.mxu0 0.0
  %7496 = vmatpush.msra.mxu0 %v5517
  %7497 = vmatmul.f32.gmra.mxu0 %v7479
  %v7498 = vpop.f32.mrf.mxu0
  %v7499 = vadd.f32 0.0, %v7498
  %7500 = vdwg.mxu0
  %7501 = vmatpush.msra.mxu0 0.0
  %7502 = vmatpush.msra.mxu0 0.0
  %7503 = vmatpush.msra.mxu0 0.0
  %7504 = vmatpush.msra.mxu0 0.0
  %7505 = vmatpush.msra.mxu0 0.0
  %7506 = vmatpush.msra.mxu0 0.0
  %7507 = vmatpush.msra.mxu0 0.0
  %7508 = vmatpush.msra.mxu0 0.0
  %7509 = vmatpush.msra.mxu0 0.0
  %7510 = vmatpush.msra.mxu0 0.0
  %7511 = vmatpush.msra.mxu0 0.0
  %7512 = vmatpush.msra.mxu0 0.0
  %7513 = vmatpush.msra.mxu0 0.0
  %7514 = vmatpush.msra.mxu0 0.0
  %7515 = vmatpush.msra.mxu0 0.0
  %7516 = vmatpush.msra.mxu0 %v5518
  %7517 = vmatmul.f32.gmra.mxu0 %v7479
  %v7518 = vpop.f32.mrf.mxu0
  %v7519 = vadd.f32 0.0, %v7518
  %7520 = vdwg.mxu0
  %v7521 = vadd.f32 %v7475, %v7499
  %v7522 = vadd.f32 %v7476, %v7519
  %v7523 = vld [vmem:[%s3168] sm:$0xff]
  %v7525 = vsel %vm142, %v7523, 0
  %7527 = vmatpush.msra.mxu0 0.0
  %7528 = vmatpush.msra.mxu0 0.0
  %7529 = vmatpush.msra.mxu0 0.0
  %7530 = vmatpush.msra.mxu0 0.0
  %7531 = vmatpush.msra.mxu0 0.0
  %7532 = vmatpush.msra.mxu0 0.0
  %7533 = vmatpush.msra.mxu0 0.0
  %7534 = vmatpush.msra.mxu0 0.0
  %7535 = vmatpush.msra.mxu0 0.0
  %7536 = vmatpush.msra.mxu0 0.0
  %7537 = vmatpush.msra.mxu0 0.0
  %7538 = vmatpush.msra.mxu0 0.0
  %7539 = vmatpush.msra.mxu0 0.0
  %7540 = vmatpush.msra.mxu0 0.0
  %7541 = vmatpush.msra.mxu0 0.0
  %7542 = vmatpush.msra.mxu0 %v5527
  %7543 = vmatmul.f32.gmra.mxu0 %v7525
  %v7544 = vpop.f32.mrf.mxu0
  %v7545 = vadd.f32 0.0, %v7544
  %7546 = vdwg.mxu0
  %7547 = vmatpush.msra.mxu0 0.0
  %7548 = vmatpush.msra.mxu0 0.0
  %7549 = vmatpush.msra.mxu0 0.0
  %7550 = vmatpush.msra.mxu0 0.0
  %7551 = vmatpush.msra.mxu0 0.0
  %7552 = vmatpush.msra.mxu0 0.0
  %7553 = vmatpush.msra.mxu0 0.0
  %7554 = vmatpush.msra.mxu0 0.0
  %7555 = vmatpush.msra.mxu0 0.0
  %7556 = vmatpush.msra.mxu0 0.0
  %7557 = vmatpush.msra.mxu0 0.0
  %7558 = vmatpush.msra.mxu0 0.0
  %7559 = vmatpush.msra.mxu0 0.0
  %7560 = vmatpush.msra.mxu0 0.0
  %7561 = vmatpush.msra.mxu0 0.0
  %7562 = vmatpush.msra.mxu0 %v5528
  %7563 = vmatmul.f32.gmra.mxu0 %v7525
  %v7564 = vpop.f32.mrf.mxu0
  %v7565 = vadd.f32 0.0, %v7564
  %7566 = vdwg.mxu0
  %v7567 = vadd.f32 %v7521, %v7545
  %v7568 = vadd.f32 %v7522, %v7565
  %v7569 = vld [vmem:[%s3215] sm:$0xff]
  %v7571 = vsel %vm142, %v7569, 0
  %7573 = vmatpush.msra.mxu0 0.0
  %7574 = vmatpush.msra.mxu0 0.0
  %7575 = vmatpush.msra.mxu0 0.0
  %7576 = vmatpush.msra.mxu0 0.0
  %7577 = vmatpush.msra.mxu0 0.0
  %7578 = vmatpush.msra.mxu0 0.0
  %7579 = vmatpush.msra.mxu0 0.0
  %7580 = vmatpush.msra.mxu0 0.0
  %7581 = vmatpush.msra.mxu0 0.0
  %7582 = vmatpush.msra.mxu0 0.0
  %7583 = vmatpush.msra.mxu0 0.0
  %7584 = vmatpush.msra.mxu0 0.0
  %7585 = vmatpush.msra.mxu0 0.0
  %7586 = vmatpush.msra.mxu0 0.0
  %7587 = vmatpush.msra.mxu0 0.0
  %7588 = vmatpush.msra.mxu0 %v5537
  %7589 = vmatmul.f32.gmra.mxu0 %v7571
  %v7590 = vpop.f32.mrf.mxu0
  %v7591 = vadd.f32 0.0, %v7590
  %7592 = vdwg.mxu0
  %7593 = vmatpush.msra.mxu0 0.0
  %7594 = vmatpush.msra.mxu0 0.0
  %7595 = vmatpush.msra.mxu0 0.0
  %7596 = vmatpush.msra.mxu0 0.0
  %7597 = vmatpush.msra.mxu0 0.0
  %7598 = vmatpush.msra.mxu0 0.0
  %7599 = vmatpush.msra.mxu0 0.0
  %7600 = vmatpush.msra.mxu0 0.0
  %7601 = vmatpush.msra.mxu0 0.0
  %7602 = vmatpush.msra.mxu0 0.0
  %7603 = vmatpush.msra.mxu0 0.0
  %7604 = vmatpush.msra.mxu0 0.0
  %7605 = vmatpush.msra.mxu0 0.0
  %7606 = vmatpush.msra.mxu0 0.0
  %7607 = vmatpush.msra.mxu0 0.0
  %7608 = vmatpush.msra.mxu0 %v5538
  %7609 = vmatmul.f32.gmra.mxu0 %v7571
  %v7610 = vpop.f32.mrf.mxu0
  %v7611 = vadd.f32 0.0, %v7610
  %7612 = vdwg.mxu0
  %v7613 = vadd.f32 %v7567, %v7591
  %v7614 = vadd.f32 %v7568, %v7611
  %v7615 = vld [vmem:[%s3262] sm:$0xff]
  %v7617 = vsel %vm142, %v7615, 0
  %7619 = vmatpush.msra.mxu0 0.0
  %7620 = vmatpush.msra.mxu0 0.0
  %7621 = vmatpush.msra.mxu0 0.0
  %7622 = vmatpush.msra.mxu0 0.0
  %7623 = vmatpush.msra.mxu0 0.0
  %7624 = vmatpush.msra.mxu0 0.0
  %7625 = vmatpush.msra.mxu0 0.0
  %7626 = vmatpush.msra.mxu0 0.0
  %7627 = vmatpush.msra.mxu0 0.0
  %7628 = vmatpush.msra.mxu0 0.0
  %7629 = vmatpush.msra.mxu0 0.0
  %7630 = vmatpush.msra.mxu0 0.0
  %7631 = vmatpush.msra.mxu0 0.0
  %7632 = vmatpush.msra.mxu0 0.0
  %7633 = vmatpush.msra.mxu0 0.0
  %7634 = vmatpush.msra.mxu0 %v5495
  %7635 = vmatmul.f32.gmra.mxu0 %v7617
  %v7636 = vpop.f32.mrf.mxu0
  %v7637 = vadd.f32 0.0, %v7636
  %7638 = vdwg.mxu0
  %7639 = vmatpush.msra.mxu0 0.0
  %7640 = vmatpush.msra.mxu0 0.0
  %7641 = vmatpush.msra.mxu0 0.0
  %7642 = vmatpush.msra.mxu0 0.0
  %7643 = vmatpush.msra.mxu0 0.0
  %7644 = vmatpush.msra.mxu0 0.0
  %7645 = vmatpush.msra.mxu0 0.0
  %7646 = vmatpush.msra.mxu0 0.0
  %7647 = vmatpush.msra.mxu0 0.0
  %7648 = vmatpush.msra.mxu0 0.0
  %7649 = vmatpush.msra.mxu0 0.0
  %7650 = vmatpush.msra.mxu0 0.0
  %7651 = vmatpush.msra.mxu0 0.0
  %7652 = vmatpush.msra.mxu0 0.0
  %7653 = vmatpush.msra.mxu0 0.0
  %7654 = vmatpush.msra.mxu0 %v5496
  %7655 = vmatmul.f32.gmra.mxu0 %v7617
  %v7656 = vpop.f32.mrf.mxu0
  %v7657 = vadd.f32 0.0, %v7656
  %7658 = vdwg.mxu0
  %v7659 = vadd.f32 %v7613, %v7637
  %v7660 = vadd.f32 %v7614, %v7657
  %v7661 = vld [vmem:[%s3309] sm:$0xff]
  %v7663 = vsel %vm142, %v7661, 0
  %7665 = vmatpush.msra.mxu0 0.0
  %7666 = vmatpush.msra.mxu0 0.0
  %7667 = vmatpush.msra.mxu0 0.0
  %7668 = vmatpush.msra.mxu0 0.0
  %7669 = vmatpush.msra.mxu0 0.0
  %7670 = vmatpush.msra.mxu0 0.0
  %7671 = vmatpush.msra.mxu0 0.0
  %7672 = vmatpush.msra.mxu0 0.0
  %7673 = vmatpush.msra.mxu0 0.0
  %7674 = vmatpush.msra.mxu0 0.0
  %7675 = vmatpush.msra.mxu0 0.0
  %7676 = vmatpush.msra.mxu0 0.0
  %7677 = vmatpush.msra.mxu0 0.0
  %7678 = vmatpush.msra.mxu0 0.0
  %7679 = vmatpush.msra.mxu0 0.0
  %7680 = vmatpush.msra.mxu0 %v5547
  %7681 = vmatmul.f32.gmra.mxu0 %v7663
  %v7682 = vpop.f32.mrf.mxu0
  %v7683 = vadd.f32 0.0, %v7682
  %7684 = vdwg.mxu0
  %7685 = vmatpush.msra.mxu0 0.0
  %7686 = vmatpush.msra.mxu0 0.0
  %7687 = vmatpush.msra.mxu0 0.0
  %7688 = vmatpush.msra.mxu0 0.0
  %7689 = vmatpush.msra.mxu0 0.0
  %7690 = vmatpush.msra.mxu0 0.0
  %7691 = vmatpush.msra.mxu0 0.0
  %7692 = vmatpush.msra.mxu0 0.0
  %7693 = vmatpush.msra.mxu0 0.0
  %7694 = vmatpush.msra.mxu0 0.0
  %7695 = vmatpush.msra.mxu0 0.0
  %7696 = vmatpush.msra.mxu0 0.0
  %7697 = vmatpush.msra.mxu0 0.0
  %7698 = vmatpush.msra.mxu0 0.0
  %7699 = vmatpush.msra.mxu0 0.0
  %7700 = vmatpush.msra.mxu0 %v5548
  %7701 = vmatmul.f32.gmra.mxu0 %v7663
  %v7702 = vpop.f32.mrf.mxu0
  %v7703 = vadd.f32 0.0, %v7702
  %7704 = vdwg.mxu0
  %v7705 = vadd.f32 %v7659, %v7683
  %v7706 = vadd.f32 %v7660, %v7703
  %v7707 = vld [vmem:[%s3356] sm:$0xff]
  %v7709 = vsel %vm142, %v7707, 0
  %7711 = vmatpush.msra.mxu0 0.0
  %7712 = vmatpush.msra.mxu0 0.0
  %7713 = vmatpush.msra.mxu0 0.0
  %7714 = vmatpush.msra.mxu0 0.0
  %7715 = vmatpush.msra.mxu0 0.0
  %7716 = vmatpush.msra.mxu0 0.0
  %7717 = vmatpush.msra.mxu0 0.0
  %7718 = vmatpush.msra.mxu0 0.0
  %7719 = vmatpush.msra.mxu0 0.0
  %7720 = vmatpush.msra.mxu0 0.0
  %7721 = vmatpush.msra.mxu0 0.0
  %7722 = vmatpush.msra.mxu0 0.0
  %7723 = vmatpush.msra.mxu0 0.0
  %7724 = vmatpush.msra.mxu0 0.0
  %7725 = vmatpush.msra.mxu0 0.0
  %7726 = vmatpush.msra.mxu0 %v5557
  %7727 = vmatmul.f32.gmra.mxu0 %v7709
  %v7728 = vpop.f32.mrf.mxu0
  %v7729 = vadd.f32 0.0, %v7728
  %7730 = vdwg.mxu0
  %7731 = vmatpush.msra.mxu0 0.0
  %7732 = vmatpush.msra.mxu0 0.0
  %7733 = vmatpush.msra.mxu0 0.0
  %7734 = vmatpush.msra.mxu0 0.0
  %7735 = vmatpush.msra.mxu0 0.0
  %7736 = vmatpush.msra.mxu0 0.0
  %7737 = vmatpush.msra.mxu0 0.0
  %7738 = vmatpush.msra.mxu0 0.0
  %7739 = vmatpush.msra.mxu0 0.0
  %7740 = vmatpush.msra.mxu0 0.0
  %7741 = vmatpush.msra.mxu0 0.0
  %7742 = vmatpush.msra.mxu0 0.0
  %7743 = vmatpush.msra.mxu0 0.0
  %7744 = vmatpush.msra.mxu0 0.0
  %7745 = vmatpush.msra.mxu0 0.0
  %7746 = vmatpush.msra.mxu0 %v5558
  %7747 = vmatmul.f32.gmra.mxu0 %v7709
  %v7748 = vpop.f32.mrf.mxu0
  %v7749 = vadd.f32 0.0, %v7748
  %7750 = vdwg.mxu0
  %v7751 = vadd.f32 %v7705, %v7729
  %v7752 = vadd.f32 %v7706, %v7749
  %v7753 = vld [vmem:[%s3403] sm:$0xff]
  %v7755 = vsel %vm142, %v7753, 0
  %7757 = vmatpush.msra.mxu0 0.0
  %7758 = vmatpush.msra.mxu0 0.0
  %7759 = vmatpush.msra.mxu0 0.0
  %7760 = vmatpush.msra.mxu0 0.0
  %7761 = vmatpush.msra.mxu0 0.0
  %7762 = vmatpush.msra.mxu0 0.0
  %7763 = vmatpush.msra.mxu0 0.0
  %7764 = vmatpush.msra.mxu0 0.0
  %7765 = vmatpush.msra.mxu0 0.0
  %7766 = vmatpush.msra.mxu0 0.0
  %7767 = vmatpush.msra.mxu0 0.0
  %7768 = vmatpush.msra.mxu0 0.0
  %7769 = vmatpush.msra.mxu0 0.0
  %7770 = vmatpush.msra.mxu0 0.0
  %7771 = vmatpush.msra.mxu0 0.0
  %7772 = vmatpush.msra.mxu0 %v5567
  %7773 = vmatmul.f32.gmra.mxu0 %v7755
  %v7774 = vpop.f32.mrf.mxu0
  %v7775 = vadd.f32 0.0, %v7774
  %7776 = vdwg.mxu0
  %7777 = vmatpush.msra.mxu0 0.0
  %7778 = vmatpush.msra.mxu0 0.0
  %7779 = vmatpush.msra.mxu0 0.0
  %7780 = vmatpush.msra.mxu0 0.0
  %7781 = vmatpush.msra.mxu0 0.0
  %7782 = vmatpush.msra.mxu0 0.0
  %7783 = vmatpush.msra.mxu0 0.0
  %7784 = vmatpush.msra.mxu0 0.0
  %7785 = vmatpush.msra.mxu0 0.0
  %7786 = vmatpush.msra.mxu0 0.0
  %7787 = vmatpush.msra.mxu0 0.0
  %7788 = vmatpush.msra.mxu0 0.0
  %7789 = vmatpush.msra.mxu0 0.0
  %7790 = vmatpush.msra.mxu0 0.0
  %7791 = vmatpush.msra.mxu0 0.0
  %7792 = vmatpush.msra.mxu0 %v5568
  %7793 = vmatmul.f32.gmra.mxu0 %v7755
  %v7794 = vpop.f32.mrf.mxu0
  %v7795 = vadd.f32 0.0, %v7794
  %7796 = vdwg.mxu0
  %v7797 = vadd.f32 %v7751, %v7775
  %v7798 = vadd.f32 %v7752, %v7795
  %v7799 = vld [vmem:[%s3450] sm:$0xff]
  %v7801 = vsel %vm142, %v7799, 0
  %7803 = vmatpush.msra.mxu0 0.0
  %7804 = vmatpush.msra.mxu0 0.0
  %7805 = vmatpush.msra.mxu0 0.0
  %7806 = vmatpush.msra.mxu0 0.0
  %7807 = vmatpush.msra.mxu0 0.0
  %7808 = vmatpush.msra.mxu0 0.0
  %7809 = vmatpush.msra.mxu0 0.0
  %7810 = vmatpush.msra.mxu0 0.0
  %7811 = vmatpush.msra.mxu0 0.0
  %7812 = vmatpush.msra.mxu0 0.0
  %7813 = vmatpush.msra.mxu0 0.0
  %7814 = vmatpush.msra.mxu0 0.0
  %7815 = vmatpush.msra.mxu0 0.0
  %7816 = vmatpush.msra.mxu0 0.0
  %7817 = vmatpush.msra.mxu0 0.0
  %7818 = vmatpush.msra.mxu0 %v5577
  %7819 = vmatmul.f32.gmra.mxu0 %v7801
  %v7820 = vpop.f32.mrf.mxu0
  %v7821 = vadd.f32 0.0, %v7820
  %7822 = vdwg.mxu0
  %7823 = vmatpush.msra.mxu0 0.0
  %7824 = vmatpush.msra.mxu0 0.0
  %7825 = vmatpush.msra.mxu0 0.0
  %7826 = vmatpush.msra.mxu0 0.0
  %7827 = vmatpush.msra.mxu0 0.0
  %7828 = vmatpush.msra.mxu0 0.0
  %7829 = vmatpush.msra.mxu0 0.0
  %7830 = vmatpush.msra.mxu0 0.0
  %7831 = vmatpush.msra.mxu0 0.0
  %7832 = vmatpush.msra.mxu0 0.0
  %7833 = vmatpush.msra.mxu0 0.0
  %7834 = vmatpush.msra.mxu0 0.0
  %7835 = vmatpush.msra.mxu0 0.0
  %7836 = vmatpush.msra.mxu0 0.0
  %7837 = vmatpush.msra.mxu0 0.0
  %7838 = vmatpush.msra.mxu0 %v5578
  %7839 = vmatmul.f32.gmra.mxu0 %v7801
  %v7840 = vpop.f32.mrf.mxu0
  %v7841 = vadd.f32 0.0, %v7840
  %7842 = vdwg.mxu0
  %v7843 = vadd.f32 %v7797, %v7821
  %v7844 = vadd.f32 %v7798, %v7841
  %v7845 = vld [vmem:[%s9] sm:$0xff]
  %v7847 = vsel %vm142, %v7845, 0
  %7849 = vmatpush.msra.mxu0 0.0
  %7850 = vmatpush.msra.mxu0 0.0
  %7851 = vmatpush.msra.mxu0 0.0
  %7852 = vmatpush.msra.mxu0 0.0
  %7853 = vmatpush.msra.mxu0 0.0
  %7854 = vmatpush.msra.mxu0 0.0
  %7855 = vmatpush.msra.mxu0 0.0
  %7856 = vmatpush.msra.mxu0 0.0
  %7857 = vmatpush.msra.mxu0 0.0
  %7858 = vmatpush.msra.mxu0 0.0
  %7859 = vmatpush.msra.mxu0 0.0
  %7860 = vmatpush.msra.mxu0 0.0
  %7861 = vmatpush.msra.mxu0 0.0
  %7862 = vmatpush.msra.mxu0 0.0
  %7863 = vmatpush.msra.mxu0 0.0
  %7864 = vmatpush.msra.mxu0 %v6949
  %7865 = vmatmul.f32.gmra.mxu0 %v7847
  %v7866 = vpop.f32.mrf.mxu0
  %v7867 = vadd.f32 0.0, %v7866
  %7868 = vdwg.mxu0
  %7869 = vmatpush.msra.mxu0 0.0
  %7870 = vmatpush.msra.mxu0 0.0
  %7871 = vmatpush.msra.mxu0 0.0
  %7872 = vmatpush.msra.mxu0 0.0
  %7873 = vmatpush.msra.mxu0 0.0
  %7874 = vmatpush.msra.mxu0 0.0
  %7875 = vmatpush.msra.mxu0 0.0
  %7876 = vmatpush.msra.mxu0 0.0
  %7877 = vmatpush.msra.mxu0 0.0
  %7878 = vmatpush.msra.mxu0 0.0
  %7879 = vmatpush.msra.mxu0 0.0
  %7880 = vmatpush.msra.mxu0 0.0
  %7881 = vmatpush.msra.mxu0 0.0
  %7882 = vmatpush.msra.mxu0 0.0
  %7883 = vmatpush.msra.mxu0 0.0
  %7884 = vmatpush.msra.mxu0 %v6950
  %7885 = vmatmul.f32.gmra.mxu0 %v7847
  %v7886 = vpop.f32.mrf.mxu0
  %v7887 = vadd.f32 0.0, %v7886
  %7888 = vdwg.mxu0
  %v7889 = vadd.f32 %v7843, %v7867
  %v7890 = vadd.f32 %v7844, %v7887
  %v7891 = vld [vmem:[%s3543] sm:$0xff]
  %v7893 = vsel %vm142, %v7891, 0
  %7895 = vmatpush.msra.mxu0 0.0
  %7896 = vmatpush.msra.mxu0 0.0
  %7897 = vmatpush.msra.mxu0 0.0
  %7898 = vmatpush.msra.mxu0 0.0
  %7899 = vmatpush.msra.mxu0 0.0
  %7900 = vmatpush.msra.mxu0 0.0
  %7901 = vmatpush.msra.mxu0 0.0
  %7902 = vmatpush.msra.mxu0 0.0
  %7903 = vmatpush.msra.mxu0 0.0
  %7904 = vmatpush.msra.mxu0 0.0
  %7905 = vmatpush.msra.mxu0 0.0
  %7906 = vmatpush.msra.mxu0 0.0
  %7907 = vmatpush.msra.mxu0 0.0
  %7908 = vmatpush.msra.mxu0 0.0
  %7909 = vmatpush.msra.mxu0 0.0
  %7910 = vmatpush.msra.mxu0 %v6959
  %7911 = vmatmul.f32.gmra.mxu0 %v7893
  %v7912 = vpop.f32.mrf.mxu0
  %v7913 = vadd.f32 0.0, %v7912
  %7914 = vdwg.mxu0
  %7915 = vmatpush.msra.mxu0 0.0
  %7916 = vmatpush.msra.mxu0 0.0
  %7917 = vmatpush.msra.mxu0 0.0
  %7918 = vmatpush.msra.mxu0 0.0
  %7919 = vmatpush.msra.mxu0 0.0
  %7920 = vmatpush.msra.mxu0 0.0
  %7921 = vmatpush.msra.mxu0 0.0
  %7922 = vmatpush.msra.mxu0 0.0
  %7923 = vmatpush.msra.mxu0 0.0
  %7924 = vmatpush.msra.mxu0 0.0
  %7925 = vmatpush.msra.mxu0 0.0
  %7926 = vmatpush.msra.mxu0 0.0
  %7927 = vmatpush.msra.mxu0 0.0
  %7928 = vmatpush.msra.mxu0 0.0
  %7929 = vmatpush.msra.mxu0 0.0
  %7930 = vmatpush.msra.mxu0 %v6960
  %7931 = vmatmul.f32.gmra.mxu0 %v7893
  %v7932 = vpop.f32.mrf.mxu0
  %v7933 = vadd.f32 0.0, %v7932
  %7934 = vdwg.mxu0
  %v7935 = vadd.f32 %v7889, %v7913
  %v7936 = vadd.f32 %v7890, %v7933
  %v7937 = vld [vmem:[%s3590] sm:$0xff]
  %v7939 = vsel %vm142, %v7937, 0
  %7941 = vmatpush.msra.mxu0 0.0
  %7942 = vmatpush.msra.mxu0 0.0
  %7943 = vmatpush.msra.mxu0 0.0
  %7944 = vmatpush.msra.mxu0 0.0
  %7945 = vmatpush.msra.mxu0 0.0
  %7946 = vmatpush.msra.mxu0 0.0
  %7947 = vmatpush.msra.mxu0 0.0
  %7948 = vmatpush.msra.mxu0 0.0
  %7949 = vmatpush.msra.mxu0 0.0
  %7950 = vmatpush.msra.mxu0 0.0
  %7951 = vmatpush.msra.mxu0 0.0
  %7952 = vmatpush.msra.mxu0 0.0
  %7953 = vmatpush.msra.mxu0 0.0
  %7954 = vmatpush.msra.mxu0 0.0
  %7955 = vmatpush.msra.mxu0 0.0
  %7956 = vmatpush.msra.mxu0 %v6969
  %7957 = vmatmul.f32.gmra.mxu0 %v7939
  %v7958 = vpop.f32.mrf.mxu0
  %v7959 = vadd.f32 0.0, %v7958
  %7960 = vdwg.mxu0
  %7961 = vmatpush.msra.mxu0 0.0
  %7962 = vmatpush.msra.mxu0 0.0
  %7963 = vmatpush.msra.mxu0 0.0
  %7964 = vmatpush.msra.mxu0 0.0
  %7965 = vmatpush.msra.mxu0 0.0
  %7966 = vmatpush.msra.mxu0 0.0
  %7967 = vmatpush.msra.mxu0 0.0
  %7968 = vmatpush.msra.mxu0 0.0
  %7969 = vmatpush.msra.mxu0 0.0
  %7970 = vmatpush.msra.mxu0 0.0
  %7971 = vmatpush.msra.mxu0 0.0
  %7972 = vmatpush.msra.mxu0 0.0
  %7973 = vmatpush.msra.mxu0 0.0
  %7974 = vmatpush.msra.mxu0 0.0
  %7975 = vmatpush.msra.mxu0 0.0
  %7976 = vmatpush.msra.mxu0 %v6970
  %7977 = vmatmul.f32.gmra.mxu0 %v7939
  %v7978 = vpop.f32.mrf.mxu0
  %v7979 = vadd.f32 0.0, %v7978
  %7980 = vdwg.mxu0
  %v7981 = vadd.f32 %v7935, %v7959
  %v7982 = vadd.f32 %v7936, %v7979
  %v7983 = vld [vmem:[%s3637] sm:$0xff]
  %v7985 = vsel %vm142, %v7983, 0
  %7987 = vmatpush.msra.mxu0 0.0
  %7988 = vmatpush.msra.mxu0 0.0
  %7989 = vmatpush.msra.mxu0 0.0
  %7990 = vmatpush.msra.mxu0 0.0
  %7991 = vmatpush.msra.mxu0 0.0
  %7992 = vmatpush.msra.mxu0 0.0
  %7993 = vmatpush.msra.mxu0 0.0
  %7994 = vmatpush.msra.mxu0 0.0
  %7995 = vmatpush.msra.mxu0 0.0
  %7996 = vmatpush.msra.mxu0 0.0
  %7997 = vmatpush.msra.mxu0 0.0
  %7998 = vmatpush.msra.mxu0 0.0
  %7999 = vmatpush.msra.mxu0 0.0
  %8000 = vmatpush.msra.mxu0 0.0
  %8001 = vmatpush.msra.mxu0 0.0
  %8002 = vmatpush.msra.mxu0 %v6979
  %8003 = vmatmul.f32.gmra.mxu0 %v7985
  %v8004 = vpop.f32.mrf.mxu0
  %v8005 = vadd.f32 0.0, %v8004
  %8006 = vdwg.mxu0
  %8007 = vmatpush.msra.mxu0 0.0
  %8008 = vmatpush.msra.mxu0 0.0
  %8009 = vmatpush.msra.mxu0 0.0
  %8010 = vmatpush.msra.mxu0 0.0
  %8011 = vmatpush.msra.mxu0 0.0
  %8012 = vmatpush.msra.mxu0 0.0
  %8013 = vmatpush.msra.mxu0 0.0
  %8014 = vmatpush.msra.mxu0 0.0
  %8015 = vmatpush.msra.mxu0 0.0
  %8016 = vmatpush.msra.mxu0 0.0
  %8017 = vmatpush.msra.mxu0 0.0
  %8018 = vmatpush.msra.mxu0 0.0
  %8019 = vmatpush.msra.mxu0 0.0
  %8020 = vmatpush.msra.mxu0 0.0
  %8021 = vmatpush.msra.mxu0 0.0
  %8022 = vmatpush.msra.mxu0 %v6980
  %8023 = vmatmul.f32.gmra.mxu0 %v7985
  %v8024 = vpop.f32.mrf.mxu0
  %v8025 = vadd.f32 0.0, %v8024
  %8026 = vdwg.mxu0
  %v8027 = vadd.f32 %v7981, %v8005
  %v8028 = vadd.f32 %v7982, %v8025
  %v8029 = vld [vmem:[%s3684] sm:$0xff]
  %v8031 = vsel %vm142, %v8029, 0
  %8033 = vmatpush.msra.mxu0 0.0
  %8034 = vmatpush.msra.mxu0 0.0
  %8035 = vmatpush.msra.mxu0 0.0
  %8036 = vmatpush.msra.mxu0 0.0
  %8037 = vmatpush.msra.mxu0 0.0
  %8038 = vmatpush.msra.mxu0 0.0
  %8039 = vmatpush.msra.mxu0 0.0
  %8040 = vmatpush.msra.mxu0 0.0
  %8041 = vmatpush.msra.mxu0 0.0
  %8042 = vmatpush.msra.mxu0 0.0
  %8043 = vmatpush.msra.mxu0 0.0
  %8044 = vmatpush.msra.mxu0 0.0
  %8045 = vmatpush.msra.mxu0 0.0
  %8046 = vmatpush.msra.mxu0 0.0
  %8047 = vmatpush.msra.mxu0 0.0
  %8048 = vmatpush.msra.mxu0 %v6937
  %8049 = vmatmul.f32.gmra.mxu0 %v8031
  %v8050 = vpop.f32.mrf.mxu0
  %v8051 = vadd.f32 0.0, %v8050
  %8052 = vdwg.mxu0
  %8053 = vmatpush.msra.mxu0 0.0
  %8054 = vmatpush.msra.mxu0 0.0
  %8055 = vmatpush.msra.mxu0 0.0
  %8056 = vmatpush.msra.mxu0 0.0
  %8057 = vmatpush.msra.mxu0 0.0
  %8058 = vmatpush.msra.mxu0 0.0
  %8059 = vmatpush.msra.mxu0 0.0
  %8060 = vmatpush.msra.mxu0 0.0
  %8061 = vmatpush.msra.mxu0 0.0
  %8062 = vmatpush.msra.mxu0 0.0
  %8063 = vmatpush.msra.mxu0 0.0
  %8064 = vmatpush.msra.mxu0 0.0
  %8065 = vmatpush.msra.mxu0 0.0
  %8066 = vmatpush.msra.mxu0 0.0
  %8067 = vmatpush.msra.mxu0 0.0
  %8068 = vmatpush.msra.mxu0 %v6938
  %8069 = vmatmul.f32.gmra.mxu0 %v8031
  %v8070 = vpop.f32.mrf.mxu0
  %v8071 = vadd.f32 0.0, %v8070
  %8072 = vdwg.mxu0
  %v8073 = vadd.f32 %v8027, %v8051
  %v8074 = vadd.f32 %v8028, %v8071
  %v8075 = vld [vmem:[%s3731] sm:$0xff]
  %v8077 = vsel %vm142, %v8075, 0
  %8079 = vmatpush.msra.mxu0 0.0
  %8080 = vmatpush.msra.mxu0 0.0
  %8081 = vmatpush.msra.mxu0 0.0
  %8082 = vmatpush.msra.mxu0 0.0
  %8083 = vmatpush.msra.mxu0 0.0
  %8084 = vmatpush.msra.mxu0 0.0
  %8085 = vmatpush.msra.mxu0 0.0
  %8086 = vmatpush.msra.mxu0 0.0
  %8087 = vmatpush.msra.mxu0 0.0
  %8088 = vmatpush.msra.mxu0 0.0
  %8089 = vmatpush.msra.mxu0 0.0
  %8090 = vmatpush.msra.mxu0 0.0
  %8091 = vmatpush.msra.mxu0 0.0
  %8092 = vmatpush.msra.mxu0 0.0
  %8093 = vmatpush.msra.mxu0 0.0
  %8094 = vmatpush.msra.mxu0 %v6989
  %8095 = vmatmul.f32.gmra.mxu0 %v8077
  %v8096 = vpop.f32.mrf.mxu0
  %v8097 = vadd.f32 0.0, %v8096
  %8098 = vdwg.mxu0
  %8099 = vmatpush.msra.mxu0 0.0
  %8100 = vmatpush.msra.mxu0 0.0
  %8101 = vmatpush.msra.mxu0 0.0
  %8102 = vmatpush.msra.mxu0 0.0
  %8103 = vmatpush.msra.mxu0 0.0
  %8104 = vmatpush.msra.mxu0 0.0
  %8105 = vmatpush.msra.mxu0 0.0
  %8106 = vmatpush.msra.mxu0 0.0
  %8107 = vmatpush.msra.mxu0 0.0
  %8108 = vmatpush.msra.mxu0 0.0
  %8109 = vmatpush.msra.mxu0 0.0
  %8110 = vmatpush.msra.mxu0 0.0
  %8111 = vmatpush.msra.mxu0 0.0
  %8112 = vmatpush.msra.mxu0 0.0
  %8113 = vmatpush.msra.mxu0 0.0
  %8114 = vmatpush.msra.mxu0 %v6990
  %8115 = vmatmul.f32.gmra.mxu0 %v8077
  %v8116 = vpop.f32.mrf.mxu0
  %v8117 = vadd.f32 0.0, %v8116
  %8118 = vdwg.mxu0
  %v8119 = vadd.f32 %v8073, %v8097
  %v8120 = vadd.f32 %v8074, %v8117
  %v8121 = vld [vmem:[%s3778] sm:$0xff]
  %v8123 = vsel %vm142, %v8121, 0
  %8125 = vmatpush.msra.mxu0 0.0
  %8126 = vmatpush.msra.mxu0 0.0
  %8127 = vmatpush.msra.mxu0 0.0
  %8128 = vmatpush.msra.mxu0 0.0
  %8129 = vmatpush.msra.mxu0 0.0
  %8130 = vmatpush.msra.mxu0 0.0
  %8131 = vmatpush.msra.mxu0 0.0
  %8132 = vmatpush.msra.mxu0 0.0
  %8133 = vmatpush.msra.mxu0 0.0
  %8134 = vmatpush.msra.mxu0 0.0
  %8135 = vmatpush.msra.mxu0 0.0
  %8136 = vmatpush.msra.mxu0 0.0
  %8137 = vmatpush.msra.mxu0 0.0
  %8138 = vmatpush.msra.mxu0 0.0
  %8139 = vmatpush.msra.mxu0 0.0
  %8140 = vmatpush.msra.mxu0 %v6999
  %8141 = vmatmul.f32.gmra.mxu0 %v8123
  %v8142 = vpop.f32.mrf.mxu0
  %v8143 = vadd.f32 0.0, %v8142
  %8144 = vdwg.mxu0
  %8145 = vmatpush.msra.mxu0 0.0
  %8146 = vmatpush.msra.mxu0 0.0
  %8147 = vmatpush.msra.mxu0 0.0
  %8148 = vmatpush.msra.mxu0 0.0
  %8149 = vmatpush.msra.mxu0 0.0
  %8150 = vmatpush.msra.mxu0 0.0
  %8151 = vmatpush.msra.mxu0 0.0
  %8152 = vmatpush.msra.mxu0 0.0
  %8153 = vmatpush.msra.mxu0 0.0
  %8154 = vmatpush.msra.mxu0 0.0
  %8155 = vmatpush.msra.mxu0 0.0
  %8156 = vmatpush.msra.mxu0 0.0
  %8157 = vmatpush.msra.mxu0 0.0
  %8158 = vmatpush.msra.mxu0 0.0
  %8159 = vmatpush.msra.mxu0 0.0
  %8160 = vmatpush.msra.mxu0 %v7000
  %8161 = vmatmul.f32.gmra.mxu0 %v8123
  %v8162 = vpop.f32.mrf.mxu0
  %v8163 = vadd.f32 0.0, %v8162
  %8164 = vdwg.mxu0
  %v8165 = vadd.f32 %v8119, %v8143
  %v8166 = vadd.f32 %v8120, %v8163
  %v8167 = vld [vmem:[%s3825] sm:$0xff]
  %v8169 = vsel %vm142, %v8167, 0
  %8171 = vmatpush.msra.mxu0 0.0
  %8172 = vmatpush.msra.mxu0 0.0
  %8173 = vmatpush.msra.mxu0 0.0
  %8174 = vmatpush.msra.mxu0 0.0
  %8175 = vmatpush.msra.mxu0 0.0
  %8176 = vmatpush.msra.mxu0 0.0
  %8177 = vmatpush.msra.mxu0 0.0
  %8178 = vmatpush.msra.mxu0 0.0
  %8179 = vmatpush.msra.mxu0 0.0
  %8180 = vmatpush.msra.mxu0 0.0
  %8181 = vmatpush.msra.mxu0 0.0
  %8182 = vmatpush.msra.mxu0 0.0
  %8183 = vmatpush.msra.mxu0 0.0
  %8184 = vmatpush.msra.mxu0 0.0
  %8185 = vmatpush.msra.mxu0 0.0
  %8186 = vmatpush.msra.mxu0 %v7009
  %8187 = vmatmul.f32.gmra.mxu0 %v8169
  %v8188 = vpop.f32.mrf.mxu0
  %v8189 = vadd.f32 0.0, %v8188
  %8190 = vdwg.mxu0
  %8191 = vmatpush.msra.mxu0 0.0
  %8192 = vmatpush.msra.mxu0 0.0
  %8193 = vmatpush.msra.mxu0 0.0
  %8194 = vmatpush.msra.mxu0 0.0
  %8195 = vmatpush.msra.mxu0 0.0
  %8196 = vmatpush.msra.mxu0 0.0
  %8197 = vmatpush.msra.mxu0 0.0
  %8198 = vmatpush.msra.mxu0 0.0
  %8199 = vmatpush.msra.mxu0 0.0
  %8200 = vmatpush.msra.mxu0 0.0
  %8201 = vmatpush.msra.mxu0 0.0
  %8202 = vmatpush.msra.mxu0 0.0
  %8203 = vmatpush.msra.mxu0 0.0
  %8204 = vmatpush.msra.mxu0 0.0
  %8205 = vmatpush.msra.mxu0 0.0
  %8206 = vmatpush.msra.mxu0 %v7010
  %8207 = vmatmul.f32.gmra.mxu0 %v8169
  %v8208 = vpop.f32.mrf.mxu0
  %v8209 = vadd.f32 0.0, %v8208
  %8210 = vdwg.mxu0
  %v8211 = vadd.f32 %v8165, %v8189
  %v8212 = vadd.f32 %v8166, %v8209
  %v8213 = vld [vmem:[%s3872] sm:$0xff]
  %v8215 = vsel %vm142, %v8213, 0
  %8217 = vmatpush.msra.mxu0 0.0
  %8218 = vmatpush.msra.mxu0 0.0
  %8219 = vmatpush.msra.mxu0 0.0
  %8220 = vmatpush.msra.mxu0 0.0
  %8221 = vmatpush.msra.mxu0 0.0
  %8222 = vmatpush.msra.mxu0 0.0
  %8223 = vmatpush.msra.mxu0 0.0
  %8224 = vmatpush.msra.mxu0 0.0
  %8225 = vmatpush.msra.mxu0 0.0
  %8226 = vmatpush.msra.mxu0 0.0
  %8227 = vmatpush.msra.mxu0 0.0
  %8228 = vmatpush.msra.mxu0 0.0
  %8229 = vmatpush.msra.mxu0 0.0
  %8230 = vmatpush.msra.mxu0 0.0
  %8231 = vmatpush.msra.mxu0 0.0
  %8232 = vmatpush.msra.mxu0 %v7019
  %8233 = vmatmul.f32.gmra.mxu0 %v8215
  %v8234 = vpop.f32.mrf.mxu0
  %v8235 = vadd.f32 0.0, %v8234
  %8236 = vdwg.mxu0
  %8237 = vmatpush.msra.mxu0 0.0
  %8238 = vmatpush.msra.mxu0 0.0
  %8239 = vmatpush.msra.mxu0 0.0
  %8240 = vmatpush.msra.mxu0 0.0
  %8241 = vmatpush.msra.mxu0 0.0
  %8242 = vmatpush.msra.mxu0 0.0
  %8243 = vmatpush.msra.mxu0 0.0
  %8244 = vmatpush.msra.mxu0 0.0
  %8245 = vmatpush.msra.mxu0 0.0
  %8246 = vmatpush.msra.mxu0 0.0
  %8247 = vmatpush.msra.mxu0 0.0
  %8248 = vmatpush.msra.mxu0 0.0
  %8249 = vmatpush.msra.mxu0 0.0
  %8250 = vmatpush.msra.mxu0 0.0
  %8251 = vmatpush.msra.mxu0 0.0
  %8252 = vmatpush.msra.mxu0 %v7020
  %8253 = vmatmul.f32.gmra.mxu0 %v8215
  %v8254 = vpop.f32.mrf.mxu0
  %v8255 = vadd.f32 0.0, %v8254
  %8256 = vdwg.mxu0
  %v8257 = vadd.f32 %v8211, %v8235
  %v8258 = vadd.f32 %v8212, %v8255
  %v8259 = vadd.f32 %v8257, %v8258
  %8260 = vadd.xlane.f32.xlu0 %v8259
  %v8261 = vpop.xlane.xlu0 %8260
  %v8262 = vmul.f32 %v8261, %v567
  %v8263 = vsub.f32 %v8257, %v8262
  %v8264 = vsub.f32 %v8258, %v8262
  %v8265 = vmul.f32 %v8263, %v8263
  %v8266 = vmul.f32 %v8264, %v8264
  %v8267 = vadd.f32 %v8265, %v8266
  %8268 = vadd.xlane.f32.xlu0 %v8267
  %v8269 = vpop.xlane.xlu0 %8268
  %v8270 = vmul.f32 %v8269, %v567
  %v8271 = vadd.f32 %v8270, 1e-05
  %v8272 = vrsqrt.pop %v8271
  %v8273 = vmul.f32 %v8272, %v8271
  %v8274 = vmul.f32 %v8273, %v8272
  %v8275 = vmul.f32 0.5, %v8274
  %v8276 = vsub.f32 1.5, %v8275
  %v8277 = vmul.f32 %v8272, %v8276
  %vm8278 = vweird.f32 %v8271
  %vm8279 = vweird.f32 %v8272
  %vm8280 = vmor %vm8278, %vm8279
  %v8281 = vsel %vm8280, %v8272, %v8277
  %v8282 = vmul.f32 %v8263, %v8281
  %v8283 = vmul.f32 %v8264, %v8281
  %vm8284 = vcmp.ge.f32.partialorder %v8282, 0.0
  %vm8285 = vcmp.ge.f32.partialorder %v8283, 0.0
  %v8286 = vmul.f32 %v8282, 0.01
  %v8287 = vmul.f32 %v8283, 0.01
  %v8288 = vsel %vm8284, %v8282, %v8286
  %v8289 = vsel %vm8285, %v8283, %v8287
  %8290 = vrot.lane.b32.xlu0 %v8288, 17
  %v8291 = vpop.permute.xlu0 %8290
  %8292 = vrot.lane.b32.xlu0 %v8289, 17
  %v8293 = vpop.permute.xlu0 %8292
  %v8294 = vsel %vm48, %v8291, %v8293
  %v8295 = vsel %vm48, %v8293, %v8291
  %v8296 = vmul.f32 %v8295, %v6947
  %v8297 = vmul.f32 %v8294, %v6948
  %8298 = vrot.lane.b32.xlu0 %v8288, 16
  %v8299 = vpop.permute.xlu0 %8298
  %8300 = vrot.lane.b32.xlu0 %v8289, 16
  %v8301 = vpop.permute.xlu0 %8300
  %v8302 = vsel %vm59, %v8299, %v8301
  %v8303 = vsel %vm59, %v8301, %v8299
  %v8304 = vmul.f32 %v8303, %v6957
  %v8305 = vmul.f32 %v8302, %v6958
  %8306 = vrot.lane.b32.xlu0 %v8288, 15
  %v8307 = vpop.permute.xlu0 %8306
  %8308 = vrot.lane.b32.xlu0 %v8289, 15
  %v8309 = vpop.permute.xlu0 %8308
  %v8310 = vsel %vm71, %v8307, %v8309
  %v8311 = vsel %vm71, %v8309, %v8307
  %v8312 = vmul.f32 %v8311, %v6967
  %v8313 = vmul.f32 %v8310, %v6968
  %8314 = vrot.lane.b32.xlu0 %v8288, 1
  %v8315 = vpop.permute.xlu0 %8314
  %8316 = vrot.lane.b32.xlu0 %v8289, 1
  %v8317 = vpop.permute.xlu0 %8316
  %v8318 = vsel %vm83, %v8315, %v8317
  %v8319 = vsel %vm83, %v8317, %v8315
  %v8320 = vmul.f32 %v8319, %v6977
  %v8321 = vmul.f32 %v8318, %v6978
  %8322 = vrot.lane.b32.xlu0 %v8288, 127
  %v8323 = vpop.permute.xlu0 %8322
  %8324 = vrot.lane.b32.xlu0 %v8289, 127
  %v8325 = vpop.permute.xlu0 %8324
  %v8326 = vsel %vm95, %v8323, %v8325
  %v8327 = vsel %vm95, %v8325, %v8323
  %v8328 = vmul.f32 %v8326, %v6987
  %v8329 = vmul.f32 %v8327, %v6988
  %8330 = vrot.lane.b32.xlu0 %v8288, 113
  %v8331 = vpop.permute.xlu0 %8330
  %8332 = vrot.lane.b32.xlu0 %v8289, 113
  %v8333 = vpop.permute.xlu0 %8332
  %v8334 = vsel %vm107, %v8331, %v8333
  %v8335 = vsel %vm107, %v8333, %v8331
  %v8336 = vmul.f32 %v8334, %v6997
  %v8337 = vmul.f32 %v8335, %v6998
  %8338 = vrot.lane.b32.xlu0 %v8288, 112
  %v8339 = vpop.permute.xlu0 %8338
  %8340 = vrot.lane.b32.xlu0 %v8289, 112
  %v8341 = vpop.permute.xlu0 %8340
  %v8342 = vsel %vm119, %v8339, %v8341
  %v8343 = vsel %vm119, %v8341, %v8339
  %v8344 = vmul.f32 %v8342, %v7007
  %v8345 = vmul.f32 %v8343, %v7008
  %8346 = vrot.lane.b32.xlu0 %v8288, 111
  %v8347 = vpop.permute.xlu0 %8346
  %8348 = vrot.lane.b32.xlu0 %v8289, 111
  %v8349 = vpop.permute.xlu0 %8348
  %v8350 = vsel %vm131, %v8347, %v8349
  %v8351 = vsel %vm131, %v8349, %v8347
  %v8352 = vmul.f32 %v8350, %v7017
  %v8353 = vmul.f32 %v8351, %v7018
  %v8354 = vld [vmem:[%s10] sm:$0xff]
  %v8355 = vld [vmem:[%s4015] sm:$0xff]
  %v8357 = vsel %vm142, %v8355, 0
  %8359 = vmatpush.msra.mxu0 0.0
  %8360 = vmatpush.msra.mxu0 0.0
  %8361 = vmatpush.msra.mxu0 0.0
  %8362 = vmatpush.msra.mxu0 0.0
  %8363 = vmatpush.msra.mxu0 0.0
  %8364 = vmatpush.msra.mxu0 0.0
  %8365 = vmatpush.msra.mxu0 0.0
  %8366 = vmatpush.msra.mxu0 0.0
  %8367 = vmatpush.msra.mxu0 0.0
  %8368 = vmatpush.msra.mxu0 0.0
  %8369 = vmatpush.msra.mxu0 0.0
  %8370 = vmatpush.msra.mxu0 0.0
  %8371 = vmatpush.msra.mxu0 0.0
  %8372 = vmatpush.msra.mxu0 0.0
  %8373 = vmatpush.msra.mxu0 0.0
  %8374 = vmatpush.msra.mxu0 %v8304
  %8375 = vmatmul.f32.gmra.mxu0 %v8357
  %v8376 = vpop.f32.mrf.mxu0
  %v8377 = vadd.f32 0.0, %v8376
  %8378 = vdwg.mxu0
  %8379 = vmatpush.msra.mxu0 0.0
  %8380 = vmatpush.msra.mxu0 0.0
  %8381 = vmatpush.msra.mxu0 0.0
  %8382 = vmatpush.msra.mxu0 0.0
  %8383 = vmatpush.msra.mxu0 0.0
  %8384 = vmatpush.msra.mxu0 0.0
  %8385 = vmatpush.msra.mxu0 0.0
  %8386 = vmatpush.msra.mxu0 0.0
  %8387 = vmatpush.msra.mxu0 0.0
  %8388 = vmatpush.msra.mxu0 0.0
  %8389 = vmatpush.msra.mxu0 0.0
  %8390 = vmatpush.msra.mxu0 0.0
  %8391 = vmatpush.msra.mxu0 0.0
  %8392 = vmatpush.msra.mxu0 0.0
  %8393 = vmatpush.msra.mxu0 0.0
  %8394 = vmatpush.msra.mxu0 %v8305
  %8395 = vmatmul.f32.gmra.mxu0 %v8357
  %v8396 = vpop.f32.mrf.mxu0
  %v8397 = vadd.f32 0.0, %v8396
  %8398 = vdwg.mxu0
  %v8400 = vsel %vm142, %v8354, 0
  %8402 = vmatpush.msra.mxu0 0.0
  %8403 = vmatpush.msra.mxu0 0.0
  %8404 = vmatpush.msra.mxu0 0.0
  %8405 = vmatpush.msra.mxu0 0.0
  %8406 = vmatpush.msra.mxu0 0.0
  %8407 = vmatpush.msra.mxu0 0.0
  %8408 = vmatpush.msra.mxu0 0.0
  %8409 = vmatpush.msra.mxu0 0.0
  %8410 = vmatpush.msra.mxu0 0.0
  %8411 = vmatpush.msra.mxu0 0.0
  %8412 = vmatpush.msra.mxu0 0.0
  %8413 = vmatpush.msra.mxu0 0.0
  %8414 = vmatpush.msra.mxu0 0.0
  %8415 = vmatpush.msra.mxu0 0.0
  %8416 = vmatpush.msra.mxu0 0.0
  %8417 = vmatpush.msra.mxu0 %v8296
  %8418 = vmatmul.f32.gmra.mxu0 %v8400
  %v8419 = vpop.f32.mrf.mxu0
  %v8420 = vadd.f32 %v8377, %v8419
  %8421 = vdwg.mxu0
  %8422 = vmatpush.msra.mxu0 0.0
  %8423 = vmatpush.msra.mxu0 0.0
  %8424 = vmatpush.msra.mxu0 0.0
  %8425 = vmatpush.msra.mxu0 0.0
  %8426 = vmatpush.msra.mxu0 0.0
  %8427 = vmatpush.msra.mxu0 0.0
  %8428 = vmatpush.msra.mxu0 0.0
  %8429 = vmatpush.msra.mxu0 0.0
  %8430 = vmatpush.msra.mxu0 0.0
  %8431 = vmatpush.msra.mxu0 0.0
  %8432 = vmatpush.msra.mxu0 0.0
  %8433 = vmatpush.msra.mxu0 0.0
  %8434 = vmatpush.msra.mxu0 0.0
  %8435 = vmatpush.msra.mxu0 0.0
  %8436 = vmatpush.msra.mxu0 0.0
  %8437 = vmatpush.msra.mxu0 %v8297
  %8438 = vmatmul.f32.gmra.mxu0 %v8400
  %v8439 = vpop.f32.mrf.mxu0
  %v8440 = vadd.f32 %v8397, %v8439
  %8441 = vdwg.mxu0
  %v8442 = vld [vmem:[%s4103] sm:$0xff]
  %v8444 = vsel %vm142, %v8442, 0
  %8446 = vmatpush.msra.mxu0 0.0
  %8447 = vmatpush.msra.mxu0 0.0
  %8448 = vmatpush.msra.mxu0 0.0
  %8449 = vmatpush.msra.mxu0 0.0
  %8450 = vmatpush.msra.mxu0 0.0
  %8451 = vmatpush.msra.mxu0 0.0
  %8452 = vmatpush.msra.mxu0 0.0
  %8453 = vmatpush.msra.mxu0 0.0
  %8454 = vmatpush.msra.mxu0 0.0
  %8455 = vmatpush.msra.mxu0 0.0
  %8456 = vmatpush.msra.mxu0 0.0
  %8457 = vmatpush.msra.mxu0 0.0
  %8458 = vmatpush.msra.mxu0 0.0
  %8459 = vmatpush.msra.mxu0 0.0
  %8460 = vmatpush.msra.mxu0 0.0
  %8461 = vmatpush.msra.mxu0 %v8312
  %8462 = vmatmul.f32.gmra.mxu0 %v8444
  %v8463 = vpop.f32.mrf.mxu0
  %v8464 = vadd.f32 0.0, %v8463
  %8465 = vdwg.mxu0
  %8466 = vmatpush.msra.mxu0 0.0
  %8467 = vmatpush.msra.mxu0 0.0
  %8468 = vmatpush.msra.mxu0 0.0
  %8469 = vmatpush.msra.mxu0 0.0
  %8470 = vmatpush.msra.mxu0 0.0
  %8471 = vmatpush.msra.mxu0 0.0
  %8472 = vmatpush.msra.mxu0 0.0
  %8473 = vmatpush.msra.mxu0 0.0
  %8474 = vmatpush.msra.mxu0 0.0
  %8475 = vmatpush.msra.mxu0 0.0
  %8476 = vmatpush.msra.mxu0 0.0
  %8477 = vmatpush.msra.mxu0 0.0
  %8478 = vmatpush.msra.mxu0 0.0
  %8479 = vmatpush.msra.mxu0 0.0
  %8480 = vmatpush.msra.mxu0 0.0
  %8481 = vmatpush.msra.mxu0 %v8313
  %8482 = vmatmul.f32.gmra.mxu0 %v8444
  %v8483 = vpop.f32.mrf.mxu0
  %v8484 = vadd.f32 0.0, %v8483
  %8485 = vdwg.mxu0
  %v8486 = vadd.f32 %v8420, %v8464
  %v8487 = vadd.f32 %v8440, %v8484
  %v8488 = vld [vmem:[%s4150] sm:$0xff]
  %v8490 = vsel %vm142, %v8488, 0
  %8492 = vmatpush.msra.mxu0 0.0
  %8493 = vmatpush.msra.mxu0 0.0
  %8494 = vmatpush.msra.mxu0 0.0
  %8495 = vmatpush.msra.mxu0 0.0
  %8496 = vmatpush.msra.mxu0 0.0
  %8497 = vmatpush.msra.mxu0 0.0
  %8498 = vmatpush.msra.mxu0 0.0
  %8499 = vmatpush.msra.mxu0 0.0
  %8500 = vmatpush.msra.mxu0 0.0
  %8501 = vmatpush.msra.mxu0 0.0
  %8502 = vmatpush.msra.mxu0 0.0
  %8503 = vmatpush.msra.mxu0 0.0
  %8504 = vmatpush.msra.mxu0 0.0
  %8505 = vmatpush.msra.mxu0 0.0
  %8506 = vmatpush.msra.mxu0 0.0
  %8507 = vmatpush.msra.mxu0 %v8320
  %8508 = vmatmul.f32.gmra.mxu0 %v8490
  %v8509 = vpop.f32.mrf.mxu0
  %v8510 = vadd.f32 0.0, %v8509
  %8511 = vdwg.mxu0
  %8512 = vmatpush.msra.mxu0 0.0
  %8513 = vmatpush.msra.mxu0 0.0
  %8514 = vmatpush.msra.mxu0 0.0
  %8515 = vmatpush.msra.mxu0 0.0
  %8516 = vmatpush.msra.mxu0 0.0
  %8517 = vmatpush.msra.mxu0 0.0
  %8518 = vmatpush.msra.mxu0 0.0
  %8519 = vmatpush.msra.mxu0 0.0
  %8520 = vmatpush.msra.mxu0 0.0
  %8521 = vmatpush.msra.mxu0 0.0
  %8522 = vmatpush.msra.mxu0 0.0
  %8523 = vmatpush.msra.mxu0 0.0
  %8524 = vmatpush.msra.mxu0 0.0
  %8525 = vmatpush.msra.mxu0 0.0
  %8526 = vmatpush.msra.mxu0 0.0
  %8527 = vmatpush.msra.mxu0 %v8321
  %8528 = vmatmul.f32.gmra.mxu0 %v8490
  %v8529 = vpop.f32.mrf.mxu0
  %v8530 = vadd.f32 0.0, %v8529
  %8531 = vdwg.mxu0
  %v8532 = vadd.f32 %v8486, %v8510
  %v8533 = vadd.f32 %v8487, %v8530
  %v8534 = vld [vmem:[%s4197] sm:$0xff]
  %v8536 = vsel %vm142, %v8534, 0
  %8538 = vmatpush.msra.mxu0 0.0
  %8539 = vmatpush.msra.mxu0 0.0
  %8540 = vmatpush.msra.mxu0 0.0
  %8541 = vmatpush.msra.mxu0 0.0
  %8542 = vmatpush.msra.mxu0 0.0
  %8543 = vmatpush.msra.mxu0 0.0
  %8544 = vmatpush.msra.mxu0 0.0
  %8545 = vmatpush.msra.mxu0 0.0
  %8546 = vmatpush.msra.mxu0 0.0
  %8547 = vmatpush.msra.mxu0 0.0
  %8548 = vmatpush.msra.mxu0 0.0
  %8549 = vmatpush.msra.mxu0 0.0
  %8550 = vmatpush.msra.mxu0 0.0
  %8551 = vmatpush.msra.mxu0 0.0
  %8552 = vmatpush.msra.mxu0 0.0
  %8553 = vmatpush.msra.mxu0 %v8288
  %8554 = vmatmul.f32.gmra.mxu0 %v8536
  %v8555 = vpop.f32.mrf.mxu0
  %v8556 = vadd.f32 0.0, %v8555
  %8557 = vdwg.mxu0
  %8558 = vmatpush.msra.mxu0 0.0
  %8559 = vmatpush.msra.mxu0 0.0
  %8560 = vmatpush.msra.mxu0 0.0
  %8561 = vmatpush.msra.mxu0 0.0
  %8562 = vmatpush.msra.mxu0 0.0
  %8563 = vmatpush.msra.mxu0 0.0
  %8564 = vmatpush.msra.mxu0 0.0
  %8565 = vmatpush.msra.mxu0 0.0
  %8566 = vmatpush.msra.mxu0 0.0
  %8567 = vmatpush.msra.mxu0 0.0
  %8568 = vmatpush.msra.mxu0 0.0
  %8569 = vmatpush.msra.mxu0 0.0
  %8570 = vmatpush.msra.mxu0 0.0
  %8571 = vmatpush.msra.mxu0 0.0
  %8572 = vmatpush.msra.mxu0 0.0
  %8573 = vmatpush.msra.mxu0 %v8289
  %8574 = vmatmul.f32.gmra.mxu0 %v8536
  %v8575 = vpop.f32.mrf.mxu0
  %v8576 = vadd.f32 0.0, %v8575
  %8577 = vdwg.mxu0
  %v8578 = vadd.f32 %v8532, %v8556
  %v8579 = vadd.f32 %v8533, %v8576
  %v8580 = vld [vmem:[%s4244] sm:$0xff]
  %v8582 = vsel %vm142, %v8580, 0
  %8584 = vmatpush.msra.mxu0 0.0
  %8585 = vmatpush.msra.mxu0 0.0
  %8586 = vmatpush.msra.mxu0 0.0
  %8587 = vmatpush.msra.mxu0 0.0
  %8588 = vmatpush.msra.mxu0 0.0
  %8589 = vmatpush.msra.mxu0 0.0
  %8590 = vmatpush.msra.mxu0 0.0
  %8591 = vmatpush.msra.mxu0 0.0
  %8592 = vmatpush.msra.mxu0 0.0
  %8593 = vmatpush.msra.mxu0 0.0
  %8594 = vmatpush.msra.mxu0 0.0
  %8595 = vmatpush.msra.mxu0 0.0
  %8596 = vmatpush.msra.mxu0 0.0
  %8597 = vmatpush.msra.mxu0 0.0
  %8598 = vmatpush.msra.mxu0 0.0
  %8599 = vmatpush.msra.mxu0 %v8328
  %8600 = vmatmul.f32.gmra.mxu0 %v8582
  %v8601 = vpop.f32.mrf.mxu0
  %v8602 = vadd.f32 0.0, %v8601
  %8603 = vdwg.mxu0
  %8604 = vmatpush.msra.mxu0 0.0
  %8605 = vmatpush.msra.mxu0 0.0
  %8606 = vmatpush.msra.mxu0 0.0
  %8607 = vmatpush.msra.mxu0 0.0
  %8608 = vmatpush.msra.mxu0 0.0
  %8609 = vmatpush.msra.mxu0 0.0
  %8610 = vmatpush.msra.mxu0 0.0
  %8611 = vmatpush.msra.mxu0 0.0
  %8612 = vmatpush.msra.mxu0 0.0
  %8613 = vmatpush.msra.mxu0 0.0
  %8614 = vmatpush.msra.mxu0 0.0
  %8615 = vmatpush.msra.mxu0 0.0
  %8616 = vmatpush.msra.mxu0 0.0
  %8617 = vmatpush.msra.mxu0 0.0
  %8618 = vmatpush.msra.mxu0 0.0
  %8619 = vmatpush.msra.mxu0 %v8329
  %8620 = vmatmul.f32.gmra.mxu0 %v8582
  %v8621 = vpop.f32.mrf.mxu0
  %v8622 = vadd.f32 0.0, %v8621
  %8623 = vdwg.mxu0
  %v8624 = vadd.f32 %v8578, %v8602
  %v8625 = vadd.f32 %v8579, %v8622
  %v8626 = vld [vmem:[%s4291] sm:$0xff]
  %v8628 = vsel %vm142, %v8626, 0
  %8630 = vmatpush.msra.mxu0 0.0
  %8631 = vmatpush.msra.mxu0 0.0
  %8632 = vmatpush.msra.mxu0 0.0
  %8633 = vmatpush.msra.mxu0 0.0
  %8634 = vmatpush.msra.mxu0 0.0
  %8635 = vmatpush.msra.mxu0 0.0
  %8636 = vmatpush.msra.mxu0 0.0
  %8637 = vmatpush.msra.mxu0 0.0
  %8638 = vmatpush.msra.mxu0 0.0
  %8639 = vmatpush.msra.mxu0 0.0
  %8640 = vmatpush.msra.mxu0 0.0
  %8641 = vmatpush.msra.mxu0 0.0
  %8642 = vmatpush.msra.mxu0 0.0
  %8643 = vmatpush.msra.mxu0 0.0
  %8644 = vmatpush.msra.mxu0 0.0
  %8645 = vmatpush.msra.mxu0 %v8336
  %8646 = vmatmul.f32.gmra.mxu0 %v8628
  %v8647 = vpop.f32.mrf.mxu0
  %v8648 = vadd.f32 0.0, %v8647
  %8649 = vdwg.mxu0
  %8650 = vmatpush.msra.mxu0 0.0
  %8651 = vmatpush.msra.mxu0 0.0
  %8652 = vmatpush.msra.mxu0 0.0
  %8653 = vmatpush.msra.mxu0 0.0
  %8654 = vmatpush.msra.mxu0 0.0
  %8655 = vmatpush.msra.mxu0 0.0
  %8656 = vmatpush.msra.mxu0 0.0
  %8657 = vmatpush.msra.mxu0 0.0
  %8658 = vmatpush.msra.mxu0 0.0
  %8659 = vmatpush.msra.mxu0 0.0
  %8660 = vmatpush.msra.mxu0 0.0
  %8661 = vmatpush.msra.mxu0 0.0
  %8662 = vmatpush.msra.mxu0 0.0
  %8663 = vmatpush.msra.mxu0 0.0
  %8664 = vmatpush.msra.mxu0 0.0
  %8665 = vmatpush.msra.mxu0 %v8337
  %8666 = vmatmul.f32.gmra.mxu0 %v8628
  %v8667 = vpop.f32.mrf.mxu0
  %v8668 = vadd.f32 0.0, %v8667
  %8669 = vdwg.mxu0
  %v8670 = vadd.f32 %v8624, %v8648
  %v8671 = vadd.f32 %v8625, %v8668
  %v8672 = vld [vmem:[%s4338] sm:$0xff]
  %v8674 = vsel %vm142, %v8672, 0
  %8676 = vmatpush.msra.mxu0 0.0
  %8677 = vmatpush.msra.mxu0 0.0
  %8678 = vmatpush.msra.mxu0 0.0
  %8679 = vmatpush.msra.mxu0 0.0
  %8680 = vmatpush.msra.mxu0 0.0
  %8681 = vmatpush.msra.mxu0 0.0
  %8682 = vmatpush.msra.mxu0 0.0
  %8683 = vmatpush.msra.mxu0 0.0
  %8684 = vmatpush.msra.mxu0 0.0
  %8685 = vmatpush.msra.mxu0 0.0
  %8686 = vmatpush.msra.mxu0 0.0
  %8687 = vmatpush.msra.mxu0 0.0
  %8688 = vmatpush.msra.mxu0 0.0
  %8689 = vmatpush.msra.mxu0 0.0
  %8690 = vmatpush.msra.mxu0 0.0
  %8691 = vmatpush.msra.mxu0 %v8344
  %8692 = vmatmul.f32.gmra.mxu0 %v8674
  %v8693 = vpop.f32.mrf.mxu0
  %v8694 = vadd.f32 0.0, %v8693
  %8695 = vdwg.mxu0
  %8696 = vmatpush.msra.mxu0 0.0
  %8697 = vmatpush.msra.mxu0 0.0
  %8698 = vmatpush.msra.mxu0 0.0
  %8699 = vmatpush.msra.mxu0 0.0
  %8700 = vmatpush.msra.mxu0 0.0
  %8701 = vmatpush.msra.mxu0 0.0
  %8702 = vmatpush.msra.mxu0 0.0
  %8703 = vmatpush.msra.mxu0 0.0
  %8704 = vmatpush.msra.mxu0 0.0
  %8705 = vmatpush.msra.mxu0 0.0
  %8706 = vmatpush.msra.mxu0 0.0
  %8707 = vmatpush.msra.mxu0 0.0
  %8708 = vmatpush.msra.mxu0 0.0
  %8709 = vmatpush.msra.mxu0 0.0
  %8710 = vmatpush.msra.mxu0 0.0
  %8711 = vmatpush.msra.mxu0 %v8345
  %8712 = vmatmul.f32.gmra.mxu0 %v8674
  %v8713 = vpop.f32.mrf.mxu0
  %v8714 = vadd.f32 0.0, %v8713
  %8715 = vdwg.mxu0
  %v8716 = vadd.f32 %v8670, %v8694
  %v8717 = vadd.f32 %v8671, %v8714
  %v8718 = vld [vmem:[%s4385] sm:$0xff]
  %v8720 = vsel %vm142, %v8718, 0
  %8722 = vmatpush.msra.mxu0 0.0
  %8723 = vmatpush.msra.mxu0 0.0
  %8724 = vmatpush.msra.mxu0 0.0
  %8725 = vmatpush.msra.mxu0 0.0
  %8726 = vmatpush.msra.mxu0 0.0
  %8727 = vmatpush.msra.mxu0 0.0
  %8728 = vmatpush.msra.mxu0 0.0
  %8729 = vmatpush.msra.mxu0 0.0
  %8730 = vmatpush.msra.mxu0 0.0
  %8731 = vmatpush.msra.mxu0 0.0
  %8732 = vmatpush.msra.mxu0 0.0
  %8733 = vmatpush.msra.mxu0 0.0
  %8734 = vmatpush.msra.mxu0 0.0
  %8735 = vmatpush.msra.mxu0 0.0
  %8736 = vmatpush.msra.mxu0 0.0
  %8737 = vmatpush.msra.mxu0 %v8352
  %8738 = vmatmul.f32.gmra.mxu0 %v8720
  %v8739 = vpop.f32.mrf.mxu0
  %v8740 = vadd.f32 0.0, %v8739
  %8741 = vdwg.mxu0
  %8742 = vmatpush.msra.mxu0 0.0
  %8743 = vmatpush.msra.mxu0 0.0
  %8744 = vmatpush.msra.mxu0 0.0
  %8745 = vmatpush.msra.mxu0 0.0
  %8746 = vmatpush.msra.mxu0 0.0
  %8747 = vmatpush.msra.mxu0 0.0
  %8748 = vmatpush.msra.mxu0 0.0
  %8749 = vmatpush.msra.mxu0 0.0
  %8750 = vmatpush.msra.mxu0 0.0
  %8751 = vmatpush.msra.mxu0 0.0
  %8752 = vmatpush.msra.mxu0 0.0
  %8753 = vmatpush.msra.mxu0 0.0
  %8754 = vmatpush.msra.mxu0 0.0
  %8755 = vmatpush.msra.mxu0 0.0
  %8756 = vmatpush.msra.mxu0 0.0
  %8757 = vmatpush.msra.mxu0 %v8353
  %8758 = vmatmul.f32.gmra.mxu0 %v8720
  %v8759 = vpop.f32.mrf.mxu0
  %v8760 = vadd.f32 0.0, %v8759
  %8761 = vdwg.mxu0
  %v8762 = vadd.f32 %v8716, %v8740
  %v8763 = vadd.f32 %v8717, %v8760
  %v8764 = vadd.f32 %v8762, %v8763
  %8765 = vadd.xlane.f32.xlu0 %v8764
  %v8766 = vpop.xlane.xlu0 %8765
  %v8767 = vmul.f32 %v8766, %v567
  %v8768 = vsub.f32 %v8762, %v8767
  %v8769 = vsub.f32 %v8763, %v8767
  %v8770 = vmul.f32 %v8768, %v8768
  %v8771 = vmul.f32 %v8769, %v8769
  %v8772 = vadd.f32 %v8770, %v8771
  %8773 = vadd.xlane.f32.xlu0 %v8772
  %v8774 = vpop.xlane.xlu0 %8773
  %v8775 = vmul.f32 %v8774, %v567
  %v8776 = vadd.f32 %v8775, 1e-05
  %v8777 = vrsqrt.pop %v8776
  %v8778 = vmul.f32 %v8777, %v8776
  %v8779 = vmul.f32 %v8778, %v8777
  %v8780 = vmul.f32 0.5, %v8779
  %v8781 = vsub.f32 1.5, %v8780
  %v8782 = vmul.f32 %v8777, %v8781
  %vm8783 = vweird.f32 %v8776
  %vm8784 = vweird.f32 %v8777
  %vm8785 = vmor %vm8783, %vm8784
  %v8786 = vsel %vm8785, %v8777, %v8782
  %v8787 = vmul.f32 %v8768, %v8786
  %v8788 = vmul.f32 %v8769, %v8786
  %vm8789 = vcmp.ge.f32.partialorder %v8787, 0.0
  %vm8790 = vcmp.ge.f32.partialorder %v8788, 0.0
  %v8791 = vmul.f32 %v8787, 0.01
  %v8792 = vmul.f32 %v8788, 0.01
  %v8793 = vsel %vm8789, %v8787, %v8791
  %v8794 = vsel %vm8790, %v8788, %v8792
  %8795 = vst [vmem:[%s4468 + $0x30] sm:$0xff] %v8793
  %8796 = vst [vmem:[%s4468 + $0x38] sm:$0xff] %v8794
  // Predicated region
  $region46: #{feature_extraction_block.1} parent=0 // pred_check
    _
  $region47: #{feature_extraction_block.1} parent=0 // pred_check_branch
    %8798 = sbr.rel (0) target = $region49
  $region48: #{feature_extraction_block.1} parent=0 // pred_region
    _
  $region49: #{feature_extraction_block.1} parent=0 // pred_fallthru
    _
  // Predicated region
  $region50: #{feature_extraction_block.1} parent=0 // pred_check
    _
  $region51: #{feature_extraction_block.1} parent=0 // pred_check_branch
    %8800 = sbr.rel (0) target = $region53
  $region52: #{feature_extraction_block.1} parent=0 // pred_region
    _
  $region53: #{feature_extraction_block.1} parent=0 // pred_fallthru
    _

</llo_original>
